<compile_context>
chip_gen: v7x
topology: tpu7x:2x2x1
jax: 0.10.0
libtpu: 0.0.40
codegen_flags: <defaults>
</compile_context>

<pallas_src>
import functools

import jax
import jax.numpy as jnp
from jax import lax
from jax.experimental import pallas as pl
from jax.experimental.pallas import tpu as pltpu

_PAD = 18  # halo on each side = largest dilation


def _build_tap_table(dilations=(6, 12, 18)):
    """Group the 28 taps (1x1 + 3 dilated 3x3) by their row shift.

    Returns (tap_rows, n_taps) where tap_rows is a static tuple of
    (dh, ((col_block, dw), ...)) entries — 7 distinct row shifts in total —
    and col_block is the tap's column-block index inside the im2col strip
    (which matches the row-block order of the concatenated weight).
    """
    by_row = {0: [(0, 0)]}                      # 1x1 branch: center tap, col 0
    t = 1
    for d in dilations:
        for kh in range(3):
            for kw in range(3):
                by_row.setdefault((kh - 1) * d, []).append((t, (kw - 1) * d))
                t += 1
    tap_rows = tuple(sorted((dh, tuple(v)) for dh, v in by_row.items()))
    return tap_rows, t                          # n_taps == 28


def _aspp_kernel(xpad_ref, add_ref, w_ref, out_ref, strip_ref, *,
                 th, width, cin, tap_rows):
    """One (batch, H-tile) per grid step.

    xpad_ref  : (1, Hp, Wp, cin)   bf16  zero-padded NHWC image (whole image,
                                         resident across the H-tile axis)
    add_ref   : (1, 8, D)          f32   pooled branch + folded biases
    w_ref     : (28*cin, D)        bf16  concatenated fuse-folded weights
    out_ref   : (1, th*width, D)   f32   this tile's output rows
    strip_ref : (th*width, 28*cin) bf16  per-tile im2col scratch
    """
    P = _PAD
    r0 = pl.multiple_of(pl.program_id(1) * th, th)

    # Assemble the im2col strip: load each of the 7 distinct row shifts once,
    # derive its kw taps from value slices, write each element once per tap.
    for dh, cols in tap_rows:
        rows = xpad_ref[0, pl.ds(r0 + P + dh, th), :, :]        # (th, Wp, cin)
        for col, dw in cols:
            win = rows[:, P + dw:P + dw + width, :]             # (th, width, cin)
            strip_ref[:, col * cin:(col + 1) * cin] = win.reshape(th * width, cin)

    # One matmul per tile: K = 28*cin, accumulation stays on the MXU.
    acc = jnp.dot(strip_ref[...], w_ref[...], preferred_element_type=jnp.float32)

    # Pooled branch (already fused through the 1x1-output conv) + all biases.
    out_ref[0, :, :] = (acc + add_ref[0, 0:1, :]).astype(out_ref.dtype)


def _fold_params(params, cin, depth):
    """Fold conv_1x1_output (and every bias) into the branch weights, in f32."""
    f32 = jnp.float32
    wo = params['w_out'].astype(f32)                       # (5D, D)
    wo_img = wo[0 * depth:1 * depth]
    wo_1 = wo[1 * depth:2 * depth]
    wo_6 = wo[2 * depth:3 * depth]
    wo_12 = wo[3 * depth:4 * depth]
    wo_18 = wo[4 * depth:5 * depth]

    w1_eff = params['w1'].astype(f32) @ wo_1                              # (Cin, D)
    w6_eff = params['w6'].astype(f32).reshape(9 * cin, depth) @ wo_6      # (9Cin, D)
    w12_eff = params['w12'].astype(f32).reshape(9 * cin, depth) @ wo_12
    w18_eff = params['w18'].astype(f32).reshape(9 * cin, depth) @ wo_18

    b_eff = (params['b1'].astype(f32) @ wo_1
             + params['b6'].astype(f32) @ wo_6
             + params['b12'].astype(f32) @ wo_12
             + params['b18'].astype(f32) @ wo_18
             + params['b_out'].astype(f32))                               # (1, D)
    return w1_eff, w6_eff, w12_eff, w18_eff, wo_img, b_eff


def init_params(key, cin, depth):
    """Deterministic synthetic init (PyTorch-style uniform fan-in bound)."""
    ks = jax.random.split(key, 12)

    def u(k, shape, fan_in):
        bound = 1.0 / (fan_in ** 0.5)
        return jax.random.uniform(k, shape, jnp.float32, -bound, bound)

    p = {}
    p['w_pool'] = u(ks[0], (cin, depth), cin)
    p['b_pool'] = u(ks[1], (1, depth), cin)
    p['w1'] = u(ks[2], (cin, depth), cin)
    p['b1'] = u(ks[3], (1, depth), cin)
    p['w6'] = u(ks[4], (3, 3, cin, depth), 9 * cin)        # (kh,kw,Cin,D)
    p['b6'] = u(ks[5], (1, depth), 9 * cin)
    p['w12'] = u(ks[6], (3, 3, cin, depth), 9 * cin)
    p['b12'] = u(ks[7], (1, depth), 9 * cin)
    p['w18'] = u(ks[8], (3, 3, cin, depth), 9 * cin)
    p['b18'] = u(ks[9], (1, depth), 9 * cin)
    p['w_out'] = u(ks[10], (5 * depth, depth), 5 * depth)
    p['b_out'] = u(ks[11], (1, depth), 5 * depth)
    return p


def _pick_vmem_limit():
    # ~96 MiB on v5e/v6e (128 MiB physical), ~48 MiB on v7x (64 MiB physical).
    try:
        cap = int(pltpu.get_tpu_info().vmem_capacity_bytes)
        limit = min(cap * 3 // 4, 100 * 1024 * 1024)
    except Exception:
        limit = 48 * 1024 * 1024
    return max(limit, 32 * 1024 * 1024)


def aspp_forward(x_nchw, params, *, compute_dtype=jnp.bfloat16, tile_h=8):
    N, Cin, H, W = x_nchw.shape
    D = params['w_out'].shape[1]
    P = _PAD

    # Round W up to a sublane multiple (8) and H up to the H-tile so the
    # in-kernel (th, w, c) -> (th*w, c) collapse and the tiled output blocks
    # are well formed.  Extra zero rows/cols act like conv zero-padding for
    # the valid pixels and are dropped from the output.
    TH = tile_h
    Wr = ((W + 7) // 8) * 8
    Hr = ((H + TH - 1) // TH) * TH
    n_tiles = Hr // TH
    Hp, Wp = Hr + 2 * P, Wr + 2 * P
    L = Hr * Wr

    # Pooled branch uses the exact f32 mean of the original (unpadded) input.
    x32 = x_nchw.astype(jnp.float32)

    # Cast BEFORE transpose/pad so the padded HBM buffer is bf16 (half the DMA).
    x_nhwc = jnp.transpose(x_nchw.astype(compute_dtype), (0, 2, 3, 1))    # (N,H,W,Cin)
    xpad = jnp.pad(x_nhwc, ((0, 0), (P, P + (Hr - H)), (P, P + (Wr - W)), (0, 0)))

    w1e, w6e, w12e, w18e, wo_img, b_eff = _fold_params(params, Cin, D)
    # Single concatenated weight: rows ordered [1x1 | d=6 taps | d=12 | d=18].
    w_all = jnp.concatenate([w1e, w6e, w12e, w18e], axis=0).astype(compute_dtype)

    # Pooled branch per batch (mean -> 1x1 -> broadcast), folded through the
    # fuse conv and merged with the effective bias.  Tiny; stays in f32 JAX.
    mean = jnp.mean(x32, axis=(2, 3))                                     # (N, Cin)
    pooled = (mean @ params['w_pool'].astype(jnp.float32)
              + params['b_pool'].astype(jnp.float32)) @ wo_img            # (N, D)
    add = (pooled + b_eff).astype(jnp.float32)                            # (N, D)
    add = jnp.broadcast_to(add[:, None, :], (N, 8, D))                    # sublane-safe block

    tap_rows, n_taps = _build_tap_table()
    K = n_taps * Cin                                                      # 28 * Cin

    itemsize = jnp.dtype(compute_dtype).itemsize
    bytes_accessed = int(xpad.size * itemsize + w_all.size * itemsize
                         + add.size * 4 + N * L * D * 4)
    cost = pl.CostEstimate(flops=int(2 * N * L * K * D),
                           transcendentals=0,
                           bytes_accessed=bytes_accessed)

    kern = functools.partial(_aspp_kernel, th=TH, width=Wr, cin=Cin,
                             tap_rows=tap_rows)
    vmem_limit = _pick_vmem_limit()

    def _run(single_buffer_weights):
        if single_buffer_weights:
            # Constant index_map => DMA'd once; don't waste VMEM double-buffering.
            w_spec = pl.BlockSpec((K, D), lambda b, t: (0, 0),
                                  pipeline_mode=pl.Buffered(1))
        else:
            w_spec = pl.BlockSpec((K, D), lambda b, t: (0, 0))
        grid_spec = pltpu.PrefetchScalarGridSpec(
            num_scalar_prefetch=0,
            grid=(N, n_tiles),
            in_specs=[
                # Whole padded image; block index constant across the H-tile
                # axis => stays resident, re-DMA'd only when b changes.
                pl.BlockSpec((1, Hp, Wp, Cin), lambda b, t: (b, 0, 0, 0)),
                pl.BlockSpec((1, 8, D), lambda b, t: (b, 0, 0)),
                w_spec,
            ],
            out_specs=pl.BlockSpec((1, TH * Wr, D), lambda b, t: (b, t, 0)),
            scratch_shapes=[pltpu.VMEM((TH * Wr, K), compute_dtype)],
        )
        return pl.pallas_call(
            kern,
            out_shape=jax.ShapeDtypeStruct((N, L, D), jnp.float32),
            grid_spec=grid_spec,
            compiler_params=pltpu.CompilerParams(
                dimension_semantics=("parallel", "parallel"),
                vmem_limit_bytes=vmem_limit),
            cost_estimate=cost,
        )(xpad, add, w_all)

    try:
        out = jax.block_until_ready(_run(True))
    except Exception:
        # Fallback if single-buffering via pipeline_mode is unavailable.
        out = jax.block_until_ready(_run(False))

    out = out.reshape(N, Hr, Wr, D)[:, :H, :W, :]      # drop the round-up rows/cols
    return jnp.transpose(out, (0, 3, 1, 2))            # back to NCHW


def aspp_reference(x_nchw, params):
    """Plain-JAX reference (lax conv) for correctness checking."""
    N, Cin, H, W = x_nchw.shape
    D = params['w_out'].shape[1]
    x = x_nchw.astype(jnp.float32)
    dn = ('NCHW', 'OIHW', 'NCHW')

    def conv1x1(inp, w, b):                      # w: (Cin_, D)
        k = jnp.transpose(w, (1, 0))[:, :, None, None]
        y = lax.conv_general_dilated(inp, k, (1, 1), 'VALID', dimension_numbers=dn)
        return y + b.reshape(1, -1, 1, 1)

    def conv3x3(inp, w, b, d):                   # w: (3,3,Cin,D)
        k = jnp.transpose(w, (3, 2, 0, 1))       # OIHW
        y = lax.conv_general_dilated(inp, k, (1, 1), [(d, d), (d, d)],
                                     rhs_dilation=(d, d), dimension_numbers=dn)
        return y + b.reshape(1, -1, 1, 1)

    mean = jnp.mean(x, axis=(2, 3), keepdims=True)
    img = jnp.broadcast_to(conv1x1(mean, params['w_pool'], params['b_pool']),
                           (N, D, H, W))
    a1 = conv1x1(x, params['w1'], params['b1'])
    a6 = conv3x3(x, params['w6'], params['b6'], 6)
    a12 = conv3x3(x, params['w12'], params['b12'], 12)
    a18 = conv3x3(x, params['w18'], params['b18'], 18)
    cat = jnp.concatenate([img, a1, a6, a12, a18], axis=1)
    return conv1x1(cat, params['w_out'], params['b_out'])


if __name__ == "__main__":
    key = jax.random.PRNGKey(0)
    k_x, k_p = jax.random.split(key)

    # Small shapes consistent with the module (real module is 512 -> 256).
    # D kept lane-dense (multiple of 128) per the perf review.
    N, Cin, H, W = 2, 16, 24, 24
    depth = 128
    x = jax.random.normal(k_x, (N, Cin, H, W), jnp.float32)   # NCHW, like PyTorch
    params = init_params(k_p, Cin, depth)

    out = jax.block_until_ready(aspp_forward(x, params))
    ref = jax.block_until_ready(aspp_reference(x, params))

    assert out.shape == (N, depth, H, W), out.shape
    max_err = float(jnp.max(jnp.abs(out - ref)))
    # bf16 activations/weights with f32 accumulation -> loose-but-meaningful tol.
    assert jnp.allclose(out, ref, atol=5e-2, rtol=5e-2), max_err
    print("KERNEL_OK")
</pallas_src>

<mosaic_0001>
module attributes {stable_mosaic.version = 11 : i64} {
  func.func @_aspp_kernel(%arg0: i32, %arg1: i32, %arg2: memref<1x60x60x16xbf16, #tpu.memory_space<vmem>>, %arg3: memref<1x8x128xf32, #tpu.memory_space<vmem>>, %arg4: memref<448x128xbf16, #tpu.memory_space<vmem>>, %arg5: memref<1x192x128xf32, #tpu.memory_space<vmem>>, %arg6: memref<192x448xbf16, #tpu.memory_space<vmem>>) attributes {dimension_semantics = [#tpu.dimension_semantics<parallel>, #tpu.dimension_semantics<parallel>], iteration_bounds = array<i64: 2, 3>, scalar_prefetch = 0 : i64, scratch_operands = 1 : i64, tpu.core_type = #tpu.core_type<tc>, window_params = [{transform_indices = @transform_0, window_bounds = array<i64: 1, 60, 60, 16>}, {transform_indices = @transform_1, window_bounds = array<i64: 1, 8, 128>}, {pipeline_mode = #tpu.pipeline_mode<synchronous>, transform_indices = @transform_2, window_bounds = array<i64: 448, 128>}, {transform_indices = @transform_3, window_bounds = array<i64: 1, 192, 128>}]} {
    %c8_i32 = arith.constant 8 : i32
    %0 = arith.muli %arg1, %c8_i32 : i32
    %1 = tpu.assume_multiple %0, 8 : i32
    %c18_i32 = arith.constant 18 : i32
    %2 = arith.addi %1, %c18_i32 : i32
    %c-18_i32 = arith.constant -18 : i32
    %3 = arith.addi %2, %c-18_i32 : i32
    %c0 = arith.constant 0 : index
    %4 = arith.index_cast %3 : i32 to index
    %c0_0 = arith.constant 0 : index
    %c0_1 = arith.constant 0 : index
    %5 = vector.load %arg2[%c0, %4, %c0_0, %c0_1] : memref<1x60x60x16xbf16, #tpu.memory_space<vmem>>, vector<1x8x60x16xbf16>
    %6 = vector.shape_cast %5 : vector<1x8x60x16xbf16> to vector<8x60x16xbf16>
    %7 = vector.extract_strided_slice %6 {offsets = [0, 0, 0], sizes = [8, 24, 16], strides = [1, 1, 1]} : vector<8x60x16xbf16> to vector<8x24x16xbf16>
    %8 = vector.shape_cast %7 : vector<8x24x16xbf16> to vector<192x16xbf16>
    %c0_2 = arith.constant 0 : index
    %c304 = arith.constant 304 : index
    %9 = vector.load %arg6[%c0_2, %c304] : memref<192x448xbf16, #tpu.memory_space<vmem>>, vector<192x16xbf16>
    tpu.vector_store %arg6[%c0_2, %c304], %8 {strides = array<i32>} : memref<192x448xbf16, #tpu.memory_space<vmem>>, vector<192x16xbf16>,
    %10 = vector.extract_strided_slice %6 {offsets = [0, 18, 0], sizes = [8, 24, 16], strides = [1, 1, 1]} : vector<8x60x16xbf16> to vector<8x24x16xbf16>
    %11 = vector.shape_cast %10 : vector<8x24x16xbf16> to vector<192x16xbf16>
    %c0_3 = arith.constant 0 : index
    %c320 = arith.constant 320 : index
    %12 = vector.load %arg6[%c0_3, %c320] : memref<192x448xbf16, #tpu.memory_space<vmem>>, vector<192x16xbf16>
    tpu.vector_store %arg6[%c0_3, %c320], %11 {strides = array<i32>} : memref<192x448xbf16, #tpu.memory_space<vmem>>, vector<192x16xbf16>,
    %13 = vector.extract_strided_slice %6 {offsets = [0, 36, 0], sizes = [8, 24, 16], strides = [1, 1, 1]} : vector<8x60x16xbf16> to vector<8x24x16xbf16>
    %14 = vector.shape_cast %13 : vector<8x24x16xbf16> to vector<192x16xbf16>
    %c0_4 = arith.constant 0 : index
    %c336 = arith.constant 336 : index
    %15 = vector.load %arg6[%c0_4, %c336] : memref<192x448xbf16, #tpu.memory_space<vmem>>, vector<192x16xbf16>
    tpu.vector_store %arg6[%c0_4, %c336], %14 {strides = array<i32>} : memref<192x448xbf16, #tpu.memory_space<vmem>>, vector<192x16xbf16>,
    %c18_i32_5 = arith.constant 18 : i32
    %16 = arith.addi %1, %c18_i32_5 : i32
    %c-12_i32 = arith.constant -12 : i32
    %17 = arith.addi %16, %c-12_i32 : i32
    %c0_6 = arith.constant 0 : index
    %18 = arith.index_cast %17 : i32 to index
    %c0_7 = arith.constant 0 : index
    %c0_8 = arith.constant 0 : index
    %19 = vector.load %arg2[%c0_6, %18, %c0_7, %c0_8] : memref<1x60x60x16xbf16, #tpu.memory_space<vmem>>, vector<1x8x60x16xbf16>
    %20 = vector.shape_cast %19 : vector<1x8x60x16xbf16> to vector<8x60x16xbf16>
    %21 = vector.extract_strided_slice %20 {offsets = [0, 6, 0], sizes = [8, 24, 16], strides = [1, 1, 1]} : vector<8x60x16xbf16> to vector<8x24x16xbf16>
    %22 = vector.shape_cast %21 : vector<8x24x16xbf16> to vector<192x16xbf16>
    %c0_9 = arith.constant 0 : index
    %c160 = arith.constant 160 : index
    %23 = vector.load %arg6[%c0_9, %c160] : memref<192x448xbf16, #tpu.memory_space<vmem>>, vector<192x16xbf16>
    tpu.vector_store %arg6[%c0_9, %c160], %22 {strides = array<i32>} : memref<192x448xbf16, #tpu.memory_space<vmem>>, vector<192x16xbf16>,
    %24 = vector.extract_strided_slice %20 {offsets = [0, 18, 0], sizes = [8, 24, 16], strides = [1, 1, 1]} : vector<8x60x16xbf16> to vector<8x24x16xbf16>
    %25 = vector.shape_cast %24 : vector<8x24x16xbf16> to vector<192x16xbf16>
    %c0_10 = arith.constant 0 : index
    %c176 = arith.constant 176 : index
    %26 = vector.load %arg6[%c0_10, %c176] : memref<192x448xbf16, #tpu.memory_space<vmem>>, vector<192x16xbf16>
    tpu.vector_store %arg6[%c0_10, %c176], %25 {strides = array<i32>} : memref<192x448xbf16, #tpu.memory_space<vmem>>, vector<192x16xbf16>,
    %27 = vector.extract_strided_slice %20 {offsets = [0, 30, 0], sizes = [8, 24, 16], strides = [1, 1, 1]} : vector<8x60x16xbf16> to vector<8x24x16xbf16>
    %28 = vector.shape_cast %27 : vector<8x24x16xbf16> to vector<192x16xbf16>
    %c0_11 = arith.constant 0 : index
    %c192 = arith.constant 192 : index
    %29 = vector.load %arg6[%c0_11, %c192] : memref<192x448xbf16, #tpu.memory_space<vmem>>, vector<192x16xbf16>
    tpu.vector_store %arg6[%c0_11, %c192], %28 {strides = array<i32>} : memref<192x448xbf16, #tpu.memory_space<vmem>>, vector<192x16xbf16>,
    %c18_i32_12 = arith.constant 18 : i32
    %30 = arith.addi %1, %c18_i32_12 : i32
    %c-6_i32 = arith.constant -6 : i32
    %31 = arith.addi %30, %c-6_i32 : i32
    %c0_13 = arith.constant 0 : index
    %32 = arith.index_cast %31 : i32 to index
    %c0_14 = arith.constant 0 : index
    %c0_15 = arith.constant 0 : index
    %33 = vector.load %arg2[%c0_13, %32, %c0_14, %c0_15] : memref<1x60x60x16xbf16, #tpu.memory_space<vmem>>, vector<1x8x60x16xbf16>
    %34 = vector.shape_cast %33 : vector<1x8x60x16xbf16> to vector<8x60x16xbf16>
    %35 = vector.extract_strided_slice %34 {offsets = [0, 12, 0], sizes = [8, 24, 16], strides = [1, 1, 1]} : vector<8x60x16xbf16> to vector<8x24x16xbf16>
    %36 = vector.shape_cast %35 : vector<8x24x16xbf16> to vector<192x16xbf16>
    %c0_16 = arith.constant 0 : index
    %c16 = arith.constant 16 : index
    %37 = vector.load %arg6[%c0_16, %c16] : memref<192x448xbf16, #tpu.memory_space<vmem>>, vector<192x16xbf16>
    tpu.vector_store %arg6[%c0_16, %c16], %36 {strides = array<i32>} : memref<192x448xbf16, #tpu.memory_space<vmem>>, vector<192x16xbf16>,
    %38 = vector.extract_strided_slice %34 {offsets = [0, 18, 0], sizes = [8, 24, 16], strides = [1, 1, 1]} : vector<8x60x16xbf16> to vector<8x24x16xbf16>
    %39 = vector.shape_cast %38 : vector<8x24x16xbf16> to vector<192x16xbf16>
    %c0_17 = arith.constant 0 : index
    %c32 = arith.constant 32 : index
    %40 = vector.load %arg6[%c0_17, %c32] : memref<192x448xbf16, #tpu.memory_space<vmem>>, vector<192x16xbf16>
    tpu.vector_store %arg6[%c0_17, %c32], %39 {strides = array<i32>} : memref<192x448xbf16, #tpu.memory_space<vmem>>, vector<192x16xbf16>,
    %41 = vector.extract_strided_slice %34 {offsets = [0, 24, 0], sizes = [8, 24, 16], strides = [1, 1, 1]} : vector<8x60x16xbf16> to vector<8x24x16xbf16>
    %42 = vector.shape_cast %41 : vector<8x24x16xbf16> to vector<192x16xbf16>
    %c0_18 = arith.constant 0 : index
    %c48 = arith.constant 48 : index
    %43 = vector.load %arg6[%c0_18, %c48] : memref<192x448xbf16, #tpu.memory_space<vmem>>, vector<192x16xbf16>
    tpu.vector_store %arg6[%c0_18, %c48], %42 {strides = array<i32>} : memref<192x448xbf16, #tpu.memory_space<vmem>>, vector<192x16xbf16>,
    %c18_i32_19 = arith.constant 18 : i32
    %44 = arith.addi %1, %c18_i32_19 : i32
    %c0_i32 = arith.constant 0 : i32
    %45 = arith.addi %44, %c0_i32 : i32
    %c0_20 = arith.constant 0 : index
    %46 = arith.index_cast %45 : i32 to index
    %c0_21 = arith.constant 0 : index
    %c0_22 = arith.constant 0 : index
    %47 = vector.load %arg2[%c0_20, %46, %c0_21, %c0_22] : memref<1x60x60x16xbf16, #tpu.memory_space<vmem>>, vector<1x8x60x16xbf16>
    %48 = vector.shape_cast %47 : vector<1x8x60x16xbf16> to vector<8x60x16xbf16>
    %49 = vector.extract_strided_slice %48 {offsets = [0, 18, 0], sizes = [8, 24, 16], strides = [1, 1, 1]} : vector<8x60x16xbf16> to vector<8x24x16xbf16>
    %50 = vector.shape_cast %49 : vector<8x24x16xbf16> to vector<192x16xbf16>
    %c0_23 = arith.constant 0 : index
    %c0_24 = arith.constant 0 : index
    %51 = vector.load %arg6[%c0_23, %c0_24] : memref<192x448xbf16, #tpu.memory_space<vmem>>, vector<192x16xbf16>
    tpu.vector_store %arg6[%c0_23, %c0_24], %50 {strides = array<i32>} : memref<192x448xbf16, #tpu.memory_space<vmem>>, vector<192x16xbf16>,
    %52 = vector.extract_strided_slice %48 {offsets = [0, 12, 0], sizes = [8, 24, 16], strides = [1, 1, 1]} : vector<8x60x16xbf16> to vector<8x24x16xbf16>
    %53 = vector.shape_cast %52 : vector<8x24x16xbf16> to vector<192x16xbf16>
    %c0_25 = arith.constant 0 : index
    %c64 = arith.constant 64 : index
    %54 = vector.load %arg6[%c0_25, %c64] : memref<192x448xbf16, #tpu.memory_space<vmem>>, vector<192x16xbf16>
    tpu.vector_store %arg6[%c0_25, %c64], %53 {strides = array<i32>} : memref<192x448xbf16, #tpu.memory_space<vmem>>, vector<192x16xbf16>,
    %55 = vector.extract_strided_slice %48 {offsets = [0, 18, 0], sizes = [8, 24, 16], strides = [1, 1, 1]} : vector<8x60x16xbf16> to vector<8x24x16xbf16>
    %56 = vector.shape_cast %55 : vector<8x24x16xbf16> to vector<192x16xbf16>
    %c0_26 = arith.constant 0 : index
    %c80 = arith.constant 80 : index
    %57 = vector.load %arg6[%c0_26, %c80] : memref<192x448xbf16, #tpu.memory_space<vmem>>, vector<192x16xbf16>
    tpu.vector_store %arg6[%c0_26, %c80], %56 {strides = array<i32>} : memref<192x448xbf16, #tpu.memory_space<vmem>>, vector<192x16xbf16>,
    %58 = vector.extract_strided_slice %48 {offsets = [0, 24, 0], sizes = [8, 24, 16], strides = [1, 1, 1]} : vector<8x60x16xbf16> to vector<8x24x16xbf16>
    %59 = vector.shape_cast %58 : vector<8x24x16xbf16> to vector<192x16xbf16>
    %c0_27 = arith.constant 0 : index
    %c96 = arith.constant 96 : index
    %60 = vector.load %arg6[%c0_27, %c96] : memref<192x448xbf16, #tpu.memory_space<vmem>>, vector<192x16xbf16>
    tpu.vector_store %arg6[%c0_27, %c96], %59 {strides = array<i32>} : memref<192x448xbf16, #tpu.memory_space<vmem>>, vector<192x16xbf16>,
    %61 = vector.extract_strided_slice %48 {offsets = [0, 6, 0], sizes = [8, 24, 16], strides = [1, 1, 1]} : vector<8x60x16xbf16> to vector<8x24x16xbf16>
    %62 = vector.shape_cast %61 : vector<8x24x16xbf16> to vector<192x16xbf16>
    %c0_28 = arith.constant 0 : index
    %c208 = arith.constant 208 : index
    %63 = vector.load %arg6[%c0_28, %c208] : memref<192x448xbf16, #tpu.memory_space<vmem>>, vector<192x16xbf16>
    tpu.vector_store %arg6[%c0_28, %c208], %62 {strides = array<i32>} : memref<192x448xbf16, #tpu.memory_space<vmem>>, vector<192x16xbf16>,
    %64 = vector.extract_strided_slice %48 {offsets = [0, 18, 0], sizes = [8, 24, 16], strides = [1, 1, 1]} : vector<8x60x16xbf16> to vector<8x24x16xbf16>
    %65 = vector.shape_cast %64 : vector<8x24x16xbf16> to vector<192x16xbf16>
    %c0_29 = arith.constant 0 : index
    %c224 = arith.constant 224 : index
    %66 = vector.load %arg6[%c0_29, %c224] : memref<192x448xbf16, #tpu.memory_space<vmem>>, vector<192x16xbf16>
    tpu.vector_store %arg6[%c0_29, %c224], %65 {strides = array<i32>} : memref<192x448xbf16, #tpu.memory_space<vmem>>, vector<192x16xbf16>,
    %67 = vector.extract_strided_slice %48 {offsets = [0, 30, 0], sizes = [8, 24, 16], strides = [1, 1, 1]} : vector<8x60x16xbf16> to vector<8x24x16xbf16>
    %68 = vector.shape_cast %67 : vector<8x24x16xbf16> to vector<192x16xbf16>
    %c0_30 = arith.constant 0 : index
    %c240 = arith.constant 240 : index
    %69 = vector.load %arg6[%c0_30, %c240] : memref<192x448xbf16, #tpu.memory_space<vmem>>, vector<192x16xbf16>
    tpu.vector_store %arg6[%c0_30, %c240], %68 {strides = array<i32>} : memref<192x448xbf16, #tpu.memory_space<vmem>>, vector<192x16xbf16>,
    %70 = vector.extract_strided_slice %48 {offsets = [0, 0, 0], sizes = [8, 24, 16], strides = [1, 1, 1]} : vector<8x60x16xbf16> to vector<8x24x16xbf16>
    %71 = vector.shape_cast %70 : vector<8x24x16xbf16> to vector<192x16xbf16>
    %c0_31 = arith.constant 0 : index
    %c352 = arith.constant 352 : index
    %72 = vector.load %arg6[%c0_31, %c352] : memref<192x448xbf16, #tpu.memory_space<vmem>>, vector<192x16xbf16>
    tpu.vector_store %arg6[%c0_31, %c352], %71 {strides = array<i32>} : memref<192x448xbf16, #tpu.memory_space<vmem>>, vector<192x16xbf16>,
    %73 = vector.extract_strided_slice %48 {offsets = [0, 18, 0], sizes = [8, 24, 16], strides = [1, 1, 1]} : vector<8x60x16xbf16> to vector<8x24x16xbf16>
    %74 = vector.shape_cast %73 : vector<8x24x16xbf16> to vector<192x16xbf16>
    %c0_32 = arith.constant 0 : index
    %c368 = arith.constant 368 : index
    %75 = vector.load %arg6[%c0_32, %c368] : memref<192x448xbf16, #tpu.memory_space<vmem>>, vector<192x16xbf16>
    tpu.vector_store %arg6[%c0_32, %c368], %74 {strides = array<i32>} : memref<192x448xbf16, #tpu.memory_space<vmem>>, vector<192x16xbf16>,
    %76 = vector.extract_strided_slice %48 {offsets = [0, 36, 0], sizes = [8, 24, 16], strides = [1, 1, 1]} : vector<8x60x16xbf16> to vector<8x24x16xbf16>
    %77 = vector.shape_cast %76 : vector<8x24x16xbf16> to vector<192x16xbf16>
    %c0_33 = arith.constant 0 : index
    %c384 = arith.constant 384 : index
    %78 = vector.load %arg6[%c0_33, %c384] : memref<192x448xbf16, #tpu.memory_space<vmem>>, vector<192x16xbf16>
    tpu.vector_store %arg6[%c0_33, %c384], %77 {strides = array<i32>} : memref<192x448xbf16, #tpu.memory_space<vmem>>, vector<192x16xbf16>,
    %c18_i32_34 = arith.constant 18 : i32
    %79 = arith.addi %1, %c18_i32_34 : i32
    %c6_i32 = arith.constant 6 : i32
    %80 = arith.addi %79, %c6_i32 : i32
    %c0_35 = arith.constant 0 : index
    %81 = arith.index_cast %80 : i32 to index
    %c0_36 = arith.constant 0 : index
    %c0_37 = arith.constant 0 : index
    %82 = vector.load %arg2[%c0_35, %81, %c0_36, %c0_37] : memref<1x60x60x16xbf16, #tpu.memory_space<vmem>>, vector<1x8x60x16xbf16>
    %83 = vector.shape_cast %82 : vector<1x8x60x16xbf16> to vector<8x60x16xbf16>
    %84 = vector.extract_strided_slice %83 {offsets = [0, 12, 0], sizes = [8, 24, 16], strides = [1, 1, 1]} : vector<8x60x16xbf16> to vector<8x24x16xbf16>
    %85 = vector.shape_cast %84 : vector<8x24x16xbf16> to vector<192x16xbf16>
    %c0_38 = arith.constant 0 : index
    %c112 = arith.constant 112 : index
    %86 = vector.load %arg6[%c0_38, %c112] : memref<192x448xbf16, #tpu.memory_space<vmem>>, vector<192x16xbf16>
    tpu.vector_store %arg6[%c0_38, %c112], %85 {strides = array<i32>} : memref<192x448xbf16, #tpu.memory_space<vmem>>, vector<192x16xbf16>,
    %87 = vector.extract_strided_slice %83 {offsets = [0, 18, 0], sizes = [8, 24, 16], strides = [1, 1, 1]} : vector<8x60x16xbf16> to vector<8x24x16xbf16>
    %88 = vector.shape_cast %87 : vector<8x24x16xbf16> to vector<192x16xbf16>
    %c0_39 = arith.constant 0 : index
    %c128 = arith.constant 128 : index
    %89 = vector.load %arg6[%c0_39, %c128] : memref<192x448xbf16, #tpu.memory_space<vmem>>, vector<192x16xbf16>
    tpu.vector_store %arg6[%c0_39, %c128], %88 {strides = array<i32>} : memref<192x448xbf16, #tpu.memory_space<vmem>>, vector<192x16xbf16>,
    %90 = vector.extract_strided_slice %83 {offsets = [0, 24, 0], sizes = [8, 24, 16], strides = [1, 1, 1]} : vector<8x60x16xbf16> to vector<8x24x16xbf16>
    %91 = vector.shape_cast %90 : vector<8x24x16xbf16> to vector<192x16xbf16>
    %c0_40 = arith.constant 0 : index
    %c144 = arith.constant 144 : index
    %92 = vector.load %arg6[%c0_40, %c144] : memref<192x448xbf16, #tpu.memory_space<vmem>>, vector<192x16xbf16>
    tpu.vector_store %arg6[%c0_40, %c144], %91 {strides = array<i32>} : memref<192x448xbf16, #tpu.memory_space<vmem>>, vector<192x16xbf16>,
    %c18_i32_41 = arith.constant 18 : i32
    %93 = arith.addi %1, %c18_i32_41 : i32
    %c12_i32 = arith.constant 12 : i32
    %94 = arith.addi %93, %c12_i32 : i32
    %c0_42 = arith.constant 0 : index
    %95 = arith.index_cast %94 : i32 to index
    %c0_43 = arith.constant 0 : index
    %c0_44 = arith.constant 0 : index
    %96 = vector.load %arg2[%c0_42, %95, %c0_43, %c0_44] : memref<1x60x60x16xbf16, #tpu.memory_space<vmem>>, vector<1x8x60x16xbf16>
    %97 = vector.shape_cast %96 : vector<1x8x60x16xbf16> to vector<8x60x16xbf16>
    %98 = vector.extract_strided_slice %97 {offsets = [0, 6, 0], sizes = [8, 24, 16], strides = [1, 1, 1]} : vector<8x60x16xbf16> to vector<8x24x16xbf16>
    %99 = vector.shape_cast %98 : vector<8x24x16xbf16> to vector<192x16xbf16>
    %c0_45 = arith.constant 0 : index
    %c256 = arith.constant 256 : index
    %100 = vector.load %arg6[%c0_45, %c256] : memref<192x448xbf16, #tpu.memory_space<vmem>>, vector<192x16xbf16>
    tpu.vector_store %arg6[%c0_45, %c256], %99 {strides = array<i32>} : memref<192x448xbf16, #tpu.memory_space<vmem>>, vector<192x16xbf16>,
    %101 = vector.extract_strided_slice %97 {offsets = [0, 18, 0], sizes = [8, 24, 16], strides = [1, 1, 1]} : vector<8x60x16xbf16> to vector<8x24x16xbf16>
    %102 = vector.shape_cast %101 : vector<8x24x16xbf16> to vector<192x16xbf16>
    %c0_46 = arith.constant 0 : index
    %c272 = arith.constant 272 : index
    %103 = vector.load %arg6[%c0_46, %c272] : memref<192x448xbf16, #tpu.memory_space<vmem>>, vector<192x16xbf16>
    tpu.vector_store %arg6[%c0_46, %c272], %102 {strides = array<i32>} : memref<192x448xbf16, #tpu.memory_space<vmem>>, vector<192x16xbf16>,
    %104 = vector.extract_strided_slice %97 {offsets = [0, 30, 0], sizes = [8, 24, 16], strides = [1, 1, 1]} : vector<8x60x16xbf16> to vector<8x24x16xbf16>
    %105 = vector.shape_cast %104 : vector<8x24x16xbf16> to vector<192x16xbf16>
    %c0_47 = arith.constant 0 : index
    %c288 = arith.constant 288 : index
    %106 = vector.load %arg6[%c0_47, %c288] : memref<192x448xbf16, #tpu.memory_space<vmem>>, vector<192x16xbf16>
    tpu.vector_store %arg6[%c0_47, %c288], %105 {strides = array<i32>} : memref<192x448xbf16, #tpu.memory_space<vmem>>, vector<192x16xbf16>,
    %c18_i32_48 = arith.constant 18 : i32
    %107 = arith.addi %1, %c18_i32_48 : i32
    %c18_i32_49 = arith.constant 18 : i32
    %108 = arith.addi %107, %c18_i32_49 : i32
    %c0_50 = arith.constant 0 : index
    %109 = arith.index_cast %108 : i32 to index
    %c0_51 = arith.constant 0 : index
    %c0_52 = arith.constant 0 : index
    %110 = vector.load %arg2[%c0_50, %109, %c0_51, %c0_52] : memref<1x60x60x16xbf16, #tpu.memory_space<vmem>>, vector<1x8x60x16xbf16>
    %111 = vector.shape_cast %110 : vector<1x8x60x16xbf16> to vector<8x60x16xbf16>
    %112 = vector.extract_strided_slice %111 {offsets = [0, 0, 0], sizes = [8, 24, 16], strides = [1, 1, 1]} : vector<8x60x16xbf16> to vector<8x24x16xbf16>
    %113 = vector.shape_cast %112 : vector<8x24x16xbf16> to vector<192x16xbf16>
    %c0_53 = arith.constant 0 : index
    %c400 = arith.constant 400 : index
    %114 = vector.load %arg6[%c0_53, %c400] : memref<192x448xbf16, #tpu.memory_space<vmem>>, vector<192x16xbf16>
    tpu.vector_store %arg6[%c0_53, %c400], %113 {strides = array<i32>} : memref<192x448xbf16, #tpu.memory_space<vmem>>, vector<192x16xbf16>,
    %115 = vector.extract_strided_slice %111 {offsets = [0, 18, 0], sizes = [8, 24, 16], strides = [1, 1, 1]} : vector<8x60x16xbf16> to vector<8x24x16xbf16>
    %116 = vector.shape_cast %115 : vector<8x24x16xbf16> to vector<192x16xbf16>
    %c0_54 = arith.constant 0 : index
    %c416 = arith.constant 416 : index
    %117 = vector.load %arg6[%c0_54, %c416] : memref<192x448xbf16, #tpu.memory_space<vmem>>, vector<192x16xbf16>
    tpu.vector_store %arg6[%c0_54, %c416], %116 {strides = array<i32>} : memref<192x448xbf16, #tpu.memory_space<vmem>>, vector<192x16xbf16>,
    %118 = vector.extract_strided_slice %111 {offsets = [0, 36, 0], sizes = [8, 24, 16], strides = [1, 1, 1]} : vector<8x60x16xbf16> to vector<8x24x16xbf16>
    %119 = vector.shape_cast %118 : vector<8x24x16xbf16> to vector<192x16xbf16>
    %c0_55 = arith.constant 0 : index
    %c432 = arith.constant 432 : index
    %120 = vector.load %arg6[%c0_55, %c432] : memref<192x448xbf16, #tpu.memory_space<vmem>>, vector<192x16xbf16>
    tpu.vector_store %arg6[%c0_55, %c432], %119 {strides = array<i32>} : memref<192x448xbf16, #tpu.memory_space<vmem>>, vector<192x16xbf16>,
    %c0_56 = arith.constant 0 : index
    %c0_57 = arith.constant 0 : index
    %121 = vector.load %arg6[%c0_56, %c0_57] : memref<192x448xbf16, #tpu.memory_space<vmem>>, vector<192x448xbf16>
    %c0_58 = arith.constant 0 : index
    %c0_59 = arith.constant 0 : index
    %122 = vector.load %arg4[%c0_58, %c0_59] : memref<448x128xbf16, #tpu.memory_space<vmem>>, vector<448x128xbf16>
    %cst = arith.constant dense<0.000000e+00> : vector<192x128xf32>
    %123 = tpu.matmul %121, %122, %cst {dimension_numbers = #tpu.dot_dimension_numbers<[1], [0], [0], [1], [0, 0, 1, 1], [], []>} : vector<192x448xbf16>, vector<448x128xbf16>, vector<192x128xf32> -> vector<192x128xf32>
    %c0_60 = arith.constant 0 : index
    %c0_61 = arith.constant 0 : index
    %c0_62 = arith.constant 0 : index
    %124 = vector.load %arg3[%c0_60, %c0_61, %c0_62] : memref<1x8x128xf32, #tpu.memory_space<vmem>>, vector<1x1x128xf32>
    %125 = vector.shape_cast %124 : vector<1x1x128xf32> to vector<1x128xf32>
    %126 = vector.broadcast %125 : vector<1x128xf32> to vector<192x128xf32>
    %127 = arith.addf %123, %126 : vector<192x128xf32>
    %c0_63 = arith.constant 0 : index
    %c0_64 = arith.constant 0 : index
    %c0_65 = arith.constant 0 : index
    %128 = vector.load %arg5[%c0_63, %c0_64, %c0_65] : memref<1x192x128xf32, #tpu.memory_space<vmem>>, vector<1x192x128xf32>
    %129 = vector.shape_cast %128 : vector<1x192x128xf32> to vector<192x128xf32>
    %130 = vector.shape_cast %127 : vector<192x128xf32> to vector<1x192x128xf32>
    tpu.vector_store %arg5[%c0_63, %c0_64, %c0_65], %130 {strides = array<i32>} : memref<1x192x128xf32, #tpu.memory_space<vmem>>, vector<1x192x128xf32>,
    return
  }
  func.func @transform_0(%arg0: i32, %arg1: i32) -> (i32, i32, i32, i32) {
    %c0_i32 = arith.constant 0 : i32
    %c0_i32_0 = arith.constant 0 : i32
    %c0_i32_1 = arith.constant 0 : i32
    %c0_i32_2 = arith.constant 0 : i32
    return %arg0, %c0_i32, %c0_i32_0, %c0_i32_1 : i32, i32, i32, i32
  }
  func.func @transform_1(%arg0: i32, %arg1: i32) -> (i32, i32, i32) {
    %c0_i32 = arith.constant 0 : i32
    %c0_i32_0 = arith.constant 0 : i32
    %c0_i32_1 = arith.constant 0 : i32
    return %arg0, %c0_i32, %c0_i32_0 : i32, i32, i32
  }
  func.func @transform_2(%arg0: i32, %arg1: i32) -> (i32, i32) {
    %c0_i32 = arith.constant 0 : i32
    %c0_i32_0 = arith.constant 0 : i32
    %c0_i32_1 = arith.constant 0 : i32
    return %c0_i32, %c0_i32_0 : i32, i32
  }
  func.func @transform_3(%arg0: i32, %arg1: i32) -> (i32, i32, i32) {
    %c0_i32 = arith.constant 0 : i32
    %c0_i32_0 = arith.constant 0 : i32
    return %arg0, %arg1, %c0_i32 : i32, i32, i32
  }
}

module attributes {stable_mosaic.version = 11 : i64} {
  func.func @_aspp_kernel(%arg0: i32, %arg1: i32, %arg2: memref<1x60x60x16xbf16, #tpu.memory_space<vmem>>, %arg3: memref<1x8x128xf32, #tpu.memory_space<vmem>>, %arg4: memref<448x128xbf16, #tpu.memory_space<vmem>>, %arg5: memref<1x192x128xf32, #tpu.memory_space<vmem>>, %arg6: memref<192x448xbf16, #tpu.memory_space<vmem>>) attributes {dimension_semantics = [#tpu.dimension_semantics<parallel>, #tpu.dimension_semantics<parallel>], iteration_bounds = array<i64: 2, 3>, scalar_prefetch = 0 : i64, scratch_operands = 1 : i64, tpu.core_type = #tpu.core_type<tc>, window_params = [{transform_indices = @transform_0, window_bounds = array<i64: 1, 60, 60, 16>}, {transform_indices = @transform_1, window_bounds = array<i64: 1, 8, 128>}, {pipeline_mode = #tpu.pipeline_mode<synchronous>, transform_indices = @transform_2, window_bounds = array<i64: 448, 128>}, {transform_indices = @transform_3, window_bounds = array<i64: 1, 192, 128>}]} {
    %c8_i32 = arith.constant 8 : i32
    %0 = arith.muli %arg1, %c8_i32 : i32
    %1 = tpu.assume_multiple %0, 8 : i32
    %c18_i32 = arith.constant 18 : i32
    %2 = arith.addi %1, %c18_i32 : i32
    %c-18_i32 = arith.constant -18 : i32
    %3 = arith.addi %2, %c-18_i32 : i32
    %c0 = arith.constant 0 : index
    %4 = arith.index_cast %3 : i32 to index
    %c0_0 = arith.constant 0 : index
    %c0_1 = arith.constant 0 : index
    %5 = vector.load %arg2[%c0, %4, %c0_0, %c0_1] : memref<1x60x60x16xbf16, #tpu.memory_space<vmem>>, vector<1x8x60x16xbf16>
    %6 = vector.shape_cast %5 : vector<1x8x60x16xbf16> to vector<8x60x16xbf16>
    %7 = vector.extract_strided_slice %6 {offsets = [0, 0, 0], sizes = [8, 24, 16], strides = [1, 1, 1]} : vector<8x60x16xbf16> to vector<8x24x16xbf16>
    %8 = vector.shape_cast %7 : vector<8x24x16xbf16> to vector<192x16xbf16>
    %c0_2 = arith.constant 0 : index
    %c304 = arith.constant 304 : index
    %9 = vector.load %arg6[%c0_2, %c304] : memref<192x448xbf16, #tpu.memory_space<vmem>>, vector<192x16xbf16>
    tpu.vector_store %arg6[%c0_2, %c304], %8 {strides = array<i32>} : memref<192x448xbf16, #tpu.memory_space<vmem>>, vector<192x16xbf16>,
    %10 = vector.extract_strided_slice %6 {offsets = [0, 18, 0], sizes = [8, 24, 16], strides = [1, 1, 1]} : vector<8x60x16xbf16> to vector<8x24x16xbf16>
    %11 = vector.shape_cast %10 : vector<8x24x16xbf16> to vector<192x16xbf16>
    %c0_3 = arith.constant 0 : index
    %c320 = arith.constant 320 : index
    %12 = vector.load %arg6[%c0_3, %c320] : memref<192x448xbf16, #tpu.memory_space<vmem>>, vector<192x16xbf16>
    tpu.vector_store %arg6[%c0_3, %c320], %11 {strides = array<i32>} : memref<192x448xbf16, #tpu.memory_space<vmem>>, vector<192x16xbf16>,
    %13 = vector.extract_strided_slice %6 {offsets = [0, 36, 0], sizes = [8, 24, 16], strides = [1, 1, 1]} : vector<8x60x16xbf16> to vector<8x24x16xbf16>
    %14 = vector.shape_cast %13 : vector<8x24x16xbf16> to vector<192x16xbf16>
    %c0_4 = arith.constant 0 : index
    %c336 = arith.constant 336 : index
    %15 = vector.load %arg6[%c0_4, %c336] : memref<192x448xbf16, #tpu.memory_space<vmem>>, vector<192x16xbf16>
    tpu.vector_store %arg6[%c0_4, %c336], %14 {strides = array<i32>} : memref<192x448xbf16, #tpu.memory_space<vmem>>, vector<192x16xbf16>,
    %c18_i32_5 = arith.constant 18 : i32
    %16 = arith.addi %1, %c18_i32_5 : i32
    %c-12_i32 = arith.constant -12 : i32
    %17 = arith.addi %16, %c-12_i32 : i32
    %c0_6 = arith.constant 0 : index
    %18 = arith.index_cast %17 : i32 to index
    %c0_7 = arith.constant 0 : index
    %c0_8 = arith.constant 0 : index
    %19 = vector.load %arg2[%c0_6, %18, %c0_7, %c0_8] : memref<1x60x60x16xbf16, #tpu.memory_space<vmem>>, vector<1x8x60x16xbf16>
    %20 = vector.shape_cast %19 : vector<1x8x60x16xbf16> to vector<8x60x16xbf16>
    %21 = vector.extract_strided_slice %20 {offsets = [0, 6, 0], sizes = [8, 24, 16], strides = [1, 1, 1]} : vector<8x60x16xbf16> to vector<8x24x16xbf16>
    %22 = vector.shape_cast %21 : vector<8x24x16xbf16> to vector<192x16xbf16>
    %c0_9 = arith.constant 0 : index
    %c160 = arith.constant 160 : index
    %23 = vector.load %arg6[%c0_9, %c160] : memref<192x448xbf16, #tpu.memory_space<vmem>>, vector<192x16xbf16>
    tpu.vector_store %arg6[%c0_9, %c160], %22 {strides = array<i32>} : memref<192x448xbf16, #tpu.memory_space<vmem>>, vector<192x16xbf16>,
    %24 = vector.extract_strided_slice %20 {offsets = [0, 18, 0], sizes = [8, 24, 16], strides = [1, 1, 1]} : vector<8x60x16xbf16> to vector<8x24x16xbf16>
    %25 = vector.shape_cast %24 : vector<8x24x16xbf16> to vector<192x16xbf16>
    %c0_10 = arith.constant 0 : index
    %c176 = arith.constant 176 : index
    %26 = vector.load %arg6[%c0_10, %c176] : memref<192x448xbf16, #tpu.memory_space<vmem>>, vector<192x16xbf16>
    tpu.vector_store %arg6[%c0_10, %c176], %25 {strides = array<i32>} : memref<192x448xbf16, #tpu.memory_space<vmem>>, vector<192x16xbf16>,
    %27 = vector.extract_strided_slice %20 {offsets = [0, 30, 0], sizes = [8, 24, 16], strides = [1, 1, 1]} : vector<8x60x16xbf16> to vector<8x24x16xbf16>
    %28 = vector.shape_cast %27 : vector<8x24x16xbf16> to vector<192x16xbf16>
    %c0_11 = arith.constant 0 : index
    %c192 = arith.constant 192 : index
    %29 = vector.load %arg6[%c0_11, %c192] : memref<192x448xbf16, #tpu.memory_space<vmem>>, vector<192x16xbf16>
    tpu.vector_store %arg6[%c0_11, %c192], %28 {strides = array<i32>} : memref<192x448xbf16, #tpu.memory_space<vmem>>, vector<192x16xbf16>,
    %c18_i32_12 = arith.constant 18 : i32
    %30 = arith.addi %1, %c18_i32_12 : i32
    %c-6_i32 = arith.constant -6 : i32
    %31 = arith.addi %30, %c-6_i32 : i32
    %c0_13 = arith.constant 0 : index
    %32 = arith.index_cast %31 : i32 to index
    %c0_14 = arith.constant 0 : index
    %c0_15 = arith.constant 0 : index
    %33 = vector.load %arg2[%c0_13, %32, %c0_14, %c0_15] : memref<1x60x60x16xbf16, #tpu.memory_space<vmem>>, vector<1x8x60x16xbf16>
    %34 = vector.shape_cast %33 : vector<1x8x60x16xbf16> to vector<8x60x16xbf16>
    %35 = vector.extract_strided_slice %34 {offsets = [0, 12, 0], sizes = [8, 24, 16], strides = [1, 1, 1]} : vector<8x60x16xbf16> to vector<8x24x16xbf16>
    %36 = vector.shape_cast %35 : vector<8x24x16xbf16> to vector<192x16xbf16>
    %c0_16 = arith.constant 0 : index
    %c16 = arith.constant 16 : index
    %37 = vector.load %arg6[%c0_16, %c16] : memref<192x448xbf16, #tpu.memory_space<vmem>>, vector<192x16xbf16>
    tpu.vector_store %arg6[%c0_16, %c16], %36 {strides = array<i32>} : memref<192x448xbf16, #tpu.memory_space<vmem>>, vector<192x16xbf16>,
    %38 = vector.extract_strided_slice %34 {offsets = [0, 18, 0], sizes = [8, 24, 16], strides = [1, 1, 1]} : vector<8x60x16xbf16> to vector<8x24x16xbf16>
    %39 = vector.shape_cast %38 : vector<8x24x16xbf16> to vector<192x16xbf16>
    %c0_17 = arith.constant 0 : index
    %c32 = arith.constant 32 : index
    %40 = vector.load %arg6[%c0_17, %c32] : memref<192x448xbf16, #tpu.memory_space<vmem>>, vector<192x16xbf16>
    tpu.vector_store %arg6[%c0_17, %c32], %39 {strides = array<i32>} : memref<192x448xbf16, #tpu.memory_space<vmem>>, vector<192x16xbf16>,
    %41 = vector.extract_strided_slice %34 {offsets = [0, 24, 0], sizes = [8, 24, 16], strides = [1, 1, 1]} : vector<8x60x16xbf16> to vector<8x24x16xbf16>
    %42 = vector.shape_cast %41 : vector<8x24x16xbf16> to vector<192x16xbf16>
    %c0_18 = arith.constant 0 : index
    %c48 = arith.constant 48 : index
    %43 = vector.load %arg6[%c0_18, %c48] : memref<192x448xbf16, #tpu.memory_space<vmem>>, vector<192x16xbf16>
    tpu.vector_store %arg6[%c0_18, %c48], %42 {strides = array<i32>} : memref<192x448xbf16, #tpu.memory_space<vmem>>, vector<192x16xbf16>,
    %c18_i32_19 = arith.constant 18 : i32
    %44 = arith.addi %1, %c18_i32_19 : i32
    %c0_i32 = arith.constant 0 : i32
    %45 = arith.addi %44, %c0_i32 : i32
    %c0_20 = arith.constant 0 : index
    %46 = arith.index_cast %45 : i32 to index
    %c0_21 = arith.constant 0 : index
    %c0_22 = arith.constant 0 : index
    %47 = vector.load %arg2[%c0_20, %46, %c0_21, %c0_22] : memref<1x60x60x16xbf16, #tpu.memory_space<vmem>>, vector<1x8x60x16xbf16>
    %48 = vector.shape_cast %47 : vector<1x8x60x16xbf16> to vector<8x60x16xbf16>
    %49 = vector.extract_strided_slice %48 {offsets = [0, 18, 0], sizes = [8, 24, 16], strides = [1, 1, 1]} : vector<8x60x16xbf16> to vector<8x24x16xbf16>
    %50 = vector.shape_cast %49 : vector<8x24x16xbf16> to vector<192x16xbf16>
    %c0_23 = arith.constant 0 : index
    %c0_24 = arith.constant 0 : index
    %51 = vector.load %arg6[%c0_23, %c0_24] : memref<192x448xbf16, #tpu.memory_space<vmem>>, vector<192x16xbf16>
    tpu.vector_store %arg6[%c0_23, %c0_24], %50 {strides = array<i32>} : memref<192x448xbf16, #tpu.memory_space<vmem>>, vector<192x16xbf16>,
    %52 = vector.extract_strided_slice %48 {offsets = [0, 12, 0], sizes = [8, 24, 16], strides = [1, 1, 1]} : vector<8x60x16xbf16> to vector<8x24x16xbf16>
    %53 = vector.shape_cast %52 : vector<8x24x16xbf16> to vector<192x16xbf16>
    %c0_25 = arith.constant 0 : index
    %c64 = arith.constant 64 : index
    %54 = vector.load %arg6[%c0_25, %c64] : memref<192x448xbf16, #tpu.memory_space<vmem>>, vector<192x16xbf16>
    tpu.vector_store %arg6[%c0_25, %c64], %53 {strides = array<i32>} : memref<192x448xbf16, #tpu.memory_space<vmem>>, vector<192x16xbf16>,
    %55 = vector.extract_strided_slice %48 {offsets = [0, 18, 0], sizes = [8, 24, 16], strides = [1, 1, 1]} : vector<8x60x16xbf16> to vector<8x24x16xbf16>
    %56 = vector.shape_cast %55 : vector<8x24x16xbf16> to vector<192x16xbf16>
    %c0_26 = arith.constant 0 : index
    %c80 = arith.constant 80 : index
    %57 = vector.load %arg6[%c0_26, %c80] : memref<192x448xbf16, #tpu.memory_space<vmem>>, vector<192x16xbf16>
    tpu.vector_store %arg6[%c0_26, %c80], %56 {strides = array<i32>} : memref<192x448xbf16, #tpu.memory_space<vmem>>, vector<192x16xbf16>,
    %58 = vector.extract_strided_slice %48 {offsets = [0, 24, 0], sizes = [8, 24, 16], strides = [1, 1, 1]} : vector<8x60x16xbf16> to vector<8x24x16xbf16>
    %59 = vector.shape_cast %58 : vector<8x24x16xbf16> to vector<192x16xbf16>
    %c0_27 = arith.constant 0 : index
    %c96 = arith.constant 96 : index
    %60 = vector.load %arg6[%c0_27, %c96] : memref<192x448xbf16, #tpu.memory_space<vmem>>, vector<192x16xbf16>
    tpu.vector_store %arg6[%c0_27, %c96], %59 {strides = array<i32>} : memref<192x448xbf16, #tpu.memory_space<vmem>>, vector<192x16xbf16>,
    %61 = vector.extract_strided_slice %48 {offsets = [0, 6, 0], sizes = [8, 24, 16], strides = [1, 1, 1]} : vector<8x60x16xbf16> to vector<8x24x16xbf16>
    %62 = vector.shape_cast %61 : vector<8x24x16xbf16> to vector<192x16xbf16>
    %c0_28 = arith.constant 0 : index
    %c208 = arith.constant 208 : index
    %63 = vector.load %arg6[%c0_28, %c208] : memref<192x448xbf16, #tpu.memory_space<vmem>>, vector<192x16xbf16>
    tpu.vector_store %arg6[%c0_28, %c208], %62 {strides = array<i32>} : memref<192x448xbf16, #tpu.memory_space<vmem>>, vector<192x16xbf16>,
    %64 = vector.extract_strided_slice %48 {offsets = [0, 18, 0], sizes = [8, 24, 16], strides = [1, 1, 1]} : vector<8x60x16xbf16> to vector<8x24x16xbf16>
    %65 = vector.shape_cast %64 : vector<8x24x16xbf16> to vector<192x16xbf16>
    %c0_29 = arith.constant 0 : index
    %c224 = arith.constant 224 : index
    %66 = vector.load %arg6[%c0_29, %c224] : memref<192x448xbf16, #tpu.memory_space<vmem>>, vector<192x16xbf16>
    tpu.vector_store %arg6[%c0_29, %c224], %65 {strides = array<i32>} : memref<192x448xbf16, #tpu.memory_space<vmem>>, vector<192x16xbf16>,
    %67 = vector.extract_strided_slice %48 {offsets = [0, 30, 0], sizes = [8, 24, 16], strides = [1, 1, 1]} : vector<8x60x16xbf16> to vector<8x24x16xbf16>
    %68 = vector.shape_cast %67 : vector<8x24x16xbf16> to vector<192x16xbf16>
    %c0_30 = arith.constant 0 : index
    %c240 = arith.constant 240 : index
    %69 = vector.load %arg6[%c0_30, %c240] : memref<192x448xbf16, #tpu.memory_space<vmem>>, vector<192x16xbf16>
    tpu.vector_store %arg6[%c0_30, %c240], %68 {strides = array<i32>} : memref<192x448xbf16, #tpu.memory_space<vmem>>, vector<192x16xbf16>,
    %70 = vector.extract_strided_slice %48 {offsets = [0, 0, 0], sizes = [8, 24, 16], strides = [1, 1, 1]} : vector<8x60x16xbf16> to vector<8x24x16xbf16>
    %71 = vector.shape_cast %70 : vector<8x24x16xbf16> to vector<192x16xbf16>
    %c0_31 = arith.constant 0 : index
    %c352 = arith.constant 352 : index
    %72 = vector.load %arg6[%c0_31, %c352] : memref<192x448xbf16, #tpu.memory_space<vmem>>, vector<192x16xbf16>
    tpu.vector_store %arg6[%c0_31, %c352], %71 {strides = array<i32>} : memref<192x448xbf16, #tpu.memory_space<vmem>>, vector<192x16xbf16>,
    %73 = vector.extract_strided_slice %48 {offsets = [0, 18, 0], sizes = [8, 24, 16], strides = [1, 1, 1]} : vector<8x60x16xbf16> to vector<8x24x16xbf16>
    %74 = vector.shape_cast %73 : vector<8x24x16xbf16> to vector<192x16xbf16>
    %c0_32 = arith.constant 0 : index
    %c368 = arith.constant 368 : index
    %75 = vector.load %arg6[%c0_32, %c368] : memref<192x448xbf16, #tpu.memory_space<vmem>>, vector<192x16xbf16>
    tpu.vector_store %arg6[%c0_32, %c368], %74 {strides = array<i32>} : memref<192x448xbf16, #tpu.memory_space<vmem>>, vector<192x16xbf16>,
    %76 = vector.extract_strided_slice %48 {offsets = [0, 36, 0], sizes = [8, 24, 16], strides = [1, 1, 1]} : vector<8x60x16xbf16> to vector<8x24x16xbf16>
    %77 = vector.shape_cast %76 : vector<8x24x16xbf16> to vector<192x16xbf16>
    %c0_33 = arith.constant 0 : index
    %c384 = arith.constant 384 : index
    %78 = vector.load %arg6[%c0_33, %c384] : memref<192x448xbf16, #tpu.memory_space<vmem>>, vector<192x16xbf16>
    tpu.vector_store %arg6[%c0_33, %c384], %77 {strides = array<i32>} : memref<192x448xbf16, #tpu.memory_space<vmem>>, vector<192x16xbf16>,
    %c18_i32_34 = arith.constant 18 : i32
    %79 = arith.addi %1, %c18_i32_34 : i32
    %c6_i32 = arith.constant 6 : i32
    %80 = arith.addi %79, %c6_i32 : i32
    %c0_35 = arith.constant 0 : index
    %81 = arith.index_cast %80 : i32 to index
    %c0_36 = arith.constant 0 : index
    %c0_37 = arith.constant 0 : index
    %82 = vector.load %arg2[%c0_35, %81, %c0_36, %c0_37] : memref<1x60x60x16xbf16, #tpu.memory_space<vmem>>, vector<1x8x60x16xbf16>
    %83 = vector.shape_cast %82 : vector<1x8x60x16xbf16> to vector<8x60x16xbf16>
    %84 = vector.extract_strided_slice %83 {offsets = [0, 12, 0], sizes = [8, 24, 16], strides = [1, 1, 1]} : vector<8x60x16xbf16> to vector<8x24x16xbf16>
    %85 = vector.shape_cast %84 : vector<8x24x16xbf16> to vector<192x16xbf16>
    %c0_38 = arith.constant 0 : index
    %c112 = arith.constant 112 : index
    %86 = vector.load %arg6[%c0_38, %c112] : memref<192x448xbf16, #tpu.memory_space<vmem>>, vector<192x16xbf16>
    tpu.vector_store %arg6[%c0_38, %c112], %85 {strides = array<i32>} : memref<192x448xbf16, #tpu.memory_space<vmem>>, vector<192x16xbf16>,
    %87 = vector.extract_strided_slice %83 {offsets = [0, 18, 0], sizes = [8, 24, 16], strides = [1, 1, 1]} : vector<8x60x16xbf16> to vector<8x24x16xbf16>
    %88 = vector.shape_cast %87 : vector<8x24x16xbf16> to vector<192x16xbf16>
    %c0_39 = arith.constant 0 : index
    %c128 = arith.constant 128 : index
    %89 = vector.load %arg6[%c0_39, %c128] : memref<192x448xbf16, #tpu.memory_space<vmem>>, vector<192x16xbf16>
    tpu.vector_store %arg6[%c0_39, %c128], %88 {strides = array<i32>} : memref<192x448xbf16, #tpu.memory_space<vmem>>, vector<192x16xbf16>,
    %90 = vector.extract_strided_slice %83 {offsets = [0, 24, 0], sizes = [8, 24, 16], strides = [1, 1, 1]} : vector<8x60x16xbf16> to vector<8x24x16xbf16>
    %91 = vector.shape_cast %90 : vector<8x24x16xbf16> to vector<192x16xbf16>
    %c0_40 = arith.constant 0 : index
    %c144 = arith.constant 144 : index
    %92 = vector.load %arg6[%c0_40, %c144] : memref<192x448xbf16, #tpu.memory_space<vmem>>, vector<192x16xbf16>
    tpu.vector_store %arg6[%c0_40, %c144], %91 {strides = array<i32>} : memref<192x448xbf16, #tpu.memory_space<vmem>>, vector<192x16xbf16>,
    %c18_i32_41 = arith.constant 18 : i32
    %93 = arith.addi %1, %c18_i32_41 : i32
    %c12_i32 = arith.constant 12 : i32
    %94 = arith.addi %93, %c12_i32 : i32
    %c0_42 = arith.constant 0 : index
    %95 = arith.index_cast %94 : i32 to index
    %c0_43 = arith.constant 0 : index
    %c0_44 = arith.constant 0 : index
    %96 = vector.load %arg2[%c0_42, %95, %c0_43, %c0_44] : memref<1x60x60x16xbf16, #tpu.memory_space<vmem>>, vector<1x8x60x16xbf16>
    %97 = vector.shape_cast %96 : vector<1x8x60x16xbf16> to vector<8x60x16xbf16>
    %98 = vector.extract_strided_slice %97 {offsets = [0, 6, 0], sizes = [8, 24, 16], strides = [1, 1, 1]} : vector<8x60x16xbf16> to vector<8x24x16xbf16>
    %99 = vector.shape_cast %98 : vector<8x24x16xbf16> to vector<192x16xbf16>
    %c0_45 = arith.constant 0 : index
    %c256 = arith.constant 256 : index
    %100 = vector.load %arg6[%c0_45, %c256] : memref<192x448xbf16, #tpu.memory_space<vmem>>, vector<192x16xbf16>
    tpu.vector_store %arg6[%c0_45, %c256], %99 {strides = array<i32>} : memref<192x448xbf16, #tpu.memory_space<vmem>>, vector<192x16xbf16>,
    %101 = vector.extract_strided_slice %97 {offsets = [0, 18, 0], sizes = [8, 24, 16], strides = [1, 1, 1]} : vector<8x60x16xbf16> to vector<8x24x16xbf16>
    %102 = vector.shape_cast %101 : vector<8x24x16xbf16> to vector<192x16xbf16>
    %c0_46 = arith.constant 0 : index
    %c272 = arith.constant 272 : index
    %103 = vector.load %arg6[%c0_46, %c272] : memref<192x448xbf16, #tpu.memory_space<vmem>>, vector<192x16xbf16>
    tpu.vector_store %arg6[%c0_46, %c272], %102 {strides = array<i32>} : memref<192x448xbf16, #tpu.memory_space<vmem>>, vector<192x16xbf16>,
    %104 = vector.extract_strided_slice %97 {offsets = [0, 30, 0], sizes = [8, 24, 16], strides = [1, 1, 1]} : vector<8x60x16xbf16> to vector<8x24x16xbf16>
    %105 = vector.shape_cast %104 : vector<8x24x16xbf16> to vector<192x16xbf16>
    %c0_47 = arith.constant 0 : index
    %c288 = arith.constant 288 : index
    %106 = vector.load %arg6[%c0_47, %c288] : memref<192x448xbf16, #tpu.memory_space<vmem>>, vector<192x16xbf16>
    tpu.vector_store %arg6[%c0_47, %c288], %105 {strides = array<i32>} : memref<192x448xbf16, #tpu.memory_space<vmem>>, vector<192x16xbf16>,
    %c18_i32_48 = arith.constant 18 : i32
    %107 = arith.addi %1, %c18_i32_48 : i32
    %c18_i32_49 = arith.constant 18 : i32
    %108 = arith.addi %107, %c18_i32_49 : i32
    %c0_50 = arith.constant 0 : index
    %109 = arith.index_cast %108 : i32 to index
    %c0_51 = arith.constant 0 : index
    %c0_52 = arith.constant 0 : index
    %110 = vector.load %arg2[%c0_50, %109, %c0_51, %c0_52] : memref<1x60x60x16xbf16, #tpu.memory_space<vmem>>, vector<1x8x60x16xbf16>
    %111 = vector.shape_cast %110 : vector<1x8x60x16xbf16> to vector<8x60x16xbf16>
    %112 = vector.extract_strided_slice %111 {offsets = [0, 0, 0], sizes = [8, 24, 16], strides = [1, 1, 1]} : vector<8x60x16xbf16> to vector<8x24x16xbf16>
    %113 = vector.shape_cast %112 : vector<8x24x16xbf16> to vector<192x16xbf16>
    %c0_53 = arith.constant 0 : index
    %c400 = arith.constant 400 : index
    %114 = vector.load %arg6[%c0_53, %c400] : memref<192x448xbf16, #tpu.memory_space<vmem>>, vector<192x16xbf16>
    tpu.vector_store %arg6[%c0_53, %c400], %113 {strides = array<i32>} : memref<192x448xbf16, #tpu.memory_space<vmem>>, vector<192x16xbf16>,
    %115 = vector.extract_strided_slice %111 {offsets = [0, 18, 0], sizes = [8, 24, 16], strides = [1, 1, 1]} : vector<8x60x16xbf16> to vector<8x24x16xbf16>
    %116 = vector.shape_cast %115 : vector<8x24x16xbf16> to vector<192x16xbf16>
    %c0_54 = arith.constant 0 : index
    %c416 = arith.constant 416 : index
    %117 = vector.load %arg6[%c0_54, %c416] : memref<192x448xbf16, #tpu.memory_space<vmem>>, vector<192x16xbf16>
    tpu.vector_store %arg6[%c0_54, %c416], %116 {strides = array<i32>} : memref<192x448xbf16, #tpu.memory_space<vmem>>, vector<192x16xbf16>,
    %118 = vector.extract_strided_slice %111 {offsets = [0, 36, 0], sizes = [8, 24, 16], strides = [1, 1, 1]} : vector<8x60x16xbf16> to vector<8x24x16xbf16>
    %119 = vector.shape_cast %118 : vector<8x24x16xbf16> to vector<192x16xbf16>
    %c0_55 = arith.constant 0 : index
    %c432 = arith.constant 432 : index
    %120 = vector.load %arg6[%c0_55, %c432] : memref<192x448xbf16, #tpu.memory_space<vmem>>, vector<192x16xbf16>
    tpu.vector_store %arg6[%c0_55, %c432], %119 {strides = array<i32>} : memref<192x448xbf16, #tpu.memory_space<vmem>>, vector<192x16xbf16>,
    %c0_56 = arith.constant 0 : index
    %c0_57 = arith.constant 0 : index
    %121 = vector.load %arg6[%c0_56, %c0_57] : memref<192x448xbf16, #tpu.memory_space<vmem>>, vector<192x448xbf16>
    %c0_58 = arith.constant 0 : index
    %c0_59 = arith.constant 0 : index
    %122 = vector.load %arg4[%c0_58, %c0_59] : memref<448x128xbf16, #tpu.memory_space<vmem>>, vector<448x128xbf16>
    %cst = arith.constant dense<0.000000e+00> : vector<192x128xf32>
    %123 = tpu.matmul %121, %122, %cst {dimension_numbers = #tpu.dot_dimension_numbers<[1], [0], [0], [1], [0, 0, 1, 1], [], []>} : vector<192x448xbf16>, vector<448x128xbf16>, vector<192x128xf32> -> vector<192x128xf32>
    %c0_60 = arith.constant 0 : index
    %c0_61 = arith.constant 0 : index
    %c0_62 = arith.constant 0 : index
    %124 = vector.load %arg3[%c0_60, %c0_61, %c0_62] : memref<1x8x128xf32, #tpu.memory_space<vmem>>, vector<1x1x128xf32>
    %125 = vector.shape_cast %124 : vector<1x1x128xf32> to vector<1x128xf32>
    %126 = vector.broadcast %125 : vector<1x128xf32> to vector<192x128xf32>
    %127 = arith.addf %123, %126 : vector<192x128xf32>
    %c0_63 = arith.constant 0 : index
    %c0_64 = arith.constant 0 : index
    %c0_65 = arith.constant 0 : index
    %128 = vector.load %arg5[%c0_63, %c0_64, %c0_65] : memref<1x192x128xf32, #tpu.memory_space<vmem>>, vector<1x192x128xf32>
    %129 = vector.shape_cast %128 : vector<1x192x128xf32> to vector<192x128xf32>
    %130 = vector.shape_cast %127 : vector<192x128xf32> to vector<1x192x128xf32>
    tpu.vector_store %arg5[%c0_63, %c0_64, %c0_65], %130 {strides = array<i32>} : memref<1x192x128xf32, #tpu.memory_space<vmem>>, vector<1x192x128xf32>,
    return
  }
  func.func @transform_0(%arg0: i32, %arg1: i32) -> (i32, i32, i32, i32) {
    %c0_i32 = arith.constant 0 : i32
    %c0_i32_0 = arith.constant 0 : i32
    %c0_i32_1 = arith.constant 0 : i32
    %c0_i32_2 = arith.constant 0 : i32
    return %arg0, %c0_i32, %c0_i32_0, %c0_i32_1 : i32, i32, i32, i32
  }
  func.func @transform_1(%arg0: i32, %arg1: i32) -> (i32, i32, i32) {
    %c0_i32 = arith.constant 0 : i32
    %c0_i32_0 = arith.constant 0 : i32
    %c0_i32_1 = arith.constant 0 : i32
    return %arg0, %c0_i32, %c0_i32_0 : i32, i32, i32
  }
  func.func @transform_2(%arg0: i32, %arg1: i32) -> (i32, i32) {
    %c0_i32 = arith.constant 0 : i32
    %c0_i32_0 = arith.constant 0 : i32
    %c0_i32_1 = arith.constant 0 : i32
    return %c0_i32, %c0_i32_0 : i32, i32
  }
  func.func @transform_3(%arg0: i32, %arg1: i32) -> (i32, i32, i32) {
    %c0_i32 = arith.constant 0 : i32
    %c0_i32_0 = arith.constant 0 : i32
    return %arg0, %arg1, %c0_i32 : i32, i32, i32
  }
}

</mosaic_0001>

<llo_original>
// kernel: tpu_custom_call.1
$region0: #{tpu_custom_call.1}
  #allocation0 [shape = 'u32[]', space=smem, size = 0x4, offset = 0x4, fixed_abs, tag = 'smem constant byte address 0x4 - core index']
  #allocation1 [shape = 'u32[144,128]{1,0:T(1,128)}', space=vmem, size = 0x12000, scoped, tag = 'internal scratch']
  #allocation2 [shape = 'bf16[192,448]{1,0:T(16,128)(2,1)}', space=vmem, size = 0x30000, scoped, tag = 'scratch operand']
  %s0 = inlined_call_operand.vmem [shape: bf16[2,60,60,16], index: 0, kind: input, shape index: {}]
  %s1 = inlined_call_operand.vmem [shape: f32[2,8,128], index: 1, kind: input, shape index: {}]
  %s2 = inlined_call_operand.vmem [shape: bf16[448,128], index: 2, kind: input, shape index: {}]
  %s3 = inlined_call_operand.hbm [shape: f32[2,576,128], index: 3, kind: output, shape index: {}]
  %s4 = sld [smem:[#allocation0]]
  $region45: #{tpu_custom_call.1} parent=0
    _
  %s6 = ssub.s32 1, %s4
  %s7 = scalar_select 0, %s6, %s4
  $region1: #{tpu_custom_call.1} parent=0
    #allocation3 [shape = 'u8[196608]{0}', space=vmem, size = 0x30000, scoped, tag = 'output window, operand 0']
    #allocation4 [shape = 's32[2]{0}', space=sflag, size = 0x8, scoped, tag = 'scoped memory for tpu_custom_call.1']
    %8 = vsyncpa [#allocation4], 0
    %s9 = scalar_lea.sflag [#allocation4], 1
    %10 = vsyncpa %s9, 0
    loop: start=0, step=1, limit=8
    $region2: #{tpu_custom_call.1} parent=1 // loop_pre_header
      _
    $region3: #{tpu_custom_call.1} parent=1 // loop_header
      %s12 = sphi 0, %s16
      %p13 = scmp.ge.s32.totalorder %s12, 8
      %s19 = sphi 0, %s31
      %s20 = sphi 0, %s27
      %s21 = sphi 0, %s19
      %s22 = sphi 0, %s20
      %s23 = sphi 0, %s21
      %s24 = sphi 0, %s22
      %s34 = sphi 0, %s36
      %s37 = sphi 0, %s34
      %s38 = sphi 0, %s37
      %s54 = sphi 0, %s38
      %s60 = sphi 0, %s62
      %s63 = sphi 0, %s60
      %s64 = sphi 0, %s63
      %s80 = sphi 0, %s64
      %s84 = sphi 0, %s84
      %s86 = sphi 0, %s84
      %s87 = sphi 0, %s86
      %s101 = sphi 0, %s87
      %s109 = sphi 0, %s111
      %s112 = sphi 0, %s109
      %s113 = sphi 0, %s112
      %s129 = sphi 0, %s113
    $region4: #{tpu_custom_call.1} parent=1 // loop_header_branch
      %15 = sbr.rel (%p13) target = $region8
    $region5: #{tpu_custom_call.1} parent=1 // loop_body
      %s17 = ssub.s32 %s12, 1
      %s18 = ssub.s32 %s12, 2
      %s25 = sadd.s32 1, %s20
      %p26 = scmp.ge.s32.totalorder %s25, 3
      %s27 = scalar_select %p26, 0, %s25
      %s28 = sadd.s32 1, %s19
      %s29 = scalar_select %p26, %s28, %s19
      %p30 = scmp.ge.s32.totalorder %s29, 2
      %s31 = scalar_select %p30, 0, %s29
      %s32 = ssub.s32 %s19, %s31
      %p33 = scmp.eq.s32.totalorder %s32, 0
      %s35 = sadd.s32 %s34, 1
      %s36 = scalar_select %p33, %s34, %s35
      %p39 = pneg %p33
      %p40 = scmp.eq.s32.totalorder %s12, 5
      %p41 = por %p39, %p40
      %p42 = scmp.ne.s32.totalorder %s34, %s37
      %p43 = scmp.eq.s32.totalorder %s12, 0
      %p44 = por %p42, %p43
      %p45 = scmp.ne.s32.totalorder %s34, %s37
      %p46 = scmp.eq.s32.totalorder %s17, 5
      %p47 = por %p45, %p46
      %p48 = scmp.ne.s32.totalorder %s37, %s38
      %p49 = scmp.eq.s32.totalorder %s17, 0
      %p50 = por %p48, %p49
      %p51 = scmp.ne.s32.totalorder %s37, %s38
      %p52 = scmp.eq.s32.totalorder %s18, 5
      %p53 = por %p51, %p52
      %p55 = scmp.ne.s32.totalorder %s38, %s54
      %p56 = scmp.eq.s32.totalorder %s18, 0
      %p57 = por %p55, %p56
      %s58 = ssub.s32 %s19, %s31
      %p59 = scmp.eq.s32.totalorder %s58, 0
      %s61 = sadd.s32 %s60, 1
      %s62 = scalar_select %p59, %s60, %s61
      %p65 = pneg %p59
      %p66 = scmp.eq.s32.totalorder %s12, 5
      %p67 = por %p65, %p66
      %p68 = scmp.ne.s32.totalorder %s60, %s63
      %p69 = scmp.eq.s32.totalorder %s12, 0
      %p70 = por %p68, %p69
      %p71 = scmp.ne.s32.totalorder %s60, %s63
      %p72 = scmp.eq.s32.totalorder %s17, 5
      %p73 = por %p71, %p72
      %p74 = scmp.ne.s32.totalorder %s63, %s64
      %p75 = scmp.eq.s32.totalorder %s17, 0
      %p76 = por %p74, %p75
      %p77 = scmp.ne.s32.totalorder %s63, %s64
      %p78 = scmp.eq.s32.totalorder %s18, 5
      %p79 = por %p77, %p78
      %p81 = scmp.ne.s32.totalorder %s64, %s80
      %p82 = scmp.eq.s32.totalorder %s18, 0
      %p83 = por %p81, %p82
      %s85 = sadd.s32 %s84, 1
      %p88 = scmp.eq.s32.totalorder %s12, 5
      %p89 = scmp.ne.s32.totalorder %s84, %s86
      %p90 = scmp.eq.s32.totalorder %s12, 0
      %p91 = por %p89, %p90
      %p92 = scmp.ne.s32.totalorder %s84, %s86
      %p93 = scmp.eq.s32.totalorder %s17, 5
      %p94 = por %p92, %p93
      %p95 = scmp.ne.s32.totalorder %s86, %s87
      %p96 = scmp.eq.s32.totalorder %s17, 0
      %p97 = por %p95, %p96
      %p98 = scmp.ne.s32.totalorder %s86, %s87
      %p99 = scmp.eq.s32.totalorder %s18, 5
      %p100 = por %p98, %p99
      %p102 = scmp.ne.s32.totalorder %s87, %s101
      %p103 = scmp.eq.s32.totalorder %s18, 0
      %p104 = por %p102, %p103
      %s105 = ssub.s32 %s19, %s31
      %s106 = ssub.s32 %s20, %s27
      %s107 = sor.u32 %s105, %s106
      %p108 = scmp.eq.s32.totalorder %s107, 0
      %s110 = sadd.s32 %s109, 1
      %s111 = scalar_select %p108, %s109, %s110
      %p114 = pneg %p108
      %p115 = scmp.eq.s32.totalorder %s12, 5
      %p116 = por %p114, %p115
      %p117 = scmp.ne.s32.totalorder %s109, %s112
      %p118 = scmp.eq.s32.totalorder %s12, 0
      %p119 = por %p117, %p118
      %p120 = scmp.ne.s32.totalorder %s109, %s112
      %p121 = scmp.eq.s32.totalorder %s17, 5
      %p122 = por %p120, %p121
      %p123 = scmp.ne.s32.totalorder %s112, %s113
      %p124 = scmp.eq.s32.totalorder %s17, 0
      %p125 = por %p123, %p124
      %p126 = scmp.ne.s32.totalorder %s112, %s113
      %p127 = scmp.eq.s32.totalorder %s18, 5
      %p128 = por %p126, %p127
      %p130 = scmp.ne.s32.totalorder %s113, %s129
      %p131 = scmp.eq.s32.totalorder %s18, 0
      %p132 = por %p130, %p131
      %p133 = scmp.le.s32.totalorder 1, %s12
      %p134 = scmp.lt.s32.totalorder %s12, 7
      %p135 = pnand %p133, %p134
      %p136 = pneg %p135
      // Predicated region
      $region9: #{tpu_custom_call.1} parent=5 // pred_check
        _
      $region10: #{tpu_custom_call.1} parent=5 // pred_check_branch
        %138 = sbr.rel (%p135) target = $region12
      $region11: #{tpu_custom_call.1} parent=5 // pred_region
        %s139 = ssub.s32 %s12, 1
        // Predicated region
        $region13: #{tpu_custom_call.1} parent=11 // pred_check
          %p140 = pneg %p97
        $region14: #{tpu_custom_call.1} parent=11 // pred_check_branch
          %142 = sbr.rel (%p140) target = $region16
        $region15: #{tpu_custom_call.1} parent=11 // pred_region
          _
        $region16: #{tpu_custom_call.1} parent=11 // pred_fallthru
          _
      $region12: #{tpu_custom_call.1} parent=5 // pred_fallthru
        _
      %p143 = scmp.lt.s32.totalorder %s12, 6
      // Predicated region
      $region17: #{tpu_custom_call.1} parent=5 // pred_check
        %p144 = pneg %p143
      $region18: #{tpu_custom_call.1} parent=5 // pred_check_branch
        %146 = sbr.rel (%p144) target = $region20
      $region19: #{tpu_custom_call.1} parent=5 // pred_region
        // Predicated region
        $region21: #{tpu_custom_call.1} parent=19 // pred_check
          %p147 = pneg %p44
        $region22: #{tpu_custom_call.1} parent=19 // pred_check_branch
          %149 = sbr.rel (%p147) target = $region24
        $region23: #{tpu_custom_call.1} parent=19 // pred_region
          %p150 = scmp.lt.s32.totalorder %s19, 1
          %s151 = scalar_select %p150, %s19, 1
          %s152 = smul.addr %s151, 480
          %s153 = smul.addr %s152, 4
          %s154 = scalar_lea.vmem %s0, %s153
        $region24: #{tpu_custom_call.1} parent=19 // pred_fallthru
          _
        // Predicated region
        $region25: #{tpu_custom_call.1} parent=19 // pred_check
          %p155 = pneg %p70
        $region26: #{tpu_custom_call.1} parent=19 // pred_check_branch
          %157 = sbr.rel (%p155) target = $region28
        $region27: #{tpu_custom_call.1} parent=19 // pred_region
          %p158 = scmp.lt.s32.totalorder %s19, 1
          %s159 = scalar_select %p158, %s19, 1
          %s160 = smul.addr %s159, 8
          %s161 = scalar_lea.vmem %s1, %s160
        $region28: #{tpu_custom_call.1} parent=19 // pred_fallthru
          _
      $region20: #{tpu_custom_call.1} parent=5 // pred_fallthru
        _
      %p162 = scmp.le.s32.totalorder 1, %s12
      %p163 = scmp.lt.s32.totalorder %s12, 7
      %p164 = pnand %p162, %p163
      %p165 = pneg %p164
      // Predicated region
      $region29: #{tpu_custom_call.1} parent=5 // pred_check
        _
      $region30: #{tpu_custom_call.1} parent=5 // pred_check_branch
        %167 = sbr.rel (%p164) target = $region32
      $region31: #{tpu_custom_call.1} parent=5 // pred_region
        %s168 = ssub.s32 %s12, 1
        %p169 = scmp.lt.s32.totalorder %s21, 1
        %s170 = scalar_select %p169, %s21, 1
        %s171 = smul.addr %s170, 480
        %s172 = smul.addr %s171, 4
        %s173 = scalar_lea.vmem %s0, %s172
        %p174 = pneg %p50
        %p175 = pneg %p47
        %p176 = scmp.lt.s32.totalorder %s21, 1
        %s177 = scalar_select %p176, %s21, 1
        %s178 = smul.addr %s177, 8
        %s179 = scalar_lea.vmem %s1, %s178
        %p180 = pneg %p76
        %p181 = pneg %p73
        %p182 = pneg %p97
        %p183 = pneg %p94
        %p184 = pneg %p125
        %p185 = pneg %p122
        %s186 = sand.u32 %s112, 1
        %s187 = scalar_lea.sflag [#allocation4], %s186
        %s188 = sand.u32 %s112, 1
        %s189 = smul.addr %s188, 192
        %s190 = scalar_lea.vmem [#allocation3], %s189
        %p191 = scmp.lt.s32.totalorder %s21, 1
        %s192 = scalar_select %p191, %s21, 1
        %s193 = smul.addr %s192, 480
        %s194 = smul.addr %s193, 4
        %s195 = scalar_lea.vmem %s0, %s194
        %p196 = scmp.lt.s32.totalorder %s21, 1
        %s197 = scalar_select %p196, %s21, 1
        %s198 = smul.addr %s197, 8
        %s199 = scalar_lea.vmem %s1, %s198
        %s200 = smul.u32 24, %s22
        %s202 = smul.u32 %s22, 8
        %s203 = smul.u32 %s202, 8
        %s204 = smul.addr %s203, 4
        %s205 = scalar_lea.vmem %s195, %s204
        %v206 = vld [vmem:[%s205] sm:$0xf]
        %v207 = vld [vmem:[%s205 + $0x4] sm:$0xf]
        %v208 = vld [vmem:[%s205 + $0x8] sm:$0xf]
        %v209 = vld [vmem:[%s205 + $0xc] sm:$0xf]
        %v210 = vld [vmem:[%s205 + $0x10] sm:$0xf]
        %v211 = vld [vmem:[%s205 + $0x14] sm:$0xf]
        %v212 = vld [vmem:[%s205 + $0x18] sm:$0xf]
        %v213 = vld [vmem:[%s205 + $0x1c] sm:$0x3]
        %v214 = vld [vmem:[%s205 + $0x20] sm:$0xf]
        %v215 = vld [vmem:[%s205 + $0x24] sm:$0xf]
        %v216 = vld [vmem:[%s205 + $0x28] sm:$0xf]
        %v217 = vld [vmem:[%s205 + $0x2c] sm:$0xf]
        %v218 = vld [vmem:[%s205 + $0x30] sm:$0xf]
        %v219 = vld [vmem:[%s205 + $0x34] sm:$0xf]
        %v220 = vld [vmem:[%s205 + $0x38] sm:$0xf]
        %v221 = vld [vmem:[%s205 + $0x3c] sm:$0x3]
        %v222 = vld [vmem:[%s205 + $0x40] sm:$0xf]
        %v223 = vld [vmem:[%s205 + $0x44] sm:$0xf]
        %v224 = vld [vmem:[%s205 + $0x48] sm:$0xf]
        %v225 = vld [vmem:[%s205 + $0x4c] sm:$0xf]
        %v226 = vld [vmem:[%s205 + $0x50] sm:$0xf]
        %v227 = vld [vmem:[%s205 + $0x54] sm:$0xf]
        %v228 = vld [vmem:[%s205 + $0x58] sm:$0xf]
        %v229 = vld [vmem:[%s205 + $0x5c] sm:$0x3]
        %v230 = vld [vmem:[%s205 + $0x60] sm:$0xf]
        %v231 = vld [vmem:[%s205 + $0x64] sm:$0xf]
        %v232 = vld [vmem:[%s205 + $0x68] sm:$0xf]
        %v233 = vld [vmem:[%s205 + $0x6c] sm:$0xf]
        %v234 = vld [vmem:[%s205 + $0x70] sm:$0xf]
        %v235 = vld [vmem:[%s205 + $0x74] sm:$0xf]
        %v236 = vld [vmem:[%s205 + $0x78] sm:$0xf]
        %v237 = vld [vmem:[%s205 + $0x7c] sm:$0x3]
        %v238 = vld [vmem:[%s205 + $0x80] sm:$0xf]
        %v239 = vld [vmem:[%s205 + $0x84] sm:$0xf]
        %v240 = vld [vmem:[%s205 + $0x88] sm:$0xf]
        %v241 = vld [vmem:[%s205 + $0x8c] sm:$0xf]
        %v242 = vld [vmem:[%s205 + $0x90] sm:$0xf]
        %v243 = vld [vmem:[%s205 + $0x94] sm:$0xf]
        %v244 = vld [vmem:[%s205 + $0x98] sm:$0xf]
        %v245 = vld [vmem:[%s205 + $0x9c] sm:$0x3]
        %v246 = vld [vmem:[%s205 + $0xa0] sm:$0xf]
        %v247 = vld [vmem:[%s205 + $0xa4] sm:$0xf]
        %v248 = vld [vmem:[%s205 + $0xa8] sm:$0xf]
        %v249 = vld [vmem:[%s205 + $0xac] sm:$0xf]
        %v250 = vld [vmem:[%s205 + $0xb0] sm:$0xf]
        %v251 = vld [vmem:[%s205 + $0xb4] sm:$0xf]
        %v252 = vld [vmem:[%s205 + $0xb8] sm:$0xf]
        %v253 = vld [vmem:[%s205 + $0xbc] sm:$0x3]
        %v254 = vld [vmem:[%s205 + $0xc0] sm:$0xf]
        %v255 = vld [vmem:[%s205 + $0xc4] sm:$0xf]
        %v256 = vld [vmem:[%s205 + $0xc8] sm:$0xf]
        %v257 = vld [vmem:[%s205 + $0xcc] sm:$0xf]
        %v258 = vld [vmem:[%s205 + $0xd0] sm:$0xf]
        %v259 = vld [vmem:[%s205 + $0xd4] sm:$0xf]
        %v260 = vld [vmem:[%s205 + $0xd8] sm:$0xf]
        %v261 = vld [vmem:[%s205 + $0xdc] sm:$0x3]
        %v262 = vld [vmem:[%s205 + $0xe0] sm:$0xf]
        %v263 = vld [vmem:[%s205 + $0xe4] sm:$0xf]
        %v264 = vld [vmem:[%s205 + $0xe8] sm:$0xf]
        %v265 = vld [vmem:[%s205 + $0xec] sm:$0xf]
        %v266 = vld [vmem:[%s205 + $0xf0] sm:$0xf]
        %v267 = vld [vmem:[%s205 + $0xf4] sm:$0xf]
        %v268 = vld [vmem:[%s205 + $0xf8] sm:$0xf]
        %v269 = vld [vmem:[%s205 + $0xfc] sm:$0x3]
        %v294 = vunpack.c.l.b16 %v206
        %v295 = vunpack.c.l.b16 %v207
        %v296 = vunpack.c.l.b16 %v208
        %v297 = vunpack.c.l.b16 %v214
        %v298 = vunpack.c.l.b16 %v215
        %v299 = vunpack.c.l.b16 %v216
        %v300 = vunpack.c.l.b16 %v222
        %v301 = vunpack.c.l.b16 %v223
        %v302 = vunpack.c.l.b16 %v224
        %v303 = vunpack.c.l.b16 %v230
        %v304 = vunpack.c.l.b16 %v231
        %v305 = vunpack.c.l.b16 %v232
        %v306 = vunpack.c.l.b16 %v238
        %v307 = vunpack.c.l.b16 %v239
        %v308 = vunpack.c.l.b16 %v240
        %v309 = vunpack.c.l.b16 %v246
        %v310 = vunpack.c.l.b16 %v247
        %v311 = vunpack.c.l.b16 %v248
        %v312 = vunpack.c.l.b16 %v254
        %v313 = vunpack.c.l.b16 %v255
        %v314 = vunpack.c.l.b16 %v256
        %v315 = vunpack.c.l.b16 %v262
        %v316 = vunpack.c.l.b16 %v263
        %v317 = vunpack.c.l.b16 %v264
        %v318 = vpack.c.b16 %v295, %v294
        %v319 = vpack.c.b16 %v297, %v296
        %v320 = vpack.c.b16 %v299, %v298
        %v321 = vpack.c.b16 %v301, %v300
        %v322 = vpack.c.b16 %v303, %v302
        %v323 = vpack.c.b16 %v305, %v304
        %v324 = vpack.c.b16 %v307, %v306
        %v325 = vpack.c.b16 %v309, %v308
        %v326 = vpack.c.b16 %v311, %v310
        %v327 = vpack.c.b16 %v313, %v312
        %v328 = vpack.c.b16 %v315, %v314
        %v329 = vpack.c.b16 %v317, %v316
        %330 = vrot.lane.b32.xlu0 %v318, 48
        %v331 = vpop.permute.xlu0 %330
        %332 = vrot.lane.b32.xlu0 %v319, 48
        %v333 = vpop.permute.xlu0 %332
        %334 = vrot.lane.b32.xlu0 %v320, 48
        %v335 = vpop.permute.xlu0 %334
        %336 = vrot.lane.b32.xlu0 %v321, 48
        %v337 = vpop.permute.xlu0 %336
        %338 = vrot.lane.b32.xlu0 %v322, 48
        %v339 = vpop.permute.xlu0 %338
        %340 = vrot.lane.b32.xlu0 %v323, 48
        %v341 = vpop.permute.xlu0 %340
        %342 = vrot.lane.b32.xlu0 %v324, 48
        %v343 = vpop.permute.xlu0 %342
        %344 = vrot.lane.b32.xlu0 %v325, 48
        %v345 = vpop.permute.xlu0 %344
        %346 = vrot.lane.b32.xlu0 %v326, 48
        %v347 = vpop.permute.xlu0 %346
        %348 = vrot.lane.b32.xlu0 %v327, 48
        %v349 = vpop.permute.xlu0 %348
        %350 = vrot.lane.b32.xlu0 %v328, 48
        %v351 = vpop.permute.xlu0 %350
        %352 = vrot.lane.b32.xlu0 %v329, 48
        %v353 = vpop.permute.xlu0 %352
        %vm366 = vcmask 523648
        %367 = vst.msk [vmem:[#allocation2 + $0x10] sm:$0xff] %vm366, %v331
        %368 = vst.msk [vmem:[#allocation2 + $0x30] sm:$0xff] %vm366, %v333
        %369 = vst.msk [vmem:[#allocation2 + $0x50] sm:$0xff] %vm366, %v335
        %370 = vst.msk [vmem:[#allocation2 + $0x70] sm:$0xff] %vm366, %v337
        %371 = vst.msk [vmem:[#allocation2 + $0x90] sm:$0xff] %vm366, %v339
        %372 = vst.msk [vmem:[#allocation2 + $0xb0] sm:$0xff] %vm366, %v341
        %373 = vst.msk [vmem:[#allocation2 + $0xd0] sm:$0xff] %vm366, %v343
        %374 = vst.msk [vmem:[#allocation2 + $0xf0] sm:$0xff] %vm366, %v345
        %375 = vst.msk [vmem:[#allocation2 + $0x110] sm:$0xff] %vm366, %v347
        %376 = vst.msk [vmem:[#allocation2 + $0x130] sm:$0xff] %vm366, %v349
        %377 = vst.msk [vmem:[#allocation2 + $0x150] sm:$0xff] %vm366, %v351
        %378 = vst.msk [vmem:[#allocation2 + $0x170] sm:$0xff] %vm366, %v353
        %vm403 = vcmask 1042432
        %vm404 = vcmask 1046532
        %vm405 = vmor %vm403, %vm404
        %v406 = vrot.slane %v208, 5
        %v407 = vrot.slane %v406, 4
        %v408 = vrot.slane %v209, 5
        %v409 = vsel %vm405, %v407, %v408
        %v410 = vrot.slane %v408, 4
        %v411 = vrot.slane %v210, 5
        %v412 = vsel %vm405, %v410, %v411
        %v413 = vrot.slane %v411, 4
        %v414 = vrot.slane %v211, 5
        %v415 = vsel %vm405, %v413, %v414
        %v416 = vrot.slane %v216, 5
        %v417 = vrot.slane %v416, 4
        %v418 = vrot.slane %v217, 5
        %v419 = vsel %vm405, %v417, %v418
        %v420 = vrot.slane %v418, 4
        %v421 = vrot.slane %v218, 5
        %v422 = vsel %vm405, %v420, %v421
        %v423 = vrot.slane %v421, 4
        %v424 = vrot.slane %v219, 5
        %v425 = vsel %vm405, %v423, %v424
        %v426 = vrot.slane %v224, 5
        %v427 = vrot.slane %v426, 4
        %v428 = vrot.slane %v225, 5
        %v429 = vsel %vm405, %v427, %v428
        %v430 = vrot.slane %v428, 4
        %v431 = vrot.slane %v226, 5
        %v432 = vsel %vm405, %v430, %v431
        %v433 = vrot.slane %v431, 4
        %v434 = vrot.slane %v227, 5
        %v435 = vsel %vm405, %v433, %v434
        %v436 = vrot.slane %v232, 5
        %v437 = vrot.slane %v436, 4
        %v438 = vrot.slane %v233, 5
        %v439 = vsel %vm405, %v437, %v438
        %v440 = vrot.slane %v438, 4
        %v441 = vrot.slane %v234, 5
        %v442 = vsel %vm405, %v440, %v441
        %v443 = vrot.slane %v441, 4
        %v444 = vrot.slane %v235, 5
        %v445 = vsel %vm405, %v443, %v444
        %v446 = vrot.slane %v240, 5
        %v447 = vrot.slane %v446, 4
        %v448 = vrot.slane %v241, 5
        %v449 = vsel %vm405, %v447, %v448
        %v450 = vrot.slane %v448, 4
        %v451 = vrot.slane %v242, 5
        %v452 = vsel %vm405, %v450, %v451
        %v453 = vrot.slane %v451, 4
        %v454 = vrot.slane %v243, 5
        %v455 = vsel %vm405, %v453, %v454
        %v456 = vrot.slane %v248, 5
        %v457 = vrot.slane %v456, 4
        %v458 = vrot.slane %v249, 5
        %v459 = vsel %vm405, %v457, %v458
        %v460 = vrot.slane %v458, 4
        %v461 = vrot.slane %v250, 5
        %v462 = vsel %vm405, %v460, %v461
        %v463 = vrot.slane %v461, 4
        %v464 = vrot.slane %v251, 5
        %v465 = vsel %vm405, %v463, %v464
        %v466 = vrot.slane %v256, 5
        %v467 = vrot.slane %v466, 4
        %v468 = vrot.slane %v257, 5
        %v469 = vsel %vm405, %v467, %v468
        %v470 = vrot.slane %v468, 4
        %v471 = vrot.slane %v258, 5
        %v472 = vsel %vm405, %v470, %v471
        %v473 = vrot.slane %v471, 4
        %v474 = vrot.slane %v259, 5
        %v475 = vsel %vm405, %v473, %v474
        %v476 = vrot.slane %v264, 5
        %v477 = vrot.slane %v476, 4
        %v478 = vrot.slane %v265, 5
        %v479 = vsel %vm405, %v477, %v478
        %v480 = vrot.slane %v478, 4
        %v481 = vrot.slane %v266, 5
        %v482 = vsel %vm405, %v480, %v481
        %v483 = vrot.slane %v481, 4
        %v484 = vrot.slane %v267, 5
        %v485 = vsel %vm405, %v483, %v484
        %v486 = vunpack.c.l.b16 %v409
        %v487 = vunpack.c.l.b16 %v412
        %v488 = vunpack.c.l.b16 %v415
        %v489 = vunpack.c.l.b16 %v419
        %v490 = vunpack.c.l.b16 %v422
        %v491 = vunpack.c.l.b16 %v425
        %v492 = vunpack.c.l.b16 %v429
        %v493 = vunpack.c.l.b16 %v432
        %v494 = vunpack.c.l.b16 %v435
        %v495 = vunpack.c.l.b16 %v439
        %v496 = vunpack.c.l.b16 %v442
        %v497 = vunpack.c.l.b16 %v445
        %v498 = vunpack.c.l.b16 %v449
        %v499 = vunpack.c.l.b16 %v452
        %v500 = vunpack.c.l.b16 %v455
        %v501 = vunpack.c.l.b16 %v459
        %v502 = vunpack.c.l.b16 %v462
        %v503 = vunpack.c.l.b16 %v465
        %v504 = vunpack.c.l.b16 %v469
        %v505 = vunpack.c.l.b16 %v472
        %v506 = vunpack.c.l.b16 %v475
        %v507 = vunpack.c.l.b16 %v479
        %v508 = vunpack.c.l.b16 %v482
        %v509 = vunpack.c.l.b16 %v485
        %v510 = vpack.c.b16 %v487, %v486
        %v511 = vpack.c.b16 %v489, %v488
        %v512 = vpack.c.b16 %v491, %v490
        %v513 = vpack.c.b16 %v493, %v492
        %v514 = vpack.c.b16 %v495, %v494
        %v515 = vpack.c.b16 %v497, %v496
        %v516 = vpack.c.b16 %v499, %v498
        %v517 = vpack.c.b16 %v501, %v500
        %v518 = vpack.c.b16 %v503, %v502
        %v519 = vpack.c.b16 %v505, %v504
        %v520 = vpack.c.b16 %v507, %v506
        %v521 = vpack.c.b16 %v509, %v508
        %522 = vrot.lane.b32.xlu0 %v510, 64
        %v523 = vpop.permute.xlu0 %522
        %524 = vrot.lane.b32.xlu0 %v511, 64
        %v525 = vpop.permute.xlu0 %524
        %526 = vrot.lane.b32.xlu0 %v512, 64
        %v527 = vpop.permute.xlu0 %526
        %528 = vrot.lane.b32.xlu0 %v513, 64
        %v529 = vpop.permute.xlu0 %528
        %530 = vrot.lane.b32.xlu0 %v514, 64
        %v531 = vpop.permute.xlu0 %530
        %532 = vrot.lane.b32.xlu0 %v515, 64
        %v533 = vpop.permute.xlu0 %532
        %534 = vrot.lane.b32.xlu0 %v516, 64
        %v535 = vpop.permute.xlu0 %534
        %536 = vrot.lane.b32.xlu0 %v517, 64
        %v537 = vpop.permute.xlu0 %536
        %538 = vrot.lane.b32.xlu0 %v518, 64
        %v539 = vpop.permute.xlu0 %538
        %540 = vrot.lane.b32.xlu0 %v519, 64
        %v541 = vpop.permute.xlu0 %540
        %542 = vrot.lane.b32.xlu0 %v520, 64
        %v543 = vpop.permute.xlu0 %542
        %544 = vrot.lane.b32.xlu0 %v521, 64
        %v545 = vpop.permute.xlu0 %544
        %vm558 = vcmask 654848
        %559 = vst.msk [vmem:[#allocation2 + $0x10] sm:$0xff] %vm558, %v523
        %560 = vst.msk [vmem:[#allocation2 + $0x30] sm:$0xff] %vm558, %v525
        %561 = vst.msk [vmem:[#allocation2 + $0x50] sm:$0xff] %vm558, %v527
        %562 = vst.msk [vmem:[#allocation2 + $0x70] sm:$0xff] %vm558, %v529
        %563 = vst.msk [vmem:[#allocation2 + $0x90] sm:$0xff] %vm558, %v531
        %564 = vst.msk [vmem:[#allocation2 + $0xb0] sm:$0xff] %vm558, %v533
        %565 = vst.msk [vmem:[#allocation2 + $0xd0] sm:$0xff] %vm558, %v535
        %566 = vst.msk [vmem:[#allocation2 + $0xf0] sm:$0xff] %vm558, %v537
        %567 = vst.msk [vmem:[#allocation2 + $0x110] sm:$0xff] %vm558, %v539
        %568 = vst.msk [vmem:[#allocation2 + $0x130] sm:$0xff] %vm558, %v541
        %569 = vst.msk [vmem:[#allocation2 + $0x150] sm:$0xff] %vm558, %v543
        %570 = vst.msk [vmem:[#allocation2 + $0x170] sm:$0xff] %vm558, %v545
        %vm587 = vcmask 1041408
        %vm588 = vcmask 1045508
        %vm589 = vmor %vm587, %vm588
        %v590 = vrot.slane %v210, 6
        %v591 = vrot.slane %v590, 4
        %v592 = vrot.slane %v211, 6
        %v593 = vsel %vm589, %v591, %v592
        %v594 = vrot.slane %v592, 4
        %v595 = vrot.slane %v212, 6
        %v596 = vsel %vm589, %v594, %v595
        %v597 = vrot.slane %v595, 4
        %v598 = vrot.slane %v213, 6
        %v599 = vsel %vm589, %v597, %v598
        %v600 = vrot.slane %v218, 6
        %v601 = vrot.slane %v600, 4
        %v602 = vrot.slane %v219, 6
        %v603 = vsel %vm589, %v601, %v602
        %v604 = vrot.slane %v602, 4
        %v605 = vrot.slane %v220, 6
        %v606 = vsel %vm589, %v604, %v605
        %v607 = vrot.slane %v605, 4
        %v608 = vrot.slane %v221, 6
        %v609 = vsel %vm589, %v607, %v608
        %v610 = vrot.slane %v226, 6
        %v611 = vrot.slane %v610, 4
        %v612 = vrot.slane %v227, 6
        %v613 = vsel %vm589, %v611, %v612
        %v614 = vrot.slane %v612, 4
        %v615 = vrot.slane %v228, 6
        %v616 = vsel %vm589, %v614, %v615
        %v617 = vrot.slane %v615, 4
        %v618 = vrot.slane %v229, 6
        %v619 = vsel %vm589, %v617, %v618
        %v620 = vrot.slane %v234, 6
        %v621 = vrot.slane %v620, 4
        %v622 = vrot.slane %v235, 6
        %v623 = vsel %vm589, %v621, %v622
        %v624 = vrot.slane %v622, 4
        %v625 = vrot.slane %v236, 6
        %v626 = vsel %vm589, %v624, %v625
        %v627 = vrot.slane %v625, 4
        %v628 = vrot.slane %v237, 6
        %v629 = vsel %vm589, %v627, %v628
        %v630 = vrot.slane %v242, 6
        %v631 = vrot.slane %v630, 4
        %v632 = vrot.slane %v243, 6
        %v633 = vsel %vm589, %v631, %v632
        %v634 = vrot.slane %v632, 4
        %v635 = vrot.slane %v244, 6
        %v636 = vsel %vm589, %v634, %v635
        %v637 = vrot.slane %v635, 4
        %v638 = vrot.slane %v245, 6
        %v639 = vsel %vm589, %v637, %v638
        %v640 = vrot.slane %v250, 6
        %v641 = vrot.slane %v640, 4
        %v642 = vrot.slane %v251, 6
        %v643 = vsel %vm589, %v641, %v642
        %v644 = vrot.slane %v642, 4
        %v645 = vrot.slane %v252, 6
        %v646 = vsel %vm589, %v644, %v645
        %v647 = vrot.slane %v645, 4
        %v648 = vrot.slane %v253, 6
        %v649 = vsel %vm589, %v647, %v648
        %v650 = vrot.slane %v258, 6
        %v651 = vrot.slane %v650, 4
        %v652 = vrot.slane %v259, 6
        %v653 = vsel %vm589, %v651, %v652
        %v654 = vrot.slane %v652, 4
        %v655 = vrot.slane %v260, 6
        %v656 = vsel %vm589, %v654, %v655
        %v657 = vrot.slane %v655, 4
        %v658 = vrot.slane %v261, 6
        %v659 = vsel %vm589, %v657, %v658
        %v660 = vrot.slane %v266, 6
        %v661 = vrot.slane %v660, 4
        %v662 = vrot.slane %v267, 6
        %v663 = vsel %vm589, %v661, %v662
        %v664 = vrot.slane %v662, 4
        %v665 = vrot.slane %v268, 6
        %v666 = vsel %vm589, %v664, %v665
        %v667 = vrot.slane %v665, 4
        %v668 = vrot.slane %v269, 6
        %v669 = vsel %vm589, %v667, %v668
        %v670 = vunpack.c.l.b16 %v593
        %v671 = vunpack.c.l.b16 %v596
        %v672 = vunpack.c.l.b16 %v599
        %v673 = vunpack.c.l.b16 %v603
        %v674 = vunpack.c.l.b16 %v606
        %v675 = vunpack.c.l.b16 %v609
        %v676 = vunpack.c.l.b16 %v613
        %v677 = vunpack.c.l.b16 %v616
        %v678 = vunpack.c.l.b16 %v619
        %v679 = vunpack.c.l.b16 %v623
        %v680 = vunpack.c.l.b16 %v626
        %v681 = vunpack.c.l.b16 %v629
        %v682 = vunpack.c.l.b16 %v633
        %v683 = vunpack.c.l.b16 %v636
        %v684 = vunpack.c.l.b16 %v639
        %v685 = vunpack.c.l.b16 %v643
        %v686 = vunpack.c.l.b16 %v646
        %v687 = vunpack.c.l.b16 %v649
        %v688 = vunpack.c.l.b16 %v653
        %v689 = vunpack.c.l.b16 %v656
        %v690 = vunpack.c.l.b16 %v659
        %v691 = vunpack.c.l.b16 %v663
        %v692 = vunpack.c.l.b16 %v666
        %v693 = vunpack.c.l.b16 %v669
        %v694 = vpack.c.b16 %v671, %v670
        %v695 = vpack.c.b16 %v673, %v672
        %v696 = vpack.c.b16 %v675, %v674
        %v697 = vpack.c.b16 %v677, %v676
        %v698 = vpack.c.b16 %v679, %v678
        %v699 = vpack.c.b16 %v681, %v680
        %v700 = vpack.c.b16 %v683, %v682
        %v701 = vpack.c.b16 %v685, %v684
        %v702 = vpack.c.b16 %v687, %v686
        %v703 = vpack.c.b16 %v689, %v688
        %v704 = vpack.c.b16 %v691, %v690
        %v705 = vpack.c.b16 %v693, %v692
        %706 = vrot.lane.b32.xlu0 %v694, 80
        %v707 = vpop.permute.xlu0 %706
        %708 = vrot.lane.b32.xlu0 %v695, 80
        %v709 = vpop.permute.xlu0 %708
        %710 = vrot.lane.b32.xlu0 %v696, 80
        %v711 = vpop.permute.xlu0 %710
        %712 = vrot.lane.b32.xlu0 %v697, 80
        %v713 = vpop.permute.xlu0 %712
        %714 = vrot.lane.b32.xlu0 %v698, 80
        %v715 = vpop.permute.xlu0 %714
        %716 = vrot.lane.b32.xlu0 %v699, 80
        %v717 = vpop.permute.xlu0 %716
        %718 = vrot.lane.b32.xlu0 %v700, 80
        %v719 = vpop.permute.xlu0 %718
        %720 = vrot.lane.b32.xlu0 %v701, 80
        %v721 = vpop.permute.xlu0 %720
        %722 = vrot.lane.b32.xlu0 %v702, 80
        %v723 = vpop.permute.xlu0 %722
        %724 = vrot.lane.b32.xlu0 %v703, 80
        %v725 = vpop.permute.xlu0 %724
        %726 = vrot.lane.b32.xlu0 %v704, 80
        %v727 = vpop.permute.xlu0 %726
        %728 = vrot.lane.b32.xlu0 %v705, 80
        %v729 = vpop.permute.xlu0 %728
        %vm742 = vcmask 786048
        %743 = vst.msk [vmem:[#allocation2 + $0x10] sm:$0xff] %vm742, %v707
        %744 = vst.msk [vmem:[#allocation2 + $0x30] sm:$0xff] %vm742, %v709
        %745 = vst.msk [vmem:[#allocation2 + $0x50] sm:$0xff] %vm742, %v711
        %746 = vst.msk [vmem:[#allocation2 + $0x70] sm:$0xff] %vm742, %v713
        %747 = vst.msk [vmem:[#allocation2 + $0x90] sm:$0xff] %vm742, %v715
        %748 = vst.msk [vmem:[#allocation2 + $0xb0] sm:$0xff] %vm742, %v717
        %749 = vst.msk [vmem:[#allocation2 + $0xd0] sm:$0xff] %vm742, %v719
        %750 = vst.msk [vmem:[#allocation2 + $0xf0] sm:$0xff] %vm742, %v721
        %751 = vst.msk [vmem:[#allocation2 + $0x110] sm:$0xff] %vm742, %v723
        %752 = vst.msk [vmem:[#allocation2 + $0x130] sm:$0xff] %vm742, %v725
        %753 = vst.msk [vmem:[#allocation2 + $0x150] sm:$0xff] %vm742, %v727
        %754 = vst.msk [vmem:[#allocation2 + $0x170] sm:$0xff] %vm742, %v729
        %s755 = sadd.s32 %s202, 6
        %s756 = smul.u32 %s755, 8
        %s757 = smul.addr %s756, 4
        %s758 = scalar_lea.vmem %s195, %s757
        %v759 = vld [vmem:[%s758] sm:$0xf]
        %v760 = vld [vmem:[%s758 + $0x4] sm:$0xf]
        %v761 = vld [vmem:[%s758 + $0x8] sm:$0xf]
        %v762 = vld [vmem:[%s758 + $0xc] sm:$0xf]
        %v763 = vld [vmem:[%s758 + $0x10] sm:$0xf]
        %v764 = vld [vmem:[%s758 + $0x14] sm:$0xf]
        %v765 = vld [vmem:[%s758 + $0x18] sm:$0xf]
        %v766 = vld [vmem:[%s758 + $0x20] sm:$0xf]
        %v767 = vld [vmem:[%s758 + $0x24] sm:$0xf]
        %v768 = vld [vmem:[%s758 + $0x28] sm:$0xf]
        %v769 = vld [vmem:[%s758 + $0x2c] sm:$0xf]
        %v770 = vld [vmem:[%s758 + $0x30] sm:$0xf]
        %v771 = vld [vmem:[%s758 + $0x34] sm:$0xf]
        %v772 = vld [vmem:[%s758 + $0x38] sm:$0xf]
        %v773 = vld [vmem:[%s758 + $0x40] sm:$0xf]
        %v774 = vld [vmem:[%s758 + $0x44] sm:$0xf]
        %v775 = vld [vmem:[%s758 + $0x48] sm:$0xf]
        %v776 = vld [vmem:[%s758 + $0x4c] sm:$0xf]
        %v777 = vld [vmem:[%s758 + $0x50] sm:$0xf]
        %v778 = vld [vmem:[%s758 + $0x54] sm:$0xf]
        %v779 = vld [vmem:[%s758 + $0x58] sm:$0xf]
        %v780 = vld [vmem:[%s758 + $0x60] sm:$0xf]
        %v781 = vld [vmem:[%s758 + $0x64] sm:$0xf]
        %v782 = vld [vmem:[%s758 + $0x68] sm:$0xf]
        %v783 = vld [vmem:[%s758 + $0x6c] sm:$0xf]
        %v784 = vld [vmem:[%s758 + $0x70] sm:$0xf]
        %v785 = vld [vmem:[%s758 + $0x74] sm:$0xf]
        %v786 = vld [vmem:[%s758 + $0x78] sm:$0xf]
        %v787 = vld [vmem:[%s758 + $0x80] sm:$0xf]
        %v788 = vld [vmem:[%s758 + $0x84] sm:$0xf]
        %v789 = vld [vmem:[%s758 + $0x88] sm:$0xf]
        %v790 = vld [vmem:[%s758 + $0x8c] sm:$0xf]
        %v791 = vld [vmem:[%s758 + $0x90] sm:$0xf]
        %v792 = vld [vmem:[%s758 + $0x94] sm:$0xf]
        %v793 = vld [vmem:[%s758 + $0x98] sm:$0xf]
        %v794 = vld [vmem:[%s758 + $0xa0] sm:$0xf]
        %v795 = vld [vmem:[%s758 + $0xa4] sm:$0xf]
        %v796 = vld [vmem:[%s758 + $0xa8] sm:$0xf]
        %v797 = vld [vmem:[%s758 + $0xac] sm:$0xf]
        %v798 = vld [vmem:[%s758 + $0xb0] sm:$0xf]
        %v799 = vld [vmem:[%s758 + $0xb4] sm:$0xf]
        %v800 = vld [vmem:[%s758 + $0xb8] sm:$0xf]
        %v801 = vld [vmem:[%s758 + $0xc0] sm:$0xf]
        %v802 = vld [vmem:[%s758 + $0xc4] sm:$0xf]
        %v803 = vld [vmem:[%s758 + $0xc8] sm:$0xf]
        %v804 = vld [vmem:[%s758 + $0xcc] sm:$0xf]
        %v805 = vld [vmem:[%s758 + $0xd0] sm:$0xf]
        %v806 = vld [vmem:[%s758 + $0xd4] sm:$0xf]
        %v807 = vld [vmem:[%s758 + $0xd8] sm:$0xf]
        %v808 = vld [vmem:[%s758 + $0xe0] sm:$0xf]
        %v809 = vld [vmem:[%s758 + $0xe4] sm:$0xf]
        %v810 = vld [vmem:[%s758 + $0xe8] sm:$0xf]
        %v811 = vld [vmem:[%s758 + $0xec] sm:$0xf]
        %v812 = vld [vmem:[%s758 + $0xf0] sm:$0xf]
        %v813 = vld [vmem:[%s758 + $0xf4] sm:$0xf]
        %v814 = vld [vmem:[%s758 + $0xf8] sm:$0xf]
        %vm847 = vcmask 1040384
        %vm848 = vcmask 1044484
        %vm849 = vmor %vm847, %vm848
        %v850 = vrot.slane %v759, 7
        %v851 = vrot.slane %v850, 4
        %v852 = vrot.slane %v760, 7
        %v853 = vsel %vm849, %v851, %v852
        %v854 = vrot.slane %v852, 4
        %v855 = vrot.slane %v761, 7
        %v856 = vsel %vm849, %v854, %v855
        %v857 = vrot.slane %v855, 4
        %v858 = vrot.slane %v762, 7
        %v859 = vsel %vm849, %v857, %v858
        %v860 = vrot.slane %v766, 7
        %v861 = vrot.slane %v860, 4
        %v862 = vrot.slane %v767, 7
        %v863 = vsel %vm849, %v861, %v862
        %v864 = vrot.slane %v862, 4
        %v865 = vrot.slane %v768, 7
        %v866 = vsel %vm849, %v864, %v865
        %v867 = vrot.slane %v865, 4
        %v868 = vrot.slane %v769, 7
        %v869 = vsel %vm849, %v867, %v868
        %v870 = vrot.slane %v773, 7
        %v871 = vrot.slane %v870, 4
        %v872 = vrot.slane %v774, 7
        %v873 = vsel %vm849, %v871, %v872
        %v874 = vrot.slane %v872, 4
        %v875 = vrot.slane %v775, 7
        %v876 = vsel %vm849, %v874, %v875
        %v877 = vrot.slane %v875, 4
        %v878 = vrot.slane %v776, 7
        %v879 = vsel %vm849, %v877, %v878
        %v880 = vrot.slane %v780, 7
        %v881 = vrot.slane %v880, 4
        %v882 = vrot.slane %v781, 7
        %v883 = vsel %vm849, %v881, %v882
        %v884 = vrot.slane %v882, 4
        %v885 = vrot.slane %v782, 7
        %v886 = vsel %vm849, %v884, %v885
        %v887 = vrot.slane %v885, 4
        %v888 = vrot.slane %v783, 7
        %v889 = vsel %vm849, %v887, %v888
        %v890 = vrot.slane %v787, 7
        %v891 = vrot.slane %v890, 4
        %v892 = vrot.slane %v788, 7
        %v893 = vsel %vm849, %v891, %v892
        %v894 = vrot.slane %v892, 4
        %v895 = vrot.slane %v789, 7
        %v896 = vsel %vm849, %v894, %v895
        %v897 = vrot.slane %v895, 4
        %v898 = vrot.slane %v790, 7
        %v899 = vsel %vm849, %v897, %v898
        %v900 = vrot.slane %v794, 7
        %v901 = vrot.slane %v900, 4
        %v902 = vrot.slane %v795, 7
        %v903 = vsel %vm849, %v901, %v902
        %v904 = vrot.slane %v902, 4
        %v905 = vrot.slane %v796, 7
        %v906 = vsel %vm849, %v904, %v905
        %v907 = vrot.slane %v905, 4
        %v908 = vrot.slane %v797, 7
        %v909 = vsel %vm849, %v907, %v908
        %v910 = vrot.slane %v801, 7
        %v911 = vrot.slane %v910, 4
        %v912 = vrot.slane %v802, 7
        %v913 = vsel %vm849, %v911, %v912
        %v914 = vrot.slane %v912, 4
        %v915 = vrot.slane %v803, 7
        %v916 = vsel %vm849, %v914, %v915
        %v917 = vrot.slane %v915, 4
        %v918 = vrot.slane %v804, 7
        %v919 = vsel %vm849, %v917, %v918
        %v920 = vrot.slane %v808, 7
        %v921 = vrot.slane %v920, 4
        %v922 = vrot.slane %v809, 7
        %v923 = vsel %vm849, %v921, %v922
        %v924 = vrot.slane %v922, 4
        %v925 = vrot.slane %v810, 7
        %v926 = vsel %vm849, %v924, %v925
        %v927 = vrot.slane %v925, 4
        %v928 = vrot.slane %v811, 7
        %v929 = vsel %vm849, %v927, %v928
        %v930 = vunpack.c.l.b16 %v853
        %v931 = vunpack.c.l.b16 %v856
        %v932 = vunpack.c.l.b16 %v859
        %v933 = vunpack.c.l.b16 %v863
        %v934 = vunpack.c.l.b16 %v866
        %v935 = vunpack.c.l.b16 %v869
        %v936 = vunpack.c.l.b16 %v873
        %v937 = vunpack.c.l.b16 %v876
        %v938 = vunpack.c.l.b16 %v879
        %v939 = vunpack.c.l.b16 %v883
        %v940 = vunpack.c.l.b16 %v886
        %v941 = vunpack.c.l.b16 %v889
        %v942 = vunpack.c.l.b16 %v893
        %v943 = vunpack.c.l.b16 %v896
        %v944 = vunpack.c.l.b16 %v899
        %v945 = vunpack.c.l.b16 %v903
        %v946 = vunpack.c.l.b16 %v906
        %v947 = vunpack.c.l.b16 %v909
        %v948 = vunpack.c.l.b16 %v913
        %v949 = vunpack.c.l.b16 %v916
        %v950 = vunpack.c.l.b16 %v919
        %v951 = vunpack.c.l.b16 %v923
        %v952 = vunpack.c.l.b16 %v926
        %v953 = vunpack.c.l.b16 %v929
        %v954 = vpack.c.b16 %v931, %v930
        %v955 = vpack.c.b16 %v933, %v932
        %v956 = vpack.c.b16 %v935, %v934
        %v957 = vpack.c.b16 %v937, %v936
        %v958 = vpack.c.b16 %v939, %v938
        %v959 = vpack.c.b16 %v941, %v940
        %v960 = vpack.c.b16 %v943, %v942
        %v961 = vpack.c.b16 %v945, %v944
        %v962 = vpack.c.b16 %v947, %v946
        %v963 = vpack.c.b16 %v949, %v948
        %v964 = vpack.c.b16 %v951, %v950
        %v965 = vpack.c.b16 %v953, %v952
        %966 = vrot.lane.b32.xlu0 %v954, 32
        %v967 = vpop.permute.xlu0 %966
        %968 = vrot.lane.b32.xlu0 %v955, 32
        %v969 = vpop.permute.xlu0 %968
        %970 = vrot.lane.b32.xlu0 %v956, 32
        %v971 = vpop.permute.xlu0 %970
        %972 = vrot.lane.b32.xlu0 %v957, 32
        %v973 = vpop.permute.xlu0 %972
        %974 = vrot.lane.b32.xlu0 %v958, 32
        %v975 = vpop.permute.xlu0 %974
        %976 = vrot.lane.b32.xlu0 %v959, 32
        %v977 = vpop.permute.xlu0 %976
        %978 = vrot.lane.b32.xlu0 %v960, 32
        %v979 = vpop.permute.xlu0 %978
        %980 = vrot.lane.b32.xlu0 %v961, 32
        %v981 = vpop.permute.xlu0 %980
        %982 = vrot.lane.b32.xlu0 %v962, 32
        %v983 = vpop.permute.xlu0 %982
        %984 = vrot.lane.b32.xlu0 %v963, 32
        %v985 = vpop.permute.xlu0 %984
        %986 = vrot.lane.b32.xlu0 %v964, 32
        %v987 = vpop.permute.xlu0 %986
        %988 = vrot.lane.b32.xlu0 %v965, 32
        %v989 = vpop.permute.xlu0 %988
        %vm1002 = vcmask 392448
        %1003 = vst.msk [vmem:[#allocation2 + $0x8] sm:$0xff] %vm1002, %v967
        %1004 = vst.msk [vmem:[#allocation2 + $0x28] sm:$0xff] %vm1002, %v969
        %1005 = vst.msk [vmem:[#allocation2 + $0x48] sm:$0xff] %vm1002, %v971
        %1006 = vst.msk [vmem:[#allocation2 + $0x68] sm:$0xff] %vm1002, %v973
        %1007 = vst.msk [vmem:[#allocation2 + $0x88] sm:$0xff] %vm1002, %v975
        %1008 = vst.msk [vmem:[#allocation2 + $0xa8] sm:$0xff] %vm1002, %v977
        %1009 = vst.msk [vmem:[#allocation2 + $0xc8] sm:$0xff] %vm1002, %v979
        %1010 = vst.msk [vmem:[#allocation2 + $0xe8] sm:$0xff] %vm1002, %v981
        %1011 = vst.msk [vmem:[#allocation2 + $0x108] sm:$0xff] %vm1002, %v983
        %1012 = vst.msk [vmem:[#allocation2 + $0x128] sm:$0xff] %vm1002, %v985
        %1013 = vst.msk [vmem:[#allocation2 + $0x148] sm:$0xff] %vm1002, %v987
        %1014 = vst.msk [vmem:[#allocation2 + $0x168] sm:$0xff] %vm1002, %v989
        %v1031 = vrot.slane %v761, 5
        %v1032 = vrot.slane %v1031, 4
        %v1033 = vrot.slane %v762, 5
        %v1034 = vsel %vm405, %v1032, %v1033
        %v1035 = vrot.slane %v1033, 4
        %v1036 = vrot.slane %v763, 5
        %v1037 = vsel %vm405, %v1035, %v1036
        %v1038 = vrot.slane %v1036, 4
        %v1039 = vrot.slane %v764, 5
        %v1040 = vsel %vm405, %v1038, %v1039
        %v1041 = vrot.slane %v768, 5
        %v1042 = vrot.slane %v1041, 4
        %v1043 = vrot.slane %v769, 5
        %v1044 = vsel %vm405, %v1042, %v1043
        %v1045 = vrot.slane %v1043, 4
        %v1046 = vrot.slane %v770, 5
        %v1047 = vsel %vm405, %v1045, %v1046
        %v1048 = vrot.slane %v1046, 4
        %v1049 = vrot.slane %v771, 5
        %v1050 = vsel %vm405, %v1048, %v1049
        %v1051 = vrot.slane %v775, 5
        %v1052 = vrot.slane %v1051, 4
        %v1053 = vrot.slane %v776, 5
        %v1054 = vsel %vm405, %v1052, %v1053
        %v1055 = vrot.slane %v1053, 4
        %v1056 = vrot.slane %v777, 5
        %v1057 = vsel %vm405, %v1055, %v1056
        %v1058 = vrot.slane %v1056, 4
        %v1059 = vrot.slane %v778, 5
        %v1060 = vsel %vm405, %v1058, %v1059
        %v1061 = vrot.slane %v782, 5
        %v1062 = vrot.slane %v1061, 4
        %v1063 = vrot.slane %v783, 5
        %v1064 = vsel %vm405, %v1062, %v1063
        %v1065 = vrot.slane %v1063, 4
        %v1066 = vrot.slane %v784, 5
        %v1067 = vsel %vm405, %v1065, %v1066
        %v1068 = vrot.slane %v1066, 4
        %v1069 = vrot.slane %v785, 5
        %v1070 = vsel %vm405, %v1068, %v1069
        %v1071 = vrot.slane %v789, 5
        %v1072 = vrot.slane %v1071, 4
        %v1073 = vrot.slane %v790, 5
        %v1074 = vsel %vm405, %v1072, %v1073
        %v1075 = vrot.slane %v1073, 4
        %v1076 = vrot.slane %v791, 5
        %v1077 = vsel %vm405, %v1075, %v1076
        %v1078 = vrot.slane %v1076, 4
        %v1079 = vrot.slane %v792, 5
        %v1080 = vsel %vm405, %v1078, %v1079
        %v1081 = vrot.slane %v796, 5
        %v1082 = vrot.slane %v1081, 4
        %v1083 = vrot.slane %v797, 5
        %v1084 = vsel %vm405, %v1082, %v1083
        %v1085 = vrot.slane %v1083, 4
        %v1086 = vrot.slane %v798, 5
        %v1087 = vsel %vm405, %v1085, %v1086
        %v1088 = vrot.slane %v1086, 4
        %v1089 = vrot.slane %v799, 5
        %v1090 = vsel %vm405, %v1088, %v1089
        %v1091 = vrot.slane %v803, 5
        %v1092 = vrot.slane %v1091, 4
        %v1093 = vrot.slane %v804, 5
        %v1094 = vsel %vm405, %v1092, %v1093
        %v1095 = vrot.slane %v1093, 4
        %v1096 = vrot.slane %v805, 5
        %v1097 = vsel %vm405, %v1095, %v1096
        %v1098 = vrot.slane %v1096, 4
        %v1099 = vrot.slane %v806, 5
        %v1100 = vsel %vm405, %v1098, %v1099
        %v1101 = vrot.slane %v810, 5
        %v1102 = vrot.slane %v1101, 4
        %v1103 = vrot.slane %v811, 5
        %v1104 = vsel %vm405, %v1102, %v1103
        %v1105 = vrot.slane %v1103, 4
        %v1106 = vrot.slane %v812, 5
        %v1107 = vsel %vm405, %v1105, %v1106
        %v1108 = vrot.slane %v1106, 4
        %v1109 = vrot.slane %v813, 5
        %v1110 = vsel %vm405, %v1108, %v1109
        %v1111 = vunpack.c.l.b16 %v1034
        %v1112 = vunpack.c.l.b16 %v1037
        %v1113 = vunpack.c.l.b16 %v1040
        %v1114 = vunpack.c.l.b16 %v1044
        %v1115 = vunpack.c.l.b16 %v1047
        %v1116 = vunpack.c.l.b16 %v1050
        %v1117 = vunpack.c.l.b16 %v1054
        %v1118 = vunpack.c.l.b16 %v1057
        %v1119 = vunpack.c.l.b16 %v1060
        %v1120 = vunpack.c.l.b16 %v1064
        %v1121 = vunpack.c.l.b16 %v1067
        %v1122 = vunpack.c.l.b16 %v1070
        %v1123 = vunpack.c.l.b16 %v1074
        %v1124 = vunpack.c.l.b16 %v1077
        %v1125 = vunpack.c.l.b16 %v1080
        %v1126 = vunpack.c.l.b16 %v1084
        %v1127 = vunpack.c.l.b16 %v1087
        %v1128 = vunpack.c.l.b16 %v1090
        %v1129 = vunpack.c.l.b16 %v1094
        %v1130 = vunpack.c.l.b16 %v1097
        %v1131 = vunpack.c.l.b16 %v1100
        %v1132 = vunpack.c.l.b16 %v1104
        %v1133 = vunpack.c.l.b16 %v1107
        %v1134 = vunpack.c.l.b16 %v1110
        %v1135 = vpack.c.b16 %v1112, %v1111
        %v1136 = vpack.c.b16 %v1114, %v1113
        %v1137 = vpack.c.b16 %v1116, %v1115
        %v1138 = vpack.c.b16 %v1118, %v1117
        %v1139 = vpack.c.b16 %v1120, %v1119
        %v1140 = vpack.c.b16 %v1122, %v1121
        %v1141 = vpack.c.b16 %v1124, %v1123
        %v1142 = vpack.c.b16 %v1126, %v1125
        %v1143 = vpack.c.b16 %v1128, %v1127
        %v1144 = vpack.c.b16 %v1130, %v1129
        %v1145 = vpack.c.b16 %v1132, %v1131
        %v1146 = vpack.c.b16 %v1134, %v1133
        %1147 = vrot.lane.b32.xlu0 %v1135, 48
        %v1148 = vpop.permute.xlu0 %1147
        %1149 = vrot.lane.b32.xlu0 %v1136, 48
        %v1150 = vpop.permute.xlu0 %1149
        %1151 = vrot.lane.b32.xlu0 %v1137, 48
        %v1152 = vpop.permute.xlu0 %1151
        %1153 = vrot.lane.b32.xlu0 %v1138, 48
        %v1154 = vpop.permute.xlu0 %1153
        %1155 = vrot.lane.b32.xlu0 %v1139, 48
        %v1156 = vpop.permute.xlu0 %1155
        %1157 = vrot.lane.b32.xlu0 %v1140, 48
        %v1158 = vpop.permute.xlu0 %1157
        %1159 = vrot.lane.b32.xlu0 %v1141, 48
        %v1160 = vpop.permute.xlu0 %1159
        %1161 = vrot.lane.b32.xlu0 %v1142, 48
        %v1162 = vpop.permute.xlu0 %1161
        %1163 = vrot.lane.b32.xlu0 %v1143, 48
        %v1164 = vpop.permute.xlu0 %1163
        %1165 = vrot.lane.b32.xlu0 %v1144, 48
        %v1166 = vpop.permute.xlu0 %1165
        %1167 = vrot.lane.b32.xlu0 %v1145, 48
        %v1168 = vpop.permute.xlu0 %1167
        %1169 = vrot.lane.b32.xlu0 %v1146, 48
        %v1170 = vpop.permute.xlu0 %1169
        %1183 = vst.msk [vmem:[#allocation2 + $0x8] sm:$0xff] %vm366, %v1148
        %1184 = vst.msk [vmem:[#allocation2 + $0x28] sm:$0xff] %vm366, %v1150
        %1185 = vst.msk [vmem:[#allocation2 + $0x48] sm:$0xff] %vm366, %v1152
        %1186 = vst.msk [vmem:[#allocation2 + $0x68] sm:$0xff] %vm366, %v1154
        %1187 = vst.msk [vmem:[#allocation2 + $0x88] sm:$0xff] %vm366, %v1156
        %1188 = vst.msk [vmem:[#allocation2 + $0xa8] sm:$0xff] %vm366, %v1158
        %1189 = vst.msk [vmem:[#allocation2 + $0xc8] sm:$0xff] %vm366, %v1160
        %1190 = vst.msk [vmem:[#allocation2 + $0xe8] sm:$0xff] %vm366, %v1162
        %1191 = vst.msk [vmem:[#allocation2 + $0x108] sm:$0xff] %vm366, %v1164
        %1192 = vst.msk [vmem:[#allocation2 + $0x128] sm:$0xff] %vm366, %v1166
        %1193 = vst.msk [vmem:[#allocation2 + $0x148] sm:$0xff] %vm366, %v1168
        %1194 = vst.msk [vmem:[#allocation2 + $0x168] sm:$0xff] %vm366, %v1170
        %v1203 = vrot.slane %v858, 4
        %v1204 = vrot.slane %v763, 7
        %v1205 = vsel %vm849, %v1203, %v1204
        %v1206 = vrot.slane %v1204, 4
        %v1207 = vrot.slane %v764, 7
        %v1208 = vsel %vm849, %v1206, %v1207
        %v1209 = vrot.slane %v1207, 4
        %v1210 = vrot.slane %v765, 7
        %v1211 = vsel %vm849, %v1209, %v1210
        %v1212 = vrot.slane %v868, 4
        %v1213 = vrot.slane %v770, 7
        %v1214 = vsel %vm849, %v1212, %v1213
        %v1215 = vrot.slane %v1213, 4
        %v1216 = vrot.slane %v771, 7
        %v1217 = vsel %vm849, %v1215, %v1216
        %v1218 = vrot.slane %v1216, 4
        %v1219 = vrot.slane %v772, 7
        %v1220 = vsel %vm849, %v1218, %v1219
        %v1221 = vrot.slane %v878, 4
        %v1222 = vrot.slane %v777, 7
        %v1223 = vsel %vm849, %v1221, %v1222
        %v1224 = vrot.slane %v1222, 4
        %v1225 = vrot.slane %v778, 7
        %v1226 = vsel %vm849, %v1224, %v1225
        %v1227 = vrot.slane %v1225, 4
        %v1228 = vrot.slane %v779, 7
        %v1229 = vsel %vm849, %v1227, %v1228
        %v1230 = vrot.slane %v888, 4
        %v1231 = vrot.slane %v784, 7
        %v1232 = vsel %vm849, %v1230, %v1231
        %v1233 = vrot.slane %v1231, 4
        %v1234 = vrot.slane %v785, 7
        %v1235 = vsel %vm849, %v1233, %v1234
        %v1236 = vrot.slane %v1234, 4
        %v1237 = vrot.slane %v786, 7
        %v1238 = vsel %vm849, %v1236, %v1237
        %v1239 = vrot.slane %v898, 4
        %v1240 = vrot.slane %v791, 7
        %v1241 = vsel %vm849, %v1239, %v1240
        %v1242 = vrot.slane %v1240, 4
        %v1243 = vrot.slane %v792, 7
        %v1244 = vsel %vm849, %v1242, %v1243
        %v1245 = vrot.slane %v1243, 4
        %v1246 = vrot.slane %v793, 7
        %v1247 = vsel %vm849, %v1245, %v1246
        %v1248 = vrot.slane %v908, 4
        %v1249 = vrot.slane %v798, 7
        %v1250 = vsel %vm849, %v1248, %v1249
        %v1251 = vrot.slane %v1249, 4
        %v1252 = vrot.slane %v799, 7
        %v1253 = vsel %vm849, %v1251, %v1252
        %v1254 = vrot.slane %v1252, 4
        %v1255 = vrot.slane %v800, 7
        %v1256 = vsel %vm849, %v1254, %v1255
        %v1257 = vrot.slane %v918, 4
        %v1258 = vrot.slane %v805, 7
        %v1259 = vsel %vm849, %v1257, %v1258
        %v1260 = vrot.slane %v1258, 4
        %v1261 = vrot.slane %v806, 7
        %v1262 = vsel %vm849, %v1260, %v1261
        %v1263 = vrot.slane %v1261, 4
        %v1264 = vrot.slane %v807, 7
        %v1265 = vsel %vm849, %v1263, %v1264
        %v1266 = vrot.slane %v928, 4
        %v1267 = vrot.slane %v812, 7
        %v1268 = vsel %vm849, %v1266, %v1267
        %v1269 = vrot.slane %v1267, 4
        %v1270 = vrot.slane %v813, 7
        %v1271 = vsel %vm849, %v1269, %v1270
        %v1272 = vrot.slane %v1270, 4
        %v1273 = vrot.slane %v814, 7
        %v1274 = vsel %vm849, %v1272, %v1273
        %v1275 = vunpack.c.l.b16 %v1205
        %v1276 = vunpack.c.l.b16 %v1208
        %v1277 = vunpack.c.l.b16 %v1211
        %v1278 = vunpack.c.l.b16 %v1214
        %v1279 = vunpack.c.l.b16 %v1217
        %v1280 = vunpack.c.l.b16 %v1220
        %v1281 = vunpack.c.l.b16 %v1223
        %v1282 = vunpack.c.l.b16 %v1226
        %v1283 = vunpack.c.l.b16 %v1229
        %v1284 = vunpack.c.l.b16 %v1232
        %v1285 = vunpack.c.l.b16 %v1235
        %v1286 = vunpack.c.l.b16 %v1238
        %v1287 = vunpack.c.l.b16 %v1241
        %v1288 = vunpack.c.l.b16 %v1244
        %v1289 = vunpack.c.l.b16 %v1247
        %v1290 = vunpack.c.l.b16 %v1250
        %v1291 = vunpack.c.l.b16 %v1253
        %v1292 = vunpack.c.l.b16 %v1256
        %v1293 = vunpack.c.l.b16 %v1259
        %v1294 = vunpack.c.l.b16 %v1262
        %v1295 = vunpack.c.l.b16 %v1265
        %v1296 = vunpack.c.l.b16 %v1268
        %v1297 = vunpack.c.l.b16 %v1271
        %v1298 = vunpack.c.l.b16 %v1274
        %v1299 = vpack.c.b16 %v1276, %v1275
        %v1300 = vpack.c.b16 %v1278, %v1277
        %v1301 = vpack.c.b16 %v1280, %v1279
        %v1302 = vpack.c.b16 %v1282, %v1281
        %v1303 = vpack.c.b16 %v1284, %v1283
        %v1304 = vpack.c.b16 %v1286, %v1285
        %v1305 = vpack.c.b16 %v1288, %v1287
        %v1306 = vpack.c.b16 %v1290, %v1289
        %v1307 = vpack.c.b16 %v1292, %v1291
        %v1308 = vpack.c.b16 %v1294, %v1293
        %v1309 = vpack.c.b16 %v1296, %v1295
        %v1310 = vpack.c.b16 %v1298, %v1297
        %1311 = vrot.lane.b32.xlu0 %v1299, 64
        %v1312 = vpop.permute.xlu0 %1311
        %1313 = vrot.lane.b32.xlu0 %v1300, 64
        %v1314 = vpop.permute.xlu0 %1313
        %1315 = vrot.lane.b32.xlu0 %v1301, 64
        %v1316 = vpop.permute.xlu0 %1315
        %1317 = vrot.lane.b32.xlu0 %v1302, 64
        %v1318 = vpop.permute.xlu0 %1317
        %1319 = vrot.lane.b32.xlu0 %v1303, 64
        %v1320 = vpop.permute.xlu0 %1319
        %1321 = vrot.lane.b32.xlu0 %v1304, 64
        %v1322 = vpop.permute.xlu0 %1321
        %1323 = vrot.lane.b32.xlu0 %v1305, 64
        %v1324 = vpop.permute.xlu0 %1323
        %1325 = vrot.lane.b32.xlu0 %v1306, 64
        %v1326 = vpop.permute.xlu0 %1325
        %1327 = vrot.lane.b32.xlu0 %v1307, 64
        %v1328 = vpop.permute.xlu0 %1327
        %1329 = vrot.lane.b32.xlu0 %v1308, 64
        %v1330 = vpop.permute.xlu0 %1329
        %1331 = vrot.lane.b32.xlu0 %v1309, 64
        %v1332 = vpop.permute.xlu0 %1331
        %1333 = vrot.lane.b32.xlu0 %v1310, 64
        %v1334 = vpop.permute.xlu0 %1333
        %1347 = vst.msk [vmem:[#allocation2 + $0x8] sm:$0xff] %vm558, %v1312
        %1348 = vst.msk [vmem:[#allocation2 + $0x28] sm:$0xff] %vm558, %v1314
        %1349 = vst.msk [vmem:[#allocation2 + $0x48] sm:$0xff] %vm558, %v1316
        %1350 = vst.msk [vmem:[#allocation2 + $0x68] sm:$0xff] %vm558, %v1318
        %1351 = vst.msk [vmem:[#allocation2 + $0x88] sm:$0xff] %vm558, %v1320
        %1352 = vst.msk [vmem:[#allocation2 + $0xa8] sm:$0xff] %vm558, %v1322
        %1353 = vst.msk [vmem:[#allocation2 + $0xc8] sm:$0xff] %vm558, %v1324
        %1354 = vst.msk [vmem:[#allocation2 + $0xe8] sm:$0xff] %vm558, %v1326
        %1355 = vst.msk [vmem:[#allocation2 + $0x108] sm:$0xff] %vm558, %v1328
        %1356 = vst.msk [vmem:[#allocation2 + $0x128] sm:$0xff] %vm558, %v1330
        %1357 = vst.msk [vmem:[#allocation2 + $0x148] sm:$0xff] %vm558, %v1332
        %1358 = vst.msk [vmem:[#allocation2 + $0x168] sm:$0xff] %vm558, %v1334
        %s1359 = sadd.s32 %s202, 12
        %s1360 = smul.u32 %s1359, 8
        %s1361 = smul.addr %s1360, 4
        %s1362 = scalar_lea.vmem %s195, %s1361
        %v1363 = vld [vmem:[%s1362 + $0x4] sm:$0xf]
        %v1364 = vld [vmem:[%s1362 + $0x8] sm:$0xf]
        %v1365 = vld [vmem:[%s1362 + $0xc] sm:$0xf]
        %v1366 = vld [vmem:[%s1362 + $0x10] sm:$0xf]
        %v1367 = vld [vmem:[%s1362 + $0x14] sm:$0xf]
        %v1368 = vld [vmem:[%s1362 + $0x24] sm:$0xf]
        %v1369 = vld [vmem:[%s1362 + $0x28] sm:$0xf]
        %v1370 = vld [vmem:[%s1362 + $0x2c] sm:$0xf]
        %v1371 = vld [vmem:[%s1362 + $0x30] sm:$0xf]
        %v1372 = vld [vmem:[%s1362 + $0x34] sm:$0xf]
        %v1373 = vld [vmem:[%s1362 + $0x44] sm:$0xf]
        %v1374 = vld [vmem:[%s1362 + $0x48] sm:$0xf]
        %v1375 = vld [vmem:[%s1362 + $0x4c] sm:$0xf]
        %v1376 = vld [vmem:[%s1362 + $0x50] sm:$0xf]
        %v1377 = vld [vmem:[%s1362 + $0x54] sm:$0xf]
        %v1378 = vld [vmem:[%s1362 + $0x64] sm:$0xf]
        %v1379 = vld [vmem:[%s1362 + $0x68] sm:$0xf]
        %v1380 = vld [vmem:[%s1362 + $0x6c] sm:$0xf]
        %v1381 = vld [vmem:[%s1362 + $0x70] sm:$0xf]
        %v1382 = vld [vmem:[%s1362 + $0x74] sm:$0xf]
        %v1383 = vld [vmem:[%s1362 + $0x84] sm:$0xf]
        %v1384 = vld [vmem:[%s1362 + $0x88] sm:$0xf]
        %v1385 = vld [vmem:[%s1362 + $0x8c] sm:$0xf]
        %v1386 = vld [vmem:[%s1362 + $0x90] sm:$0xf]
        %v1387 = vld [vmem:[%s1362 + $0x94] sm:$0xf]
        %v1388 = vld [vmem:[%s1362 + $0xa4] sm:$0xf]
        %v1389 = vld [vmem:[%s1362 + $0xa8] sm:$0xf]
        %v1390 = vld [vmem:[%s1362 + $0xac] sm:$0xf]
        %v1391 = vld [vmem:[%s1362 + $0xb0] sm:$0xf]
        %v1392 = vld [vmem:[%s1362 + $0xb4] sm:$0xf]
        %v1393 = vld [vmem:[%s1362 + $0xc4] sm:$0xf]
        %v1394 = vld [vmem:[%s1362 + $0xc8] sm:$0xf]
        %v1395 = vld [vmem:[%s1362 + $0xcc] sm:$0xf]
        %v1396 = vld [vmem:[%s1362 + $0xd0] sm:$0xf]
        %v1397 = vld [vmem:[%s1362 + $0xd4] sm:$0xf]
        %v1398 = vld [vmem:[%s1362 + $0xe4] sm:$0xf]
        %v1399 = vld [vmem:[%s1362 + $0xe8] sm:$0xf]
        %v1400 = vld [vmem:[%s1362 + $0xec] sm:$0xf]
        %v1401 = vld [vmem:[%s1362 + $0xf0] sm:$0xf]
        %v1402 = vld [vmem:[%s1362 + $0xf4] sm:$0xf]
        %v1435 = vrot.slane %v1363, 6
        %v1436 = vrot.slane %v1435, 4
        %v1437 = vrot.slane %v1364, 6
        %v1438 = vsel %vm589, %v1436, %v1437
        %v1439 = vrot.slane %v1437, 4
        %v1440 = vrot.slane %v1365, 6
        %v1441 = vsel %vm589, %v1439, %v1440
        %v1442 = vrot.slane %v1440, 4
        %v1443 = vrot.slane %v1366, 6
        %v1444 = vsel %vm589, %v1442, %v1443
        %v1445 = vrot.slane %v1368, 6
        %v1446 = vrot.slane %v1445, 4
        %v1447 = vrot.slane %v1369, 6
        %v1448 = vsel %vm589, %v1446, %v1447
        %v1449 = vrot.slane %v1447, 4
        %v1450 = vrot.slane %v1370, 6
        %v1451 = vsel %vm589, %v1449, %v1450
        %v1452 = vrot.slane %v1450, 4
        %v1453 = vrot.slane %v1371, 6
        %v1454 = vsel %vm589, %v1452, %v1453
        %v1455 = vrot.slane %v1373, 6
        %v1456 = vrot.slane %v1455, 4
        %v1457 = vrot.slane %v1374, 6
        %v1458 = vsel %vm589, %v1456, %v1457
        %v1459 = vrot.slane %v1457, 4
        %v1460 = vrot.slane %v1375, 6
        %v1461 = vsel %vm589, %v1459, %v1460
        %v1462 = vrot.slane %v1460, 4
        %v1463 = vrot.slane %v1376, 6
        %v1464 = vsel %vm589, %v1462, %v1463
        %v1465 = vrot.slane %v1378, 6
        %v1466 = vrot.slane %v1465, 4
        %v1467 = vrot.slane %v1379, 6
        %v1468 = vsel %vm589, %v1466, %v1467
        %v1469 = vrot.slane %v1467, 4
        %v1470 = vrot.slane %v1380, 6
        %v1471 = vsel %vm589, %v1469, %v1470
        %v1472 = vrot.slane %v1470, 4
        %v1473 = vrot.slane %v1381, 6
        %v1474 = vsel %vm589, %v1472, %v1473
        %v1475 = vrot.slane %v1383, 6
        %v1476 = vrot.slane %v1475, 4
        %v1477 = vrot.slane %v1384, 6
        %v1478 = vsel %vm589, %v1476, %v1477
        %v1479 = vrot.slane %v1477, 4
        %v1480 = vrot.slane %v1385, 6
        %v1481 = vsel %vm589, %v1479, %v1480
        %v1482 = vrot.slane %v1480, 4
        %v1483 = vrot.slane %v1386, 6
        %v1484 = vsel %vm589, %v1482, %v1483
        %v1485 = vrot.slane %v1388, 6
        %v1486 = vrot.slane %v1485, 4
        %v1487 = vrot.slane %v1389, 6
        %v1488 = vsel %vm589, %v1486, %v1487
        %v1489 = vrot.slane %v1487, 4
        %v1490 = vrot.slane %v1390, 6
        %v1491 = vsel %vm589, %v1489, %v1490
        %v1492 = vrot.slane %v1490, 4
        %v1493 = vrot.slane %v1391, 6
        %v1494 = vsel %vm589, %v1492, %v1493
        %v1495 = vrot.slane %v1393, 6
        %v1496 = vrot.slane %v1495, 4
        %v1497 = vrot.slane %v1394, 6
        %v1498 = vsel %vm589, %v1496, %v1497
        %v1499 = vrot.slane %v1497, 4
        %v1500 = vrot.slane %v1395, 6
        %v1501 = vsel %vm589, %v1499, %v1500
        %v1502 = vrot.slane %v1500, 4
        %v1503 = vrot.slane %v1396, 6
        %v1504 = vsel %vm589, %v1502, %v1503
        %v1505 = vrot.slane %v1398, 6
        %v1506 = vrot.slane %v1505, 4
        %v1507 = vrot.slane %v1399, 6
        %v1508 = vsel %vm589, %v1506, %v1507
        %v1509 = vrot.slane %v1507, 4
        %v1510 = vrot.slane %v1400, 6
        %v1511 = vsel %vm589, %v1509, %v1510
        %v1512 = vrot.slane %v1510, 4
        %v1513 = vrot.slane %v1401, 6
        %v1514 = vsel %vm589, %v1512, %v1513
        %v1515 = vunpack.c.l.b16 %v1438
        %v1516 = vunpack.c.l.b16 %v1441
        %v1517 = vunpack.c.l.b16 %v1444
        %v1518 = vunpack.c.l.b16 %v1448
        %v1519 = vunpack.c.l.b16 %v1451
        %v1520 = vunpack.c.l.b16 %v1454
        %v1521 = vunpack.c.l.b16 %v1458
        %v1522 = vunpack.c.l.b16 %v1461
        %v1523 = vunpack.c.l.b16 %v1464
        %v1524 = vunpack.c.l.b16 %v1468
        %v1525 = vunpack.c.l.b16 %v1471
        %v1526 = vunpack.c.l.b16 %v1474
        %v1527 = vunpack.c.l.b16 %v1478
        %v1528 = vunpack.c.l.b16 %v1481
        %v1529 = vunpack.c.l.b16 %v1484
        %v1530 = vunpack.c.l.b16 %v1488
        %v1531 = vunpack.c.l.b16 %v1491
        %v1532 = vunpack.c.l.b16 %v1494
        %v1533 = vunpack.c.l.b16 %v1498
        %v1534 = vunpack.c.l.b16 %v1501
        %v1535 = vunpack.c.l.b16 %v1504
        %v1536 = vunpack.c.l.b16 %v1508
        %v1537 = vunpack.c.l.b16 %v1511
        %v1538 = vunpack.c.l.b16 %v1514
        %v1539 = vpack.c.b16 %v1516, %v1515
        %v1540 = vpack.c.b16 %v1518, %v1517
        %v1541 = vpack.c.b16 %v1520, %v1519
        %v1542 = vpack.c.b16 %v1522, %v1521
        %v1543 = vpack.c.b16 %v1524, %v1523
        %v1544 = vpack.c.b16 %v1526, %v1525
        %v1545 = vpack.c.b16 %v1528, %v1527
        %v1546 = vpack.c.b16 %v1530, %v1529
        %v1547 = vpack.c.b16 %v1532, %v1531
        %v1548 = vpack.c.b16 %v1534, %v1533
        %v1549 = vpack.c.b16 %v1536, %v1535
        %v1550 = vpack.c.b16 %v1538, %v1537
        %1551 = vrot.lane.b32.xlu0 %v1539, 16
        %v1552 = vpop.permute.xlu0 %1551
        %1553 = vrot.lane.b32.xlu0 %v1540, 16
        %v1554 = vpop.permute.xlu0 %1553
        %1555 = vrot.lane.b32.xlu0 %v1541, 16
        %v1556 = vpop.permute.xlu0 %1555
        %1557 = vrot.lane.b32.xlu0 %v1542, 16
        %v1558 = vpop.permute.xlu0 %1557
        %1559 = vrot.lane.b32.xlu0 %v1543, 16
        %v1560 = vpop.permute.xlu0 %1559
        %1561 = vrot.lane.b32.xlu0 %v1544, 16
        %v1562 = vpop.permute.xlu0 %1561
        %1563 = vrot.lane.b32.xlu0 %v1545, 16
        %v1564 = vpop.permute.xlu0 %1563
        %1565 = vrot.lane.b32.xlu0 %v1546, 16
        %v1566 = vpop.permute.xlu0 %1565
        %1567 = vrot.lane.b32.xlu0 %v1547, 16
        %v1568 = vpop.permute.xlu0 %1567
        %1569 = vrot.lane.b32.xlu0 %v1548, 16
        %v1570 = vpop.permute.xlu0 %1569
        %1571 = vrot.lane.b32.xlu0 %v1549, 16
        %v1572 = vpop.permute.xlu0 %1571
        %1573 = vrot.lane.b32.xlu0 %v1550, 16
        %v1574 = vpop.permute.xlu0 %1573
        %vm1587 = vcmask 261248
        %1588 = vst.msk [vmem:[#allocation2] sm:$0xff] %vm1587, %v1552
        %1589 = vst.msk [vmem:[#allocation2 + $0x20] sm:$0xff] %vm1587, %v1554
        %1590 = vst.msk [vmem:[#allocation2 + $0x40] sm:$0xff] %vm1587, %v1556
        %1591 = vst.msk [vmem:[#allocation2 + $0x60] sm:$0xff] %vm1587, %v1558
        %1592 = vst.msk [vmem:[#allocation2 + $0x80] sm:$0xff] %vm1587, %v1560
        %1593 = vst.msk [vmem:[#allocation2 + $0xa0] sm:$0xff] %vm1587, %v1562
        %1594 = vst.msk [vmem:[#allocation2 + $0xc0] sm:$0xff] %vm1587, %v1564
        %1595 = vst.msk [vmem:[#allocation2 + $0xe0] sm:$0xff] %vm1587, %v1566
        %1596 = vst.msk [vmem:[#allocation2 + $0x100] sm:$0xff] %vm1587, %v1568
        %1597 = vst.msk [vmem:[#allocation2 + $0x120] sm:$0xff] %vm1587, %v1570
        %1598 = vst.msk [vmem:[#allocation2 + $0x140] sm:$0xff] %vm1587, %v1572
        %1599 = vst.msk [vmem:[#allocation2 + $0x160] sm:$0xff] %vm1587, %v1574
        %v1608 = vrot.slane %v1364, 5
        %v1609 = vrot.slane %v1608, 4
        %v1610 = vrot.slane %v1365, 5
        %v1611 = vsel %vm405, %v1609, %v1610
        %v1612 = vrot.slane %v1610, 4
        %v1613 = vrot.slane %v1366, 5
        %v1614 = vsel %vm405, %v1612, %v1613
        %v1615 = vrot.slane %v1613, 4
        %v1616 = vrot.slane %v1367, 5
        %v1617 = vsel %vm405, %v1615, %v1616
        %v1618 = vrot.slane %v1369, 5
        %v1619 = vrot.slane %v1618, 4
        %v1620 = vrot.slane %v1370, 5
        %v1621 = vsel %vm405, %v1619, %v1620
        %v1622 = vrot.slane %v1620, 4
        %v1623 = vrot.slane %v1371, 5
        %v1624 = vsel %vm405, %v1622, %v1623
        %v1625 = vrot.slane %v1623, 4
        %v1626 = vrot.slane %v1372, 5
        %v1627 = vsel %vm405, %v1625, %v1626
        %v1628 = vrot.slane %v1374, 5
        %v1629 = vrot.slane %v1628, 4
        %v1630 = vrot.slane %v1375, 5
        %v1631 = vsel %vm405, %v1629, %v1630
        %v1632 = vrot.slane %v1630, 4
        %v1633 = vrot.slane %v1376, 5
        %v1634 = vsel %vm405, %v1632, %v1633
        %v1635 = vrot.slane %v1633, 4
        %v1636 = vrot.slane %v1377, 5
        %v1637 = vsel %vm405, %v1635, %v1636
        %v1638 = vrot.slane %v1379, 5
        %v1639 = vrot.slane %v1638, 4
        %v1640 = vrot.slane %v1380, 5
        %v1641 = vsel %vm405, %v1639, %v1640
        %v1642 = vrot.slane %v1640, 4
        %v1643 = vrot.slane %v1381, 5
        %v1644 = vsel %vm405, %v1642, %v1643
        %v1645 = vrot.slane %v1643, 4
        %v1646 = vrot.slane %v1382, 5
        %v1647 = vsel %vm405, %v1645, %v1646
        %v1648 = vrot.slane %v1384, 5
        %v1649 = vrot.slane %v1648, 4
        %v1650 = vrot.slane %v1385, 5
        %v1651 = vsel %vm405, %v1649, %v1650
        %v1652 = vrot.slane %v1650, 4
        %v1653 = vrot.slane %v1386, 5
        %v1654 = vsel %vm405, %v1652, %v1653
        %v1655 = vrot.slane %v1653, 4
        %v1656 = vrot.slane %v1387, 5
        %v1657 = vsel %vm405, %v1655, %v1656
        %v1658 = vrot.slane %v1389, 5
        %v1659 = vrot.slane %v1658, 4
        %v1660 = vrot.slane %v1390, 5
        %v1661 = vsel %vm405, %v1659, %v1660
        %v1662 = vrot.slane %v1660, 4
        %v1663 = vrot.slane %v1391, 5
        %v1664 = vsel %vm405, %v1662, %v1663
        %v1665 = vrot.slane %v1663, 4
        %v1666 = vrot.slane %v1392, 5
        %v1667 = vsel %vm405, %v1665, %v1666
        %v1668 = vrot.slane %v1394, 5
        %v1669 = vrot.slane %v1668, 4
        %v1670 = vrot.slane %v1395, 5
        %v1671 = vsel %vm405, %v1669, %v1670
        %v1672 = vrot.slane %v1670, 4
        %v1673 = vrot.slane %v1396, 5
        %v1674 = vsel %vm405, %v1672, %v1673
        %v1675 = vrot.slane %v1673, 4
        %v1676 = vrot.slane %v1397, 5
        %v1677 = vsel %vm405, %v1675, %v1676
        %v1678 = vrot.slane %v1399, 5
        %v1679 = vrot.slane %v1678, 4
        %v1680 = vrot.slane %v1400, 5
        %v1681 = vsel %vm405, %v1679, %v1680
        %v1682 = vrot.slane %v1680, 4
        %v1683 = vrot.slane %v1401, 5
        %v1684 = vsel %vm405, %v1682, %v1683
        %v1685 = vrot.slane %v1683, 4
        %v1686 = vrot.slane %v1402, 5
        %v1687 = vsel %vm405, %v1685, %v1686
        %v1688 = vunpack.c.l.b16 %v1611
        %v1689 = vunpack.c.l.b16 %v1614
        %v1690 = vunpack.c.l.b16 %v1617
        %v1691 = vunpack.c.l.b16 %v1621
        %v1692 = vunpack.c.l.b16 %v1624
        %v1693 = vunpack.c.l.b16 %v1627
        %v1694 = vunpack.c.l.b16 %v1631
        %v1695 = vunpack.c.l.b16 %v1634
        %v1696 = vunpack.c.l.b16 %v1637
        %v1697 = vunpack.c.l.b16 %v1641
        %v1698 = vunpack.c.l.b16 %v1644
        %v1699 = vunpack.c.l.b16 %v1647
        %v1700 = vunpack.c.l.b16 %v1651
        %v1701 = vunpack.c.l.b16 %v1654
        %v1702 = vunpack.c.l.b16 %v1657
        %v1703 = vunpack.c.l.b16 %v1661
        %v1704 = vunpack.c.l.b16 %v1664
        %v1705 = vunpack.c.l.b16 %v1667
        %v1706 = vunpack.c.l.b16 %v1671
        %v1707 = vunpack.c.l.b16 %v1674
        %v1708 = vunpack.c.l.b16 %v1677
        %v1709 = vunpack.c.l.b16 %v1681
        %v1710 = vunpack.c.l.b16 %v1684
        %v1711 = vunpack.c.l.b16 %v1687
        %v1712 = vpack.c.b16 %v1689, %v1688
        %v1713 = vpack.c.b16 %v1691, %v1690
        %v1714 = vpack.c.b16 %v1693, %v1692
        %v1715 = vpack.c.b16 %v1695, %v1694
        %v1716 = vpack.c.b16 %v1697, %v1696
        %v1717 = vpack.c.b16 %v1699, %v1698
        %v1718 = vpack.c.b16 %v1701, %v1700
        %v1719 = vpack.c.b16 %v1703, %v1702
        %v1720 = vpack.c.b16 %v1705, %v1704
        %v1721 = vpack.c.b16 %v1707, %v1706
        %v1722 = vpack.c.b16 %v1709, %v1708
        %v1723 = vpack.c.b16 %v1711, %v1710
        %1724 = vrot.lane.b32.xlu0 %v1712, 32
        %v1725 = vpop.permute.xlu0 %1724
        %1726 = vrot.lane.b32.xlu0 %v1713, 32
        %v1727 = vpop.permute.xlu0 %1726
        %1728 = vrot.lane.b32.xlu0 %v1714, 32
        %v1729 = vpop.permute.xlu0 %1728
        %1730 = vrot.lane.b32.xlu0 %v1715, 32
        %v1731 = vpop.permute.xlu0 %1730
        %1732 = vrot.lane.b32.xlu0 %v1716, 32
        %v1733 = vpop.permute.xlu0 %1732
        %1734 = vrot.lane.b32.xlu0 %v1717, 32
        %v1735 = vpop.permute.xlu0 %1734
        %1736 = vrot.lane.b32.xlu0 %v1718, 32
        %v1737 = vpop.permute.xlu0 %1736
        %1738 = vrot.lane.b32.xlu0 %v1719, 32
        %v1739 = vpop.permute.xlu0 %1738
        %1740 = vrot.lane.b32.xlu0 %v1720, 32
        %v1741 = vpop.permute.xlu0 %1740
        %1742 = vrot.lane.b32.xlu0 %v1721, 32
        %v1743 = vpop.permute.xlu0 %1742
        %1744 = vrot.lane.b32.xlu0 %v1722, 32
        %v1745 = vpop.permute.xlu0 %1744
        %1746 = vrot.lane.b32.xlu0 %v1723, 32
        %v1747 = vpop.permute.xlu0 %1746
        %1760 = vst.msk [vmem:[#allocation2] sm:$0xff] %vm1002, %v1725
        %1761 = vst.msk [vmem:[#allocation2 + $0x20] sm:$0xff] %vm1002, %v1727
        %1762 = vst.msk [vmem:[#allocation2 + $0x40] sm:$0xff] %vm1002, %v1729
        %1763 = vst.msk [vmem:[#allocation2 + $0x60] sm:$0xff] %vm1002, %v1731
        %1764 = vst.msk [vmem:[#allocation2 + $0x80] sm:$0xff] %vm1002, %v1733
        %1765 = vst.msk [vmem:[#allocation2 + $0xa0] sm:$0xff] %vm1002, %v1735
        %1766 = vst.msk [vmem:[#allocation2 + $0xc0] sm:$0xff] %vm1002, %v1737
        %1767 = vst.msk [vmem:[#allocation2 + $0xe0] sm:$0xff] %vm1002, %v1739
        %1768 = vst.msk [vmem:[#allocation2 + $0x100] sm:$0xff] %vm1002, %v1741
        %1769 = vst.msk [vmem:[#allocation2 + $0x120] sm:$0xff] %vm1002, %v1743
        %1770 = vst.msk [vmem:[#allocation2 + $0x140] sm:$0xff] %vm1002, %v1745
        %1771 = vst.msk [vmem:[#allocation2 + $0x160] sm:$0xff] %vm1002, %v1747
        %v1772 = vunpack.c.l.b16 %v1365
        %v1773 = vunpack.c.l.b16 %v1366
        %v1774 = vunpack.c.l.b16 %v1367
        %v1775 = vunpack.c.l.b16 %v1370
        %v1776 = vunpack.c.l.b16 %v1371
        %v1777 = vunpack.c.l.b16 %v1372
        %v1778 = vunpack.c.l.b16 %v1375
        %v1779 = vunpack.c.l.b16 %v1376
        %v1780 = vunpack.c.l.b16 %v1377
        %v1781 = vunpack.c.l.b16 %v1380
        %v1782 = vunpack.c.l.b16 %v1381
        %v1783 = vunpack.c.l.b16 %v1382
        %v1784 = vunpack.c.l.b16 %v1385
        %v1785 = vunpack.c.l.b16 %v1386
        %v1786 = vunpack.c.l.b16 %v1387
        %v1787 = vunpack.c.l.b16 %v1390
        %v1788 = vunpack.c.l.b16 %v1391
        %v1789 = vunpack.c.l.b16 %v1392
        %v1790 = vunpack.c.l.b16 %v1395
        %v1791 = vunpack.c.l.b16 %v1396
        %v1792 = vunpack.c.l.b16 %v1397
        %v1793 = vunpack.c.l.b16 %v1400
        %v1794 = vunpack.c.l.b16 %v1401
        %v1795 = vunpack.c.l.b16 %v1402
        %v1796 = vpack.c.b16 %v1773, %v1772
        %v1797 = vpack.c.b16 %v1775, %v1774
        %v1798 = vpack.c.b16 %v1777, %v1776
        %v1799 = vpack.c.b16 %v1779, %v1778
        %v1800 = vpack.c.b16 %v1781, %v1780
        %v1801 = vpack.c.b16 %v1783, %v1782
        %v1802 = vpack.c.b16 %v1785, %v1784
        %v1803 = vpack.c.b16 %v1787, %v1786
        %v1804 = vpack.c.b16 %v1789, %v1788
        %v1805 = vpack.c.b16 %v1791, %v1790
        %v1806 = vpack.c.b16 %v1793, %v1792
        %v1807 = vpack.c.b16 %v1795, %v1794
        %1808 = vrot.lane.b32.xlu0 %v1796, 48
        %v1809 = vpop.permute.xlu0 %1808
        %1810 = vrot.lane.b32.xlu0 %v1797, 48
        %v1811 = vpop.permute.xlu0 %1810
        %1812 = vrot.lane.b32.xlu0 %v1798, 48
        %v1813 = vpop.permute.xlu0 %1812
        %1814 = vrot.lane.b32.xlu0 %v1799, 48
        %v1815 = vpop.permute.xlu0 %1814
        %1816 = vrot.lane.b32.xlu0 %v1800, 48
        %v1817 = vpop.permute.xlu0 %1816
        %1818 = vrot.lane.b32.xlu0 %v1801, 48
        %v1819 = vpop.permute.xlu0 %1818
        %1820 = vrot.lane.b32.xlu0 %v1802, 48
        %v1821 = vpop.permute.xlu0 %1820
        %1822 = vrot.lane.b32.xlu0 %v1803, 48
        %v1823 = vpop.permute.xlu0 %1822
        %1824 = vrot.lane.b32.xlu0 %v1804, 48
        %v1825 = vpop.permute.xlu0 %1824
        %1826 = vrot.lane.b32.xlu0 %v1805, 48
        %v1827 = vpop.permute.xlu0 %1826
        %1828 = vrot.lane.b32.xlu0 %v1806, 48
        %v1829 = vpop.permute.xlu0 %1828
        %1830 = vrot.lane.b32.xlu0 %v1807, 48
        %v1831 = vpop.permute.xlu0 %1830
        %1844 = vst.msk [vmem:[#allocation2] sm:$0xff] %vm366, %v1809
        %1845 = vst.msk [vmem:[#allocation2 + $0x20] sm:$0xff] %vm366, %v1811
        %1846 = vst.msk [vmem:[#allocation2 + $0x40] sm:$0xff] %vm366, %v1813
        %1847 = vst.msk [vmem:[#allocation2 + $0x60] sm:$0xff] %vm366, %v1815
        %1848 = vst.msk [vmem:[#allocation2 + $0x80] sm:$0xff] %vm366, %v1817
        %1849 = vst.msk [vmem:[#allocation2 + $0xa0] sm:$0xff] %vm366, %v1819
        %1850 = vst.msk [vmem:[#allocation2 + $0xc0] sm:$0xff] %vm366, %v1821
        %1851 = vst.msk [vmem:[#allocation2 + $0xe0] sm:$0xff] %vm366, %v1823
        %1852 = vst.msk [vmem:[#allocation2 + $0x100] sm:$0xff] %vm366, %v1825
        %1853 = vst.msk [vmem:[#allocation2 + $0x120] sm:$0xff] %vm366, %v1827
        %1854 = vst.msk [vmem:[#allocation2 + $0x140] sm:$0xff] %vm366, %v1829
        %1855 = vst.msk [vmem:[#allocation2 + $0x160] sm:$0xff] %vm366, %v1831
        %s1856 = sadd.s32 %s202, 18
        %s1857 = smul.u32 %s1856, 8
        %s1858 = smul.addr %s1857, 4
        %s1859 = scalar_lea.vmem %s195, %s1858
        %v1860 = vld [vmem:[%s1859] sm:$0xf]
        %v1861 = vld [vmem:[%s1859 + $0x4] sm:$0xf]
        %v1862 = vld [vmem:[%s1859 + $0x8] sm:$0xf]
        %v1863 = vld [vmem:[%s1859 + $0xc] sm:$0xf]
        %v1864 = vld [vmem:[%s1859 + $0x10] sm:$0xf]
        %v1865 = vld [vmem:[%s1859 + $0x14] sm:$0xf]
        %v1866 = vld [vmem:[%s1859 + $0x18] sm:$0xf]
        %v1867 = vld [vmem:[%s1859 + $0x1c] sm:$0x3]
        %v1868 = vld [vmem:[%s1859 + $0x20] sm:$0xf]
        %v1869 = vld [vmem:[%s1859 + $0x24] sm:$0xf]
        %v1870 = vld [vmem:[%s1859 + $0x28] sm:$0xf]
        %v1871 = vld [vmem:[%s1859 + $0x2c] sm:$0xf]
        %v1872 = vld [vmem:[%s1859 + $0x30] sm:$0xf]
        %v1873 = vld [vmem:[%s1859 + $0x34] sm:$0xf]
        %v1874 = vld [vmem:[%s1859 + $0x38] sm:$0xf]
        %v1875 = vld [vmem:[%s1859 + $0x3c] sm:$0x3]
        %v1876 = vld [vmem:[%s1859 + $0x40] sm:$0xf]
        %v1877 = vld [vmem:[%s1859 + $0x44] sm:$0xf]
        %v1878 = vld [vmem:[%s1859 + $0x48] sm:$0xf]
        %v1879 = vld [vmem:[%s1859 + $0x4c] sm:$0xf]
        %v1880 = vld [vmem:[%s1859 + $0x50] sm:$0xf]
        %v1881 = vld [vmem:[%s1859 + $0x54] sm:$0xf]
        %v1882 = vld [vmem:[%s1859 + $0x58] sm:$0xf]
        %v1883 = vld [vmem:[%s1859 + $0x5c] sm:$0x3]
        %v1884 = vld [vmem:[%s1859 + $0x60] sm:$0xf]
        %v1885 = vld [vmem:[%s1859 + $0x64] sm:$0xf]
        %v1886 = vld [vmem:[%s1859 + $0x68] sm:$0xf]
        %v1887 = vld [vmem:[%s1859 + $0x6c] sm:$0xf]
        %v1888 = vld [vmem:[%s1859 + $0x70] sm:$0xf]
        %v1889 = vld [vmem:[%s1859 + $0x74] sm:$0xf]
        %v1890 = vld [vmem:[%s1859 + $0x78] sm:$0xf]
        %v1891 = vld [vmem:[%s1859 + $0x7c] sm:$0x3]
        %v1892 = vld [vmem:[%s1859 + $0x80] sm:$0xf]
        %v1893 = vld [vmem:[%s1859 + $0x84] sm:$0xf]
        %v1894 = vld [vmem:[%s1859 + $0x88] sm:$0xf]
        %v1895 = vld [vmem:[%s1859 + $0x8c] sm:$0xf]
        %v1896 = vld [vmem:[%s1859 + $0x90] sm:$0xf]
        %v1897 = vld [vmem:[%s1859 + $0x94] sm:$0xf]
        %v1898 = vld [vmem:[%s1859 + $0x98] sm:$0xf]
        %v1899 = vld [vmem:[%s1859 + $0x9c] sm:$0x3]
        %v1900 = vld [vmem:[%s1859 + $0xa0] sm:$0xf]
        %v1901 = vld [vmem:[%s1859 + $0xa4] sm:$0xf]
        %v1902 = vld [vmem:[%s1859 + $0xa8] sm:$0xf]
        %v1903 = vld [vmem:[%s1859 + $0xac] sm:$0xf]
        %v1904 = vld [vmem:[%s1859 + $0xb0] sm:$0xf]
        %v1905 = vld [vmem:[%s1859 + $0xb4] sm:$0xf]
        %v1906 = vld [vmem:[%s1859 + $0xb8] sm:$0xf]
        %v1907 = vld [vmem:[%s1859 + $0xbc] sm:$0x3]
        %v1908 = vld [vmem:[%s1859 + $0xc0] sm:$0xf]
        %v1909 = vld [vmem:[%s1859 + $0xc4] sm:$0xf]
        %v1910 = vld [vmem:[%s1859 + $0xc8] sm:$0xf]
        %v1911 = vld [vmem:[%s1859 + $0xcc] sm:$0xf]
        %v1912 = vld [vmem:[%s1859 + $0xd0] sm:$0xf]
        %v1913 = vld [vmem:[%s1859 + $0xd4] sm:$0xf]
        %v1914 = vld [vmem:[%s1859 + $0xd8] sm:$0xf]
        %v1915 = vld [vmem:[%s1859 + $0xdc] sm:$0x3]
        %v1916 = vld [vmem:[%s1859 + $0xe0] sm:$0xf]
        %v1917 = vld [vmem:[%s1859 + $0xe4] sm:$0xf]
        %v1918 = vld [vmem:[%s1859 + $0xe8] sm:$0xf]
        %v1919 = vld [vmem:[%s1859 + $0xec] sm:$0xf]
        %v1920 = vld [vmem:[%s1859 + $0xf0] sm:$0xf]
        %v1921 = vld [vmem:[%s1859 + $0xf4] sm:$0xf]
        %v1922 = vld [vmem:[%s1859 + $0xf8] sm:$0xf]
        %v1923 = vld [vmem:[%s1859 + $0xfc] sm:$0x3]
        %v1956 = vrot.slane %v1862, 5
        %v1957 = vrot.slane %v1956, 4
        %v1958 = vrot.slane %v1863, 5
        %v1959 = vsel %vm405, %v1957, %v1958
        %v1960 = vrot.slane %v1958, 4
        %v1961 = vrot.slane %v1864, 5
        %v1962 = vsel %vm405, %v1960, %v1961
        %v1963 = vrot.slane %v1961, 4
        %v1964 = vrot.slane %v1865, 5
        %v1965 = vsel %vm405, %v1963, %v1964
        %v1966 = vrot.slane %v1870, 5
        %v1967 = vrot.slane %v1966, 4
        %v1968 = vrot.slane %v1871, 5
        %v1969 = vsel %vm405, %v1967, %v1968
        %v1970 = vrot.slane %v1968, 4
        %v1971 = vrot.slane %v1872, 5
        %v1972 = vsel %vm405, %v1970, %v1971
        %v1973 = vrot.slane %v1971, 4
        %v1974 = vrot.slane %v1873, 5
        %v1975 = vsel %vm405, %v1973, %v1974
        %v1976 = vrot.slane %v1878, 5
        %v1977 = vrot.slane %v1976, 4
        %v1978 = vrot.slane %v1879, 5
        %v1979 = vsel %vm405, %v1977, %v1978
        %v1980 = vrot.slane %v1978, 4
        %v1981 = vrot.slane %v1880, 5
        %v1982 = vsel %vm405, %v1980, %v1981
        %v1983 = vrot.slane %v1981, 4
        %v1984 = vrot.slane %v1881, 5
        %v1985 = vsel %vm405, %v1983, %v1984
        %v1986 = vrot.slane %v1886, 5
        %v1987 = vrot.slane %v1986, 4
        %v1988 = vrot.slane %v1887, 5
        %v1989 = vsel %vm405, %v1987, %v1988
        %v1990 = vrot.slane %v1988, 4
        %v1991 = vrot.slane %v1888, 5
        %v1992 = vsel %vm405, %v1990, %v1991
        %v1993 = vrot.slane %v1991, 4
        %v1994 = vrot.slane %v1889, 5
        %v1995 = vsel %vm405, %v1993, %v1994
        %v1996 = vrot.slane %v1894, 5
        %v1997 = vrot.slane %v1996, 4
        %v1998 = vrot.slane %v1895, 5
        %v1999 = vsel %vm405, %v1997, %v1998
        %v2000 = vrot.slane %v1998, 4
        %v2001 = vrot.slane %v1896, 5
        %v2002 = vsel %vm405, %v2000, %v2001
        %v2003 = vrot.slane %v2001, 4
        %v2004 = vrot.slane %v1897, 5
        %v2005 = vsel %vm405, %v2003, %v2004
        %v2006 = vrot.slane %v1902, 5
        %v2007 = vrot.slane %v2006, 4
        %v2008 = vrot.slane %v1903, 5
        %v2009 = vsel %vm405, %v2007, %v2008
        %v2010 = vrot.slane %v2008, 4
        %v2011 = vrot.slane %v1904, 5
        %v2012 = vsel %vm405, %v2010, %v2011
        %v2013 = vrot.slane %v2011, 4
        %v2014 = vrot.slane %v1905, 5
        %v2015 = vsel %vm405, %v2013, %v2014
        %v2016 = vrot.slane %v1910, 5
        %v2017 = vrot.slane %v2016, 4
        %v2018 = vrot.slane %v1911, 5
        %v2019 = vsel %vm405, %v2017, %v2018
        %v2020 = vrot.slane %v2018, 4
        %v2021 = vrot.slane %v1912, 5
        %v2022 = vsel %vm405, %v2020, %v2021
        %v2023 = vrot.slane %v2021, 4
        %v2024 = vrot.slane %v1913, 5
        %v2025 = vsel %vm405, %v2023, %v2024
        %v2026 = vrot.slane %v1918, 5
        %v2027 = vrot.slane %v2026, 4
        %v2028 = vrot.slane %v1919, 5
        %v2029 = vsel %vm405, %v2027, %v2028
        %v2030 = vrot.slane %v2028, 4
        %v2031 = vrot.slane %v1920, 5
        %v2032 = vsel %vm405, %v2030, %v2031
        %v2033 = vrot.slane %v2031, 4
        %v2034 = vrot.slane %v1921, 5
        %v2035 = vsel %vm405, %v2033, %v2034
        %v2036 = vunpack.c.l.b16 %v1959
        %v2037 = vunpack.c.l.b16 %v1962
        %v2038 = vunpack.c.l.b16 %v1965
        %v2039 = vunpack.c.l.b16 %v1969
        %v2040 = vunpack.c.l.b16 %v1972
        %v2041 = vunpack.c.l.b16 %v1975
        %v2042 = vunpack.c.l.b16 %v1979
        %v2043 = vunpack.c.l.b16 %v1982
        %v2044 = vunpack.c.l.b16 %v1985
        %v2045 = vunpack.c.l.b16 %v1989
        %v2046 = vunpack.c.l.b16 %v1992
        %v2047 = vunpack.c.l.b16 %v1995
        %v2048 = vunpack.c.l.b16 %v1999
        %v2049 = vunpack.c.l.b16 %v2002
        %v2050 = vunpack.c.l.b16 %v2005
        %v2051 = vunpack.c.l.b16 %v2009
        %v2052 = vunpack.c.l.b16 %v2012
        %v2053 = vunpack.c.l.b16 %v2015
        %v2054 = vunpack.c.l.b16 %v2019
        %v2055 = vunpack.c.l.b16 %v2022
        %v2056 = vunpack.c.l.b16 %v2025
        %v2057 = vunpack.c.l.b16 %v2029
        %v2058 = vunpack.c.l.b16 %v2032
        %v2059 = vunpack.c.l.b16 %v2035
        %v2060 = vpack.c.b16 %v2037, %v2036
        %v2061 = vpack.c.b16 %v2039, %v2038
        %v2062 = vpack.c.b16 %v2041, %v2040
        %v2063 = vpack.c.b16 %v2043, %v2042
        %v2064 = vpack.c.b16 %v2045, %v2044
        %v2065 = vpack.c.b16 %v2047, %v2046
        %v2066 = vpack.c.b16 %v2049, %v2048
        %v2067 = vpack.c.b16 %v2051, %v2050
        %v2068 = vpack.c.b16 %v2053, %v2052
        %v2069 = vpack.c.b16 %v2055, %v2054
        %v2070 = vpack.c.b16 %v2057, %v2056
        %v2071 = vpack.c.b16 %v2059, %v2058
        %vm2084 = vcmask 130048
        %2085 = vst.msk [vmem:[#allocation2] sm:$0xff] %vm2084, %v2060
        %2086 = vst.msk [vmem:[#allocation2 + $0x20] sm:$0xff] %vm2084, %v2061
        %2087 = vst.msk [vmem:[#allocation2 + $0x40] sm:$0xff] %vm2084, %v2062
        %2088 = vst.msk [vmem:[#allocation2 + $0x60] sm:$0xff] %vm2084, %v2063
        %2089 = vst.msk [vmem:[#allocation2 + $0x80] sm:$0xff] %vm2084, %v2064
        %2090 = vst.msk [vmem:[#allocation2 + $0xa0] sm:$0xff] %vm2084, %v2065
        %2091 = vst.msk [vmem:[#allocation2 + $0xc0] sm:$0xff] %vm2084, %v2066
        %2092 = vst.msk [vmem:[#allocation2 + $0xe0] sm:$0xff] %vm2084, %v2067
        %2093 = vst.msk [vmem:[#allocation2 + $0x100] sm:$0xff] %vm2084, %v2068
        %2094 = vst.msk [vmem:[#allocation2 + $0x120] sm:$0xff] %vm2084, %v2069
        %2095 = vst.msk [vmem:[#allocation2 + $0x140] sm:$0xff] %vm2084, %v2070
        %2096 = vst.msk [vmem:[#allocation2 + $0x160] sm:$0xff] %vm2084, %v2071
        %v2105 = vrot.slane %v1861, 6
        %v2106 = vrot.slane %v2105, 4
        %v2107 = vrot.slane %v1862, 6
        %v2108 = vsel %vm589, %v2106, %v2107
        %v2109 = vrot.slane %v2107, 4
        %v2110 = vrot.slane %v1863, 6
        %v2111 = vsel %vm589, %v2109, %v2110
        %v2112 = vrot.slane %v2110, 4
        %v2113 = vrot.slane %v1864, 6
        %v2114 = vsel %vm589, %v2112, %v2113
        %v2115 = vrot.slane %v1869, 6
        %v2116 = vrot.slane %v2115, 4
        %v2117 = vrot.slane %v1870, 6
        %v2118 = vsel %vm589, %v2116, %v2117
        %v2119 = vrot.slane %v2117, 4
        %v2120 = vrot.slane %v1871, 6
        %v2121 = vsel %vm589, %v2119, %v2120
        %v2122 = vrot.slane %v2120, 4
        %v2123 = vrot.slane %v1872, 6
        %v2124 = vsel %vm589, %v2122, %v2123
        %v2125 = vrot.slane %v1877, 6
        %v2126 = vrot.slane %v2125, 4
        %v2127 = vrot.slane %v1878, 6
        %v2128 = vsel %vm589, %v2126, %v2127
        %v2129 = vrot.slane %v2127, 4
        %v2130 = vrot.slane %v1879, 6
        %v2131 = vsel %vm589, %v2129, %v2130
        %v2132 = vrot.slane %v2130, 4
        %v2133 = vrot.slane %v1880, 6
        %v2134 = vsel %vm589, %v2132, %v2133
        %v2135 = vrot.slane %v1885, 6
        %v2136 = vrot.slane %v2135, 4
        %v2137 = vrot.slane %v1886, 6
        %v2138 = vsel %vm589, %v2136, %v2137
        %v2139 = vrot.slane %v2137, 4
        %v2140 = vrot.slane %v1887, 6
        %v2141 = vsel %vm589, %v2139, %v2140
        %v2142 = vrot.slane %v2140, 4
        %v2143 = vrot.slane %v1888, 6
        %v2144 = vsel %vm589, %v2142, %v2143
        %v2145 = vrot.slane %v1893, 6
        %v2146 = vrot.slane %v2145, 4
        %v2147 = vrot.slane %v1894, 6
        %v2148 = vsel %vm589, %v2146, %v2147
        %v2149 = vrot.slane %v2147, 4
        %v2150 = vrot.slane %v1895, 6
        %v2151 = vsel %vm589, %v2149, %v2150
        %v2152 = vrot.slane %v2150, 4
        %v2153 = vrot.slane %v1896, 6
        %v2154 = vsel %vm589, %v2152, %v2153
        %v2155 = vrot.slane %v1901, 6
        %v2156 = vrot.slane %v2155, 4
        %v2157 = vrot.slane %v1902, 6
        %v2158 = vsel %vm589, %v2156, %v2157
        %v2159 = vrot.slane %v2157, 4
        %v2160 = vrot.slane %v1903, 6
        %v2161 = vsel %vm589, %v2159, %v2160
        %v2162 = vrot.slane %v2160, 4
        %v2163 = vrot.slane %v1904, 6
        %v2164 = vsel %vm589, %v2162, %v2163
        %v2165 = vrot.slane %v1909, 6
        %v2166 = vrot.slane %v2165, 4
        %v2167 = vrot.slane %v1910, 6
        %v2168 = vsel %vm589, %v2166, %v2167
        %v2169 = vrot.slane %v2167, 4
        %v2170 = vrot.slane %v1911, 6
        %v2171 = vsel %vm589, %v2169, %v2170
        %v2172 = vrot.slane %v2170, 4
        %v2173 = vrot.slane %v1912, 6
        %v2174 = vsel %vm589, %v2172, %v2173
        %v2175 = vrot.slane %v1917, 6
        %v2176 = vrot.slane %v2175, 4
        %v2177 = vrot.slane %v1918, 6
        %v2178 = vsel %vm589, %v2176, %v2177
        %v2179 = vrot.slane %v2177, 4
        %v2180 = vrot.slane %v1919, 6
        %v2181 = vsel %vm589, %v2179, %v2180
        %v2182 = vrot.slane %v2180, 4
        %v2183 = vrot.slane %v1920, 6
        %v2184 = vsel %vm589, %v2182, %v2183
        %v2185 = vunpack.c.l.b16 %v2108
        %v2186 = vunpack.c.l.b16 %v2111
        %v2187 = vunpack.c.l.b16 %v2114
        %v2188 = vunpack.c.l.b16 %v2118
        %v2189 = vunpack.c.l.b16 %v2121
        %v2190 = vunpack.c.l.b16 %v2124
        %v2191 = vunpack.c.l.b16 %v2128
        %v2192 = vunpack.c.l.b16 %v2131
        %v2193 = vunpack.c.l.b16 %v2134
        %v2194 = vunpack.c.l.b16 %v2138
        %v2195 = vunpack.c.l.b16 %v2141
        %v2196 = vunpack.c.l.b16 %v2144
        %v2197 = vunpack.c.l.b16 %v2148
        %v2198 = vunpack.c.l.b16 %v2151
        %v2199 = vunpack.c.l.b16 %v2154
        %v2200 = vunpack.c.l.b16 %v2158
        %v2201 = vunpack.c.l.b16 %v2161
        %v2202 = vunpack.c.l.b16 %v2164
        %v2203 = vunpack.c.l.b16 %v2168
        %v2204 = vunpack.c.l.b16 %v2171
        %v2205 = vunpack.c.l.b16 %v2174
        %v2206 = vunpack.c.l.b16 %v2178
        %v2207 = vunpack.c.l.b16 %v2181
        %v2208 = vunpack.c.l.b16 %v2184
        %v2209 = vpack.c.b16 %v2186, %v2185
        %v2210 = vpack.c.b16 %v2188, %v2187
        %v2211 = vpack.c.b16 %v2190, %v2189
        %v2212 = vpack.c.b16 %v2192, %v2191
        %v2213 = vpack.c.b16 %v2194, %v2193
        %v2214 = vpack.c.b16 %v2196, %v2195
        %v2215 = vpack.c.b16 %v2198, %v2197
        %v2216 = vpack.c.b16 %v2200, %v2199
        %v2217 = vpack.c.b16 %v2202, %v2201
        %v2218 = vpack.c.b16 %v2204, %v2203
        %v2219 = vpack.c.b16 %v2206, %v2205
        %v2220 = vpack.c.b16 %v2208, %v2207
        %2221 = vrot.lane.b32.xlu0 %v2209, 64
        %v2222 = vpop.permute.xlu0 %2221
        %2223 = vrot.lane.b32.xlu0 %v2210, 64
        %v2224 = vpop.permute.xlu0 %2223
        %2225 = vrot.lane.b32.xlu0 %v2211, 64
        %v2226 = vpop.permute.xlu0 %2225
        %2227 = vrot.lane.b32.xlu0 %v2212, 64
        %v2228 = vpop.permute.xlu0 %2227
        %2229 = vrot.lane.b32.xlu0 %v2213, 64
        %v2230 = vpop.permute.xlu0 %2229
        %2231 = vrot.lane.b32.xlu0 %v2214, 64
        %v2232 = vpop.permute.xlu0 %2231
        %2233 = vrot.lane.b32.xlu0 %v2215, 64
        %v2234 = vpop.permute.xlu0 %2233
        %2235 = vrot.lane.b32.xlu0 %v2216, 64
        %v2236 = vpop.permute.xlu0 %2235
        %2237 = vrot.lane.b32.xlu0 %v2217, 64
        %v2238 = vpop.permute.xlu0 %2237
        %2239 = vrot.lane.b32.xlu0 %v2218, 64
        %v2240 = vpop.permute.xlu0 %2239
        %2241 = vrot.lane.b32.xlu0 %v2219, 64
        %v2242 = vpop.permute.xlu0 %2241
        %2243 = vrot.lane.b32.xlu0 %v2220, 64
        %v2244 = vpop.permute.xlu0 %2243
        %2257 = vst.msk [vmem:[#allocation2] sm:$0xff] %vm558, %v2222
        %2258 = vst.msk [vmem:[#allocation2 + $0x20] sm:$0xff] %vm558, %v2224
        %2259 = vst.msk [vmem:[#allocation2 + $0x40] sm:$0xff] %vm558, %v2226
        %2260 = vst.msk [vmem:[#allocation2 + $0x60] sm:$0xff] %vm558, %v2228
        %2261 = vst.msk [vmem:[#allocation2 + $0x80] sm:$0xff] %vm558, %v2230
        %2262 = vst.msk [vmem:[#allocation2 + $0xa0] sm:$0xff] %vm558, %v2232
        %2263 = vst.msk [vmem:[#allocation2 + $0xc0] sm:$0xff] %vm558, %v2234
        %2264 = vst.msk [vmem:[#allocation2 + $0xe0] sm:$0xff] %vm558, %v2236
        %2265 = vst.msk [vmem:[#allocation2 + $0x100] sm:$0xff] %vm558, %v2238
        %2266 = vst.msk [vmem:[#allocation2 + $0x120] sm:$0xff] %vm558, %v2240
        %2267 = vst.msk [vmem:[#allocation2 + $0x140] sm:$0xff] %vm558, %v2242
        %2268 = vst.msk [vmem:[#allocation2 + $0x160] sm:$0xff] %vm558, %v2244
        %2269 = vrot.lane.b32.xlu0 %v2060, 80
        %v2270 = vpop.permute.xlu0 %2269
        %2271 = vrot.lane.b32.xlu0 %v2061, 80
        %v2272 = vpop.permute.xlu0 %2271
        %2273 = vrot.lane.b32.xlu0 %v2062, 80
        %v2274 = vpop.permute.xlu0 %2273
        %2275 = vrot.lane.b32.xlu0 %v2063, 80
        %v2276 = vpop.permute.xlu0 %2275
        %2277 = vrot.lane.b32.xlu0 %v2064, 80
        %v2278 = vpop.permute.xlu0 %2277
        %2279 = vrot.lane.b32.xlu0 %v2065, 80
        %v2280 = vpop.permute.xlu0 %2279
        %2281 = vrot.lane.b32.xlu0 %v2066, 80
        %v2282 = vpop.permute.xlu0 %2281
        %2283 = vrot.lane.b32.xlu0 %v2067, 80
        %v2284 = vpop.permute.xlu0 %2283
        %2285 = vrot.lane.b32.xlu0 %v2068, 80
        %v2286 = vpop.permute.xlu0 %2285
        %2287 = vrot.lane.b32.xlu0 %v2069, 80
        %v2288 = vpop.permute.xlu0 %2287
        %2289 = vrot.lane.b32.xlu0 %v2070, 80
        %v2290 = vpop.permute.xlu0 %2289
        %2291 = vrot.lane.b32.xlu0 %v2071, 80
        %v2292 = vpop.permute.xlu0 %2291
        %2305 = vst.msk [vmem:[#allocation2] sm:$0xff] %vm742, %v2270
        %2306 = vst.msk [vmem:[#allocation2 + $0x20] sm:$0xff] %vm742, %v2272
        %2307 = vst.msk [vmem:[#allocation2 + $0x40] sm:$0xff] %vm742, %v2274
        %2308 = vst.msk [vmem:[#allocation2 + $0x60] sm:$0xff] %vm742, %v2276
        %2309 = vst.msk [vmem:[#allocation2 + $0x80] sm:$0xff] %vm742, %v2278
        %2310 = vst.msk [vmem:[#allocation2 + $0xa0] sm:$0xff] %vm742, %v2280
        %2311 = vst.msk [vmem:[#allocation2 + $0xc0] sm:$0xff] %vm742, %v2282
        %2312 = vst.msk [vmem:[#allocation2 + $0xe0] sm:$0xff] %vm742, %v2284
        %2313 = vst.msk [vmem:[#allocation2 + $0x100] sm:$0xff] %vm742, %v2286
        %2314 = vst.msk [vmem:[#allocation2 + $0x120] sm:$0xff] %vm742, %v2288
        %2315 = vst.msk [vmem:[#allocation2 + $0x140] sm:$0xff] %vm742, %v2290
        %2316 = vst.msk [vmem:[#allocation2 + $0x160] sm:$0xff] %vm742, %v2292
        %v2317 = vunpack.c.l.b16 %v1863
        %v2318 = vunpack.c.l.b16 %v1864
        %v2319 = vunpack.c.l.b16 %v1865
        %v2320 = vunpack.c.l.b16 %v1871
        %v2321 = vunpack.c.l.b16 %v1872
        %v2322 = vunpack.c.l.b16 %v1873
        %v2323 = vunpack.c.l.b16 %v1879
        %v2324 = vunpack.c.l.b16 %v1880
        %v2325 = vunpack.c.l.b16 %v1881
        %v2326 = vunpack.c.l.b16 %v1887
        %v2327 = vunpack.c.l.b16 %v1888
        %v2328 = vunpack.c.l.b16 %v1889
        %v2329 = vunpack.c.l.b16 %v1895
        %v2330 = vunpack.c.l.b16 %v1896
        %v2331 = vunpack.c.l.b16 %v1897
        %v2332 = vunpack.c.l.b16 %v1903
        %v2333 = vunpack.c.l.b16 %v1904
        %v2334 = vunpack.c.l.b16 %v1905
        %v2335 = vunpack.c.l.b16 %v1911
        %v2336 = vunpack.c.l.b16 %v1912
        %v2337 = vunpack.c.l.b16 %v1913
        %v2338 = vunpack.c.l.b16 %v1919
        %v2339 = vunpack.c.l.b16 %v1920
        %v2340 = vunpack.c.l.b16 %v1921
        %v2341 = vpack.c.b16 %v2318, %v2317
        %v2342 = vpack.c.b16 %v2320, %v2319
        %v2343 = vpack.c.b16 %v2322, %v2321
        %v2344 = vpack.c.b16 %v2324, %v2323
        %v2345 = vpack.c.b16 %v2326, %v2325
        %v2346 = vpack.c.b16 %v2328, %v2327
        %v2347 = vpack.c.b16 %v2330, %v2329
        %v2348 = vpack.c.b16 %v2332, %v2331
        %v2349 = vpack.c.b16 %v2334, %v2333
        %v2350 = vpack.c.b16 %v2336, %v2335
        %v2351 = vpack.c.b16 %v2338, %v2337
        %v2352 = vpack.c.b16 %v2340, %v2339
        %2353 = vrot.lane.b32.xlu0 %v2341, 96
        %v2354 = vpop.permute.xlu0 %2353
        %2355 = vrot.lane.b32.xlu0 %v2342, 96
        %v2356 = vpop.permute.xlu0 %2355
        %2357 = vrot.lane.b32.xlu0 %v2343, 96
        %v2358 = vpop.permute.xlu0 %2357
        %2359 = vrot.lane.b32.xlu0 %v2344, 96
        %v2360 = vpop.permute.xlu0 %2359
        %2361 = vrot.lane.b32.xlu0 %v2345, 96
        %v2362 = vpop.permute.xlu0 %2361
        %2363 = vrot.lane.b32.xlu0 %v2346, 96
        %v2364 = vpop.permute.xlu0 %2363
        %2365 = vrot.lane.b32.xlu0 %v2347, 96
        %v2366 = vpop.permute.xlu0 %2365
        %2367 = vrot.lane.b32.xlu0 %v2348, 96
        %v2368 = vpop.permute.xlu0 %2367
        %2369 = vrot.lane.b32.xlu0 %v2349, 96
        %v2370 = vpop.permute.xlu0 %2369
        %2371 = vrot.lane.b32.xlu0 %v2350, 96
        %v2372 = vpop.permute.xlu0 %2371
        %2373 = vrot.lane.b32.xlu0 %v2351, 96
        %v2374 = vpop.permute.xlu0 %2373
        %2375 = vrot.lane.b32.xlu0 %v2352, 96
        %v2376 = vpop.permute.xlu0 %2375
        %vm2389 = vcmask 917248
        %2390 = vst.msk [vmem:[#allocation2] sm:$0xff] %vm2389, %v2354
        %2391 = vst.msk [vmem:[#allocation2 + $0x20] sm:$0xff] %vm2389, %v2356
        %2392 = vst.msk [vmem:[#allocation2 + $0x40] sm:$0xff] %vm2389, %v2358
        %2393 = vst.msk [vmem:[#allocation2 + $0x60] sm:$0xff] %vm2389, %v2360
        %2394 = vst.msk [vmem:[#allocation2 + $0x80] sm:$0xff] %vm2389, %v2362
        %2395 = vst.msk [vmem:[#allocation2 + $0xa0] sm:$0xff] %vm2389, %v2364
        %2396 = vst.msk [vmem:[#allocation2 + $0xc0] sm:$0xff] %vm2389, %v2366
        %2397 = vst.msk [vmem:[#allocation2 + $0xe0] sm:$0xff] %vm2389, %v2368
        %2398 = vst.msk [vmem:[#allocation2 + $0x100] sm:$0xff] %vm2389, %v2370
        %2399 = vst.msk [vmem:[#allocation2 + $0x120] sm:$0xff] %vm2389, %v2372
        %2400 = vst.msk [vmem:[#allocation2 + $0x140] sm:$0xff] %vm2389, %v2374
        %2401 = vst.msk [vmem:[#allocation2 + $0x160] sm:$0xff] %vm2389, %v2376
        %v2410 = vrot.slane %v1860, 7
        %v2411 = vrot.slane %v2410, 4
        %v2412 = vrot.slane %v1861, 7
        %v2413 = vsel %vm849, %v2411, %v2412
        %v2414 = vrot.slane %v2412, 4
        %v2415 = vrot.slane %v1862, 7
        %v2416 = vsel %vm849, %v2414, %v2415
        %v2417 = vrot.slane %v2415, 4
        %v2418 = vrot.slane %v1863, 7
        %v2419 = vsel %vm849, %v2417, %v2418
        %v2420 = vrot.slane %v1868, 7
        %v2421 = vrot.slane %v2420, 4
        %v2422 = vrot.slane %v1869, 7
        %v2423 = vsel %vm849, %v2421, %v2422
        %v2424 = vrot.slane %v2422, 4
        %v2425 = vrot.slane %v1870, 7
        %v2426 = vsel %vm849, %v2424, %v2425
        %v2427 = vrot.slane %v2425, 4
        %v2428 = vrot.slane %v1871, 7
        %v2429 = vsel %vm849, %v2427, %v2428
        %v2430 = vrot.slane %v1876, 7
        %v2431 = vrot.slane %v2430, 4
        %v2432 = vrot.slane %v1877, 7
        %v2433 = vsel %vm849, %v2431, %v2432
        %v2434 = vrot.slane %v2432, 4
        %v2435 = vrot.slane %v1878, 7
        %v2436 = vsel %vm849, %v2434, %v2435
        %v2437 = vrot.slane %v2435, 4
        %v2438 = vrot.slane %v1879, 7
        %v2439 = vsel %vm849, %v2437, %v2438
        %v2440 = vrot.slane %v1884, 7
        %v2441 = vrot.slane %v2440, 4
        %v2442 = vrot.slane %v1885, 7
        %v2443 = vsel %vm849, %v2441, %v2442
        %v2444 = vrot.slane %v2442, 4
        %v2445 = vrot.slane %v1886, 7
        %v2446 = vsel %vm849, %v2444, %v2445
        %v2447 = vrot.slane %v2445, 4
        %v2448 = vrot.slane %v1887, 7
        %v2449 = vsel %vm849, %v2447, %v2448
        %v2450 = vrot.slane %v1892, 7
        %v2451 = vrot.slane %v2450, 4
        %v2452 = vrot.slane %v1893, 7
        %v2453 = vsel %vm849, %v2451, %v2452
        %v2454 = vrot.slane %v2452, 4
        %v2455 = vrot.slane %v1894, 7
        %v2456 = vsel %vm849, %v2454, %v2455
        %v2457 = vrot.slane %v2455, 4
        %v2458 = vrot.slane %v1895, 7
        %v2459 = vsel %vm849, %v2457, %v2458
        %v2460 = vrot.slane %v1900, 7
        %v2461 = vrot.slane %v2460, 4
        %v2462 = vrot.slane %v1901, 7
        %v2463 = vsel %vm849, %v2461, %v2462
        %v2464 = vrot.slane %v2462, 4
        %v2465 = vrot.slane %v1902, 7
        %v2466 = vsel %vm849, %v2464, %v2465
        %v2467 = vrot.slane %v2465, 4
        %v2468 = vrot.slane %v1903, 7
        %v2469 = vsel %vm849, %v2467, %v2468
        %v2470 = vrot.slane %v1908, 7
        %v2471 = vrot.slane %v2470, 4
        %v2472 = vrot.slane %v1909, 7
        %v2473 = vsel %vm849, %v2471, %v2472
        %v2474 = vrot.slane %v2472, 4
        %v2475 = vrot.slane %v1910, 7
        %v2476 = vsel %vm849, %v2474, %v2475
        %v2477 = vrot.slane %v2475, 4
        %v2478 = vrot.slane %v1911, 7
        %v2479 = vsel %vm849, %v2477, %v2478
        %v2480 = vrot.slane %v1916, 7
        %v2481 = vrot.slane %v2480, 4
        %v2482 = vrot.slane %v1917, 7
        %v2483 = vsel %vm849, %v2481, %v2482
        %v2484 = vrot.slane %v2482, 4
        %v2485 = vrot.slane %v1918, 7
        %v2486 = vsel %vm849, %v2484, %v2485
        %v2487 = vrot.slane %v2485, 4
        %v2488 = vrot.slane %v1919, 7
        %v2489 = vsel %vm849, %v2487, %v2488
        %v2490 = vunpack.c.l.b16 %v2413
        %v2491 = vunpack.c.l.b16 %v2416
        %v2492 = vunpack.c.l.b16 %v2419
        %v2493 = vunpack.c.l.b16 %v2423
        %v2494 = vunpack.c.l.b16 %v2426
        %v2495 = vunpack.c.l.b16 %v2429
        %v2496 = vunpack.c.l.b16 %v2433
        %v2497 = vunpack.c.l.b16 %v2436
        %v2498 = vunpack.c.l.b16 %v2439
        %v2499 = vunpack.c.l.b16 %v2443
        %v2500 = vunpack.c.l.b16 %v2446
        %v2501 = vunpack.c.l.b16 %v2449
        %v2502 = vunpack.c.l.b16 %v2453
        %v2503 = vunpack.c.l.b16 %v2456
        %v2504 = vunpack.c.l.b16 %v2459
        %v2505 = vunpack.c.l.b16 %v2463
        %v2506 = vunpack.c.l.b16 %v2466
        %v2507 = vunpack.c.l.b16 %v2469
        %v2508 = vunpack.c.l.b16 %v2473
        %v2509 = vunpack.c.l.b16 %v2476
        %v2510 = vunpack.c.l.b16 %v2479
        %v2511 = vunpack.c.l.b16 %v2483
        %v2512 = vunpack.c.l.b16 %v2486
        %v2513 = vunpack.c.l.b16 %v2489
        %v2514 = vpack.c.b16 %v2491, %v2490
        %v2515 = vpack.c.b16 %v2493, %v2492
        %v2516 = vpack.c.b16 %v2495, %v2494
        %v2517 = vpack.c.b16 %v2497, %v2496
        %v2518 = vpack.c.b16 %v2499, %v2498
        %v2519 = vpack.c.b16 %v2501, %v2500
        %v2520 = vpack.c.b16 %v2503, %v2502
        %v2521 = vpack.c.b16 %v2505, %v2504
        %v2522 = vpack.c.b16 %v2507, %v2506
        %v2523 = vpack.c.b16 %v2509, %v2508
        %v2524 = vpack.c.b16 %v2511, %v2510
        %v2525 = vpack.c.b16 %v2513, %v2512
        %2526 = vrot.lane.b32.xlu0 %v2514, 80
        %v2527 = vpop.permute.xlu0 %2526
        %2528 = vrot.lane.b32.xlu0 %v2515, 80
        %v2529 = vpop.permute.xlu0 %2528
        %2530 = vrot.lane.b32.xlu0 %v2516, 80
        %v2531 = vpop.permute.xlu0 %2530
        %2532 = vrot.lane.b32.xlu0 %v2517, 80
        %v2533 = vpop.permute.xlu0 %2532
        %2534 = vrot.lane.b32.xlu0 %v2518, 80
        %v2535 = vpop.permute.xlu0 %2534
        %2536 = vrot.lane.b32.xlu0 %v2519, 80
        %v2537 = vpop.permute.xlu0 %2536
        %2538 = vrot.lane.b32.xlu0 %v2520, 80
        %v2539 = vpop.permute.xlu0 %2538
        %2540 = vrot.lane.b32.xlu0 %v2521, 80
        %v2541 = vpop.permute.xlu0 %2540
        %2542 = vrot.lane.b32.xlu0 %v2522, 80
        %v2543 = vpop.permute.xlu0 %2542
        %2544 = vrot.lane.b32.xlu0 %v2523, 80
        %v2545 = vpop.permute.xlu0 %2544
        %2546 = vrot.lane.b32.xlu0 %v2524, 80
        %v2547 = vpop.permute.xlu0 %2546
        %2548 = vrot.lane.b32.xlu0 %v2525, 80
        %v2549 = vpop.permute.xlu0 %2548
        %2562 = vst.msk [vmem:[#allocation2 + $0x8] sm:$0xff] %vm742, %v2527
        %2563 = vst.msk [vmem:[#allocation2 + $0x28] sm:$0xff] %vm742, %v2529
        %2564 = vst.msk [vmem:[#allocation2 + $0x48] sm:$0xff] %vm742, %v2531
        %2565 = vst.msk [vmem:[#allocation2 + $0x68] sm:$0xff] %vm742, %v2533
        %2566 = vst.msk [vmem:[#allocation2 + $0x88] sm:$0xff] %vm742, %v2535
        %2567 = vst.msk [vmem:[#allocation2 + $0xa8] sm:$0xff] %vm742, %v2537
        %2568 = vst.msk [vmem:[#allocation2 + $0xc8] sm:$0xff] %vm742, %v2539
        %2569 = vst.msk [vmem:[#allocation2 + $0xe8] sm:$0xff] %vm742, %v2541
        %2570 = vst.msk [vmem:[#allocation2 + $0x108] sm:$0xff] %vm742, %v2543
        %2571 = vst.msk [vmem:[#allocation2 + $0x128] sm:$0xff] %vm742, %v2545
        %2572 = vst.msk [vmem:[#allocation2 + $0x148] sm:$0xff] %vm742, %v2547
        %2573 = vst.msk [vmem:[#allocation2 + $0x168] sm:$0xff] %vm742, %v2549
        %2574 = vrot.lane.b32.xlu0 %v2060, 96
        %v2575 = vpop.permute.xlu0 %2574
        %2576 = vrot.lane.b32.xlu0 %v2061, 96
        %v2577 = vpop.permute.xlu0 %2576
        %2578 = vrot.lane.b32.xlu0 %v2062, 96
        %v2579 = vpop.permute.xlu0 %2578
        %2580 = vrot.lane.b32.xlu0 %v2063, 96
        %v2581 = vpop.permute.xlu0 %2580
        %2582 = vrot.lane.b32.xlu0 %v2064, 96
        %v2583 = vpop.permute.xlu0 %2582
        %2584 = vrot.lane.b32.xlu0 %v2065, 96
        %v2585 = vpop.permute.xlu0 %2584
        %2586 = vrot.lane.b32.xlu0 %v2066, 96
        %v2587 = vpop.permute.xlu0 %2586
        %2588 = vrot.lane.b32.xlu0 %v2067, 96
        %v2589 = vpop.permute.xlu0 %2588
        %2590 = vrot.lane.b32.xlu0 %v2068, 96
        %v2591 = vpop.permute.xlu0 %2590
        %2592 = vrot.lane.b32.xlu0 %v2069, 96
        %v2593 = vpop.permute.xlu0 %2592
        %2594 = vrot.lane.b32.xlu0 %v2070, 96
        %v2595 = vpop.permute.xlu0 %2594
        %2596 = vrot.lane.b32.xlu0 %v2071, 96
        %v2597 = vpop.permute.xlu0 %2596
        %2610 = vst.msk [vmem:[#allocation2 + $0x8] sm:$0xff] %vm2389, %v2575
        %2611 = vst.msk [vmem:[#allocation2 + $0x28] sm:$0xff] %vm2389, %v2577
        %2612 = vst.msk [vmem:[#allocation2 + $0x48] sm:$0xff] %vm2389, %v2579
        %2613 = vst.msk [vmem:[#allocation2 + $0x68] sm:$0xff] %vm2389, %v2581
        %2614 = vst.msk [vmem:[#allocation2 + $0x88] sm:$0xff] %vm2389, %v2583
        %2615 = vst.msk [vmem:[#allocation2 + $0xa8] sm:$0xff] %vm2389, %v2585
        %2616 = vst.msk [vmem:[#allocation2 + $0xc8] sm:$0xff] %vm2389, %v2587
        %2617 = vst.msk [vmem:[#allocation2 + $0xe8] sm:$0xff] %vm2389, %v2589
        %2618 = vst.msk [vmem:[#allocation2 + $0x108] sm:$0xff] %vm2389, %v2591
        %2619 = vst.msk [vmem:[#allocation2 + $0x128] sm:$0xff] %vm2389, %v2593
        %2620 = vst.msk [vmem:[#allocation2 + $0x148] sm:$0xff] %vm2389, %v2595
        %2621 = vst.msk [vmem:[#allocation2 + $0x168] sm:$0xff] %vm2389, %v2597
        %v2630 = vrot.slane %v2418, 4
        %v2631 = vrot.slane %v1864, 7
        %v2632 = vsel %vm849, %v2630, %v2631
        %v2633 = vrot.slane %v2631, 4
        %v2634 = vrot.slane %v1865, 7
        %v2635 = vsel %vm849, %v2633, %v2634
        %v2636 = vrot.slane %v2634, 4
        %v2637 = vrot.slane %v1866, 7
        %v2638 = vsel %vm849, %v2636, %v2637
        %v2639 = vrot.slane %v2428, 4
        %v2640 = vrot.slane %v1872, 7
        %v2641 = vsel %vm849, %v2639, %v2640
        %v2642 = vrot.slane %v2640, 4
        %v2643 = vrot.slane %v1873, 7
        %v2644 = vsel %vm849, %v2642, %v2643
        %v2645 = vrot.slane %v2643, 4
        %v2646 = vrot.slane %v1874, 7
        %v2647 = vsel %vm849, %v2645, %v2646
        %v2648 = vrot.slane %v2438, 4
        %v2649 = vrot.slane %v1880, 7
        %v2650 = vsel %vm849, %v2648, %v2649
        %v2651 = vrot.slane %v2649, 4
        %v2652 = vrot.slane %v1881, 7
        %v2653 = vsel %vm849, %v2651, %v2652
        %v2654 = vrot.slane %v2652, 4
        %v2655 = vrot.slane %v1882, 7
        %v2656 = vsel %vm849, %v2654, %v2655
        %v2657 = vrot.slane %v2448, 4
        %v2658 = vrot.slane %v1888, 7
        %v2659 = vsel %vm849, %v2657, %v2658
        %v2660 = vrot.slane %v2658, 4
        %v2661 = vrot.slane %v1889, 7
        %v2662 = vsel %vm849, %v2660, %v2661
        %v2663 = vrot.slane %v2661, 4
        %v2664 = vrot.slane %v1890, 7
        %v2665 = vsel %vm849, %v2663, %v2664
        %v2666 = vrot.slane %v2458, 4
        %v2667 = vrot.slane %v1896, 7
        %v2668 = vsel %vm849, %v2666, %v2667
        %v2669 = vrot.slane %v2667, 4
        %v2670 = vrot.slane %v1897, 7
        %v2671 = vsel %vm849, %v2669, %v2670
        %v2672 = vrot.slane %v2670, 4
        %v2673 = vrot.slane %v1898, 7
        %v2674 = vsel %vm849, %v2672, %v2673
        %v2675 = vrot.slane %v2468, 4
        %v2676 = vrot.slane %v1904, 7
        %v2677 = vsel %vm849, %v2675, %v2676
        %v2678 = vrot.slane %v2676, 4
        %v2679 = vrot.slane %v1905, 7
        %v2680 = vsel %vm849, %v2678, %v2679
        %v2681 = vrot.slane %v2679, 4
        %v2682 = vrot.slane %v1906, 7
        %v2683 = vsel %vm849, %v2681, %v2682
        %v2684 = vrot.slane %v2478, 4
        %v2685 = vrot.slane %v1912, 7
        %v2686 = vsel %vm849, %v2684, %v2685
        %v2687 = vrot.slane %v2685, 4
        %v2688 = vrot.slane %v1913, 7
        %v2689 = vsel %vm849, %v2687, %v2688
        %v2690 = vrot.slane %v2688, 4
        %v2691 = vrot.slane %v1914, 7
        %v2692 = vsel %vm849, %v2690, %v2691
        %v2693 = vrot.slane %v2488, 4
        %v2694 = vrot.slane %v1920, 7
        %v2695 = vsel %vm849, %v2693, %v2694
        %v2696 = vrot.slane %v2694, 4
        %v2697 = vrot.slane %v1921, 7
        %v2698 = vsel %vm849, %v2696, %v2697
        %v2699 = vrot.slane %v2697, 4
        %v2700 = vrot.slane %v1922, 7
        %v2701 = vsel %vm849, %v2699, %v2700
        %v2702 = vunpack.c.l.b16 %v2632
        %v2703 = vunpack.c.l.b16 %v2635
        %v2704 = vunpack.c.l.b16 %v2638
        %v2705 = vunpack.c.l.b16 %v2641
        %v2706 = vunpack.c.l.b16 %v2644
        %v2707 = vunpack.c.l.b16 %v2647
        %v2708 = vunpack.c.l.b16 %v2650
        %v2709 = vunpack.c.l.b16 %v2653
        %v2710 = vunpack.c.l.b16 %v2656
        %v2711 = vunpack.c.l.b16 %v2659
        %v2712 = vunpack.c.l.b16 %v2662
        %v2713 = vunpack.c.l.b16 %v2665
        %v2714 = vunpack.c.l.b16 %v2668
        %v2715 = vunpack.c.l.b16 %v2671
        %v2716 = vunpack.c.l.b16 %v2674
        %v2717 = vunpack.c.l.b16 %v2677
        %v2718 = vunpack.c.l.b16 %v2680
        %v2719 = vunpack.c.l.b16 %v2683
        %v2720 = vunpack.c.l.b16 %v2686
        %v2721 = vunpack.c.l.b16 %v2689
        %v2722 = vunpack.c.l.b16 %v2692
        %v2723 = vunpack.c.l.b16 %v2695
        %v2724 = vunpack.c.l.b16 %v2698
        %v2725 = vunpack.c.l.b16 %v2701
        %v2726 = vpack.c.b16 %v2703, %v2702
        %v2727 = vpack.c.b16 %v2705, %v2704
        %v2728 = vpack.c.b16 %v2707, %v2706
        %v2729 = vpack.c.b16 %v2709, %v2708
        %v2730 = vpack.c.b16 %v2711, %v2710
        %v2731 = vpack.c.b16 %v2713, %v2712
        %v2732 = vpack.c.b16 %v2715, %v2714
        %v2733 = vpack.c.b16 %v2717, %v2716
        %v2734 = vpack.c.b16 %v2719, %v2718
        %v2735 = vpack.c.b16 %v2721, %v2720
        %v2736 = vpack.c.b16 %v2723, %v2722
        %v2737 = vpack.c.b16 %v2725, %v2724
        %2738 = vrot.lane.b32.xlu0 %v2726, 112
        %v2739 = vpop.permute.xlu0 %2738
        %2740 = vrot.lane.b32.xlu0 %v2727, 112
        %v2741 = vpop.permute.xlu0 %2740
        %2742 = vrot.lane.b32.xlu0 %v2728, 112
        %v2743 = vpop.permute.xlu0 %2742
        %2744 = vrot.lane.b32.xlu0 %v2729, 112
        %v2745 = vpop.permute.xlu0 %2744
        %2746 = vrot.lane.b32.xlu0 %v2730, 112
        %v2747 = vpop.permute.xlu0 %2746
        %2748 = vrot.lane.b32.xlu0 %v2731, 112
        %v2749 = vpop.permute.xlu0 %2748
        %2750 = vrot.lane.b32.xlu0 %v2732, 112
        %v2751 = vpop.permute.xlu0 %2750
        %2752 = vrot.lane.b32.xlu0 %v2733, 112
        %v2753 = vpop.permute.xlu0 %2752
        %2754 = vrot.lane.b32.xlu0 %v2734, 112
        %v2755 = vpop.permute.xlu0 %2754
        %2756 = vrot.lane.b32.xlu0 %v2735, 112
        %v2757 = vpop.permute.xlu0 %2756
        %2758 = vrot.lane.b32.xlu0 %v2736, 112
        %v2759 = vpop.permute.xlu0 %2758
        %2760 = vrot.lane.b32.xlu0 %v2737, 112
        %v2761 = vpop.permute.xlu0 %2760
        %vm2774 = vcmask 1048448
        %2775 = vst.msk [vmem:[#allocation2 + $0x8] sm:$0xff] %vm2774, %v2739
        %2776 = vst.msk [vmem:[#allocation2 + $0x28] sm:$0xff] %vm2774, %v2741
        %2777 = vst.msk [vmem:[#allocation2 + $0x48] sm:$0xff] %vm2774, %v2743
        %2778 = vst.msk [vmem:[#allocation2 + $0x68] sm:$0xff] %vm2774, %v2745
        %2779 = vst.msk [vmem:[#allocation2 + $0x88] sm:$0xff] %vm2774, %v2747
        %2780 = vst.msk [vmem:[#allocation2 + $0xa8] sm:$0xff] %vm2774, %v2749
        %2781 = vst.msk [vmem:[#allocation2 + $0xc8] sm:$0xff] %vm2774, %v2751
        %2782 = vst.msk [vmem:[#allocation2 + $0xe8] sm:$0xff] %vm2774, %v2753
        %2783 = vst.msk [vmem:[#allocation2 + $0x108] sm:$0xff] %vm2774, %v2755
        %2784 = vst.msk [vmem:[#allocation2 + $0x128] sm:$0xff] %vm2774, %v2757
        %2785 = vst.msk [vmem:[#allocation2 + $0x148] sm:$0xff] %vm2774, %v2759
        %2786 = vst.msk [vmem:[#allocation2 + $0x168] sm:$0xff] %vm2774, %v2761
        %v2787 = vunpack.c.l.b16 %v1860
        %v2788 = vunpack.c.l.b16 %v1861
        %v2789 = vunpack.c.l.b16 %v1862
        %v2790 = vunpack.c.l.b16 %v1868
        %v2791 = vunpack.c.l.b16 %v1869
        %v2792 = vunpack.c.l.b16 %v1870
        %v2793 = vunpack.c.l.b16 %v1876
        %v2794 = vunpack.c.l.b16 %v1877
        %v2795 = vunpack.c.l.b16 %v1878
        %v2796 = vunpack.c.l.b16 %v1884
        %v2797 = vunpack.c.l.b16 %v1885
        %v2798 = vunpack.c.l.b16 %v1886
        %v2799 = vunpack.c.l.b16 %v1892
        %v2800 = vunpack.c.l.b16 %v1893
        %v2801 = vunpack.c.l.b16 %v1894
        %v2802 = vunpack.c.l.b16 %v1900
        %v2803 = vunpack.c.l.b16 %v1901
        %v2804 = vunpack.c.l.b16 %v1902
        %v2805 = vunpack.c.l.b16 %v1908
        %v2806 = vunpack.c.l.b16 %v1909
        %v2807 = vunpack.c.l.b16 %v1910
        %v2808 = vunpack.c.l.b16 %v1916
        %v2809 = vunpack.c.l.b16 %v1917
        %v2810 = vunpack.c.l.b16 %v1918
        %v2811 = vpack.c.b16 %v2788, %v2787
        %v2812 = vpack.c.b16 %v2790, %v2789
        %v2813 = vpack.c.b16 %v2792, %v2791
        %v2814 = vpack.c.b16 %v2794, %v2793
        %v2815 = vpack.c.b16 %v2796, %v2795
        %v2816 = vpack.c.b16 %v2798, %v2797
        %v2817 = vpack.c.b16 %v2800, %v2799
        %v2818 = vpack.c.b16 %v2802, %v2801
        %v2819 = vpack.c.b16 %v2804, %v2803
        %v2820 = vpack.c.b16 %v2806, %v2805
        %v2821 = vpack.c.b16 %v2808, %v2807
        %v2822 = vpack.c.b16 %v2810, %v2809
        %2823 = vrot.lane.b32.xlu0 %v2811, 96
        %v2824 = vpop.permute.xlu0 %2823
        %2825 = vrot.lane.b32.xlu0 %v2812, 96
        %v2826 = vpop.permute.xlu0 %2825
        %2827 = vrot.lane.b32.xlu0 %v2813, 96
        %v2828 = vpop.permute.xlu0 %2827
        %2829 = vrot.lane.b32.xlu0 %v2814, 96
        %v2830 = vpop.permute.xlu0 %2829
        %2831 = vrot.lane.b32.xlu0 %v2815, 96
        %v2832 = vpop.permute.xlu0 %2831
        %2833 = vrot.lane.b32.xlu0 %v2816, 96
        %v2834 = vpop.permute.xlu0 %2833
        %2835 = vrot.lane.b32.xlu0 %v2817, 96
        %v2836 = vpop.permute.xlu0 %2835
        %2837 = vrot.lane.b32.xlu0 %v2818, 96
        %v2838 = vpop.permute.xlu0 %2837
        %2839 = vrot.lane.b32.xlu0 %v2819, 96
        %v2840 = vpop.permute.xlu0 %2839
        %2841 = vrot.lane.b32.xlu0 %v2820, 96
        %v2842 = vpop.permute.xlu0 %2841
        %2843 = vrot.lane.b32.xlu0 %v2821, 96
        %v2844 = vpop.permute.xlu0 %2843
        %2845 = vrot.lane.b32.xlu0 %v2822, 96
        %v2846 = vpop.permute.xlu0 %2845
        %2859 = vst.msk [vmem:[#allocation2 + $0x10] sm:$0xff] %vm2389, %v2824
        %2860 = vst.msk [vmem:[#allocation2 + $0x30] sm:$0xff] %vm2389, %v2826
        %2861 = vst.msk [vmem:[#allocation2 + $0x50] sm:$0xff] %vm2389, %v2828
        %2862 = vst.msk [vmem:[#allocation2 + $0x70] sm:$0xff] %vm2389, %v2830
        %2863 = vst.msk [vmem:[#allocation2 + $0x90] sm:$0xff] %vm2389, %v2832
        %2864 = vst.msk [vmem:[#allocation2 + $0xb0] sm:$0xff] %vm2389, %v2834
        %2865 = vst.msk [vmem:[#allocation2 + $0xd0] sm:$0xff] %vm2389, %v2836
        %2866 = vst.msk [vmem:[#allocation2 + $0xf0] sm:$0xff] %vm2389, %v2838
        %2867 = vst.msk [vmem:[#allocation2 + $0x110] sm:$0xff] %vm2389, %v2840
        %2868 = vst.msk [vmem:[#allocation2 + $0x130] sm:$0xff] %vm2389, %v2842
        %2869 = vst.msk [vmem:[#allocation2 + $0x150] sm:$0xff] %vm2389, %v2844
        %2870 = vst.msk [vmem:[#allocation2 + $0x170] sm:$0xff] %vm2389, %v2846
        %2871 = vrot.lane.b32.xlu0 %v2060, 112
        %v2872 = vpop.permute.xlu0 %2871
        %2873 = vrot.lane.b32.xlu0 %v2061, 112
        %v2874 = vpop.permute.xlu0 %2873
        %2875 = vrot.lane.b32.xlu0 %v2062, 112
        %v2876 = vpop.permute.xlu0 %2875
        %2877 = vrot.lane.b32.xlu0 %v2063, 112
        %v2878 = vpop.permute.xlu0 %2877
        %2879 = vrot.lane.b32.xlu0 %v2064, 112
        %v2880 = vpop.permute.xlu0 %2879
        %2881 = vrot.lane.b32.xlu0 %v2065, 112
        %v2882 = vpop.permute.xlu0 %2881
        %2883 = vrot.lane.b32.xlu0 %v2066, 112
        %v2884 = vpop.permute.xlu0 %2883
        %2885 = vrot.lane.b32.xlu0 %v2067, 112
        %v2886 = vpop.permute.xlu0 %2885
        %2887 = vrot.lane.b32.xlu0 %v2068, 112
        %v2888 = vpop.permute.xlu0 %2887
        %2889 = vrot.lane.b32.xlu0 %v2069, 112
        %v2890 = vpop.permute.xlu0 %2889
        %2891 = vrot.lane.b32.xlu0 %v2070, 112
        %v2892 = vpop.permute.xlu0 %2891
        %2893 = vrot.lane.b32.xlu0 %v2071, 112
        %v2894 = vpop.permute.xlu0 %2893
        %2907 = vst.msk [vmem:[#allocation2 + $0x10] sm:$0xff] %vm2774, %v2872
        %2908 = vst.msk [vmem:[#allocation2 + $0x30] sm:$0xff] %vm2774, %v2874
        %2909 = vst.msk [vmem:[#allocation2 + $0x50] sm:$0xff] %vm2774, %v2876
        %2910 = vst.msk [vmem:[#allocation2 + $0x70] sm:$0xff] %vm2774, %v2878
        %2911 = vst.msk [vmem:[#allocation2 + $0x90] sm:$0xff] %vm2774, %v2880
        %2912 = vst.msk [vmem:[#allocation2 + $0xb0] sm:$0xff] %vm2774, %v2882
        %2913 = vst.msk [vmem:[#allocation2 + $0xd0] sm:$0xff] %vm2774, %v2884
        %2914 = vst.msk [vmem:[#allocation2 + $0xf0] sm:$0xff] %vm2774, %v2886
        %2915 = vst.msk [vmem:[#allocation2 + $0x110] sm:$0xff] %vm2774, %v2888
        %2916 = vst.msk [vmem:[#allocation2 + $0x130] sm:$0xff] %vm2774, %v2890
        %2917 = vst.msk [vmem:[#allocation2 + $0x150] sm:$0xff] %vm2774, %v2892
        %2918 = vst.msk [vmem:[#allocation2 + $0x170] sm:$0xff] %vm2774, %v2894
        %v2927 = vrot.slane %v2113, 4
        %v2928 = vrot.slane %v1865, 6
        %v2929 = vsel %vm589, %v2927, %v2928
        %v2930 = vrot.slane %v2928, 4
        %v2931 = vrot.slane %v1866, 6
        %v2932 = vsel %vm589, %v2930, %v2931
        %v2933 = vrot.slane %v2931, 4
        %v2934 = vrot.slane %v1867, 6
        %v2935 = vsel %vm589, %v2933, %v2934
        %v2936 = vrot.slane %v2123, 4
        %v2937 = vrot.slane %v1873, 6
        %v2938 = vsel %vm589, %v2936, %v2937
        %v2939 = vrot.slane %v2937, 4
        %v2940 = vrot.slane %v1874, 6
        %v2941 = vsel %vm589, %v2939, %v2940
        %v2942 = vrot.slane %v2940, 4
        %v2943 = vrot.slane %v1875, 6
        %v2944 = vsel %vm589, %v2942, %v2943
        %v2945 = vrot.slane %v2133, 4
        %v2946 = vrot.slane %v1881, 6
        %v2947 = vsel %vm589, %v2945, %v2946
        %v2948 = vrot.slane %v2946, 4
        %v2949 = vrot.slane %v1882, 6
        %v2950 = vsel %vm589, %v2948, %v2949
        %v2951 = vrot.slane %v2949, 4
        %v2952 = vrot.slane %v1883, 6
        %v2953 = vsel %vm589, %v2951, %v2952
        %v2954 = vrot.slane %v2143, 4
        %v2955 = vrot.slane %v1889, 6
        %v2956 = vsel %vm589, %v2954, %v2955
        %v2957 = vrot.slane %v2955, 4
        %v2958 = vrot.slane %v1890, 6
        %v2959 = vsel %vm589, %v2957, %v2958
        %v2960 = vrot.slane %v2958, 4
        %v2961 = vrot.slane %v1891, 6
        %v2962 = vsel %vm589, %v2960, %v2961
        %v2963 = vrot.slane %v2153, 4
        %v2964 = vrot.slane %v1897, 6
        %v2965 = vsel %vm589, %v2963, %v2964
        %v2966 = vrot.slane %v2964, 4
        %v2967 = vrot.slane %v1898, 6
        %v2968 = vsel %vm589, %v2966, %v2967
        %v2969 = vrot.slane %v2967, 4
        %v2970 = vrot.slane %v1899, 6
        %v2971 = vsel %vm589, %v2969, %v2970
        %v2972 = vrot.slane %v2163, 4
        %v2973 = vrot.slane %v1905, 6
        %v2974 = vsel %vm589, %v2972, %v2973
        %v2975 = vrot.slane %v2973, 4
        %v2976 = vrot.slane %v1906, 6
        %v2977 = vsel %vm589, %v2975, %v2976
        %v2978 = vrot.slane %v2976, 4
        %v2979 = vrot.slane %v1907, 6
        %v2980 = vsel %vm589, %v2978, %v2979
        %v2981 = vrot.slane %v2173, 4
        %v2982 = vrot.slane %v1913, 6
        %v2983 = vsel %vm589, %v2981, %v2982
        %v2984 = vrot.slane %v2982, 4
        %v2985 = vrot.slane %v1914, 6
        %v2986 = vsel %vm589, %v2984, %v2985
        %v2987 = vrot.slane %v2985, 4
        %v2988 = vrot.slane %v1915, 6
        %v2989 = vsel %vm589, %v2987, %v2988
        %v2990 = vrot.slane %v2183, 4
        %v2991 = vrot.slane %v1921, 6
        %v2992 = vsel %vm589, %v2990, %v2991
        %v2993 = vrot.slane %v2991, 4
        %v2994 = vrot.slane %v1922, 6
        %v2995 = vsel %vm589, %v2993, %v2994
        %v2996 = vrot.slane %v2994, 4
        %v2997 = vrot.slane %v1923, 6
        %v2998 = vsel %vm589, %v2996, %v2997
        %v2999 = vunpack.c.l.b16 %v2929
        %v3000 = vunpack.c.l.b16 %v2932
        %v3001 = vunpack.c.l.b16 %v2935
        %v3002 = vunpack.c.l.b16 %v2938
        %v3003 = vunpack.c.l.b16 %v2941
        %v3004 = vunpack.c.l.b16 %v2944
        %v3005 = vunpack.c.l.b16 %v2947
        %v3006 = vunpack.c.l.b16 %v2950
        %v3007 = vunpack.c.l.b16 %v2953
        %v3008 = vunpack.c.l.b16 %v2956
        %v3009 = vunpack.c.l.b16 %v2959
        %v3010 = vunpack.c.l.b16 %v2962
        %v3011 = vunpack.c.l.b16 %v2965
        %v3012 = vunpack.c.l.b16 %v2968
        %v3013 = vunpack.c.l.b16 %v2971
        %v3014 = vunpack.c.l.b16 %v2974
        %v3015 = vunpack.c.l.b16 %v2977
        %v3016 = vunpack.c.l.b16 %v2980
        %v3017 = vunpack.c.l.b16 %v2983
        %v3018 = vunpack.c.l.b16 %v2986
        %v3019 = vunpack.c.l.b16 %v2989
        %v3020 = vunpack.c.l.b16 %v2992
        %v3021 = vunpack.c.l.b16 %v2995
        %v3022 = vunpack.c.l.b16 %v2998
        %v3023 = vpack.c.b16 %v3000, %v2999
        %v3024 = vpack.c.b16 %v3002, %v3001
        %v3025 = vpack.c.b16 %v3004, %v3003
        %v3026 = vpack.c.b16 %v3006, %v3005
        %v3027 = vpack.c.b16 %v3008, %v3007
        %v3028 = vpack.c.b16 %v3010, %v3009
        %v3029 = vpack.c.b16 %v3012, %v3011
        %v3030 = vpack.c.b16 %v3014, %v3013
        %v3031 = vpack.c.b16 %v3016, %v3015
        %v3032 = vpack.c.b16 %v3018, %v3017
        %v3033 = vpack.c.b16 %v3020, %v3019
        %v3034 = vpack.c.b16 %v3022, %v3021
        %3047 = vst.msk [vmem:[#allocation2 + $0x18] sm:$0xff] %vm2084, %v3023
        %3048 = vst.msk [vmem:[#allocation2 + $0x38] sm:$0xff] %vm2084, %v3024
        %3049 = vst.msk [vmem:[#allocation2 + $0x58] sm:$0xff] %vm2084, %v3025
        %3050 = vst.msk [vmem:[#allocation2 + $0x78] sm:$0xff] %vm2084, %v3026
        %3051 = vst.msk [vmem:[#allocation2 + $0x98] sm:$0xff] %vm2084, %v3027
        %3052 = vst.msk [vmem:[#allocation2 + $0xb8] sm:$0xff] %vm2084, %v3028
        %3053 = vst.msk [vmem:[#allocation2 + $0xd8] sm:$0xff] %vm2084, %v3029
        %3054 = vst.msk [vmem:[#allocation2 + $0xf8] sm:$0xff] %vm2084, %v3030
        %3055 = vst.msk [vmem:[#allocation2 + $0x118] sm:$0xff] %vm2084, %v3031
        %3056 = vst.msk [vmem:[#allocation2 + $0x138] sm:$0xff] %vm2084, %v3032
        %3057 = vst.msk [vmem:[#allocation2 + $0x158] sm:$0xff] %vm2084, %v3033
        %3058 = vst.msk [vmem:[#allocation2 + $0x178] sm:$0xff] %vm2084, %v3034
        %s3059 = sadd.s32 %s202, 24
        %s3060 = smul.u32 %s3059, 8
        %s3061 = smul.addr %s3060, 4
        %s3062 = scalar_lea.vmem %s195, %s3061
        %v3063 = vld [vmem:[%s3062 + $0x4] sm:$0xf]
        %v3064 = vld [vmem:[%s3062 + $0x8] sm:$0xf]
        %v3065 = vld [vmem:[%s3062 + $0xc] sm:$0xf]
        %v3066 = vld [vmem:[%s3062 + $0x10] sm:$0xf]
        %v3067 = vld [vmem:[%s3062 + $0x14] sm:$0xf]
        %v3068 = vld [vmem:[%s3062 + $0x24] sm:$0xf]
        %v3069 = vld [vmem:[%s3062 + $0x28] sm:$0xf]
        %v3070 = vld [vmem:[%s3062 + $0x2c] sm:$0xf]
        %v3071 = vld [vmem:[%s3062 + $0x30] sm:$0xf]
        %v3072 = vld [vmem:[%s3062 + $0x34] sm:$0xf]
        %v3073 = vld [vmem:[%s3062 + $0x44] sm:$0xf]
        %v3074 = vld [vmem:[%s3062 + $0x48] sm:$0xf]
        %v3075 = vld [vmem:[%s3062 + $0x4c] sm:$0xf]
        %v3076 = vld [vmem:[%s3062 + $0x50] sm:$0xf]
        %v3077 = vld [vmem:[%s3062 + $0x54] sm:$0xf]
        %v3078 = vld [vmem:[%s3062 + $0x64] sm:$0xf]
        %v3079 = vld [vmem:[%s3062 + $0x68] sm:$0xf]
        %v3080 = vld [vmem:[%s3062 + $0x6c] sm:$0xf]
        %v3081 = vld [vmem:[%s3062 + $0x70] sm:$0xf]
        %v3082 = vld [vmem:[%s3062 + $0x74] sm:$0xf]
        %v3083 = vld [vmem:[%s3062 + $0x84] sm:$0xf]
        %v3084 = vld [vmem:[%s3062 + $0x88] sm:$0xf]
        %v3085 = vld [vmem:[%s3062 + $0x8c] sm:$0xf]
        %v3086 = vld [vmem:[%s3062 + $0x90] sm:$0xf]
        %v3087 = vld [vmem:[%s3062 + $0x94] sm:$0xf]
        %v3088 = vld [vmem:[%s3062 + $0xa4] sm:$0xf]
        %v3089 = vld [vmem:[%s3062 + $0xa8] sm:$0xf]
        %v3090 = vld [vmem:[%s3062 + $0xac] sm:$0xf]
        %v3091 = vld [vmem:[%s3062 + $0xb0] sm:$0xf]
        %v3092 = vld [vmem:[%s3062 + $0xb4] sm:$0xf]
        %v3093 = vld [vmem:[%s3062 + $0xc4] sm:$0xf]
        %v3094 = vld [vmem:[%s3062 + $0xc8] sm:$0xf]
        %v3095 = vld [vmem:[%s3062 + $0xcc] sm:$0xf]
        %v3096 = vld [vmem:[%s3062 + $0xd0] sm:$0xf]
        %v3097 = vld [vmem:[%s3062 + $0xd4] sm:$0xf]
        %v3098 = vld [vmem:[%s3062 + $0xe4] sm:$0xf]
        %v3099 = vld [vmem:[%s3062 + $0xe8] sm:$0xf]
        %v3100 = vld [vmem:[%s3062 + $0xec] sm:$0xf]
        %v3101 = vld [vmem:[%s3062 + $0xf0] sm:$0xf]
        %v3102 = vld [vmem:[%s3062 + $0xf4] sm:$0xf]
        %v3135 = vrot.slane %v3063, 6
        %v3136 = vrot.slane %v3135, 4
        %v3137 = vrot.slane %v3064, 6
        %v3138 = vsel %vm589, %v3136, %v3137
        %v3139 = vrot.slane %v3137, 4
        %v3140 = vrot.slane %v3065, 6
        %v3141 = vsel %vm589, %v3139, %v3140
        %v3142 = vrot.slane %v3140, 4
        %v3143 = vrot.slane %v3066, 6
        %v3144 = vsel %vm589, %v3142, %v3143
        %v3145 = vrot.slane %v3068, 6
        %v3146 = vrot.slane %v3145, 4
        %v3147 = vrot.slane %v3069, 6
        %v3148 = vsel %vm589, %v3146, %v3147
        %v3149 = vrot.slane %v3147, 4
        %v3150 = vrot.slane %v3070, 6
        %v3151 = vsel %vm589, %v3149, %v3150
        %v3152 = vrot.slane %v3150, 4
        %v3153 = vrot.slane %v3071, 6
        %v3154 = vsel %vm589, %v3152, %v3153
        %v3155 = vrot.slane %v3073, 6
        %v3156 = vrot.slane %v3155, 4
        %v3157 = vrot.slane %v3074, 6
        %v3158 = vsel %vm589, %v3156, %v3157
        %v3159 = vrot.slane %v3157, 4
        %v3160 = vrot.slane %v3075, 6
        %v3161 = vsel %vm589, %v3159, %v3160
        %v3162 = vrot.slane %v3160, 4
        %v3163 = vrot.slane %v3076, 6
        %v3164 = vsel %vm589, %v3162, %v3163
        %v3165 = vrot.slane %v3078, 6
        %v3166 = vrot.slane %v3165, 4
        %v3167 = vrot.slane %v3079, 6
        %v3168 = vsel %vm589, %v3166, %v3167
        %v3169 = vrot.slane %v3167, 4
        %v3170 = vrot.slane %v3080, 6
        %v3171 = vsel %vm589, %v3169, %v3170
        %v3172 = vrot.slane %v3170, 4
        %v3173 = vrot.slane %v3081, 6
        %v3174 = vsel %vm589, %v3172, %v3173
        %v3175 = vrot.slane %v3083, 6
        %v3176 = vrot.slane %v3175, 4
        %v3177 = vrot.slane %v3084, 6
        %v3178 = vsel %vm589, %v3176, %v3177
        %v3179 = vrot.slane %v3177, 4
        %v3180 = vrot.slane %v3085, 6
        %v3181 = vsel %vm589, %v3179, %v3180
        %v3182 = vrot.slane %v3180, 4
        %v3183 = vrot.slane %v3086, 6
        %v3184 = vsel %vm589, %v3182, %v3183
        %v3185 = vrot.slane %v3088, 6
        %v3186 = vrot.slane %v3185, 4
        %v3187 = vrot.slane %v3089, 6
        %v3188 = vsel %vm589, %v3186, %v3187
        %v3189 = vrot.slane %v3187, 4
        %v3190 = vrot.slane %v3090, 6
        %v3191 = vsel %vm589, %v3189, %v3190
        %v3192 = vrot.slane %v3190, 4
        %v3193 = vrot.slane %v3091, 6
        %v3194 = vsel %vm589, %v3192, %v3193
        %v3195 = vrot.slane %v3093, 6
        %v3196 = vrot.slane %v3195, 4
        %v3197 = vrot.slane %v3094, 6
        %v3198 = vsel %vm589, %v3196, %v3197
        %v3199 = vrot.slane %v3197, 4
        %v3200 = vrot.slane %v3095, 6
        %v3201 = vsel %vm589, %v3199, %v3200
        %v3202 = vrot.slane %v3200, 4
        %v3203 = vrot.slane %v3096, 6
        %v3204 = vsel %vm589, %v3202, %v3203
        %v3205 = vrot.slane %v3098, 6
        %v3206 = vrot.slane %v3205, 4
        %v3207 = vrot.slane %v3099, 6
        %v3208 = vsel %vm589, %v3206, %v3207
        %v3209 = vrot.slane %v3207, 4
        %v3210 = vrot.slane %v3100, 6
        %v3211 = vsel %vm589, %v3209, %v3210
        %v3212 = vrot.slane %v3210, 4
        %v3213 = vrot.slane %v3101, 6
        %v3214 = vsel %vm589, %v3212, %v3213
        %v3215 = vunpack.c.l.b16 %v3138
        %v3216 = vunpack.c.l.b16 %v3141
        %v3217 = vunpack.c.l.b16 %v3144
        %v3218 = vunpack.c.l.b16 %v3148
        %v3219 = vunpack.c.l.b16 %v3151
        %v3220 = vunpack.c.l.b16 %v3154
        %v3221 = vunpack.c.l.b16 %v3158
        %v3222 = vunpack.c.l.b16 %v3161
        %v3223 = vunpack.c.l.b16 %v3164
        %v3224 = vunpack.c.l.b16 %v3168
        %v3225 = vunpack.c.l.b16 %v3171
        %v3226 = vunpack.c.l.b16 %v3174
        %v3227 = vunpack.c.l.b16 %v3178
        %v3228 = vunpack.c.l.b16 %v3181
        %v3229 = vunpack.c.l.b16 %v3184
        %v3230 = vunpack.c.l.b16 %v3188
        %v3231 = vunpack.c.l.b16 %v3191
        %v3232 = vunpack.c.l.b16 %v3194
        %v3233 = vunpack.c.l.b16 %v3198
        %v3234 = vunpack.c.l.b16 %v3201
        %v3235 = vunpack.c.l.b16 %v3204
        %v3236 = vunpack.c.l.b16 %v3208
        %v3237 = vunpack.c.l.b16 %v3211
        %v3238 = vunpack.c.l.b16 %v3214
        %v3239 = vpack.c.b16 %v3216, %v3215
        %v3240 = vpack.c.b16 %v3218, %v3217
        %v3241 = vpack.c.b16 %v3220, %v3219
        %v3242 = vpack.c.b16 %v3222, %v3221
        %v3243 = vpack.c.b16 %v3224, %v3223
        %v3244 = vpack.c.b16 %v3226, %v3225
        %v3245 = vpack.c.b16 %v3228, %v3227
        %v3246 = vpack.c.b16 %v3230, %v3229
        %v3247 = vpack.c.b16 %v3232, %v3231
        %v3248 = vpack.c.b16 %v3234, %v3233
        %v3249 = vpack.c.b16 %v3236, %v3235
        %v3250 = vpack.c.b16 %v3238, %v3237
        %3251 = vrot.lane.b32.xlu0 %v3239, 112
        %v3252 = vpop.permute.xlu0 %3251
        %3253 = vrot.lane.b32.xlu0 %v3240, 112
        %v3254 = vpop.permute.xlu0 %3253
        %3255 = vrot.lane.b32.xlu0 %v3241, 112
        %v3256 = vpop.permute.xlu0 %3255
        %3257 = vrot.lane.b32.xlu0 %v3242, 112
        %v3258 = vpop.permute.xlu0 %3257
        %3259 = vrot.lane.b32.xlu0 %v3243, 112
        %v3260 = vpop.permute.xlu0 %3259
        %3261 = vrot.lane.b32.xlu0 %v3244, 112
        %v3262 = vpop.permute.xlu0 %3261
        %3263 = vrot.lane.b32.xlu0 %v3245, 112
        %v3264 = vpop.permute.xlu0 %3263
        %3265 = vrot.lane.b32.xlu0 %v3246, 112
        %v3266 = vpop.permute.xlu0 %3265
        %3267 = vrot.lane.b32.xlu0 %v3247, 112
        %v3268 = vpop.permute.xlu0 %3267
        %3269 = vrot.lane.b32.xlu0 %v3248, 112
        %v3270 = vpop.permute.xlu0 %3269
        %3271 = vrot.lane.b32.xlu0 %v3249, 112
        %v3272 = vpop.permute.xlu0 %3271
        %3273 = vrot.lane.b32.xlu0 %v3250, 112
        %v3274 = vpop.permute.xlu0 %3273
        %3287 = vst.msk [vmem:[#allocation2] sm:$0xff] %vm2774, %v3252
        %3288 = vst.msk [vmem:[#allocation2 + $0x20] sm:$0xff] %vm2774, %v3254
        %3289 = vst.msk [vmem:[#allocation2 + $0x40] sm:$0xff] %vm2774, %v3256
        %3290 = vst.msk [vmem:[#allocation2 + $0x60] sm:$0xff] %vm2774, %v3258
        %3291 = vst.msk [vmem:[#allocation2 + $0x80] sm:$0xff] %vm2774, %v3260
        %3292 = vst.msk [vmem:[#allocation2 + $0xa0] sm:$0xff] %vm2774, %v3262
        %3293 = vst.msk [vmem:[#allocation2 + $0xc0] sm:$0xff] %vm2774, %v3264
        %3294 = vst.msk [vmem:[#allocation2 + $0xe0] sm:$0xff] %vm2774, %v3266
        %3295 = vst.msk [vmem:[#allocation2 + $0x100] sm:$0xff] %vm2774, %v3268
        %3296 = vst.msk [vmem:[#allocation2 + $0x120] sm:$0xff] %vm2774, %v3270
        %3297 = vst.msk [vmem:[#allocation2 + $0x140] sm:$0xff] %vm2774, %v3272
        %3298 = vst.msk [vmem:[#allocation2 + $0x160] sm:$0xff] %vm2774, %v3274
        %v3307 = vrot.slane %v3064, 5
        %v3308 = vrot.slane %v3307, 4
        %v3309 = vrot.slane %v3065, 5
        %v3310 = vsel %vm405, %v3308, %v3309
        %v3311 = vrot.slane %v3309, 4
        %v3312 = vrot.slane %v3066, 5
        %v3313 = vsel %vm405, %v3311, %v3312
        %v3314 = vrot.slane %v3312, 4
        %v3315 = vrot.slane %v3067, 5
        %v3316 = vsel %vm405, %v3314, %v3315
        %v3317 = vrot.slane %v3069, 5
        %v3318 = vrot.slane %v3317, 4
        %v3319 = vrot.slane %v3070, 5
        %v3320 = vsel %vm405, %v3318, %v3319
        %v3321 = vrot.slane %v3319, 4
        %v3322 = vrot.slane %v3071, 5
        %v3323 = vsel %vm405, %v3321, %v3322
        %v3324 = vrot.slane %v3322, 4
        %v3325 = vrot.slane %v3072, 5
        %v3326 = vsel %vm405, %v3324, %v3325
        %v3327 = vrot.slane %v3074, 5
        %v3328 = vrot.slane %v3327, 4
        %v3329 = vrot.slane %v3075, 5
        %v3330 = vsel %vm405, %v3328, %v3329
        %v3331 = vrot.slane %v3329, 4
        %v3332 = vrot.slane %v3076, 5
        %v3333 = vsel %vm405, %v3331, %v3332
        %v3334 = vrot.slane %v3332, 4
        %v3335 = vrot.slane %v3077, 5
        %v3336 = vsel %vm405, %v3334, %v3335
        %v3337 = vrot.slane %v3079, 5
        %v3338 = vrot.slane %v3337, 4
        %v3339 = vrot.slane %v3080, 5
        %v3340 = vsel %vm405, %v3338, %v3339
        %v3341 = vrot.slane %v3339, 4
        %v3342 = vrot.slane %v3081, 5
        %v3343 = vsel %vm405, %v3341, %v3342
        %v3344 = vrot.slane %v3342, 4
        %v3345 = vrot.slane %v3082, 5
        %v3346 = vsel %vm405, %v3344, %v3345
        %v3347 = vrot.slane %v3084, 5
        %v3348 = vrot.slane %v3347, 4
        %v3349 = vrot.slane %v3085, 5
        %v3350 = vsel %vm405, %v3348, %v3349
        %v3351 = vrot.slane %v3349, 4
        %v3352 = vrot.slane %v3086, 5
        %v3353 = vsel %vm405, %v3351, %v3352
        %v3354 = vrot.slane %v3352, 4
        %v3355 = vrot.slane %v3087, 5
        %v3356 = vsel %vm405, %v3354, %v3355
        %v3357 = vrot.slane %v3089, 5
        %v3358 = vrot.slane %v3357, 4
        %v3359 = vrot.slane %v3090, 5
        %v3360 = vsel %vm405, %v3358, %v3359
        %v3361 = vrot.slane %v3359, 4
        %v3362 = vrot.slane %v3091, 5
        %v3363 = vsel %vm405, %v3361, %v3362
        %v3364 = vrot.slane %v3362, 4
        %v3365 = vrot.slane %v3092, 5
        %v3366 = vsel %vm405, %v3364, %v3365
        %v3367 = vrot.slane %v3094, 5
        %v3368 = vrot.slane %v3367, 4
        %v3369 = vrot.slane %v3095, 5
        %v3370 = vsel %vm405, %v3368, %v3369
        %v3371 = vrot.slane %v3369, 4
        %v3372 = vrot.slane %v3096, 5
        %v3373 = vsel %vm405, %v3371, %v3372
        %v3374 = vrot.slane %v3372, 4
        %v3375 = vrot.slane %v3097, 5
        %v3376 = vsel %vm405, %v3374, %v3375
        %v3377 = vrot.slane %v3099, 5
        %v3378 = vrot.slane %v3377, 4
        %v3379 = vrot.slane %v3100, 5
        %v3380 = vsel %vm405, %v3378, %v3379
        %v3381 = vrot.slane %v3379, 4
        %v3382 = vrot.slane %v3101, 5
        %v3383 = vsel %vm405, %v3381, %v3382
        %v3384 = vrot.slane %v3382, 4
        %v3385 = vrot.slane %v3102, 5
        %v3386 = vsel %vm405, %v3384, %v3385
        %v3387 = vunpack.c.l.b16 %v3310
        %v3388 = vunpack.c.l.b16 %v3313
        %v3389 = vunpack.c.l.b16 %v3316
        %v3390 = vunpack.c.l.b16 %v3320
        %v3391 = vunpack.c.l.b16 %v3323
        %v3392 = vunpack.c.l.b16 %v3326
        %v3393 = vunpack.c.l.b16 %v3330
        %v3394 = vunpack.c.l.b16 %v3333
        %v3395 = vunpack.c.l.b16 %v3336
        %v3396 = vunpack.c.l.b16 %v3340
        %v3397 = vunpack.c.l.b16 %v3343
        %v3398 = vunpack.c.l.b16 %v3346
        %v3399 = vunpack.c.l.b16 %v3350
        %v3400 = vunpack.c.l.b16 %v3353
        %v3401 = vunpack.c.l.b16 %v3356
        %v3402 = vunpack.c.l.b16 %v3360
        %v3403 = vunpack.c.l.b16 %v3363
        %v3404 = vunpack.c.l.b16 %v3366
        %v3405 = vunpack.c.l.b16 %v3370
        %v3406 = vunpack.c.l.b16 %v3373
        %v3407 = vunpack.c.l.b16 %v3376
        %v3408 = vunpack.c.l.b16 %v3380
        %v3409 = vunpack.c.l.b16 %v3383
        %v3410 = vunpack.c.l.b16 %v3386
        %v3411 = vpack.c.b16 %v3388, %v3387
        %v3412 = vpack.c.b16 %v3390, %v3389
        %v3413 = vpack.c.b16 %v3392, %v3391
        %v3414 = vpack.c.b16 %v3394, %v3393
        %v3415 = vpack.c.b16 %v3396, %v3395
        %v3416 = vpack.c.b16 %v3398, %v3397
        %v3417 = vpack.c.b16 %v3400, %v3399
        %v3418 = vpack.c.b16 %v3402, %v3401
        %v3419 = vpack.c.b16 %v3404, %v3403
        %v3420 = vpack.c.b16 %v3406, %v3405
        %v3421 = vpack.c.b16 %v3408, %v3407
        %v3422 = vpack.c.b16 %v3410, %v3409
        %3435 = vst.msk [vmem:[#allocation2 + $0x8] sm:$0xff] %vm2084, %v3411
        %3436 = vst.msk [vmem:[#allocation2 + $0x28] sm:$0xff] %vm2084, %v3412
        %3437 = vst.msk [vmem:[#allocation2 + $0x48] sm:$0xff] %vm2084, %v3413
        %3438 = vst.msk [vmem:[#allocation2 + $0x68] sm:$0xff] %vm2084, %v3414
        %3439 = vst.msk [vmem:[#allocation2 + $0x88] sm:$0xff] %vm2084, %v3415
        %3440 = vst.msk [vmem:[#allocation2 + $0xa8] sm:$0xff] %vm2084, %v3416
        %3441 = vst.msk [vmem:[#allocation2 + $0xc8] sm:$0xff] %vm2084, %v3417
        %3442 = vst.msk [vmem:[#allocation2 + $0xe8] sm:$0xff] %vm2084, %v3418
        %3443 = vst.msk [vmem:[#allocation2 + $0x108] sm:$0xff] %vm2084, %v3419
        %3444 = vst.msk [vmem:[#allocation2 + $0x128] sm:$0xff] %vm2084, %v3420
        %3445 = vst.msk [vmem:[#allocation2 + $0x148] sm:$0xff] %vm2084, %v3421
        %3446 = vst.msk [vmem:[#allocation2 + $0x168] sm:$0xff] %vm2084, %v3422
        %v3447 = vunpack.c.l.b16 %v3065
        %v3448 = vunpack.c.l.b16 %v3066
        %v3449 = vunpack.c.l.b16 %v3067
        %v3450 = vunpack.c.l.b16 %v3070
        %v3451 = vunpack.c.l.b16 %v3071
        %v3452 = vunpack.c.l.b16 %v3072
        %v3453 = vunpack.c.l.b16 %v3075
        %v3454 = vunpack.c.l.b16 %v3076
        %v3455 = vunpack.c.l.b16 %v3077
        %v3456 = vunpack.c.l.b16 %v3080
        %v3457 = vunpack.c.l.b16 %v3081
        %v3458 = vunpack.c.l.b16 %v3082
        %v3459 = vunpack.c.l.b16 %v3085
        %v3460 = vunpack.c.l.b16 %v3086
        %v3461 = vunpack.c.l.b16 %v3087
        %v3462 = vunpack.c.l.b16 %v3090
        %v3463 = vunpack.c.l.b16 %v3091
        %v3464 = vunpack.c.l.b16 %v3092
        %v3465 = vunpack.c.l.b16 %v3095
        %v3466 = vunpack.c.l.b16 %v3096
        %v3467 = vunpack.c.l.b16 %v3097
        %v3468 = vunpack.c.l.b16 %v3100
        %v3469 = vunpack.c.l.b16 %v3101
        %v3470 = vunpack.c.l.b16 %v3102
        %v3471 = vpack.c.b16 %v3448, %v3447
        %v3472 = vpack.c.b16 %v3450, %v3449
        %v3473 = vpack.c.b16 %v3452, %v3451
        %v3474 = vpack.c.b16 %v3454, %v3453
        %v3475 = vpack.c.b16 %v3456, %v3455
        %v3476 = vpack.c.b16 %v3458, %v3457
        %v3477 = vpack.c.b16 %v3460, %v3459
        %v3478 = vpack.c.b16 %v3462, %v3461
        %v3479 = vpack.c.b16 %v3464, %v3463
        %v3480 = vpack.c.b16 %v3466, %v3465
        %v3481 = vpack.c.b16 %v3468, %v3467
        %v3482 = vpack.c.b16 %v3470, %v3469
        %3483 = vrot.lane.b32.xlu0 %v3471, 16
        %v3484 = vpop.permute.xlu0 %3483
        %3485 = vrot.lane.b32.xlu0 %v3472, 16
        %v3486 = vpop.permute.xlu0 %3485
        %3487 = vrot.lane.b32.xlu0 %v3473, 16
        %v3488 = vpop.permute.xlu0 %3487
        %3489 = vrot.lane.b32.xlu0 %v3474, 16
        %v3490 = vpop.permute.xlu0 %3489
        %3491 = vrot.lane.b32.xlu0 %v3475, 16
        %v3492 = vpop.permute.xlu0 %3491
        %3493 = vrot.lane.b32.xlu0 %v3476, 16
        %v3494 = vpop.permute.xlu0 %3493
        %3495 = vrot.lane.b32.xlu0 %v3477, 16
        %v3496 = vpop.permute.xlu0 %3495
        %3497 = vrot.lane.b32.xlu0 %v3478, 16
        %v3498 = vpop.permute.xlu0 %3497
        %3499 = vrot.lane.b32.xlu0 %v3479, 16
        %v3500 = vpop.permute.xlu0 %3499
        %3501 = vrot.lane.b32.xlu0 %v3480, 16
        %v3502 = vpop.permute.xlu0 %3501
        %3503 = vrot.lane.b32.xlu0 %v3481, 16
        %v3504 = vpop.permute.xlu0 %3503
        %3505 = vrot.lane.b32.xlu0 %v3482, 16
        %v3506 = vpop.permute.xlu0 %3505
        %3519 = vst.msk [vmem:[#allocation2 + $0x8] sm:$0xff] %vm1587, %v3484
        %3520 = vst.msk [vmem:[#allocation2 + $0x28] sm:$0xff] %vm1587, %v3486
        %3521 = vst.msk [vmem:[#allocation2 + $0x48] sm:$0xff] %vm1587, %v3488
        %3522 = vst.msk [vmem:[#allocation2 + $0x68] sm:$0xff] %vm1587, %v3490
        %3523 = vst.msk [vmem:[#allocation2 + $0x88] sm:$0xff] %vm1587, %v3492
        %3524 = vst.msk [vmem:[#allocation2 + $0xa8] sm:$0xff] %vm1587, %v3494
        %3525 = vst.msk [vmem:[#allocation2 + $0xc8] sm:$0xff] %vm1587, %v3496
        %3526 = vst.msk [vmem:[#allocation2 + $0xe8] sm:$0xff] %vm1587, %v3498
        %3527 = vst.msk [vmem:[#allocation2 + $0x108] sm:$0xff] %vm1587, %v3500
        %3528 = vst.msk [vmem:[#allocation2 + $0x128] sm:$0xff] %vm1587, %v3502
        %3529 = vst.msk [vmem:[#allocation2 + $0x148] sm:$0xff] %vm1587, %v3504
        %3530 = vst.msk [vmem:[#allocation2 + $0x168] sm:$0xff] %vm1587, %v3506
        %s3531 = sadd.s32 %s202, 30
        %s3532 = smul.u32 %s3531, 8
        %s3533 = smul.addr %s3532, 4
        %s3534 = scalar_lea.vmem %s195, %s3533
        %v3535 = vld [vmem:[%s3534] sm:$0xf]
        %v3536 = vld [vmem:[%s3534 + $0x4] sm:$0xf]
        %v3537 = vld [vmem:[%s3534 + $0x8] sm:$0xf]
        %v3538 = vld [vmem:[%s3534 + $0xc] sm:$0xf]
        %v3539 = vld [vmem:[%s3534 + $0x10] sm:$0xf]
        %v3540 = vld [vmem:[%s3534 + $0x14] sm:$0xf]
        %v3541 = vld [vmem:[%s3534 + $0x18] sm:$0xf]
        %v3542 = vld [vmem:[%s3534 + $0x20] sm:$0xf]
        %v3543 = vld [vmem:[%s3534 + $0x24] sm:$0xf]
        %v3544 = vld [vmem:[%s3534 + $0x28] sm:$0xf]
        %v3545 = vld [vmem:[%s3534 + $0x2c] sm:$0xf]
        %v3546 = vld [vmem:[%s3534 + $0x30] sm:$0xf]
        %v3547 = vld [vmem:[%s3534 + $0x34] sm:$0xf]
        %v3548 = vld [vmem:[%s3534 + $0x38] sm:$0xf]
        %v3549 = vld [vmem:[%s3534 + $0x40] sm:$0xf]
        %v3550 = vld [vmem:[%s3534 + $0x44] sm:$0xf]
        %v3551 = vld [vmem:[%s3534 + $0x48] sm:$0xf]
        %v3552 = vld [vmem:[%s3534 + $0x4c] sm:$0xf]
        %v3553 = vld [vmem:[%s3534 + $0x50] sm:$0xf]
        %v3554 = vld [vmem:[%s3534 + $0x54] sm:$0xf]
        %v3555 = vld [vmem:[%s3534 + $0x58] sm:$0xf]
        %v3556 = vld [vmem:[%s3534 + $0x60] sm:$0xf]
        %v3557 = vld [vmem:[%s3534 + $0x64] sm:$0xf]
        %v3558 = vld [vmem:[%s3534 + $0x68] sm:$0xf]
        %v3559 = vld [vmem:[%s3534 + $0x6c] sm:$0xf]
        %v3560 = vld [vmem:[%s3534 + $0x70] sm:$0xf]
        %v3561 = vld [vmem:[%s3534 + $0x74] sm:$0xf]
        %v3562 = vld [vmem:[%s3534 + $0x78] sm:$0xf]
        %v3563 = vld [vmem:[%s3534 + $0x80] sm:$0xf]
        %v3564 = vld [vmem:[%s3534 + $0x84] sm:$0xf]
        %v3565 = vld [vmem:[%s3534 + $0x88] sm:$0xf]
        %v3566 = vld [vmem:[%s3534 + $0x8c] sm:$0xf]
        %v3567 = vld [vmem:[%s3534 + $0x90] sm:$0xf]
        %v3568 = vld [vmem:[%s3534 + $0x94] sm:$0xf]
        %v3569 = vld [vmem:[%s3534 + $0x98] sm:$0xf]
        %v3570 = vld [vmem:[%s3534 + $0xa0] sm:$0xf]
        %v3571 = vld [vmem:[%s3534 + $0xa4] sm:$0xf]
        %v3572 = vld [vmem:[%s3534 + $0xa8] sm:$0xf]
        %v3573 = vld [vmem:[%s3534 + $0xac] sm:$0xf]
        %v3574 = vld [vmem:[%s3534 + $0xb0] sm:$0xf]
        %v3575 = vld [vmem:[%s3534 + $0xb4] sm:$0xf]
        %v3576 = vld [vmem:[%s3534 + $0xb8] sm:$0xf]
        %v3577 = vld [vmem:[%s3534 + $0xc0] sm:$0xf]
        %v3578 = vld [vmem:[%s3534 + $0xc4] sm:$0xf]
        %v3579 = vld [vmem:[%s3534 + $0xc8] sm:$0xf]
        %v3580 = vld [vmem:[%s3534 + $0xcc] sm:$0xf]
        %v3581 = vld [vmem:[%s3534 + $0xd0] sm:$0xf]
        %v3582 = vld [vmem:[%s3534 + $0xd4] sm:$0xf]
        %v3583 = vld [vmem:[%s3534 + $0xd8] sm:$0xf]
        %v3584 = vld [vmem:[%s3534 + $0xe0] sm:$0xf]
        %v3585 = vld [vmem:[%s3534 + $0xe4] sm:$0xf]
        %v3586 = vld [vmem:[%s3534 + $0xe8] sm:$0xf]
        %v3587 = vld [vmem:[%s3534 + $0xec] sm:$0xf]
        %v3588 = vld [vmem:[%s3534 + $0xf0] sm:$0xf]
        %v3589 = vld [vmem:[%s3534 + $0xf4] sm:$0xf]
        %v3590 = vld [vmem:[%s3534 + $0xf8] sm:$0xf]
        %v3623 = vrot.slane %v3535, 7
        %v3624 = vrot.slane %v3623, 4
        %v3625 = vrot.slane %v3536, 7
        %v3626 = vsel %vm849, %v3624, %v3625
        %v3627 = vrot.slane %v3625, 4
        %v3628 = vrot.slane %v3537, 7
        %v3629 = vsel %vm849, %v3627, %v3628
        %v3630 = vrot.slane %v3628, 4
        %v3631 = vrot.slane %v3538, 7
        %v3632 = vsel %vm849, %v3630, %v3631
        %v3633 = vrot.slane %v3542, 7
        %v3634 = vrot.slane %v3633, 4
        %v3635 = vrot.slane %v3543, 7
        %v3636 = vsel %vm849, %v3634, %v3635
        %v3637 = vrot.slane %v3635, 4
        %v3638 = vrot.slane %v3544, 7
        %v3639 = vsel %vm849, %v3637, %v3638
        %v3640 = vrot.slane %v3638, 4
        %v3641 = vrot.slane %v3545, 7
        %v3642 = vsel %vm849, %v3640, %v3641
        %v3643 = vrot.slane %v3549, 7
        %v3644 = vrot.slane %v3643, 4
        %v3645 = vrot.slane %v3550, 7
        %v3646 = vsel %vm849, %v3644, %v3645
        %v3647 = vrot.slane %v3645, 4
        %v3648 = vrot.slane %v3551, 7
        %v3649 = vsel %vm849, %v3647, %v3648
        %v3650 = vrot.slane %v3648, 4
        %v3651 = vrot.slane %v3552, 7
        %v3652 = vsel %vm849, %v3650, %v3651
        %v3653 = vrot.slane %v3556, 7
        %v3654 = vrot.slane %v3653, 4
        %v3655 = vrot.slane %v3557, 7
        %v3656 = vsel %vm849, %v3654, %v3655
        %v3657 = vrot.slane %v3655, 4
        %v3658 = vrot.slane %v3558, 7
        %v3659 = vsel %vm849, %v3657, %v3658
        %v3660 = vrot.slane %v3658, 4
        %v3661 = vrot.slane %v3559, 7
        %v3662 = vsel %vm849, %v3660, %v3661
        %v3663 = vrot.slane %v3563, 7
        %v3664 = vrot.slane %v3663, 4
        %v3665 = vrot.slane %v3564, 7
        %v3666 = vsel %vm849, %v3664, %v3665
        %v3667 = vrot.slane %v3665, 4
        %v3668 = vrot.slane %v3565, 7
        %v3669 = vsel %vm849, %v3667, %v3668
        %v3670 = vrot.slane %v3668, 4
        %v3671 = vrot.slane %v3566, 7
        %v3672 = vsel %vm849, %v3670, %v3671
        %v3673 = vrot.slane %v3570, 7
        %v3674 = vrot.slane %v3673, 4
        %v3675 = vrot.slane %v3571, 7
        %v3676 = vsel %vm849, %v3674, %v3675
        %v3677 = vrot.slane %v3675, 4
        %v3678 = vrot.slane %v3572, 7
        %v3679 = vsel %vm849, %v3677, %v3678
        %v3680 = vrot.slane %v3678, 4
        %v3681 = vrot.slane %v3573, 7
        %v3682 = vsel %vm849, %v3680, %v3681
        %v3683 = vrot.slane %v3577, 7
        %v3684 = vrot.slane %v3683, 4
        %v3685 = vrot.slane %v3578, 7
        %v3686 = vsel %vm849, %v3684, %v3685
        %v3687 = vrot.slane %v3685, 4
        %v3688 = vrot.slane %v3579, 7
        %v3689 = vsel %vm849, %v3687, %v3688
        %v3690 = vrot.slane %v3688, 4
        %v3691 = vrot.slane %v3580, 7
        %v3692 = vsel %vm849, %v3690, %v3691
        %v3693 = vrot.slane %v3584, 7
        %v3694 = vrot.slane %v3693, 4
        %v3695 = vrot.slane %v3585, 7
        %v3696 = vsel %vm849, %v3694, %v3695
        %v3697 = vrot.slane %v3695, 4
        %v3698 = vrot.slane %v3586, 7
        %v3699 = vsel %vm849, %v3697, %v3698
        %v3700 = vrot.slane %v3698, 4
        %v3701 = vrot.slane %v3587, 7
        %v3702 = vsel %vm849, %v3700, %v3701
        %v3703 = vunpack.c.l.b16 %v3626
        %v3704 = vunpack.c.l.b16 %v3629
        %v3705 = vunpack.c.l.b16 %v3632
        %v3706 = vunpack.c.l.b16 %v3636
        %v3707 = vunpack.c.l.b16 %v3639
        %v3708 = vunpack.c.l.b16 %v3642
        %v3709 = vunpack.c.l.b16 %v3646
        %v3710 = vunpack.c.l.b16 %v3649
        %v3711 = vunpack.c.l.b16 %v3652
        %v3712 = vunpack.c.l.b16 %v3656
        %v3713 = vunpack.c.l.b16 %v3659
        %v3714 = vunpack.c.l.b16 %v3662
        %v3715 = vunpack.c.l.b16 %v3666
        %v3716 = vunpack.c.l.b16 %v3669
        %v3717 = vunpack.c.l.b16 %v3672
        %v3718 = vunpack.c.l.b16 %v3676
        %v3719 = vunpack.c.l.b16 %v3679
        %v3720 = vunpack.c.l.b16 %v3682
        %v3721 = vunpack.c.l.b16 %v3686
        %v3722 = vunpack.c.l.b16 %v3689
        %v3723 = vunpack.c.l.b16 %v3692
        %v3724 = vunpack.c.l.b16 %v3696
        %v3725 = vunpack.c.l.b16 %v3699
        %v3726 = vunpack.c.l.b16 %v3702
        %v3727 = vpack.c.b16 %v3704, %v3703
        %v3728 = vpack.c.b16 %v3706, %v3705
        %v3729 = vpack.c.b16 %v3708, %v3707
        %v3730 = vpack.c.b16 %v3710, %v3709
        %v3731 = vpack.c.b16 %v3712, %v3711
        %v3732 = vpack.c.b16 %v3714, %v3713
        %v3733 = vpack.c.b16 %v3716, %v3715
        %v3734 = vpack.c.b16 %v3718, %v3717
        %v3735 = vpack.c.b16 %v3720, %v3719
        %v3736 = vpack.c.b16 %v3722, %v3721
        %v3737 = vpack.c.b16 %v3724, %v3723
        %v3738 = vpack.c.b16 %v3726, %v3725
        %3751 = vst.msk [vmem:[#allocation2 + $0x10] sm:$0xff] %vm2084, %v3727
        %3752 = vst.msk [vmem:[#allocation2 + $0x30] sm:$0xff] %vm2084, %v3728
        %3753 = vst.msk [vmem:[#allocation2 + $0x50] sm:$0xff] %vm2084, %v3729
        %3754 = vst.msk [vmem:[#allocation2 + $0x70] sm:$0xff] %vm2084, %v3730
        %3755 = vst.msk [vmem:[#allocation2 + $0x90] sm:$0xff] %vm2084, %v3731
        %3756 = vst.msk [vmem:[#allocation2 + $0xb0] sm:$0xff] %vm2084, %v3732
        %3757 = vst.msk [vmem:[#allocation2 + $0xd0] sm:$0xff] %vm2084, %v3733
        %3758 = vst.msk [vmem:[#allocation2 + $0xf0] sm:$0xff] %vm2084, %v3734
        %3759 = vst.msk [vmem:[#allocation2 + $0x110] sm:$0xff] %vm2084, %v3735
        %3760 = vst.msk [vmem:[#allocation2 + $0x130] sm:$0xff] %vm2084, %v3736
        %3761 = vst.msk [vmem:[#allocation2 + $0x150] sm:$0xff] %vm2084, %v3737
        %3762 = vst.msk [vmem:[#allocation2 + $0x170] sm:$0xff] %vm2084, %v3738
        %v3779 = vrot.slane %v3537, 5
        %v3780 = vrot.slane %v3779, 4
        %v3781 = vrot.slane %v3538, 5
        %v3782 = vsel %vm405, %v3780, %v3781
        %v3783 = vrot.slane %v3781, 4
        %v3784 = vrot.slane %v3539, 5
        %v3785 = vsel %vm405, %v3783, %v3784
        %v3786 = vrot.slane %v3784, 4
        %v3787 = vrot.slane %v3540, 5
        %v3788 = vsel %vm405, %v3786, %v3787
        %v3789 = vrot.slane %v3544, 5
        %v3790 = vrot.slane %v3789, 4
        %v3791 = vrot.slane %v3545, 5
        %v3792 = vsel %vm405, %v3790, %v3791
        %v3793 = vrot.slane %v3791, 4
        %v3794 = vrot.slane %v3546, 5
        %v3795 = vsel %vm405, %v3793, %v3794
        %v3796 = vrot.slane %v3794, 4
        %v3797 = vrot.slane %v3547, 5
        %v3798 = vsel %vm405, %v3796, %v3797
        %v3799 = vrot.slane %v3551, 5
        %v3800 = vrot.slane %v3799, 4
        %v3801 = vrot.slane %v3552, 5
        %v3802 = vsel %vm405, %v3800, %v3801
        %v3803 = vrot.slane %v3801, 4
        %v3804 = vrot.slane %v3553, 5
        %v3805 = vsel %vm405, %v3803, %v3804
        %v3806 = vrot.slane %v3804, 4
        %v3807 = vrot.slane %v3554, 5
        %v3808 = vsel %vm405, %v3806, %v3807
        %v3809 = vrot.slane %v3558, 5
        %v3810 = vrot.slane %v3809, 4
        %v3811 = vrot.slane %v3559, 5
        %v3812 = vsel %vm405, %v3810, %v3811
        %v3813 = vrot.slane %v3811, 4
        %v3814 = vrot.slane %v3560, 5
        %v3815 = vsel %vm405, %v3813, %v3814
        %v3816 = vrot.slane %v3814, 4
        %v3817 = vrot.slane %v3561, 5
        %v3818 = vsel %vm405, %v3816, %v3817
        %v3819 = vrot.slane %v3565, 5
        %v3820 = vrot.slane %v3819, 4
        %v3821 = vrot.slane %v3566, 5
        %v3822 = vsel %vm405, %v3820, %v3821
        %v3823 = vrot.slane %v3821, 4
        %v3824 = vrot.slane %v3567, 5
        %v3825 = vsel %vm405, %v3823, %v3824
        %v3826 = vrot.slane %v3824, 4
        %v3827 = vrot.slane %v3568, 5
        %v3828 = vsel %vm405, %v3826, %v3827
        %v3829 = vrot.slane %v3572, 5
        %v3830 = vrot.slane %v3829, 4
        %v3831 = vrot.slane %v3573, 5
        %v3832 = vsel %vm405, %v3830, %v3831
        %v3833 = vrot.slane %v3831, 4
        %v3834 = vrot.slane %v3574, 5
        %v3835 = vsel %vm405, %v3833, %v3834
        %v3836 = vrot.slane %v3834, 4
        %v3837 = vrot.slane %v3575, 5
        %v3838 = vsel %vm405, %v3836, %v3837
        %v3839 = vrot.slane %v3579, 5
        %v3840 = vrot.slane %v3839, 4
        %v3841 = vrot.slane %v3580, 5
        %v3842 = vsel %vm405, %v3840, %v3841
        %v3843 = vrot.slane %v3841, 4
        %v3844 = vrot.slane %v3581, 5
        %v3845 = vsel %vm405, %v3843, %v3844
        %v3846 = vrot.slane %v3844, 4
        %v3847 = vrot.slane %v3582, 5
        %v3848 = vsel %vm405, %v3846, %v3847
        %v3849 = vrot.slane %v3586, 5
        %v3850 = vrot.slane %v3849, 4
        %v3851 = vrot.slane %v3587, 5
        %v3852 = vsel %vm405, %v3850, %v3851
        %v3853 = vrot.slane %v3851, 4
        %v3854 = vrot.slane %v3588, 5
        %v3855 = vsel %vm405, %v3853, %v3854
        %v3856 = vrot.slane %v3854, 4
        %v3857 = vrot.slane %v3589, 5
        %v3858 = vsel %vm405, %v3856, %v3857
        %v3859 = vunpack.c.l.b16 %v3782
        %v3860 = vunpack.c.l.b16 %v3785
        %v3861 = vunpack.c.l.b16 %v3788
        %v3862 = vunpack.c.l.b16 %v3792
        %v3863 = vunpack.c.l.b16 %v3795
        %v3864 = vunpack.c.l.b16 %v3798
        %v3865 = vunpack.c.l.b16 %v3802
        %v3866 = vunpack.c.l.b16 %v3805
        %v3867 = vunpack.c.l.b16 %v3808
        %v3868 = vunpack.c.l.b16 %v3812
        %v3869 = vunpack.c.l.b16 %v3815
        %v3870 = vunpack.c.l.b16 %v3818
        %v3871 = vunpack.c.l.b16 %v3822
        %v3872 = vunpack.c.l.b16 %v3825
        %v3873 = vunpack.c.l.b16 %v3828
        %v3874 = vunpack.c.l.b16 %v3832
        %v3875 = vunpack.c.l.b16 %v3835
        %v3876 = vunpack.c.l.b16 %v3838
        %v3877 = vunpack.c.l.b16 %v3842
        %v3878 = vunpack.c.l.b16 %v3845
        %v3879 = vunpack.c.l.b16 %v3848
        %v3880 = vunpack.c.l.b16 %v3852
        %v3881 = vunpack.c.l.b16 %v3855
        %v3882 = vunpack.c.l.b16 %v3858
        %v3883 = vpack.c.b16 %v3860, %v3859
        %v3884 = vpack.c.b16 %v3862, %v3861
        %v3885 = vpack.c.b16 %v3864, %v3863
        %v3886 = vpack.c.b16 %v3866, %v3865
        %v3887 = vpack.c.b16 %v3868, %v3867
        %v3888 = vpack.c.b16 %v3870, %v3869
        %v3889 = vpack.c.b16 %v3872, %v3871
        %v3890 = vpack.c.b16 %v3874, %v3873
        %v3891 = vpack.c.b16 %v3876, %v3875
        %v3892 = vpack.c.b16 %v3878, %v3877
        %v3893 = vpack.c.b16 %v3880, %v3879
        %v3894 = vpack.c.b16 %v3882, %v3881
        %3895 = vrot.lane.b32.xlu0 %v3883, 16
        %v3896 = vpop.permute.xlu0 %3895
        %3897 = vrot.lane.b32.xlu0 %v3884, 16
        %v3898 = vpop.permute.xlu0 %3897
        %3899 = vrot.lane.b32.xlu0 %v3885, 16
        %v3900 = vpop.permute.xlu0 %3899
        %3901 = vrot.lane.b32.xlu0 %v3886, 16
        %v3902 = vpop.permute.xlu0 %3901
        %3903 = vrot.lane.b32.xlu0 %v3887, 16
        %v3904 = vpop.permute.xlu0 %3903
        %3905 = vrot.lane.b32.xlu0 %v3888, 16
        %v3906 = vpop.permute.xlu0 %3905
        %3907 = vrot.lane.b32.xlu0 %v3889, 16
        %v3908 = vpop.permute.xlu0 %3907
        %3909 = vrot.lane.b32.xlu0 %v3890, 16
        %v3910 = vpop.permute.xlu0 %3909
        %3911 = vrot.lane.b32.xlu0 %v3891, 16
        %v3912 = vpop.permute.xlu0 %3911
        %3913 = vrot.lane.b32.xlu0 %v3892, 16
        %v3914 = vpop.permute.xlu0 %3913
        %3915 = vrot.lane.b32.xlu0 %v3893, 16
        %v3916 = vpop.permute.xlu0 %3915
        %3917 = vrot.lane.b32.xlu0 %v3894, 16
        %v3918 = vpop.permute.xlu0 %3917
        %3931 = vst.msk [vmem:[#allocation2 + $0x10] sm:$0xff] %vm1587, %v3896
        %3932 = vst.msk [vmem:[#allocation2 + $0x30] sm:$0xff] %vm1587, %v3898
        %3933 = vst.msk [vmem:[#allocation2 + $0x50] sm:$0xff] %vm1587, %v3900
        %3934 = vst.msk [vmem:[#allocation2 + $0x70] sm:$0xff] %vm1587, %v3902
        %3935 = vst.msk [vmem:[#allocation2 + $0x90] sm:$0xff] %vm1587, %v3904
        %3936 = vst.msk [vmem:[#allocation2 + $0xb0] sm:$0xff] %vm1587, %v3906
        %3937 = vst.msk [vmem:[#allocation2 + $0xd0] sm:$0xff] %vm1587, %v3908
        %3938 = vst.msk [vmem:[#allocation2 + $0xf0] sm:$0xff] %vm1587, %v3910
        %3939 = vst.msk [vmem:[#allocation2 + $0x110] sm:$0xff] %vm1587, %v3912
        %3940 = vst.msk [vmem:[#allocation2 + $0x130] sm:$0xff] %vm1587, %v3914
        %3941 = vst.msk [vmem:[#allocation2 + $0x150] sm:$0xff] %vm1587, %v3916
        %3942 = vst.msk [vmem:[#allocation2 + $0x170] sm:$0xff] %vm1587, %v3918
        %v3951 = vrot.slane %v3631, 4
        %v3952 = vrot.slane %v3539, 7
        %v3953 = vsel %vm849, %v3951, %v3952
        %v3954 = vrot.slane %v3952, 4
        %v3955 = vrot.slane %v3540, 7
        %v3956 = vsel %vm849, %v3954, %v3955
        %v3957 = vrot.slane %v3955, 4
        %v3958 = vrot.slane %v3541, 7
        %v3959 = vsel %vm849, %v3957, %v3958
        %v3960 = vrot.slane %v3641, 4
        %v3961 = vrot.slane %v3546, 7
        %v3962 = vsel %vm849, %v3960, %v3961
        %v3963 = vrot.slane %v3961, 4
        %v3964 = vrot.slane %v3547, 7
        %v3965 = vsel %vm849, %v3963, %v3964
        %v3966 = vrot.slane %v3964, 4
        %v3967 = vrot.slane %v3548, 7
        %v3968 = vsel %vm849, %v3966, %v3967
        %v3969 = vrot.slane %v3651, 4
        %v3970 = vrot.slane %v3553, 7
        %v3971 = vsel %vm849, %v3969, %v3970
        %v3972 = vrot.slane %v3970, 4
        %v3973 = vrot.slane %v3554, 7
        %v3974 = vsel %vm849, %v3972, %v3973
        %v3975 = vrot.slane %v3973, 4
        %v3976 = vrot.slane %v3555, 7
        %v3977 = vsel %vm849, %v3975, %v3976
        %v3978 = vrot.slane %v3661, 4
        %v3979 = vrot.slane %v3560, 7
        %v3980 = vsel %vm849, %v3978, %v3979
        %v3981 = vrot.slane %v3979, 4
        %v3982 = vrot.slane %v3561, 7
        %v3983 = vsel %vm849, %v3981, %v3982
        %v3984 = vrot.slane %v3982, 4
        %v3985 = vrot.slane %v3562, 7
        %v3986 = vsel %vm849, %v3984, %v3985
        %v3987 = vrot.slane %v3671, 4
        %v3988 = vrot.slane %v3567, 7
        %v3989 = vsel %vm849, %v3987, %v3988
        %v3990 = vrot.slane %v3988, 4
        %v3991 = vrot.slane %v3568, 7
        %v3992 = vsel %vm849, %v3990, %v3991
        %v3993 = vrot.slane %v3991, 4
        %v3994 = vrot.slane %v3569, 7
        %v3995 = vsel %vm849, %v3993, %v3994
        %v3996 = vrot.slane %v3681, 4
        %v3997 = vrot.slane %v3574, 7
        %v3998 = vsel %vm849, %v3996, %v3997
        %v3999 = vrot.slane %v3997, 4
        %v4000 = vrot.slane %v3575, 7
        %v4001 = vsel %vm849, %v3999, %v4000
        %v4002 = vrot.slane %v4000, 4
        %v4003 = vrot.slane %v3576, 7
        %v4004 = vsel %vm849, %v4002, %v4003
        %v4005 = vrot.slane %v3691, 4
        %v4006 = vrot.slane %v3581, 7
        %v4007 = vsel %vm849, %v4005, %v4006
        %v4008 = vrot.slane %v4006, 4
        %v4009 = vrot.slane %v3582, 7
        %v4010 = vsel %vm849, %v4008, %v4009
        %v4011 = vrot.slane %v4009, 4
        %v4012 = vrot.slane %v3583, 7
        %v4013 = vsel %vm849, %v4011, %v4012
        %v4014 = vrot.slane %v3701, 4
        %v4015 = vrot.slane %v3588, 7
        %v4016 = vsel %vm849, %v4014, %v4015
        %v4017 = vrot.slane %v4015, 4
        %v4018 = vrot.slane %v3589, 7
        %v4019 = vsel %vm849, %v4017, %v4018
        %v4020 = vrot.slane %v4018, 4
        %v4021 = vrot.slane %v3590, 7
        %v4022 = vsel %vm849, %v4020, %v4021
        %v4023 = vunpack.c.l.b16 %v3953
        %v4024 = vunpack.c.l.b16 %v3956
        %v4025 = vunpack.c.l.b16 %v3959
        %v4026 = vunpack.c.l.b16 %v3962
        %v4027 = vunpack.c.l.b16 %v3965
        %v4028 = vunpack.c.l.b16 %v3968
        %v4029 = vunpack.c.l.b16 %v3971
        %v4030 = vunpack.c.l.b16 %v3974
        %v4031 = vunpack.c.l.b16 %v3977
        %v4032 = vunpack.c.l.b16 %v3980
        %v4033 = vunpack.c.l.b16 %v3983
        %v4034 = vunpack.c.l.b16 %v3986
        %v4035 = vunpack.c.l.b16 %v3989
        %v4036 = vunpack.c.l.b16 %v3992
        %v4037 = vunpack.c.l.b16 %v3995
        %v4038 = vunpack.c.l.b16 %v3998
        %v4039 = vunpack.c.l.b16 %v4001
        %v4040 = vunpack.c.l.b16 %v4004
        %v4041 = vunpack.c.l.b16 %v4007
        %v4042 = vunpack.c.l.b16 %v4010
        %v4043 = vunpack.c.l.b16 %v4013
        %v4044 = vunpack.c.l.b16 %v4016
        %v4045 = vunpack.c.l.b16 %v4019
        %v4046 = vunpack.c.l.b16 %v4022
        %v4047 = vpack.c.b16 %v4024, %v4023
        %v4048 = vpack.c.b16 %v4026, %v4025
        %v4049 = vpack.c.b16 %v4028, %v4027
        %v4050 = vpack.c.b16 %v4030, %v4029
        %v4051 = vpack.c.b16 %v4032, %v4031
        %v4052 = vpack.c.b16 %v4034, %v4033
        %v4053 = vpack.c.b16 %v4036, %v4035
        %v4054 = vpack.c.b16 %v4038, %v4037
        %v4055 = vpack.c.b16 %v4040, %v4039
        %v4056 = vpack.c.b16 %v4042, %v4041
        %v4057 = vpack.c.b16 %v4044, %v4043
        %v4058 = vpack.c.b16 %v4046, %v4045
        %4059 = vrot.lane.b32.xlu0 %v4047, 32
        %v4060 = vpop.permute.xlu0 %4059
        %4061 = vrot.lane.b32.xlu0 %v4048, 32
        %v4062 = vpop.permute.xlu0 %4061
        %4063 = vrot.lane.b32.xlu0 %v4049, 32
        %v4064 = vpop.permute.xlu0 %4063
        %4065 = vrot.lane.b32.xlu0 %v4050, 32
        %v4066 = vpop.permute.xlu0 %4065
        %4067 = vrot.lane.b32.xlu0 %v4051, 32
        %v4068 = vpop.permute.xlu0 %4067
        %4069 = vrot.lane.b32.xlu0 %v4052, 32
        %v4070 = vpop.permute.xlu0 %4069
        %4071 = vrot.lane.b32.xlu0 %v4053, 32
        %v4072 = vpop.permute.xlu0 %4071
        %4073 = vrot.lane.b32.xlu0 %v4054, 32
        %v4074 = vpop.permute.xlu0 %4073
        %4075 = vrot.lane.b32.xlu0 %v4055, 32
        %v4076 = vpop.permute.xlu0 %4075
        %4077 = vrot.lane.b32.xlu0 %v4056, 32
        %v4078 = vpop.permute.xlu0 %4077
        %4079 = vrot.lane.b32.xlu0 %v4057, 32
        %v4080 = vpop.permute.xlu0 %4079
        %4081 = vrot.lane.b32.xlu0 %v4058, 32
        %v4082 = vpop.permute.xlu0 %4081
        %4095 = vst.msk [vmem:[#allocation2 + $0x10] sm:$0xff] %vm1002, %v4060
        %4096 = vst.msk [vmem:[#allocation2 + $0x30] sm:$0xff] %vm1002, %v4062
        %4097 = vst.msk [vmem:[#allocation2 + $0x50] sm:$0xff] %vm1002, %v4064
        %4098 = vst.msk [vmem:[#allocation2 + $0x70] sm:$0xff] %vm1002, %v4066
        %4099 = vst.msk [vmem:[#allocation2 + $0x90] sm:$0xff] %vm1002, %v4068
        %4100 = vst.msk [vmem:[#allocation2 + $0xb0] sm:$0xff] %vm1002, %v4070
        %4101 = vst.msk [vmem:[#allocation2 + $0xd0] sm:$0xff] %vm1002, %v4072
        %4102 = vst.msk [vmem:[#allocation2 + $0xf0] sm:$0xff] %vm1002, %v4074
        %4103 = vst.msk [vmem:[#allocation2 + $0x110] sm:$0xff] %vm1002, %v4076
        %4104 = vst.msk [vmem:[#allocation2 + $0x130] sm:$0xff] %vm1002, %v4078
        %4105 = vst.msk [vmem:[#allocation2 + $0x150] sm:$0xff] %vm1002, %v4080
        %4106 = vst.msk [vmem:[#allocation2 + $0x170] sm:$0xff] %vm1002, %v4082
        %s4107 = sadd.s32 %s202, 36
        %s4108 = smul.u32 %s4107, 8
        %s4109 = smul.addr %s4108, 4
        %s4110 = scalar_lea.vmem %s195, %s4109
        %v4111 = vld [vmem:[%s4110] sm:$0xf]
        %v4112 = vld [vmem:[%s4110 + $0x4] sm:$0xf]
        %v4113 = vld [vmem:[%s4110 + $0x8] sm:$0xf]
        %v4114 = vld [vmem:[%s4110 + $0xc] sm:$0xf]
        %v4115 = vld [vmem:[%s4110 + $0x10] sm:$0xf]
        %v4116 = vld [vmem:[%s4110 + $0x14] sm:$0xf]
        %v4117 = vld [vmem:[%s4110 + $0x18] sm:$0xf]
        %v4118 = vld [vmem:[%s4110 + $0x1c] sm:$0x3]
        %v4119 = vld [vmem:[%s4110 + $0x20] sm:$0xf]
        %v4120 = vld [vmem:[%s4110 + $0x24] sm:$0xf]
        %v4121 = vld [vmem:[%s4110 + $0x28] sm:$0xf]
        %v4122 = vld [vmem:[%s4110 + $0x2c] sm:$0xf]
        %v4123 = vld [vmem:[%s4110 + $0x30] sm:$0xf]
        %v4124 = vld [vmem:[%s4110 + $0x34] sm:$0xf]
        %v4125 = vld [vmem:[%s4110 + $0x38] sm:$0xf]
        %v4126 = vld [vmem:[%s4110 + $0x3c] sm:$0x3]
        %v4127 = vld [vmem:[%s4110 + $0x40] sm:$0xf]
        %v4128 = vld [vmem:[%s4110 + $0x44] sm:$0xf]
        %v4129 = vld [vmem:[%s4110 + $0x48] sm:$0xf]
        %v4130 = vld [vmem:[%s4110 + $0x4c] sm:$0xf]
        %v4131 = vld [vmem:[%s4110 + $0x50] sm:$0xf]
        %v4132 = vld [vmem:[%s4110 + $0x54] sm:$0xf]
        %v4133 = vld [vmem:[%s4110 + $0x58] sm:$0xf]
        %v4134 = vld [vmem:[%s4110 + $0x5c] sm:$0x3]
        %v4135 = vld [vmem:[%s4110 + $0x60] sm:$0xf]
        %v4136 = vld [vmem:[%s4110 + $0x64] sm:$0xf]
        %v4137 = vld [vmem:[%s4110 + $0x68] sm:$0xf]
        %v4138 = vld [vmem:[%s4110 + $0x6c] sm:$0xf]
        %v4139 = vld [vmem:[%s4110 + $0x70] sm:$0xf]
        %v4140 = vld [vmem:[%s4110 + $0x74] sm:$0xf]
        %v4141 = vld [vmem:[%s4110 + $0x78] sm:$0xf]
        %v4142 = vld [vmem:[%s4110 + $0x7c] sm:$0x3]
        %v4143 = vld [vmem:[%s4110 + $0x80] sm:$0xf]
        %v4144 = vld [vmem:[%s4110 + $0x84] sm:$0xf]
        %v4145 = vld [vmem:[%s4110 + $0x88] sm:$0xf]
        %v4146 = vld [vmem:[%s4110 + $0x8c] sm:$0xf]
        %v4147 = vld [vmem:[%s4110 + $0x90] sm:$0xf]
        %v4148 = vld [vmem:[%s4110 + $0x94] sm:$0xf]
        %v4149 = vld [vmem:[%s4110 + $0x98] sm:$0xf]
        %v4150 = vld [vmem:[%s4110 + $0x9c] sm:$0x3]
        %v4151 = vld [vmem:[%s4110 + $0xa0] sm:$0xf]
        %v4152 = vld [vmem:[%s4110 + $0xa4] sm:$0xf]
        %v4153 = vld [vmem:[%s4110 + $0xa8] sm:$0xf]
        %v4154 = vld [vmem:[%s4110 + $0xac] sm:$0xf]
        %v4155 = vld [vmem:[%s4110 + $0xb0] sm:$0xf]
        %v4156 = vld [vmem:[%s4110 + $0xb4] sm:$0xf]
        %v4157 = vld [vmem:[%s4110 + $0xb8] sm:$0xf]
        %v4158 = vld [vmem:[%s4110 + $0xbc] sm:$0x3]
        %v4159 = vld [vmem:[%s4110 + $0xc0] sm:$0xf]
        %v4160 = vld [vmem:[%s4110 + $0xc4] sm:$0xf]
        %v4161 = vld [vmem:[%s4110 + $0xc8] sm:$0xf]
        %v4162 = vld [vmem:[%s4110 + $0xcc] sm:$0xf]
        %v4163 = vld [vmem:[%s4110 + $0xd0] sm:$0xf]
        %v4164 = vld [vmem:[%s4110 + $0xd4] sm:$0xf]
        %v4165 = vld [vmem:[%s4110 + $0xd8] sm:$0xf]
        %v4166 = vld [vmem:[%s4110 + $0xdc] sm:$0x3]
        %v4167 = vld [vmem:[%s4110 + $0xe0] sm:$0xf]
        %v4168 = vld [vmem:[%s4110 + $0xe4] sm:$0xf]
        %v4169 = vld [vmem:[%s4110 + $0xe8] sm:$0xf]
        %v4170 = vld [vmem:[%s4110 + $0xec] sm:$0xf]
        %v4171 = vld [vmem:[%s4110 + $0xf0] sm:$0xf]
        %v4172 = vld [vmem:[%s4110 + $0xf4] sm:$0xf]
        %v4173 = vld [vmem:[%s4110 + $0xf8] sm:$0xf]
        %v4174 = vld [vmem:[%s4110 + $0xfc] sm:$0x3]
        %v4199 = vunpack.c.l.b16 %v4111
        %v4200 = vunpack.c.l.b16 %v4112
        %v4201 = vunpack.c.l.b16 %v4113
        %v4202 = vunpack.c.l.b16 %v4119
        %v4203 = vunpack.c.l.b16 %v4120
        %v4204 = vunpack.c.l.b16 %v4121
        %v4205 = vunpack.c.l.b16 %v4127
        %v4206 = vunpack.c.l.b16 %v4128
        %v4207 = vunpack.c.l.b16 %v4129
        %v4208 = vunpack.c.l.b16 %v4135
        %v4209 = vunpack.c.l.b16 %v4136
        %v4210 = vunpack.c.l.b16 %v4137
        %v4211 = vunpack.c.l.b16 %v4143
        %v4212 = vunpack.c.l.b16 %v4144
        %v4213 = vunpack.c.l.b16 %v4145
        %v4214 = vunpack.c.l.b16 %v4151
        %v4215 = vunpack.c.l.b16 %v4152
        %v4216 = vunpack.c.l.b16 %v4153
        %v4217 = vunpack.c.l.b16 %v4159
        %v4218 = vunpack.c.l.b16 %v4160
        %v4219 = vunpack.c.l.b16 %v4161
        %v4220 = vunpack.c.l.b16 %v4167
        %v4221 = vunpack.c.l.b16 %v4168
        %v4222 = vunpack.c.l.b16 %v4169
        %v4223 = vpack.c.b16 %v4200, %v4199
        %v4224 = vpack.c.b16 %v4202, %v4201
        %v4225 = vpack.c.b16 %v4204, %v4203
        %v4226 = vpack.c.b16 %v4206, %v4205
        %v4227 = vpack.c.b16 %v4208, %v4207
        %v4228 = vpack.c.b16 %v4210, %v4209
        %v4229 = vpack.c.b16 %v4212, %v4211
        %v4230 = vpack.c.b16 %v4214, %v4213
        %v4231 = vpack.c.b16 %v4216, %v4215
        %v4232 = vpack.c.b16 %v4218, %v4217
        %v4233 = vpack.c.b16 %v4220, %v4219
        %v4234 = vpack.c.b16 %v4222, %v4221
        %4235 = vrot.lane.b32.xlu0 %v4223, 16
        %v4236 = vpop.permute.xlu0 %4235
        %4237 = vrot.lane.b32.xlu0 %v4224, 16
        %v4238 = vpop.permute.xlu0 %4237
        %4239 = vrot.lane.b32.xlu0 %v4225, 16
        %v4240 = vpop.permute.xlu0 %4239
        %4241 = vrot.lane.b32.xlu0 %v4226, 16
        %v4242 = vpop.permute.xlu0 %4241
        %4243 = vrot.lane.b32.xlu0 %v4227, 16
        %v4244 = vpop.permute.xlu0 %4243
        %4245 = vrot.lane.b32.xlu0 %v4228, 16
        %v4246 = vpop.permute.xlu0 %4245
        %4247 = vrot.lane.b32.xlu0 %v4229, 16
        %v4248 = vpop.permute.xlu0 %4247
        %4249 = vrot.lane.b32.xlu0 %v4230, 16
        %v4250 = vpop.permute.xlu0 %4249
        %4251 = vrot.lane.b32.xlu0 %v4231, 16
        %v4252 = vpop.permute.xlu0 %4251
        %4253 = vrot.lane.b32.xlu0 %v4232, 16
        %v4254 = vpop.permute.xlu0 %4253
        %4255 = vrot.lane.b32.xlu0 %v4233, 16
        %v4256 = vpop.permute.xlu0 %4255
        %4257 = vrot.lane.b32.xlu0 %v4234, 16
        %v4258 = vpop.permute.xlu0 %4257
        %4271 = vst.msk [vmem:[#allocation2 + $0x18] sm:$0xff] %vm1587, %v4236
        %4272 = vst.msk [vmem:[#allocation2 + $0x38] sm:$0xff] %vm1587, %v4238
        %4273 = vst.msk [vmem:[#allocation2 + $0x58] sm:$0xff] %vm1587, %v4240
        %4274 = vst.msk [vmem:[#allocation2 + $0x78] sm:$0xff] %vm1587, %v4242
        %4275 = vst.msk [vmem:[#allocation2 + $0x98] sm:$0xff] %vm1587, %v4244
        %4276 = vst.msk [vmem:[#allocation2 + $0xb8] sm:$0xff] %vm1587, %v4246
        %4277 = vst.msk [vmem:[#allocation2 + $0xd8] sm:$0xff] %vm1587, %v4248
        %4278 = vst.msk [vmem:[#allocation2 + $0xf8] sm:$0xff] %vm1587, %v4250
        %4279 = vst.msk [vmem:[#allocation2 + $0x118] sm:$0xff] %vm1587, %v4252
        %4280 = vst.msk [vmem:[#allocation2 + $0x138] sm:$0xff] %vm1587, %v4254
        %4281 = vst.msk [vmem:[#allocation2 + $0x158] sm:$0xff] %vm1587, %v4256
        %4282 = vst.msk [vmem:[#allocation2 + $0x178] sm:$0xff] %vm1587, %v4258
        %v4307 = vrot.slane %v4113, 5
        %v4308 = vrot.slane %v4307, 4
        %v4309 = vrot.slane %v4114, 5
        %v4310 = vsel %vm405, %v4308, %v4309
        %v4311 = vrot.slane %v4309, 4
        %v4312 = vrot.slane %v4115, 5
        %v4313 = vsel %vm405, %v4311, %v4312
        %v4314 = vrot.slane %v4312, 4
        %v4315 = vrot.slane %v4116, 5
        %v4316 = vsel %vm405, %v4314, %v4315
        %v4317 = vrot.slane %v4121, 5
        %v4318 = vrot.slane %v4317, 4
        %v4319 = vrot.slane %v4122, 5
        %v4320 = vsel %vm405, %v4318, %v4319
        %v4321 = vrot.slane %v4319, 4
        %v4322 = vrot.slane %v4123, 5
        %v4323 = vsel %vm405, %v4321, %v4322
        %v4324 = vrot.slane %v4322, 4
        %v4325 = vrot.slane %v4124, 5
        %v4326 = vsel %vm405, %v4324, %v4325
        %v4327 = vrot.slane %v4129, 5
        %v4328 = vrot.slane %v4327, 4
        %v4329 = vrot.slane %v4130, 5
        %v4330 = vsel %vm405, %v4328, %v4329
        %v4331 = vrot.slane %v4329, 4
        %v4332 = vrot.slane %v4131, 5
        %v4333 = vsel %vm405, %v4331, %v4332
        %v4334 = vrot.slane %v4332, 4
        %v4335 = vrot.slane %v4132, 5
        %v4336 = vsel %vm405, %v4334, %v4335
        %v4337 = vrot.slane %v4137, 5
        %v4338 = vrot.slane %v4337, 4
        %v4339 = vrot.slane %v4138, 5
        %v4340 = vsel %vm405, %v4338, %v4339
        %v4341 = vrot.slane %v4339, 4
        %v4342 = vrot.slane %v4139, 5
        %v4343 = vsel %vm405, %v4341, %v4342
        %v4344 = vrot.slane %v4342, 4
        %v4345 = vrot.slane %v4140, 5
        %v4346 = vsel %vm405, %v4344, %v4345
        %v4347 = vrot.slane %v4145, 5
        %v4348 = vrot.slane %v4347, 4
        %v4349 = vrot.slane %v4146, 5
        %v4350 = vsel %vm405, %v4348, %v4349
        %v4351 = vrot.slane %v4349, 4
        %v4352 = vrot.slane %v4147, 5
        %v4353 = vsel %vm405, %v4351, %v4352
        %v4354 = vrot.slane %v4352, 4
        %v4355 = vrot.slane %v4148, 5
        %v4356 = vsel %vm405, %v4354, %v4355
        %v4357 = vrot.slane %v4153, 5
        %v4358 = vrot.slane %v4357, 4
        %v4359 = vrot.slane %v4154, 5
        %v4360 = vsel %vm405, %v4358, %v4359
        %v4361 = vrot.slane %v4359, 4
        %v4362 = vrot.slane %v4155, 5
        %v4363 = vsel %vm405, %v4361, %v4362
        %v4364 = vrot.slane %v4362, 4
        %v4365 = vrot.slane %v4156, 5
        %v4366 = vsel %vm405, %v4364, %v4365
        %v4367 = vrot.slane %v4161, 5
        %v4368 = vrot.slane %v4367, 4
        %v4369 = vrot.slane %v4162, 5
        %v4370 = vsel %vm405, %v4368, %v4369
        %v4371 = vrot.slane %v4369, 4
        %v4372 = vrot.slane %v4163, 5
        %v4373 = vsel %vm405, %v4371, %v4372
        %v4374 = vrot.slane %v4372, 4
        %v4375 = vrot.slane %v4164, 5
        %v4376 = vsel %vm405, %v4374, %v4375
        %v4377 = vrot.slane %v4169, 5
        %v4378 = vrot.slane %v4377, 4
        %v4379 = vrot.slane %v4170, 5
        %v4380 = vsel %vm405, %v4378, %v4379
        %v4381 = vrot.slane %v4379, 4
        %v4382 = vrot.slane %v4171, 5
        %v4383 = vsel %vm405, %v4381, %v4382
        %v4384 = vrot.slane %v4382, 4
        %v4385 = vrot.slane %v4172, 5
        %v4386 = vsel %vm405, %v4384, %v4385
        %v4387 = vunpack.c.l.b16 %v4310
        %v4388 = vunpack.c.l.b16 %v4313
        %v4389 = vunpack.c.l.b16 %v4316
        %v4390 = vunpack.c.l.b16 %v4320
        %v4391 = vunpack.c.l.b16 %v4323
        %v4392 = vunpack.c.l.b16 %v4326
        %v4393 = vunpack.c.l.b16 %v4330
        %v4394 = vunpack.c.l.b16 %v4333
        %v4395 = vunpack.c.l.b16 %v4336
        %v4396 = vunpack.c.l.b16 %v4340
        %v4397 = vunpack.c.l.b16 %v4343
        %v4398 = vunpack.c.l.b16 %v4346
        %v4399 = vunpack.c.l.b16 %v4350
        %v4400 = vunpack.c.l.b16 %v4353
        %v4401 = vunpack.c.l.b16 %v4356
        %v4402 = vunpack.c.l.b16 %v4360
        %v4403 = vunpack.c.l.b16 %v4363
        %v4404 = vunpack.c.l.b16 %v4366
        %v4405 = vunpack.c.l.b16 %v4370
        %v4406 = vunpack.c.l.b16 %v4373
        %v4407 = vunpack.c.l.b16 %v4376
        %v4408 = vunpack.c.l.b16 %v4380
        %v4409 = vunpack.c.l.b16 %v4383
        %v4410 = vunpack.c.l.b16 %v4386
        %v4411 = vpack.c.b16 %v4388, %v4387
        %v4412 = vpack.c.b16 %v4390, %v4389
        %v4413 = vpack.c.b16 %v4392, %v4391
        %v4414 = vpack.c.b16 %v4394, %v4393
        %v4415 = vpack.c.b16 %v4396, %v4395
        %v4416 = vpack.c.b16 %v4398, %v4397
        %v4417 = vpack.c.b16 %v4400, %v4399
        %v4418 = vpack.c.b16 %v4402, %v4401
        %v4419 = vpack.c.b16 %v4404, %v4403
        %v4420 = vpack.c.b16 %v4406, %v4405
        %v4421 = vpack.c.b16 %v4408, %v4407
        %v4422 = vpack.c.b16 %v4410, %v4409
        %4423 = vrot.lane.b32.xlu0 %v4411, 32
        %v4424 = vpop.permute.xlu0 %4423
        %4425 = vrot.lane.b32.xlu0 %v4412, 32
        %v4426 = vpop.permute.xlu0 %4425
        %4427 = vrot.lane.b32.xlu0 %v4413, 32
        %v4428 = vpop.permute.xlu0 %4427
        %4429 = vrot.lane.b32.xlu0 %v4414, 32
        %v4430 = vpop.permute.xlu0 %4429
        %4431 = vrot.lane.b32.xlu0 %v4415, 32
        %v4432 = vpop.permute.xlu0 %4431
        %4433 = vrot.lane.b32.xlu0 %v4416, 32
        %v4434 = vpop.permute.xlu0 %4433
        %4435 = vrot.lane.b32.xlu0 %v4417, 32
        %v4436 = vpop.permute.xlu0 %4435
        %4437 = vrot.lane.b32.xlu0 %v4418, 32
        %v4438 = vpop.permute.xlu0 %4437
        %4439 = vrot.lane.b32.xlu0 %v4419, 32
        %v4440 = vpop.permute.xlu0 %4439
        %4441 = vrot.lane.b32.xlu0 %v4420, 32
        %v4442 = vpop.permute.xlu0 %4441
        %4443 = vrot.lane.b32.xlu0 %v4421, 32
        %v4444 = vpop.permute.xlu0 %4443
        %4445 = vrot.lane.b32.xlu0 %v4422, 32
        %v4446 = vpop.permute.xlu0 %4445
        %4459 = vst.msk [vmem:[#allocation2 + $0x18] sm:$0xff] %vm1002, %v4424
        %4460 = vst.msk [vmem:[#allocation2 + $0x38] sm:$0xff] %vm1002, %v4426
        %4461 = vst.msk [vmem:[#allocation2 + $0x58] sm:$0xff] %vm1002, %v4428
        %4462 = vst.msk [vmem:[#allocation2 + $0x78] sm:$0xff] %vm1002, %v4430
        %4463 = vst.msk [vmem:[#allocation2 + $0x98] sm:$0xff] %vm1002, %v4432
        %4464 = vst.msk [vmem:[#allocation2 + $0xb8] sm:$0xff] %vm1002, %v4434
        %4465 = vst.msk [vmem:[#allocation2 + $0xd8] sm:$0xff] %vm1002, %v4436
        %4466 = vst.msk [vmem:[#allocation2 + $0xf8] sm:$0xff] %vm1002, %v4438
        %4467 = vst.msk [vmem:[#allocation2 + $0x118] sm:$0xff] %vm1002, %v4440
        %4468 = vst.msk [vmem:[#allocation2 + $0x138] sm:$0xff] %vm1002, %v4442
        %4469 = vst.msk [vmem:[#allocation2 + $0x158] sm:$0xff] %vm1002, %v4444
        %4470 = vst.msk [vmem:[#allocation2 + $0x178] sm:$0xff] %vm1002, %v4446
        %v4487 = vrot.slane %v4115, 6
        %v4488 = vrot.slane %v4487, 4
        %v4489 = vrot.slane %v4116, 6
        %v4490 = vsel %vm589, %v4488, %v4489
        %v4491 = vrot.slane %v4489, 4
        %v4492 = vrot.slane %v4117, 6
        %v4493 = vsel %vm589, %v4491, %v4492
        %v4494 = vrot.slane %v4492, 4
        %v4495 = vrot.slane %v4118, 6
        %v4496 = vsel %vm589, %v4494, %v4495
        %v4497 = vrot.slane %v4123, 6
        %v4498 = vrot.slane %v4497, 4
        %v4499 = vrot.slane %v4124, 6
        %v4500 = vsel %vm589, %v4498, %v4499
        %v4501 = vrot.slane %v4499, 4
        %v4502 = vrot.slane %v4125, 6
        %v4503 = vsel %vm589, %v4501, %v4502
        %v4504 = vrot.slane %v4502, 4
        %v4505 = vrot.slane %v4126, 6
        %v4506 = vsel %vm589, %v4504, %v4505
        %v4507 = vrot.slane %v4131, 6
        %v4508 = vrot.slane %v4507, 4
        %v4509 = vrot.slane %v4132, 6
        %v4510 = vsel %vm589, %v4508, %v4509
        %v4511 = vrot.slane %v4509, 4
        %v4512 = vrot.slane %v4133, 6
        %v4513 = vsel %vm589, %v4511, %v4512
        %v4514 = vrot.slane %v4512, 4
        %v4515 = vrot.slane %v4134, 6
        %v4516 = vsel %vm589, %v4514, %v4515
        %v4517 = vrot.slane %v4139, 6
        %v4518 = vrot.slane %v4517, 4
        %v4519 = vrot.slane %v4140, 6
        %v4520 = vsel %vm589, %v4518, %v4519
        %v4521 = vrot.slane %v4519, 4
        %v4522 = vrot.slane %v4141, 6
        %v4523 = vsel %vm589, %v4521, %v4522
        %v4524 = vrot.slane %v4522, 4
        %v4525 = vrot.slane %v4142, 6
        %v4526 = vsel %vm589, %v4524, %v4525
        %v4527 = vrot.slane %v4147, 6
        %v4528 = vrot.slane %v4527, 4
        %v4529 = vrot.slane %v4148, 6
        %v4530 = vsel %vm589, %v4528, %v4529
        %v4531 = vrot.slane %v4529, 4
        %v4532 = vrot.slane %v4149, 6
        %v4533 = vsel %vm589, %v4531, %v4532
        %v4534 = vrot.slane %v4532, 4
        %v4535 = vrot.slane %v4150, 6
        %v4536 = vsel %vm589, %v4534, %v4535
        %v4537 = vrot.slane %v4155, 6
        %v4538 = vrot.slane %v4537, 4
        %v4539 = vrot.slane %v4156, 6
        %v4540 = vsel %vm589, %v4538, %v4539
        %v4541 = vrot.slane %v4539, 4
        %v4542 = vrot.slane %v4157, 6
        %v4543 = vsel %vm589, %v4541, %v4542
        %v4544 = vrot.slane %v4542, 4
        %v4545 = vrot.slane %v4158, 6
        %v4546 = vsel %vm589, %v4544, %v4545
        %v4547 = vrot.slane %v4163, 6
        %v4548 = vrot.slane %v4547, 4
        %v4549 = vrot.slane %v4164, 6
        %v4550 = vsel %vm589, %v4548, %v4549
        %v4551 = vrot.slane %v4549, 4
        %v4552 = vrot.slane %v4165, 6
        %v4553 = vsel %vm589, %v4551, %v4552
        %v4554 = vrot.slane %v4552, 4
        %v4555 = vrot.slane %v4166, 6
        %v4556 = vsel %vm589, %v4554, %v4555
        %v4557 = vrot.slane %v4171, 6
        %v4558 = vrot.slane %v4557, 4
        %v4559 = vrot.slane %v4172, 6
        %v4560 = vsel %vm589, %v4558, %v4559
        %v4561 = vrot.slane %v4559, 4
        %v4562 = vrot.slane %v4173, 6
        %v4563 = vsel %vm589, %v4561, %v4562
        %v4564 = vrot.slane %v4562, 4
        %v4565 = vrot.slane %v4174, 6
        %v4566 = vsel %vm589, %v4564, %v4565
        %v4567 = vunpack.c.l.b16 %v4490
        %v4568 = vunpack.c.l.b16 %v4493
        %v4569 = vunpack.c.l.b16 %v4496
        %v4570 = vunpack.c.l.b16 %v4500
        %v4571 = vunpack.c.l.b16 %v4503
        %v4572 = vunpack.c.l.b16 %v4506
        %v4573 = vunpack.c.l.b16 %v4510
        %v4574 = vunpack.c.l.b16 %v4513
        %v4575 = vunpack.c.l.b16 %v4516
        %v4576 = vunpack.c.l.b16 %v4520
        %v4577 = vunpack.c.l.b16 %v4523
        %v4578 = vunpack.c.l.b16 %v4526
        %v4579 = vunpack.c.l.b16 %v4530
        %v4580 = vunpack.c.l.b16 %v4533
        %v4581 = vunpack.c.l.b16 %v4536
        %v4582 = vunpack.c.l.b16 %v4540
        %v4583 = vunpack.c.l.b16 %v4543
        %v4584 = vunpack.c.l.b16 %v4546
        %v4585 = vunpack.c.l.b16 %v4550
        %v4586 = vunpack.c.l.b16 %v4553
        %v4587 = vunpack.c.l.b16 %v4556
        %v4588 = vunpack.c.l.b16 %v4560
        %v4589 = vunpack.c.l.b16 %v4563
        %v4590 = vunpack.c.l.b16 %v4566
        %v4591 = vpack.c.b16 %v4568, %v4567
        %v4592 = vpack.c.b16 %v4570, %v4569
        %v4593 = vpack.c.b16 %v4572, %v4571
        %v4594 = vpack.c.b16 %v4574, %v4573
        %v4595 = vpack.c.b16 %v4576, %v4575
        %v4596 = vpack.c.b16 %v4578, %v4577
        %v4597 = vpack.c.b16 %v4580, %v4579
        %v4598 = vpack.c.b16 %v4582, %v4581
        %v4599 = vpack.c.b16 %v4584, %v4583
        %v4600 = vpack.c.b16 %v4586, %v4585
        %v4601 = vpack.c.b16 %v4588, %v4587
        %v4602 = vpack.c.b16 %v4590, %v4589
        %4603 = vrot.lane.b32.xlu0 %v4591, 48
        %v4604 = vpop.permute.xlu0 %4603
        %4605 = vrot.lane.b32.xlu0 %v4592, 48
        %v4606 = vpop.permute.xlu0 %4605
        %4607 = vrot.lane.b32.xlu0 %v4593, 48
        %v4608 = vpop.permute.xlu0 %4607
        %4609 = vrot.lane.b32.xlu0 %v4594, 48
        %v4610 = vpop.permute.xlu0 %4609
        %4611 = vrot.lane.b32.xlu0 %v4595, 48
        %v4612 = vpop.permute.xlu0 %4611
        %4613 = vrot.lane.b32.xlu0 %v4596, 48
        %v4614 = vpop.permute.xlu0 %4613
        %4615 = vrot.lane.b32.xlu0 %v4597, 48
        %v4616 = vpop.permute.xlu0 %4615
        %4617 = vrot.lane.b32.xlu0 %v4598, 48
        %v4618 = vpop.permute.xlu0 %4617
        %4619 = vrot.lane.b32.xlu0 %v4599, 48
        %v4620 = vpop.permute.xlu0 %4619
        %4621 = vrot.lane.b32.xlu0 %v4600, 48
        %v4622 = vpop.permute.xlu0 %4621
        %4623 = vrot.lane.b32.xlu0 %v4601, 48
        %v4624 = vpop.permute.xlu0 %4623
        %4625 = vrot.lane.b32.xlu0 %v4602, 48
        %v4626 = vpop.permute.xlu0 %4625
        %4639 = vst.msk [vmem:[#allocation2 + $0x18] sm:$0xff] %vm366, %v4604
        %4640 = vst.msk [vmem:[#allocation2 + $0x38] sm:$0xff] %vm366, %v4606
        %4641 = vst.msk [vmem:[#allocation2 + $0x58] sm:$0xff] %vm366, %v4608
        %4642 = vst.msk [vmem:[#allocation2 + $0x78] sm:$0xff] %vm366, %v4610
        %4643 = vst.msk [vmem:[#allocation2 + $0x98] sm:$0xff] %vm366, %v4612
        %4644 = vst.msk [vmem:[#allocation2 + $0xb8] sm:$0xff] %vm366, %v4614
        %4645 = vst.msk [vmem:[#allocation2 + $0xd8] sm:$0xff] %vm366, %v4616
        %4646 = vst.msk [vmem:[#allocation2 + $0xf8] sm:$0xff] %vm366, %v4618
        %4647 = vst.msk [vmem:[#allocation2 + $0x118] sm:$0xff] %vm366, %v4620
        %4648 = vst.msk [vmem:[#allocation2 + $0x138] sm:$0xff] %vm366, %v4622
        %4649 = vst.msk [vmem:[#allocation2 + $0x158] sm:$0xff] %vm366, %v4624
        %4650 = vst.msk [vmem:[#allocation2 + $0x178] sm:$0xff] %vm366, %v4626
        %v4651 = vld [vmem:[#allocation2] sm:$0xff]
        %v4652 = vld [vmem:[#allocation2 + $0x8] sm:$0xff]
        %v4653 = vld [vmem:[#allocation2 + $0x10] sm:$0xff]
        %v4654 = vld [vmem:[#allocation2 + $0x18] sm:$0xff]
        %v4655 = vld [vmem:[#allocation2 + $0x20] sm:$0xff]
        %v4656 = vld [vmem:[#allocation2 + $0x28] sm:$0xff]
        %v4657 = vld [vmem:[#allocation2 + $0x30] sm:$0xff]
        %v4658 = vld [vmem:[#allocation2 + $0x38] sm:$0xff]
        %v4659 = vld [vmem:[#allocation2 + $0x40] sm:$0xff]
        %v4660 = vld [vmem:[#allocation2 + $0x48] sm:$0xff]
        %v4661 = vld [vmem:[#allocation2 + $0x50] sm:$0xff]
        %v4662 = vld [vmem:[#allocation2 + $0x58] sm:$0xff]
        %v4663 = vld [vmem:[#allocation2 + $0x60] sm:$0xff]
        %v4664 = vld [vmem:[#allocation2 + $0x68] sm:$0xff]
        %v4665 = vld [vmem:[#allocation2 + $0x70] sm:$0xff]
        %v4666 = vld [vmem:[#allocation2 + $0x78] sm:$0xff]
        %v4667 = vld [vmem:[#allocation2 + $0x80] sm:$0xff]
        %v4668 = vld [vmem:[#allocation2 + $0x88] sm:$0xff]
        %v4669 = vld [vmem:[#allocation2 + $0x90] sm:$0xff]
        %v4670 = vld [vmem:[#allocation2 + $0x98] sm:$0xff]
        %v4671 = vld [vmem:[#allocation2 + $0xa0] sm:$0xff]
        %v4672 = vld [vmem:[#allocation2 + $0xa8] sm:$0xff]
        %v4673 = vld [vmem:[#allocation2 + $0xb0] sm:$0xff]
        %v4674 = vld [vmem:[#allocation2 + $0xb8] sm:$0xff]
        %v4675 = vld [vmem:[#allocation2 + $0xc0] sm:$0xff]
        %v4676 = vld [vmem:[#allocation2 + $0xc8] sm:$0xff]
        %v4677 = vld [vmem:[#allocation2 + $0xd0] sm:$0xff]
        %v4678 = vld [vmem:[#allocation2 + $0xd8] sm:$0xff]
        %v4679 = vld [vmem:[#allocation2 + $0xe0] sm:$0xff]
        %v4680 = vld [vmem:[#allocation2 + $0xe8] sm:$0xff]
        %v4681 = vld [vmem:[#allocation2 + $0xf0] sm:$0xff]
        %v4682 = vld [vmem:[#allocation2 + $0xf8] sm:$0xff]
        %v4683 = vld [vmem:[#allocation2 + $0x100] sm:$0xff]
        %v4684 = vld [vmem:[#allocation2 + $0x108] sm:$0xff]
        %v4685 = vld [vmem:[#allocation2 + $0x110] sm:$0xff]
        %v4686 = vld [vmem:[#allocation2 + $0x118] sm:$0xff]
        %v4687 = vld [vmem:[#allocation2 + $0x120] sm:$0xff]
        %v4688 = vld [vmem:[#allocation2 + $0x128] sm:$0xff]
        %v4689 = vld [vmem:[#allocation2 + $0x130] sm:$0xff]
        %v4690 = vld [vmem:[#allocation2 + $0x138] sm:$0xff]
        %v4691 = vld [vmem:[#allocation2 + $0x140] sm:$0xff]
        %v4692 = vld [vmem:[#allocation2 + $0x148] sm:$0xff]
        %v4693 = vld [vmem:[#allocation2 + $0x150] sm:$0xff]
        %v4694 = vld [vmem:[#allocation2 + $0x158] sm:$0xff]
        %v4695 = vld [vmem:[#allocation2 + $0x160] sm:$0xff]
        %v4696 = vld [vmem:[#allocation2 + $0x168] sm:$0xff]
        %v4697 = vld [vmem:[#allocation2 + $0x170] sm:$0xff]
        %v4698 = vld [vmem:[#allocation2 + $0x178] sm:$0xff]
        %v4699 = vld [vmem:[%s2] sm:$0xf]
        %v4700 = vld [vmem:[%s2 + $0x4] sm:$0xf]
        %v4701 = vld [vmem:[%s2 + $0x8] sm:$0xf]
        %v4702 = vld [vmem:[%s2 + $0xc] sm:$0xf]
        %v4703 = vld [vmem:[%s2 + $0x10] sm:$0xf]
        %v4704 = vld [vmem:[%s2 + $0x14] sm:$0xf]
        %v4705 = vld [vmem:[%s2 + $0x18] sm:$0xf]
        %v4706 = vld [vmem:[%s2 + $0x1c] sm:$0xf]
        %v4707 = vld [vmem:[%s2 + $0x20] sm:$0xf]
        %v4708 = vld [vmem:[%s2 + $0x24] sm:$0xf]
        %v4709 = vld [vmem:[%s2 + $0x28] sm:$0xf]
        %v4710 = vld [vmem:[%s2 + $0x2c] sm:$0xf]
        %v4711 = vld [vmem:[%s2 + $0x30] sm:$0xf]
        %v4712 = vld [vmem:[%s2 + $0x34] sm:$0xf]
        %v4713 = vld [vmem:[%s2 + $0x38] sm:$0xf]
        %v4714 = vld [vmem:[%s2 + $0x3c] sm:$0xf]
        %v4715 = vld [vmem:[%s2 + $0x40] sm:$0xf]
        %v4716 = vld [vmem:[%s2 + $0x44] sm:$0xf]
        %v4717 = vld [vmem:[%s2 + $0x48] sm:$0xf]
        %v4718 = vld [vmem:[%s2 + $0x4c] sm:$0xf]
        %v4719 = vld [vmem:[%s2 + $0x50] sm:$0xf]
        %v4720 = vld [vmem:[%s2 + $0x54] sm:$0xf]
        %v4721 = vld [vmem:[%s2 + $0x58] sm:$0xf]
        %v4722 = vld [vmem:[%s2 + $0x5c] sm:$0xf]
        %v4723 = vld [vmem:[%s2 + $0x60] sm:$0xf]
        %v4724 = vld [vmem:[%s2 + $0x64] sm:$0xf]
        %v4725 = vld [vmem:[%s2 + $0x68] sm:$0xf]
        %v4726 = vld [vmem:[%s2 + $0x6c] sm:$0xf]
        %v4727 = vld [vmem:[%s2 + $0x70] sm:$0xf]
        %v4728 = vld [vmem:[%s2 + $0x74] sm:$0xf]
        %v4729 = vld [vmem:[%s2 + $0x78] sm:$0xf]
        %v4730 = vld [vmem:[%s2 + $0x7c] sm:$0xf]
        %v4731 = vld [vmem:[%s2 + $0x80] sm:$0xf]
        %v4732 = vld [vmem:[%s2 + $0x84] sm:$0xf]
        %v4733 = vld [vmem:[%s2 + $0x88] sm:$0xf]
        %v4734 = vld [vmem:[%s2 + $0x8c] sm:$0xf]
        %v4735 = vld [vmem:[%s2 + $0x90] sm:$0xf]
        %v4736 = vld [vmem:[%s2 + $0x94] sm:$0xf]
        %v4737 = vld [vmem:[%s2 + $0x98] sm:$0xf]
        %v4738 = vld [vmem:[%s2 + $0x9c] sm:$0xf]
        %v4739 = vld [vmem:[%s2 + $0xa0] sm:$0xf]
        %v4740 = vld [vmem:[%s2 + $0xa4] sm:$0xf]
        %v4741 = vld [vmem:[%s2 + $0xa8] sm:$0xf]
        %v4742 = vld [vmem:[%s2 + $0xac] sm:$0xf]
        %v4743 = vld [vmem:[%s2 + $0xb0] sm:$0xf]
        %v4744 = vld [vmem:[%s2 + $0xb4] sm:$0xf]
        %v4745 = vld [vmem:[%s2 + $0xb8] sm:$0xf]
        %v4746 = vld [vmem:[%s2 + $0xbc] sm:$0xf]
        %v4747 = vld [vmem:[%s2 + $0xc0] sm:$0xf]
        %v4748 = vld [vmem:[%s2 + $0xc4] sm:$0xf]
        %v4749 = vld [vmem:[%s2 + $0xc8] sm:$0xf]
        %v4750 = vld [vmem:[%s2 + $0xcc] sm:$0xf]
        %v4751 = vld [vmem:[%s2 + $0xd0] sm:$0xf]
        %v4752 = vld [vmem:[%s2 + $0xd4] sm:$0xf]
        %v4753 = vld [vmem:[%s2 + $0xd8] sm:$0xf]
        %v4754 = vld [vmem:[%s2 + $0xdc] sm:$0xf]
        %v4755 = vld [vmem:[%s199] sm:$0x1]
        %v4756 = vlaneseq
        %v4757 = vshrl.u32 %v4756, 7
        %v4758 = vsub.s32 0, %v4757
        %v4759 = vrot.slane %v4755, %v4758
        %v4816 = vunpack.c.l.b16 %v4699
        %v4817 = vunpack.c.l.b16 %v4700
        %v4818 = vunpack.c.l.b16 %v4701
        %v4819 = vunpack.c.l.b16 %v4702
        %v4820 = vunpack.c.l.b16 %v4703
        %v4821 = vunpack.c.l.b16 %v4704
        %v4822 = vunpack.c.l.b16 %v4705
        %v4823 = vunpack.c.l.b16 %v4706
        %v4824 = vunpack.c.l.b16 %v4707
        %v4825 = vunpack.c.l.b16 %v4708
        %v4826 = vunpack.c.l.b16 %v4709
        %v4827 = vunpack.c.l.b16 %v4710
        %v4828 = vunpack.c.l.b16 %v4711
        %v4829 = vunpack.c.l.b16 %v4712
        %v4830 = vunpack.c.l.b16 %v4713
        %v4831 = vunpack.c.l.b16 %v4714
        %v4832 = vunpack.c.l.b16 %v4715
        %v4833 = vunpack.c.l.b16 %v4716
        %v4834 = vunpack.c.l.b16 %v4717
        %v4835 = vunpack.c.l.b16 %v4718
        %v4836 = vunpack.c.l.b16 %v4719
        %v4837 = vunpack.c.l.b16 %v4720
        %v4838 = vunpack.c.l.b16 %v4721
        %v4839 = vunpack.c.l.b16 %v4722
        %v4840 = vunpack.c.l.b16 %v4723
        %v4841 = vunpack.c.l.b16 %v4724
        %v4842 = vunpack.c.l.b16 %v4725
        %v4843 = vunpack.c.l.b16 %v4726
        %v4844 = vunpack.c.l.b16 %v4727
        %v4845 = vunpack.c.l.b16 %v4728
        %v4846 = vunpack.c.l.b16 %v4729
        %v4847 = vunpack.c.l.b16 %v4730
        %v4848 = vunpack.c.l.b16 %v4731
        %v4849 = vunpack.c.l.b16 %v4732
        %v4850 = vunpack.c.l.b16 %v4733
        %v4851 = vunpack.c.l.b16 %v4734
        %v4852 = vunpack.c.l.b16 %v4735
        %v4853 = vunpack.c.l.b16 %v4736
        %v4854 = vunpack.c.l.b16 %v4737
        %v4855 = vunpack.c.l.b16 %v4738
        %v4856 = vunpack.c.l.b16 %v4739
        %v4857 = vunpack.c.l.b16 %v4740
        %v4858 = vunpack.c.l.b16 %v4741
        %v4859 = vunpack.c.l.b16 %v4742
        %v4860 = vunpack.c.l.b16 %v4743
        %v4861 = vunpack.c.l.b16 %v4744
        %v4862 = vunpack.c.l.b16 %v4745
        %v4863 = vunpack.c.l.b16 %v4746
        %v4864 = vunpack.c.l.b16 %v4747
        %v4865 = vunpack.c.l.b16 %v4748
        %v4866 = vunpack.c.l.b16 %v4749
        %v4867 = vunpack.c.l.b16 %v4750
        %v4868 = vunpack.c.l.b16 %v4751
        %v4869 = vunpack.c.l.b16 %v4752
        %v4870 = vunpack.c.l.b16 %v4753
        %v4871 = vunpack.c.l.b16 %v4754
        %v4872 = vpack.c.b16 %v4817, %v4816
        %v4873 = vpack.c.b16 %v4819, %v4818
        %v4874 = vpack.c.b16 %v4821, %v4820
        %v4875 = vpack.c.b16 %v4823, %v4822
        %v4876 = vpack.c.b16 %v4825, %v4824
        %v4877 = vpack.c.b16 %v4827, %v4826
        %v4878 = vpack.c.b16 %v4829, %v4828
        %v4879 = vpack.c.b16 %v4831, %v4830
        %v4880 = vpack.c.b16 %v4833, %v4832
        %v4881 = vpack.c.b16 %v4835, %v4834
        %v4882 = vpack.c.b16 %v4837, %v4836
        %v4883 = vpack.c.b16 %v4839, %v4838
        %v4884 = vpack.c.b16 %v4841, %v4840
        %v4885 = vpack.c.b16 %v4843, %v4842
        %v4886 = vpack.c.b16 %v4845, %v4844
        %v4887 = vpack.c.b16 %v4847, %v4846
        %v4888 = vpack.c.b16 %v4849, %v4848
        %v4889 = vpack.c.b16 %v4851, %v4850
        %v4890 = vpack.c.b16 %v4853, %v4852
        %v4891 = vpack.c.b16 %v4855, %v4854
        %v4892 = vpack.c.b16 %v4857, %v4856
        %v4893 = vpack.c.b16 %v4859, %v4858
        %v4894 = vpack.c.b16 %v4861, %v4860
        %v4895 = vpack.c.b16 %v4863, %v4862
        %v4896 = vpack.c.b16 %v4865, %v4864
        %v4897 = vpack.c.b16 %v4867, %v4866
        %v4898 = vpack.c.b16 %v4869, %v4868
        %v4899 = vpack.c.b16 %v4871, %v4870
        %vm4928 = vcmask 523264
        %v4930 = vsel %vm4928, %v4654, 0
        %v4933 = vsel %vm4928, %v4658, 0
        %v4936 = vsel %vm4928, %v4662, 0
        %v4939 = vsel %vm4928, %v4666, 0
        %v4942 = vsel %vm4928, %v4670, 0
        %v4945 = vsel %vm4928, %v4674, 0
        %v4948 = vsel %vm4928, %v4678, 0
        %v4951 = vsel %vm4928, %v4682, 0
        %v4954 = vsel %vm4928, %v4686, 0
        %v4957 = vsel %vm4928, %v4690, 0
        %v4960 = vsel %vm4928, %v4694, 0
        %v4963 = vsel %vm4928, %v4698, 0
        %4965 = vmatprep.subr.bf16.mxu0 0
        %4966 = vmatpush1.bf16.msra.mxu0 %v4872
        %4967 = vmatprep.subr.bf16.mxu0 0
        %4968 = vmatpush1.bf16.msra.mxu0 %v4873
        %4969 = vmatprep.subr.bf16.mxu0 0
        %4970 = vmatpush1.bf16.msra.mxu0 %v4874
        %4971 = vmatprep.subr.bf16.mxu0 0
        %4972 = vmatpush1.bf16.msra.mxu0 %v4875
        %4973 = vmatprep.subr.bf16.mxu0 0
        %4974 = vmatpush1.bf16.msra.mxu0 %v4876
        %4975 = vmatprep.subr.bf16.mxu0 0
        %4976 = vmatpush1.bf16.msra.mxu0 %v4877
        %4977 = vmatprep.subr.bf16.mxu0 0
        %4978 = vmatpush1.bf16.msra.mxu0 %v4878
        %4979 = vmatprep.subr.bf16.mxu0 0
        %4980 = vmatpush1.bf16.msra.mxu0 %v4879
        %4981 = vmatprep.subr.bf16.mxu0 0
        %4982 = vmatpush1.bf16.msra.mxu0 %v4880
        %4983 = vmatprep.subr.bf16.mxu0 0
        %4984 = vmatpush1.bf16.msra.mxu0 %v4881
        %4985 = vmatprep.subr.bf16.mxu0 0
        %4986 = vmatpush1.bf16.msra.mxu0 %v4882
        %4987 = vmatprep.subr.bf16.mxu0 0
        %4988 = vmatpush1.bf16.msra.mxu0 %v4883
        %4989 = vmatprep.subr.bf16.mxu0 0
        %4990 = vmatpush1.bf16.msra.mxu0 %v4884
        %4991 = vmatprep.subr.bf16.mxu0 0
        %4992 = vmatpush1.bf16.msra.mxu0 %v4885
        %4993 = vmatprep.subr.bf16.mxu0 0
        %4994 = vmatpush1.bf16.msra.mxu0 %v4886
        %4995 = vmatprep.subr.bf16.mxu0 0
        %4996 = vmatpush1.bf16.msra.mxu0 %v4887
        %4997 = vmatprep.mubr.bf16.mxu0 %v4652
        %4998 = vmatmul.mubr.bf16.gmra.mrb[0].mxu0 %v4651
        %v4999 = vpop.f32.mrb[0].mxu0
        %v5000 = vadd.f32 %v4759, %v4999
        %v5001 = vpop.f32.mrb[0].mxu0
        %v5002 = vpop.f32.mrb[0].mxu0
        %v5003 = vadd.f32 %v4759, %v5002
        %v5004 = vpop.f32.mrb[0].mxu0
        %5005 = vmatprep.mubr.bf16.mxu0 %v4656
        %5006 = vmatmul.mubr.bf16.gmra.mrb[0].mxu0 %v4655
        %v5007 = vpop.f32.mrb[0].mxu0
        %v5008 = vadd.f32 %v4759, %v5007
        %v5009 = vpop.f32.mrb[0].mxu0
        %v5010 = vpop.f32.mrb[0].mxu0
        %v5011 = vadd.f32 %v4759, %v5010
        %v5012 = vpop.f32.mrb[0].mxu0
        %5013 = vmatprep.mubr.bf16.mxu0 %v4660
        %5014 = vmatmul.mubr.bf16.gmra.mrb[0].mxu0 %v4659
        %v5015 = vpop.f32.mrb[0].mxu0
        %v5016 = vadd.f32 %v4759, %v5015
        %v5017 = vpop.f32.mrb[0].mxu0
        %v5018 = vpop.f32.mrb[0].mxu0
        %v5019 = vadd.f32 %v4759, %v5018
        %v5020 = vpop.f32.mrb[0].mxu0
        %5021 = vmatprep.mubr.bf16.mxu0 %v4664
        %5022 = vmatmul.mubr.bf16.gmra.mrb[0].mxu0 %v4663
        %v5023 = vpop.f32.mrb[0].mxu0
        %v5024 = vadd.f32 %v4759, %v5023
        %v5025 = vpop.f32.mrb[0].mxu0
        %v5026 = vpop.f32.mrb[0].mxu0
        %v5027 = vadd.f32 %v4759, %v5026
        %v5028 = vpop.f32.mrb[0].mxu0
        %5029 = vmatprep.mubr.bf16.mxu0 %v4668
        %5030 = vmatmul.mubr.bf16.gmra.mrb[0].mxu0 %v4667
        %v5031 = vpop.f32.mrb[0].mxu0
        %v5032 = vadd.f32 %v4759, %v5031
        %v5033 = vpop.f32.mrb[0].mxu0
        %v5034 = vpop.f32.mrb[0].mxu0
        %v5035 = vadd.f32 %v4759, %v5034
        %v5036 = vpop.f32.mrb[0].mxu0
        %5037 = vmatprep.mubr.bf16.mxu0 %v4672
        %5038 = vmatmul.mubr.bf16.gmra.mrb[0].mxu0 %v4671
        %v5039 = vpop.f32.mrb[0].mxu0
        %v5040 = vadd.f32 %v4759, %v5039
        %v5041 = vpop.f32.mrb[0].mxu0
        %v5042 = vpop.f32.mrb[0].mxu0
        %v5043 = vadd.f32 %v4759, %v5042
        %v5044 = vpop.f32.mrb[0].mxu0
        %5045 = vmatprep.mubr.bf16.mxu0 %v4676
        %5046 = vmatmul.mubr.bf16.gmra.mrb[0].mxu0 %v4675
        %v5047 = vpop.f32.mrb[0].mxu0
        %v5048 = vadd.f32 %v4759, %v5047
        %v5049 = vpop.f32.mrb[0].mxu0
        %v5050 = vpop.f32.mrb[0].mxu0
        %v5051 = vadd.f32 %v4759, %v5050
        %v5052 = vpop.f32.mrb[0].mxu0
        %5053 = vmatprep.mubr.bf16.mxu0 %v4680
        %5054 = vmatmul.mubr.bf16.gmra.mrb[0].mxu0 %v4679
        %v5055 = vpop.f32.mrb[0].mxu0
        %v5056 = vadd.f32 %v4759, %v5055
        %v5057 = vpop.f32.mrb[0].mxu0
        %v5058 = vpop.f32.mrb[0].mxu0
        %v5059 = vadd.f32 %v4759, %v5058
        %v5060 = vpop.f32.mrb[0].mxu0
        %5061 = vmatprep.mubr.bf16.mxu0 %v4684
        %5062 = vmatmul.mubr.bf16.gmra.mrb[0].mxu0 %v4683
        %v5063 = vpop.f32.mrb[0].mxu0
        %v5064 = vadd.f32 %v4759, %v5063
        %v5065 = vpop.f32.mrb[0].mxu0
        %v5066 = vpop.f32.mrb[0].mxu0
        %v5067 = vadd.f32 %v4759, %v5066
        %v5068 = vpop.f32.mrb[0].mxu0
        %5069 = vmatprep.mubr.bf16.mxu0 %v4688
        %5070 = vmatmul.mubr.bf16.gmra.mrb[0].mxu0 %v4687
        %v5071 = vpop.f32.mrb[0].mxu0
        %v5072 = vadd.f32 %v4759, %v5071
        %v5073 = vpop.f32.mrb[0].mxu0
        %v5074 = vpop.f32.mrb[0].mxu0
        %v5075 = vadd.f32 %v4759, %v5074
        %v5076 = vpop.f32.mrb[0].mxu0
        %5077 = vmatprep.mubr.bf16.mxu0 %v4692
        %5078 = vmatmul.mubr.bf16.gmra.mrb[0].mxu0 %v4691
        %v5079 = vpop.f32.mrb[0].mxu0
        %v5080 = vadd.f32 %v4759, %v5079
        %v5081 = vpop.f32.mrb[0].mxu0
        %v5082 = vpop.f32.mrb[0].mxu0
        %v5083 = vadd.f32 %v4759, %v5082
        %v5084 = vpop.f32.mrb[0].mxu0
        %5085 = vmatprep.mubr.bf16.mxu0 %v4696
        %5086 = vmatmul.mubr.bf16.gmra.mrb[0].mxu0 %v4695
        %v5087 = vpop.f32.mrb[0].mxu0
        %v5088 = vadd.f32 %v4759, %v5087
        %v5089 = vpop.f32.mrb[0].mxu0
        %v5090 = vpop.f32.mrb[0].mxu0
        %v5091 = vadd.f32 %v4759, %v5090
        %v5092 = vpop.f32.mrb[0].mxu0
        %5093 = vdwg.mxu0
        %5094 = vmatprep.subr.bf16.mxu0 0
        %5095 = vmatpush1.bf16.msra.mxu0 %v4888
        %5096 = vmatprep.subr.bf16.mxu0 0
        %5097 = vmatpush1.bf16.msra.mxu0 %v4889
        %5098 = vmatprep.subr.bf16.mxu0 0
        %5099 = vmatpush1.bf16.msra.mxu0 %v4890
        %5100 = vmatprep.subr.bf16.mxu0 0
        %5101 = vmatpush1.bf16.msra.mxu0 %v4891
        %5102 = vmatprep.subr.bf16.mxu0 0
        %5103 = vmatpush1.bf16.msra.mxu0 %v4892
        %5104 = vmatprep.subr.bf16.mxu0 0
        %5105 = vmatpush1.bf16.msra.mxu0 %v4893
        %5106 = vmatprep.subr.bf16.mxu0 0
        %5107 = vmatpush1.bf16.msra.mxu0 %v4894
        %5108 = vmatprep.subr.bf16.mxu0 0
        %5109 = vmatpush1.bf16.msra.mxu0 %v4895
        %5110 = vmatprep.subr.bf16.mxu0 0
        %5111 = vmatpush1.bf16.msra.mxu0 %v4896
        %5112 = vmatprep.subr.bf16.mxu0 0
        %5113 = vmatpush1.bf16.msra.mxu0 %v4897
        %5114 = vmatprep.subr.bf16.mxu0 0
        %5115 = vmatpush1.bf16.msra.mxu0 %v4898
        %5116 = vmatprep.subr.bf16.mxu0 0
        %5117 = vmatpush1.bf16.msra.mxu0 %v4899
        %5118 = vmatprep.subr.bf16.mxu0 0
        %5119 = vmatpush1.bf16.msra.mxu0 0
        %5120 = vmatprep.subr.bf16.mxu0 0
        %5121 = vmatpush1.bf16.msra.mxu0 0
        %5122 = vmatprep.subr.bf16.mxu0 0
        %5123 = vmatpush1.bf16.msra.mxu0 0
        %5124 = vmatprep.subr.bf16.mxu0 0
        %5125 = vmatpush1.bf16.msra.mxu0 0
        %5126 = vmatprep.mubr.bf16.mxu0 %v4930
        %5127 = vmatmul.mubr.bf16.gmra.mrb[0].mxu0 %v4653
        %v5128 = vpop.f32.mrb[0].mxu0
        %v5129 = vadd.f32 %v5000, %v5128
        %v5130 = vpop.f32.mrb[0].mxu0
        %v5131 = vpop.f32.mrb[0].mxu0
        %v5132 = vadd.f32 %v5003, %v5131
        %v5133 = vpop.f32.mrb[0].mxu0
        %5134 = vmatprep.mubr.bf16.mxu0 %v4933
        %5135 = vmatmul.mubr.bf16.gmra.mrb[0].mxu0 %v4657
        %v5136 = vpop.f32.mrb[0].mxu0
        %v5137 = vadd.f32 %v5008, %v5136
        %v5138 = vpop.f32.mrb[0].mxu0
        %v5139 = vpop.f32.mrb[0].mxu0
        %v5140 = vadd.f32 %v5011, %v5139
        %v5141 = vpop.f32.mrb[0].mxu0
        %5142 = vmatprep.mubr.bf16.mxu0 %v4936
        %5143 = vmatmul.mubr.bf16.gmra.mrb[0].mxu0 %v4661
        %v5144 = vpop.f32.mrb[0].mxu0
        %v5145 = vadd.f32 %v5016, %v5144
        %v5146 = vpop.f32.mrb[0].mxu0
        %v5147 = vpop.f32.mrb[0].mxu0
        %v5148 = vadd.f32 %v5019, %v5147
        %v5149 = vpop.f32.mrb[0].mxu0
        %5150 = vmatprep.mubr.bf16.mxu0 %v4939
        %5151 = vmatmul.mubr.bf16.gmra.mrb[0].mxu0 %v4665
        %v5152 = vpop.f32.mrb[0].mxu0
        %v5153 = vadd.f32 %v5024, %v5152
        %v5154 = vpop.f32.mrb[0].mxu0
        %v5155 = vpop.f32.mrb[0].mxu0
        %v5156 = vadd.f32 %v5027, %v5155
        %v5157 = vpop.f32.mrb[0].mxu0
        %5158 = vmatprep.mubr.bf16.mxu0 %v4942
        %5159 = vmatmul.mubr.bf16.gmra.mrb[0].mxu0 %v4669
        %v5160 = vpop.f32.mrb[0].mxu0
        %v5161 = vadd.f32 %v5032, %v5160
        %v5162 = vpop.f32.mrb[0].mxu0
        %v5163 = vpop.f32.mrb[0].mxu0
        %v5164 = vadd.f32 %v5035, %v5163
        %v5165 = vpop.f32.mrb[0].mxu0
        %5166 = vmatprep.mubr.bf16.mxu0 %v4945
        %5167 = vmatmul.mubr.bf16.gmra.mrb[0].mxu0 %v4673
        %v5168 = vpop.f32.mrb[0].mxu0
        %v5169 = vadd.f32 %v5040, %v5168
        %v5170 = vpop.f32.mrb[0].mxu0
        %v5171 = vpop.f32.mrb[0].mxu0
        %v5172 = vadd.f32 %v5043, %v5171
        %v5173 = vpop.f32.mrb[0].mxu0
        %5174 = vmatprep.mubr.bf16.mxu0 %v4948
        %5175 = vmatmul.mubr.bf16.gmra.mrb[0].mxu0 %v4677
        %v5176 = vpop.f32.mrb[0].mxu0
        %v5177 = vadd.f32 %v5048, %v5176
        %v5178 = vpop.f32.mrb[0].mxu0
        %v5179 = vpop.f32.mrb[0].mxu0
        %v5180 = vadd.f32 %v5051, %v5179
        %v5181 = vpop.f32.mrb[0].mxu0
        %5182 = vmatprep.mubr.bf16.mxu0 %v4951
        %5183 = vmatmul.mubr.bf16.gmra.mrb[0].mxu0 %v4681
        %v5184 = vpop.f32.mrb[0].mxu0
        %v5185 = vadd.f32 %v5056, %v5184
        %v5186 = vpop.f32.mrb[0].mxu0
        %v5187 = vpop.f32.mrb[0].mxu0
        %v5188 = vadd.f32 %v5059, %v5187
        %v5189 = vpop.f32.mrb[0].mxu0
        %5190 = vmatprep.mubr.bf16.mxu0 %v4954
        %5191 = vmatmul.mubr.bf16.gmra.mrb[0].mxu0 %v4685
        %v5192 = vpop.f32.mrb[0].mxu0
        %v5193 = vadd.f32 %v5064, %v5192
        %v5194 = vpop.f32.mrb[0].mxu0
        %v5195 = vpop.f32.mrb[0].mxu0
        %v5196 = vadd.f32 %v5067, %v5195
        %v5197 = vpop.f32.mrb[0].mxu0
        %5198 = vmatprep.mubr.bf16.mxu0 %v4957
        %5199 = vmatmul.mubr.bf16.gmra.mrb[0].mxu0 %v4689
        %v5200 = vpop.f32.mrb[0].mxu0
        %v5201 = vadd.f32 %v5072, %v5200
        %v5202 = vpop.f32.mrb[0].mxu0
        %v5203 = vpop.f32.mrb[0].mxu0
        %v5204 = vadd.f32 %v5075, %v5203
        %v5205 = vpop.f32.mrb[0].mxu0
        %5206 = vmatprep.mubr.bf16.mxu0 %v4960
        %5207 = vmatmul.mubr.bf16.gmra.mrb[0].mxu0 %v4693
        %v5208 = vpop.f32.mrb[0].mxu0
        %v5209 = vadd.f32 %v5080, %v5208
        %v5210 = vpop.f32.mrb[0].mxu0
        %v5211 = vpop.f32.mrb[0].mxu0
        %v5212 = vadd.f32 %v5083, %v5211
        %v5213 = vpop.f32.mrb[0].mxu0
        %5214 = vmatprep.mubr.bf16.mxu0 %v4963
        %5215 = vmatmul.mubr.bf16.gmra.mrb[0].mxu0 %v4697
        %v5216 = vpop.f32.mrb[0].mxu0
        %v5217 = vadd.f32 %v5088, %v5216
        %v5218 = vpop.f32.mrb[0].mxu0
        %v5219 = vpop.f32.mrb[0].mxu0
        %v5220 = vadd.f32 %v5091, %v5219
        %v5221 = vpop.f32.mrb[0].mxu0
        %5222 = vdwg.mxu0
        %5223 = vst [vmem:[%s190] sm:$0xff] %v5129
        %5224 = vst [vmem:[%s190 + $0x8] sm:$0xff] %v5132
        %5225 = vst [vmem:[%s190 + $0x10] sm:$0xff] %v5137
        %5226 = vst [vmem:[%s190 + $0x18] sm:$0xff] %v5140
        %5227 = vst [vmem:[%s190 + $0x20] sm:$0xff] %v5145
        %5228 = vst [vmem:[%s190 + $0x28] sm:$0xff] %v5148
        %5229 = vst [vmem:[%s190 + $0x30] sm:$0xff] %v5153
        %5230 = vst [vmem:[%s190 + $0x38] sm:$0xff] %v5156
        %5231 = vst [vmem:[%s190 + $0x40] sm:$0xff] %v5161
        %5232 = vst [vmem:[%s190 + $0x48] sm:$0xff] %v5164
        %5233 = vst [vmem:[%s190 + $0x50] sm:$0xff] %v5169
        %5234 = vst [vmem:[%s190 + $0x58] sm:$0xff] %v5172
        %5235 = vst [vmem:[%s190 + $0x60] sm:$0xff] %v5177
        %5236 = vst [vmem:[%s190 + $0x68] sm:$0xff] %v5180
        %5237 = vst [vmem:[%s190 + $0x70] sm:$0xff] %v5185
        %5238 = vst [vmem:[%s190 + $0x78] sm:$0xff] %v5188
        %5239 = vst [vmem:[%s190 + $0x80] sm:$0xff] %v5193
        %5240 = vst [vmem:[%s190 + $0x88] sm:$0xff] %v5196
        %5241 = vst [vmem:[%s190 + $0x90] sm:$0xff] %v5201
        %5242 = vst [vmem:[%s190 + $0x98] sm:$0xff] %v5204
        %5243 = vst [vmem:[%s190 + $0xa0] sm:$0xff] %v5209
        %5244 = vst [vmem:[%s190 + $0xa8] sm:$0xff] %v5212
        %5245 = vst [vmem:[%s190 + $0xb0] sm:$0xff] %v5217
        %5246 = vst [vmem:[%s190 + $0xb8] sm:$0xff] %v5220
        %s5247 = sand.u32 %s112, 1
        %s5248 = scalar_lea.sflag [#allocation4], %s5247
        %s5249 = sand.u32 %s112, 1
        %s5250 = smul.addr %s5249, 192
        %s5251 = scalar_lea.vmem [#allocation3], %s5250
        // Predicated region
        $region33: #{tpu_custom_call.1} parent=31 // pred_check
          %p5252 = pneg %p122
        $region34: #{tpu_custom_call.1} parent=31 // pred_check_branch
          %5254 = sbr.rel (%p5252) target = $region36
        $region35: #{tpu_custom_call.1} parent=31 // pred_region
          %s5255 = smul.u32 24, %s22
          %s5257 = ssub.s32 3072, 3072
          %5258 = vsyncadd %s5248, %s5257
          %s5259 = smul.addr %s21, 72
          %s5260 = sadd.s32 %s5255, %s5259
          %s5261 = smul.addr %s5260, 128
          %s5262 = scalar_lea.hbm %s3, %s5261
          %s5263 = sshll.u32 %s5251, 4
          %s5264 = int_to_ptr.vmem [resolvable:$true] %s5263
          %5269 = dma.vmem_to_hbm [thread:$0]  %s5264, 3072, %s5262, %s5248, 128, 128, 8
        $region36: #{tpu_custom_call.1} parent=31 // pred_fallthru
          _
      $region32: #{tpu_custom_call.1} parent=5 // pred_fallthru
        _
      %p5270 = scmp.le.s32.totalorder 2, %s12
      // Predicated region
      $region37: #{tpu_custom_call.1} parent=5 // pred_check
        %p5271 = pneg %p5270
      $region38: #{tpu_custom_call.1} parent=5 // pred_check_branch
        %5273 = sbr.rel (%p5271) target = $region40
      $region39: #{tpu_custom_call.1} parent=5 // pred_region
        %s5274 = ssub.s32 %s12, 2
        // Predicated region
        $region41: #{tpu_custom_call.1} parent=39 // pred_check
          %p5275 = pneg %p128
        $region42: #{tpu_custom_call.1} parent=39 // pred_check_branch
          %5277 = sbr.rel (%p5275) target = $region44
        $region43: #{tpu_custom_call.1} parent=39 // pred_region
          %s5278 = sand.u32 %s113, 1
          %s5279 = scalar_lea.sflag [#allocation4], %s5278
          %s5280 = sand.u32 %s113, 1
          %s5281 = smul.addr %s5280, 192
          %s5282 = scalar_lea.vmem [#allocation3], %s5281
          %5283 = dma.done %s5279, 3072
        $region44: #{tpu_custom_call.1} parent=39 // pred_fallthru
          _
      $region40: #{tpu_custom_call.1} parent=5 // pred_fallthru
        _
    $region6: #{tpu_custom_call.1} parent=1 // loop_footer
      %s16 = sadd.s32 1, %s12
    $region7: #{tpu_custom_call.1} parent=1 // loop_footer_branch
      %11 = sbr.rel target = $region3
    $region8: #{tpu_custom_call.1} parent=1 // loop_exit
      _
    %5284 = vsyncpa [#allocation4], 1
    %s5285 = scalar_lea.sflag [#allocation4], 1
    %5286 = vsyncpa %s5285, 1

// kernel: tpu_custom_call.1
$region0: #{tpu_custom_call.1}
  #allocation0 [shape = 'u32[]', space=smem, size = 0x4, offset = 0x4, fixed_abs, tag = 'smem constant byte address 0x4 - core index']
  #allocation1 [shape = 'u32[144,128]{1,0:T(1,128)}', space=vmem, size = 0x12000, scoped, tag = 'internal scratch']
  #allocation2 [shape = 'bf16[192,448]{1,0:T(16,128)(2,1)}', space=vmem, size = 0x30000, scoped, tag = 'scratch operand']
  %s0 = inlined_call_operand.vmem [shape: bf16[2,60,60,16], index: 0, kind: input, shape index: {}]
  %s1 = inlined_call_operand.vmem [shape: f32[2,8,128], index: 1, kind: input, shape index: {}]
  %s2 = inlined_call_operand.vmem [shape: bf16[448,128], index: 2, kind: input, shape index: {}]
  %s3 = inlined_call_operand.hbm [shape: f32[2,576,128], index: 3, kind: output, shape index: {}]
  %s4 = sld [smem:[#allocation0]]
  $region45: #{tpu_custom_call.1} parent=0
    _
  %s6 = ssub.s32 1, %s4
  %s7 = scalar_select 0, %s6, %s4
  $region1: #{tpu_custom_call.1} parent=0
    #allocation3 [shape = 'u8[196608]{0}', space=vmem, size = 0x30000, scoped, tag = 'output window, operand 0']
    #allocation4 [shape = 's32[2]{0}', space=sflag, size = 0x8, scoped, tag = 'scoped memory for tpu_custom_call.1']
    %8 = vsyncpa [#allocation4], 0
    %s9 = scalar_lea.sflag [#allocation4], 1
    %10 = vsyncpa %s9, 0
    loop: start=0, step=1, limit=8
    $region2: #{tpu_custom_call.1} parent=1 // loop_pre_header
      _
    $region3: #{tpu_custom_call.1} parent=1 // loop_header
      %s12 = sphi 0, %s16
      %p13 = scmp.ge.s32.totalorder %s12, 8
      %s19 = sphi 0, %s31
      %s20 = sphi 0, %s27
      %s21 = sphi 0, %s19
      %s22 = sphi 0, %s20
      %s23 = sphi 0, %s21
      %s24 = sphi 0, %s22
      %s34 = sphi 0, %s36
      %s37 = sphi 0, %s34
      %s38 = sphi 0, %s37
      %s54 = sphi 0, %s38
      %s60 = sphi 0, %s62
      %s63 = sphi 0, %s60
      %s64 = sphi 0, %s63
      %s80 = sphi 0, %s64
      %s84 = sphi 0, %s84
      %s86 = sphi 0, %s84
      %s87 = sphi 0, %s86
      %s101 = sphi 0, %s87
      %s109 = sphi 0, %s111
      %s112 = sphi 0, %s109
      %s113 = sphi 0, %s112
      %s129 = sphi 0, %s113
    $region4: #{tpu_custom_call.1} parent=1 // loop_header_branch
      %15 = sbr.rel (%p13) target = $region8
    $region5: #{tpu_custom_call.1} parent=1 // loop_body
      %s17 = ssub.s32 %s12, 1
      %s18 = ssub.s32 %s12, 2
      %s25 = sadd.s32 1, %s20
      %p26 = scmp.ge.s32.totalorder %s25, 3
      %s27 = scalar_select %p26, 0, %s25
      %s28 = sadd.s32 1, %s19
      %s29 = scalar_select %p26, %s28, %s19
      %p30 = scmp.ge.s32.totalorder %s29, 2
      %s31 = scalar_select %p30, 0, %s29
      %s32 = ssub.s32 %s19, %s31
      %p33 = scmp.eq.s32.totalorder %s32, 0
      %s35 = sadd.s32 %s34, 1
      %s36 = scalar_select %p33, %s34, %s35
      %p39 = pneg %p33
      %p40 = scmp.eq.s32.totalorder %s12, 5
      %p41 = por %p39, %p40
      %p42 = scmp.ne.s32.totalorder %s34, %s37
      %p43 = scmp.eq.s32.totalorder %s12, 0
      %p44 = por %p42, %p43
      %p45 = scmp.ne.s32.totalorder %s34, %s37
      %p46 = scmp.eq.s32.totalorder %s17, 5
      %p47 = por %p45, %p46
      %p48 = scmp.ne.s32.totalorder %s37, %s38
      %p49 = scmp.eq.s32.totalorder %s17, 0
      %p50 = por %p48, %p49
      %p51 = scmp.ne.s32.totalorder %s37, %s38
      %p52 = scmp.eq.s32.totalorder %s18, 5
      %p53 = por %p51, %p52
      %p55 = scmp.ne.s32.totalorder %s38, %s54
      %p56 = scmp.eq.s32.totalorder %s18, 0
      %p57 = por %p55, %p56
      %s58 = ssub.s32 %s19, %s31
      %p59 = scmp.eq.s32.totalorder %s58, 0
      %s61 = sadd.s32 %s60, 1
      %s62 = scalar_select %p59, %s60, %s61
      %p65 = pneg %p59
      %p66 = scmp.eq.s32.totalorder %s12, 5
      %p67 = por %p65, %p66
      %p68 = scmp.ne.s32.totalorder %s60, %s63
      %p69 = scmp.eq.s32.totalorder %s12, 0
      %p70 = por %p68, %p69
      %p71 = scmp.ne.s32.totalorder %s60, %s63
      %p72 = scmp.eq.s32.totalorder %s17, 5
      %p73 = por %p71, %p72
      %p74 = scmp.ne.s32.totalorder %s63, %s64
      %p75 = scmp.eq.s32.totalorder %s17, 0
      %p76 = por %p74, %p75
      %p77 = scmp.ne.s32.totalorder %s63, %s64
      %p78 = scmp.eq.s32.totalorder %s18, 5
      %p79 = por %p77, %p78
      %p81 = scmp.ne.s32.totalorder %s64, %s80
      %p82 = scmp.eq.s32.totalorder %s18, 0
      %p83 = por %p81, %p82
      %s85 = sadd.s32 %s84, 1
      %p88 = scmp.eq.s32.totalorder %s12, 5
      %p89 = scmp.ne.s32.totalorder %s84, %s86
      %p90 = scmp.eq.s32.totalorder %s12, 0
      %p91 = por %p89, %p90
      %p92 = scmp.ne.s32.totalorder %s84, %s86
      %p93 = scmp.eq.s32.totalorder %s17, 5
      %p94 = por %p92, %p93
      %p95 = scmp.ne.s32.totalorder %s86, %s87
      %p96 = scmp.eq.s32.totalorder %s17, 0
      %p97 = por %p95, %p96
      %p98 = scmp.ne.s32.totalorder %s86, %s87
      %p99 = scmp.eq.s32.totalorder %s18, 5
      %p100 = por %p98, %p99
      %p102 = scmp.ne.s32.totalorder %s87, %s101
      %p103 = scmp.eq.s32.totalorder %s18, 0
      %p104 = por %p102, %p103
      %s105 = ssub.s32 %s19, %s31
      %s106 = ssub.s32 %s20, %s27
      %s107 = sor.u32 %s105, %s106
      %p108 = scmp.eq.s32.totalorder %s107, 0
      %s110 = sadd.s32 %s109, 1
      %s111 = scalar_select %p108, %s109, %s110
      %p114 = pneg %p108
      %p115 = scmp.eq.s32.totalorder %s12, 5
      %p116 = por %p114, %p115
      %p117 = scmp.ne.s32.totalorder %s109, %s112
      %p118 = scmp.eq.s32.totalorder %s12, 0
      %p119 = por %p117, %p118
      %p120 = scmp.ne.s32.totalorder %s109, %s112
      %p121 = scmp.eq.s32.totalorder %s17, 5
      %p122 = por %p120, %p121
      %p123 = scmp.ne.s32.totalorder %s112, %s113
      %p124 = scmp.eq.s32.totalorder %s17, 0
      %p125 = por %p123, %p124
      %p126 = scmp.ne.s32.totalorder %s112, %s113
      %p127 = scmp.eq.s32.totalorder %s18, 5
      %p128 = por %p126, %p127
      %p130 = scmp.ne.s32.totalorder %s113, %s129
      %p131 = scmp.eq.s32.totalorder %s18, 0
      %p132 = por %p130, %p131
      %p133 = scmp.le.s32.totalorder 1, %s12
      %p134 = scmp.lt.s32.totalorder %s12, 7
      %p135 = pnand %p133, %p134
      %p136 = pneg %p135
      // Predicated region
      $region9: #{tpu_custom_call.1} parent=5 // pred_check
        _
      $region10: #{tpu_custom_call.1} parent=5 // pred_check_branch
        %138 = sbr.rel (%p135) target = $region12
      $region11: #{tpu_custom_call.1} parent=5 // pred_region
        %s139 = ssub.s32 %s12, 1
        // Predicated region
        $region13: #{tpu_custom_call.1} parent=11 // pred_check
          %p140 = pneg %p97
        $region14: #{tpu_custom_call.1} parent=11 // pred_check_branch
          %142 = sbr.rel (%p140) target = $region16
        $region15: #{tpu_custom_call.1} parent=11 // pred_region
          _
        $region16: #{tpu_custom_call.1} parent=11 // pred_fallthru
          _
      $region12: #{tpu_custom_call.1} parent=5 // pred_fallthru
        _
      %p143 = scmp.lt.s32.totalorder %s12, 6
      // Predicated region
      $region17: #{tpu_custom_call.1} parent=5 // pred_check
        %p144 = pneg %p143
      $region18: #{tpu_custom_call.1} parent=5 // pred_check_branch
        %146 = sbr.rel (%p144) target = $region20
      $region19: #{tpu_custom_call.1} parent=5 // pred_region
        // Predicated region
        $region21: #{tpu_custom_call.1} parent=19 // pred_check
          %p147 = pneg %p44
        $region22: #{tpu_custom_call.1} parent=19 // pred_check_branch
          %149 = sbr.rel (%p147) target = $region24
        $region23: #{tpu_custom_call.1} parent=19 // pred_region
          %p150 = scmp.lt.s32.totalorder %s19, 1
          %s151 = scalar_select %p150, %s19, 1
          %s152 = smul.addr %s151, 480
          %s153 = smul.addr %s152, 4
          %s154 = scalar_lea.vmem %s0, %s153
        $region24: #{tpu_custom_call.1} parent=19 // pred_fallthru
          _
        // Predicated region
        $region25: #{tpu_custom_call.1} parent=19 // pred_check
          %p155 = pneg %p70
        $region26: #{tpu_custom_call.1} parent=19 // pred_check_branch
          %157 = sbr.rel (%p155) target = $region28
        $region27: #{tpu_custom_call.1} parent=19 // pred_region
          %p158 = scmp.lt.s32.totalorder %s19, 1
          %s159 = scalar_select %p158, %s19, 1
          %s160 = smul.addr %s159, 8
          %s161 = scalar_lea.vmem %s1, %s160
        $region28: #{tpu_custom_call.1} parent=19 // pred_fallthru
          _
      $region20: #{tpu_custom_call.1} parent=5 // pred_fallthru
        _
      %p162 = scmp.le.s32.totalorder 1, %s12
      %p163 = scmp.lt.s32.totalorder %s12, 7
      %p164 = pnand %p162, %p163
      %p165 = pneg %p164
      // Predicated region
      $region29: #{tpu_custom_call.1} parent=5 // pred_check
        _
      $region30: #{tpu_custom_call.1} parent=5 // pred_check_branch
        %167 = sbr.rel (%p164) target = $region32
      $region31: #{tpu_custom_call.1} parent=5 // pred_region
        %s168 = ssub.s32 %s12, 1
        %p169 = scmp.lt.s32.totalorder %s21, 1
        %s170 = scalar_select %p169, %s21, 1
        %s171 = smul.addr %s170, 480
        %s172 = smul.addr %s171, 4
        %s173 = scalar_lea.vmem %s0, %s172
        %p174 = pneg %p50
        %p175 = pneg %p47
        %p176 = scmp.lt.s32.totalorder %s21, 1
        %s177 = scalar_select %p176, %s21, 1
        %s178 = smul.addr %s177, 8
        %s179 = scalar_lea.vmem %s1, %s178
        %p180 = pneg %p76
        %p181 = pneg %p73
        %p182 = pneg %p97
        %p183 = pneg %p94
        %p184 = pneg %p125
        %p185 = pneg %p122
        %s186 = sand.u32 %s112, 1
        %s187 = scalar_lea.sflag [#allocation4], %s186
        %s188 = sand.u32 %s112, 1
        %s189 = smul.addr %s188, 192
        %s190 = scalar_lea.vmem [#allocation3], %s189
        %p191 = scmp.lt.s32.totalorder %s21, 1
        %s192 = scalar_select %p191, %s21, 1
        %s193 = smul.addr %s192, 480
        %s194 = smul.addr %s193, 4
        %s195 = scalar_lea.vmem %s0, %s194
        %p196 = scmp.lt.s32.totalorder %s21, 1
        %s197 = scalar_select %p196, %s21, 1
        %s198 = smul.addr %s197, 8
        %s199 = scalar_lea.vmem %s1, %s198
        %s200 = smul.u32 24, %s22
        %s202 = smul.u32 %s22, 8
        %s203 = smul.u32 %s202, 8
        %s204 = smul.addr %s203, 4
        %s205 = scalar_lea.vmem %s195, %s204
        %v206 = vld [vmem:[%s205] sm:$0xf]
        %v207 = vld [vmem:[%s205 + $0x4] sm:$0xf]
        %v208 = vld [vmem:[%s205 + $0x8] sm:$0xf]
        %v209 = vld [vmem:[%s205 + $0xc] sm:$0xf]
        %v210 = vld [vmem:[%s205 + $0x10] sm:$0xf]
        %v211 = vld [vmem:[%s205 + $0x14] sm:$0xf]
        %v212 = vld [vmem:[%s205 + $0x18] sm:$0xf]
        %v213 = vld [vmem:[%s205 + $0x1c] sm:$0x3]
        %v214 = vld [vmem:[%s205 + $0x20] sm:$0xf]
        %v215 = vld [vmem:[%s205 + $0x24] sm:$0xf]
        %v216 = vld [vmem:[%s205 + $0x28] sm:$0xf]
        %v217 = vld [vmem:[%s205 + $0x2c] sm:$0xf]
        %v218 = vld [vmem:[%s205 + $0x30] sm:$0xf]
        %v219 = vld [vmem:[%s205 + $0x34] sm:$0xf]
        %v220 = vld [vmem:[%s205 + $0x38] sm:$0xf]
        %v221 = vld [vmem:[%s205 + $0x3c] sm:$0x3]
        %v222 = vld [vmem:[%s205 + $0x40] sm:$0xf]
        %v223 = vld [vmem:[%s205 + $0x44] sm:$0xf]
        %v224 = vld [vmem:[%s205 + $0x48] sm:$0xf]
        %v225 = vld [vmem:[%s205 + $0x4c] sm:$0xf]
        %v226 = vld [vmem:[%s205 + $0x50] sm:$0xf]
        %v227 = vld [vmem:[%s205 + $0x54] sm:$0xf]
        %v228 = vld [vmem:[%s205 + $0x58] sm:$0xf]
        %v229 = vld [vmem:[%s205 + $0x5c] sm:$0x3]
        %v230 = vld [vmem:[%s205 + $0x60] sm:$0xf]
        %v231 = vld [vmem:[%s205 + $0x64] sm:$0xf]
        %v232 = vld [vmem:[%s205 + $0x68] sm:$0xf]
        %v233 = vld [vmem:[%s205 + $0x6c] sm:$0xf]
        %v234 = vld [vmem:[%s205 + $0x70] sm:$0xf]
        %v235 = vld [vmem:[%s205 + $0x74] sm:$0xf]
        %v236 = vld [vmem:[%s205 + $0x78] sm:$0xf]
        %v237 = vld [vmem:[%s205 + $0x7c] sm:$0x3]
        %v238 = vld [vmem:[%s205 + $0x80] sm:$0xf]
        %v239 = vld [vmem:[%s205 + $0x84] sm:$0xf]
        %v240 = vld [vmem:[%s205 + $0x88] sm:$0xf]
        %v241 = vld [vmem:[%s205 + $0x8c] sm:$0xf]
        %v242 = vld [vmem:[%s205 + $0x90] sm:$0xf]
        %v243 = vld [vmem:[%s205 + $0x94] sm:$0xf]
        %v244 = vld [vmem:[%s205 + $0x98] sm:$0xf]
        %v245 = vld [vmem:[%s205 + $0x9c] sm:$0x3]
        %v246 = vld [vmem:[%s205 + $0xa0] sm:$0xf]
        %v247 = vld [vmem:[%s205 + $0xa4] sm:$0xf]
        %v248 = vld [vmem:[%s205 + $0xa8] sm:$0xf]
        %v249 = vld [vmem:[%s205 + $0xac] sm:$0xf]
        %v250 = vld [vmem:[%s205 + $0xb0] sm:$0xf]
        %v251 = vld [vmem:[%s205 + $0xb4] sm:$0xf]
        %v252 = vld [vmem:[%s205 + $0xb8] sm:$0xf]
        %v253 = vld [vmem:[%s205 + $0xbc] sm:$0x3]
        %v254 = vld [vmem:[%s205 + $0xc0] sm:$0xf]
        %v255 = vld [vmem:[%s205 + $0xc4] sm:$0xf]
        %v256 = vld [vmem:[%s205 + $0xc8] sm:$0xf]
        %v257 = vld [vmem:[%s205 + $0xcc] sm:$0xf]
        %v258 = vld [vmem:[%s205 + $0xd0] sm:$0xf]
        %v259 = vld [vmem:[%s205 + $0xd4] sm:$0xf]
        %v260 = vld [vmem:[%s205 + $0xd8] sm:$0xf]
        %v261 = vld [vmem:[%s205 + $0xdc] sm:$0x3]
        %v262 = vld [vmem:[%s205 + $0xe0] sm:$0xf]
        %v263 = vld [vmem:[%s205 + $0xe4] sm:$0xf]
        %v264 = vld [vmem:[%s205 + $0xe8] sm:$0xf]
        %v265 = vld [vmem:[%s205 + $0xec] sm:$0xf]
        %v266 = vld [vmem:[%s205 + $0xf0] sm:$0xf]
        %v267 = vld [vmem:[%s205 + $0xf4] sm:$0xf]
        %v268 = vld [vmem:[%s205 + $0xf8] sm:$0xf]
        %v269 = vld [vmem:[%s205 + $0xfc] sm:$0x3]
        %v294 = vunpack.c.l.b16 %v206
        %v295 = vunpack.c.l.b16 %v207
        %v296 = vunpack.c.l.b16 %v208
        %v297 = vunpack.c.l.b16 %v214
        %v298 = vunpack.c.l.b16 %v215
        %v299 = vunpack.c.l.b16 %v216
        %v300 = vunpack.c.l.b16 %v222
        %v301 = vunpack.c.l.b16 %v223
        %v302 = vunpack.c.l.b16 %v224
        %v303 = vunpack.c.l.b16 %v230
        %v304 = vunpack.c.l.b16 %v231
        %v305 = vunpack.c.l.b16 %v232
        %v306 = vunpack.c.l.b16 %v238
        %v307 = vunpack.c.l.b16 %v239
        %v308 = vunpack.c.l.b16 %v240
        %v309 = vunpack.c.l.b16 %v246
        %v310 = vunpack.c.l.b16 %v247
        %v311 = vunpack.c.l.b16 %v248
        %v312 = vunpack.c.l.b16 %v254
        %v313 = vunpack.c.l.b16 %v255
        %v314 = vunpack.c.l.b16 %v256
        %v315 = vunpack.c.l.b16 %v262
        %v316 = vunpack.c.l.b16 %v263
        %v317 = vunpack.c.l.b16 %v264
        %v318 = vpack.c.b16 %v295, %v294
        %v319 = vpack.c.b16 %v297, %v296
        %v320 = vpack.c.b16 %v299, %v298
        %v321 = vpack.c.b16 %v301, %v300
        %v322 = vpack.c.b16 %v303, %v302
        %v323 = vpack.c.b16 %v305, %v304
        %v324 = vpack.c.b16 %v307, %v306
        %v325 = vpack.c.b16 %v309, %v308
        %v326 = vpack.c.b16 %v311, %v310
        %v327 = vpack.c.b16 %v313, %v312
        %v328 = vpack.c.b16 %v315, %v314
        %v329 = vpack.c.b16 %v317, %v316
        %330 = vrot.lane.b32.xlu0 %v318, 48
        %v331 = vpop.permute.xlu0 %330
        %332 = vrot.lane.b32.xlu0 %v319, 48
        %v333 = vpop.permute.xlu0 %332
        %334 = vrot.lane.b32.xlu0 %v320, 48
        %v335 = vpop.permute.xlu0 %334
        %336 = vrot.lane.b32.xlu0 %v321, 48
        %v337 = vpop.permute.xlu0 %336
        %338 = vrot.lane.b32.xlu0 %v322, 48
        %v339 = vpop.permute.xlu0 %338
        %340 = vrot.lane.b32.xlu0 %v323, 48
        %v341 = vpop.permute.xlu0 %340
        %342 = vrot.lane.b32.xlu0 %v324, 48
        %v343 = vpop.permute.xlu0 %342
        %344 = vrot.lane.b32.xlu0 %v325, 48
        %v345 = vpop.permute.xlu0 %344
        %346 = vrot.lane.b32.xlu0 %v326, 48
        %v347 = vpop.permute.xlu0 %346
        %348 = vrot.lane.b32.xlu0 %v327, 48
        %v349 = vpop.permute.xlu0 %348
        %350 = vrot.lane.b32.xlu0 %v328, 48
        %v351 = vpop.permute.xlu0 %350
        %352 = vrot.lane.b32.xlu0 %v329, 48
        %v353 = vpop.permute.xlu0 %352
        %vm366 = vcmask 523648
        %367 = vst.msk [vmem:[#allocation2 + $0x10] sm:$0xff] %vm366, %v331
        %368 = vst.msk [vmem:[#allocation2 + $0x30] sm:$0xff] %vm366, %v333
        %369 = vst.msk [vmem:[#allocation2 + $0x50] sm:$0xff] %vm366, %v335
        %370 = vst.msk [vmem:[#allocation2 + $0x70] sm:$0xff] %vm366, %v337
        %371 = vst.msk [vmem:[#allocation2 + $0x90] sm:$0xff] %vm366, %v339
        %372 = vst.msk [vmem:[#allocation2 + $0xb0] sm:$0xff] %vm366, %v341
        %373 = vst.msk [vmem:[#allocation2 + $0xd0] sm:$0xff] %vm366, %v343
        %374 = vst.msk [vmem:[#allocation2 + $0xf0] sm:$0xff] %vm366, %v345
        %375 = vst.msk [vmem:[#allocation2 + $0x110] sm:$0xff] %vm366, %v347
        %376 = vst.msk [vmem:[#allocation2 + $0x130] sm:$0xff] %vm366, %v349
        %377 = vst.msk [vmem:[#allocation2 + $0x150] sm:$0xff] %vm366, %v351
        %378 = vst.msk [vmem:[#allocation2 + $0x170] sm:$0xff] %vm366, %v353
        %vm403 = vcmask 1042432
        %vm404 = vcmask 1046532
        %vm405 = vmor %vm403, %vm404
        %v406 = vrot.slane %v208, 5
        %v407 = vrot.slane %v406, 4
        %v408 = vrot.slane %v209, 5
        %v409 = vsel %vm405, %v407, %v408
        %v410 = vrot.slane %v408, 4
        %v411 = vrot.slane %v210, 5
        %v412 = vsel %vm405, %v410, %v411
        %v413 = vrot.slane %v411, 4
        %v414 = vrot.slane %v211, 5
        %v415 = vsel %vm405, %v413, %v414
        %v416 = vrot.slane %v216, 5
        %v417 = vrot.slane %v416, 4
        %v418 = vrot.slane %v217, 5
        %v419 = vsel %vm405, %v417, %v418
        %v420 = vrot.slane %v418, 4
        %v421 = vrot.slane %v218, 5
        %v422 = vsel %vm405, %v420, %v421
        %v423 = vrot.slane %v421, 4
        %v424 = vrot.slane %v219, 5
        %v425 = vsel %vm405, %v423, %v424
        %v426 = vrot.slane %v224, 5
        %v427 = vrot.slane %v426, 4
        %v428 = vrot.slane %v225, 5
        %v429 = vsel %vm405, %v427, %v428
        %v430 = vrot.slane %v428, 4
        %v431 = vrot.slane %v226, 5
        %v432 = vsel %vm405, %v430, %v431
        %v433 = vrot.slane %v431, 4
        %v434 = vrot.slane %v227, 5
        %v435 = vsel %vm405, %v433, %v434
        %v436 = vrot.slane %v232, 5
        %v437 = vrot.slane %v436, 4
        %v438 = vrot.slane %v233, 5
        %v439 = vsel %vm405, %v437, %v438
        %v440 = vrot.slane %v438, 4
        %v441 = vrot.slane %v234, 5
        %v442 = vsel %vm405, %v440, %v441
        %v443 = vrot.slane %v441, 4
        %v444 = vrot.slane %v235, 5
        %v445 = vsel %vm405, %v443, %v444
        %v446 = vrot.slane %v240, 5
        %v447 = vrot.slane %v446, 4
        %v448 = vrot.slane %v241, 5
        %v449 = vsel %vm405, %v447, %v448
        %v450 = vrot.slane %v448, 4
        %v451 = vrot.slane %v242, 5
        %v452 = vsel %vm405, %v450, %v451
        %v453 = vrot.slane %v451, 4
        %v454 = vrot.slane %v243, 5
        %v455 = vsel %vm405, %v453, %v454
        %v456 = vrot.slane %v248, 5
        %v457 = vrot.slane %v456, 4
        %v458 = vrot.slane %v249, 5
        %v459 = vsel %vm405, %v457, %v458
        %v460 = vrot.slane %v458, 4
        %v461 = vrot.slane %v250, 5
        %v462 = vsel %vm405, %v460, %v461
        %v463 = vrot.slane %v461, 4
        %v464 = vrot.slane %v251, 5
        %v465 = vsel %vm405, %v463, %v464
        %v466 = vrot.slane %v256, 5
        %v467 = vrot.slane %v466, 4
        %v468 = vrot.slane %v257, 5
        %v469 = vsel %vm405, %v467, %v468
        %v470 = vrot.slane %v468, 4
        %v471 = vrot.slane %v258, 5
        %v472 = vsel %vm405, %v470, %v471
        %v473 = vrot.slane %v471, 4
        %v474 = vrot.slane %v259, 5
        %v475 = vsel %vm405, %v473, %v474
        %v476 = vrot.slane %v264, 5
        %v477 = vrot.slane %v476, 4
        %v478 = vrot.slane %v265, 5
        %v479 = vsel %vm405, %v477, %v478
        %v480 = vrot.slane %v478, 4
        %v481 = vrot.slane %v266, 5
        %v482 = vsel %vm405, %v480, %v481
        %v483 = vrot.slane %v481, 4
        %v484 = vrot.slane %v267, 5
        %v485 = vsel %vm405, %v483, %v484
        %v486 = vunpack.c.l.b16 %v409
        %v487 = vunpack.c.l.b16 %v412
        %v488 = vunpack.c.l.b16 %v415
        %v489 = vunpack.c.l.b16 %v419
        %v490 = vunpack.c.l.b16 %v422
        %v491 = vunpack.c.l.b16 %v425
        %v492 = vunpack.c.l.b16 %v429
        %v493 = vunpack.c.l.b16 %v432
        %v494 = vunpack.c.l.b16 %v435
        %v495 = vunpack.c.l.b16 %v439
        %v496 = vunpack.c.l.b16 %v442
        %v497 = vunpack.c.l.b16 %v445
        %v498 = vunpack.c.l.b16 %v449
        %v499 = vunpack.c.l.b16 %v452
        %v500 = vunpack.c.l.b16 %v455
        %v501 = vunpack.c.l.b16 %v459
        %v502 = vunpack.c.l.b16 %v462
        %v503 = vunpack.c.l.b16 %v465
        %v504 = vunpack.c.l.b16 %v469
        %v505 = vunpack.c.l.b16 %v472
        %v506 = vunpack.c.l.b16 %v475
        %v507 = vunpack.c.l.b16 %v479
        %v508 = vunpack.c.l.b16 %v482
        %v509 = vunpack.c.l.b16 %v485
        %v510 = vpack.c.b16 %v487, %v486
        %v511 = vpack.c.b16 %v489, %v488
        %v512 = vpack.c.b16 %v491, %v490
        %v513 = vpack.c.b16 %v493, %v492
        %v514 = vpack.c.b16 %v495, %v494
        %v515 = vpack.c.b16 %v497, %v496
        %v516 = vpack.c.b16 %v499, %v498
        %v517 = vpack.c.b16 %v501, %v500
        %v518 = vpack.c.b16 %v503, %v502
        %v519 = vpack.c.b16 %v505, %v504
        %v520 = vpack.c.b16 %v507, %v506
        %v521 = vpack.c.b16 %v509, %v508
        %522 = vrot.lane.b32.xlu0 %v510, 64
        %v523 = vpop.permute.xlu0 %522
        %524 = vrot.lane.b32.xlu0 %v511, 64
        %v525 = vpop.permute.xlu0 %524
        %526 = vrot.lane.b32.xlu0 %v512, 64
        %v527 = vpop.permute.xlu0 %526
        %528 = vrot.lane.b32.xlu0 %v513, 64
        %v529 = vpop.permute.xlu0 %528
        %530 = vrot.lane.b32.xlu0 %v514, 64
        %v531 = vpop.permute.xlu0 %530
        %532 = vrot.lane.b32.xlu0 %v515, 64
        %v533 = vpop.permute.xlu0 %532
        %534 = vrot.lane.b32.xlu0 %v516, 64
        %v535 = vpop.permute.xlu0 %534
        %536 = vrot.lane.b32.xlu0 %v517, 64
        %v537 = vpop.permute.xlu0 %536
        %538 = vrot.lane.b32.xlu0 %v518, 64
        %v539 = vpop.permute.xlu0 %538
        %540 = vrot.lane.b32.xlu0 %v519, 64
        %v541 = vpop.permute.xlu0 %540
        %542 = vrot.lane.b32.xlu0 %v520, 64
        %v543 = vpop.permute.xlu0 %542
        %544 = vrot.lane.b32.xlu0 %v521, 64
        %v545 = vpop.permute.xlu0 %544
        %vm558 = vcmask 654848
        %559 = vst.msk [vmem:[#allocation2 + $0x10] sm:$0xff] %vm558, %v523
        %560 = vst.msk [vmem:[#allocation2 + $0x30] sm:$0xff] %vm558, %v525
        %561 = vst.msk [vmem:[#allocation2 + $0x50] sm:$0xff] %vm558, %v527
        %562 = vst.msk [vmem:[#allocation2 + $0x70] sm:$0xff] %vm558, %v529
        %563 = vst.msk [vmem:[#allocation2 + $0x90] sm:$0xff] %vm558, %v531
        %564 = vst.msk [vmem:[#allocation2 + $0xb0] sm:$0xff] %vm558, %v533
        %565 = vst.msk [vmem:[#allocation2 + $0xd0] sm:$0xff] %vm558, %v535
        %566 = vst.msk [vmem:[#allocation2 + $0xf0] sm:$0xff] %vm558, %v537
        %567 = vst.msk [vmem:[#allocation2 + $0x110] sm:$0xff] %vm558, %v539
        %568 = vst.msk [vmem:[#allocation2 + $0x130] sm:$0xff] %vm558, %v541
        %569 = vst.msk [vmem:[#allocation2 + $0x150] sm:$0xff] %vm558, %v543
        %570 = vst.msk [vmem:[#allocation2 + $0x170] sm:$0xff] %vm558, %v545
        %vm587 = vcmask 1041408
        %vm588 = vcmask 1045508
        %vm589 = vmor %vm587, %vm588
        %v590 = vrot.slane %v210, 6
        %v591 = vrot.slane %v590, 4
        %v592 = vrot.slane %v211, 6
        %v593 = vsel %vm589, %v591, %v592
        %v594 = vrot.slane %v592, 4
        %v595 = vrot.slane %v212, 6
        %v596 = vsel %vm589, %v594, %v595
        %v597 = vrot.slane %v595, 4
        %v598 = vrot.slane %v213, 6
        %v599 = vsel %vm589, %v597, %v598
        %v600 = vrot.slane %v218, 6
        %v601 = vrot.slane %v600, 4
        %v602 = vrot.slane %v219, 6
        %v603 = vsel %vm589, %v601, %v602
        %v604 = vrot.slane %v602, 4
        %v605 = vrot.slane %v220, 6
        %v606 = vsel %vm589, %v604, %v605
        %v607 = vrot.slane %v605, 4
        %v608 = vrot.slane %v221, 6
        %v609 = vsel %vm589, %v607, %v608
        %v610 = vrot.slane %v226, 6
        %v611 = vrot.slane %v610, 4
        %v612 = vrot.slane %v227, 6
        %v613 = vsel %vm589, %v611, %v612
        %v614 = vrot.slane %v612, 4
        %v615 = vrot.slane %v228, 6
        %v616 = vsel %vm589, %v614, %v615
        %v617 = vrot.slane %v615, 4
        %v618 = vrot.slane %v229, 6
        %v619 = vsel %vm589, %v617, %v618
        %v620 = vrot.slane %v234, 6
        %v621 = vrot.slane %v620, 4
        %v622 = vrot.slane %v235, 6
        %v623 = vsel %vm589, %v621, %v622
        %v624 = vrot.slane %v622, 4
        %v625 = vrot.slane %v236, 6
        %v626 = vsel %vm589, %v624, %v625
        %v627 = vrot.slane %v625, 4
        %v628 = vrot.slane %v237, 6
        %v629 = vsel %vm589, %v627, %v628
        %v630 = vrot.slane %v242, 6
        %v631 = vrot.slane %v630, 4
        %v632 = vrot.slane %v243, 6
        %v633 = vsel %vm589, %v631, %v632
        %v634 = vrot.slane %v632, 4
        %v635 = vrot.slane %v244, 6
        %v636 = vsel %vm589, %v634, %v635
        %v637 = vrot.slane %v635, 4
        %v638 = vrot.slane %v245, 6
        %v639 = vsel %vm589, %v637, %v638
        %v640 = vrot.slane %v250, 6
        %v641 = vrot.slane %v640, 4
        %v642 = vrot.slane %v251, 6
        %v643 = vsel %vm589, %v641, %v642
        %v644 = vrot.slane %v642, 4
        %v645 = vrot.slane %v252, 6
        %v646 = vsel %vm589, %v644, %v645
        %v647 = vrot.slane %v645, 4
        %v648 = vrot.slane %v253, 6
        %v649 = vsel %vm589, %v647, %v648
        %v650 = vrot.slane %v258, 6
        %v651 = vrot.slane %v650, 4
        %v652 = vrot.slane %v259, 6
        %v653 = vsel %vm589, %v651, %v652
        %v654 = vrot.slane %v652, 4
        %v655 = vrot.slane %v260, 6
        %v656 = vsel %vm589, %v654, %v655
        %v657 = vrot.slane %v655, 4
        %v658 = vrot.slane %v261, 6
        %v659 = vsel %vm589, %v657, %v658
        %v660 = vrot.slane %v266, 6
        %v661 = vrot.slane %v660, 4
        %v662 = vrot.slane %v267, 6
        %v663 = vsel %vm589, %v661, %v662
        %v664 = vrot.slane %v662, 4
        %v665 = vrot.slane %v268, 6
        %v666 = vsel %vm589, %v664, %v665
        %v667 = vrot.slane %v665, 4
        %v668 = vrot.slane %v269, 6
        %v669 = vsel %vm589, %v667, %v668
        %v670 = vunpack.c.l.b16 %v593
        %v671 = vunpack.c.l.b16 %v596
        %v672 = vunpack.c.l.b16 %v599
        %v673 = vunpack.c.l.b16 %v603
        %v674 = vunpack.c.l.b16 %v606
        %v675 = vunpack.c.l.b16 %v609
        %v676 = vunpack.c.l.b16 %v613
        %v677 = vunpack.c.l.b16 %v616
        %v678 = vunpack.c.l.b16 %v619
        %v679 = vunpack.c.l.b16 %v623
        %v680 = vunpack.c.l.b16 %v626
        %v681 = vunpack.c.l.b16 %v629
        %v682 = vunpack.c.l.b16 %v633
        %v683 = vunpack.c.l.b16 %v636
        %v684 = vunpack.c.l.b16 %v639
        %v685 = vunpack.c.l.b16 %v643
        %v686 = vunpack.c.l.b16 %v646
        %v687 = vunpack.c.l.b16 %v649
        %v688 = vunpack.c.l.b16 %v653
        %v689 = vunpack.c.l.b16 %v656
        %v690 = vunpack.c.l.b16 %v659
        %v691 = vunpack.c.l.b16 %v663
        %v692 = vunpack.c.l.b16 %v666
        %v693 = vunpack.c.l.b16 %v669
        %v694 = vpack.c.b16 %v671, %v670
        %v695 = vpack.c.b16 %v673, %v672
        %v696 = vpack.c.b16 %v675, %v674
        %v697 = vpack.c.b16 %v677, %v676
        %v698 = vpack.c.b16 %v679, %v678
        %v699 = vpack.c.b16 %v681, %v680
        %v700 = vpack.c.b16 %v683, %v682
        %v701 = vpack.c.b16 %v685, %v684
        %v702 = vpack.c.b16 %v687, %v686
        %v703 = vpack.c.b16 %v689, %v688
        %v704 = vpack.c.b16 %v691, %v690
        %v705 = vpack.c.b16 %v693, %v692
        %706 = vrot.lane.b32.xlu0 %v694, 80
        %v707 = vpop.permute.xlu0 %706
        %708 = vrot.lane.b32.xlu0 %v695, 80
        %v709 = vpop.permute.xlu0 %708
        %710 = vrot.lane.b32.xlu0 %v696, 80
        %v711 = vpop.permute.xlu0 %710
        %712 = vrot.lane.b32.xlu0 %v697, 80
        %v713 = vpop.permute.xlu0 %712
        %714 = vrot.lane.b32.xlu0 %v698, 80
        %v715 = vpop.permute.xlu0 %714
        %716 = vrot.lane.b32.xlu0 %v699, 80
        %v717 = vpop.permute.xlu0 %716
        %718 = vrot.lane.b32.xlu0 %v700, 80
        %v719 = vpop.permute.xlu0 %718
        %720 = vrot.lane.b32.xlu0 %v701, 80
        %v721 = vpop.permute.xlu0 %720
        %722 = vrot.lane.b32.xlu0 %v702, 80
        %v723 = vpop.permute.xlu0 %722
        %724 = vrot.lane.b32.xlu0 %v703, 80
        %v725 = vpop.permute.xlu0 %724
        %726 = vrot.lane.b32.xlu0 %v704, 80
        %v727 = vpop.permute.xlu0 %726
        %728 = vrot.lane.b32.xlu0 %v705, 80
        %v729 = vpop.permute.xlu0 %728
        %vm742 = vcmask 786048
        %743 = vst.msk [vmem:[#allocation2 + $0x10] sm:$0xff] %vm742, %v707
        %744 = vst.msk [vmem:[#allocation2 + $0x30] sm:$0xff] %vm742, %v709
        %745 = vst.msk [vmem:[#allocation2 + $0x50] sm:$0xff] %vm742, %v711
        %746 = vst.msk [vmem:[#allocation2 + $0x70] sm:$0xff] %vm742, %v713
        %747 = vst.msk [vmem:[#allocation2 + $0x90] sm:$0xff] %vm742, %v715
        %748 = vst.msk [vmem:[#allocation2 + $0xb0] sm:$0xff] %vm742, %v717
        %749 = vst.msk [vmem:[#allocation2 + $0xd0] sm:$0xff] %vm742, %v719
        %750 = vst.msk [vmem:[#allocation2 + $0xf0] sm:$0xff] %vm742, %v721
        %751 = vst.msk [vmem:[#allocation2 + $0x110] sm:$0xff] %vm742, %v723
        %752 = vst.msk [vmem:[#allocation2 + $0x130] sm:$0xff] %vm742, %v725
        %753 = vst.msk [vmem:[#allocation2 + $0x150] sm:$0xff] %vm742, %v727
        %754 = vst.msk [vmem:[#allocation2 + $0x170] sm:$0xff] %vm742, %v729
        %s755 = sadd.s32 %s202, 6
        %s756 = smul.u32 %s755, 8
        %s757 = smul.addr %s756, 4
        %s758 = scalar_lea.vmem %s195, %s757
        %v759 = vld [vmem:[%s758] sm:$0xf]
        %v760 = vld [vmem:[%s758 + $0x4] sm:$0xf]
        %v761 = vld [vmem:[%s758 + $0x8] sm:$0xf]
        %v762 = vld [vmem:[%s758 + $0xc] sm:$0xf]
        %v763 = vld [vmem:[%s758 + $0x10] sm:$0xf]
        %v764 = vld [vmem:[%s758 + $0x14] sm:$0xf]
        %v765 = vld [vmem:[%s758 + $0x18] sm:$0xf]
        %v766 = vld [vmem:[%s758 + $0x20] sm:$0xf]
        %v767 = vld [vmem:[%s758 + $0x24] sm:$0xf]
        %v768 = vld [vmem:[%s758 + $0x28] sm:$0xf]
        %v769 = vld [vmem:[%s758 + $0x2c] sm:$0xf]
        %v770 = vld [vmem:[%s758 + $0x30] sm:$0xf]
        %v771 = vld [vmem:[%s758 + $0x34] sm:$0xf]
        %v772 = vld [vmem:[%s758 + $0x38] sm:$0xf]
        %v773 = vld [vmem:[%s758 + $0x40] sm:$0xf]
        %v774 = vld [vmem:[%s758 + $0x44] sm:$0xf]
        %v775 = vld [vmem:[%s758 + $0x48] sm:$0xf]
        %v776 = vld [vmem:[%s758 + $0x4c] sm:$0xf]
        %v777 = vld [vmem:[%s758 + $0x50] sm:$0xf]
        %v778 = vld [vmem:[%s758 + $0x54] sm:$0xf]
        %v779 = vld [vmem:[%s758 + $0x58] sm:$0xf]
        %v780 = vld [vmem:[%s758 + $0x60] sm:$0xf]
        %v781 = vld [vmem:[%s758 + $0x64] sm:$0xf]
        %v782 = vld [vmem:[%s758 + $0x68] sm:$0xf]
        %v783 = vld [vmem:[%s758 + $0x6c] sm:$0xf]
        %v784 = vld [vmem:[%s758 + $0x70] sm:$0xf]
        %v785 = vld [vmem:[%s758 + $0x74] sm:$0xf]
        %v786 = vld [vmem:[%s758 + $0x78] sm:$0xf]
        %v787 = vld [vmem:[%s758 + $0x80] sm:$0xf]
        %v788 = vld [vmem:[%s758 + $0x84] sm:$0xf]
        %v789 = vld [vmem:[%s758 + $0x88] sm:$0xf]
        %v790 = vld [vmem:[%s758 + $0x8c] sm:$0xf]
        %v791 = vld [vmem:[%s758 + $0x90] sm:$0xf]
        %v792 = vld [vmem:[%s758 + $0x94] sm:$0xf]
        %v793 = vld [vmem:[%s758 + $0x98] sm:$0xf]
        %v794 = vld [vmem:[%s758 + $0xa0] sm:$0xf]
        %v795 = vld [vmem:[%s758 + $0xa4] sm:$0xf]
        %v796 = vld [vmem:[%s758 + $0xa8] sm:$0xf]
        %v797 = vld [vmem:[%s758 + $0xac] sm:$0xf]
        %v798 = vld [vmem:[%s758 + $0xb0] sm:$0xf]
        %v799 = vld [vmem:[%s758 + $0xb4] sm:$0xf]
        %v800 = vld [vmem:[%s758 + $0xb8] sm:$0xf]
        %v801 = vld [vmem:[%s758 + $0xc0] sm:$0xf]
        %v802 = vld [vmem:[%s758 + $0xc4] sm:$0xf]
        %v803 = vld [vmem:[%s758 + $0xc8] sm:$0xf]
        %v804 = vld [vmem:[%s758 + $0xcc] sm:$0xf]
        %v805 = vld [vmem:[%s758 + $0xd0] sm:$0xf]
        %v806 = vld [vmem:[%s758 + $0xd4] sm:$0xf]
        %v807 = vld [vmem:[%s758 + $0xd8] sm:$0xf]
        %v808 = vld [vmem:[%s758 + $0xe0] sm:$0xf]
        %v809 = vld [vmem:[%s758 + $0xe4] sm:$0xf]
        %v810 = vld [vmem:[%s758 + $0xe8] sm:$0xf]
        %v811 = vld [vmem:[%s758 + $0xec] sm:$0xf]
        %v812 = vld [vmem:[%s758 + $0xf0] sm:$0xf]
        %v813 = vld [vmem:[%s758 + $0xf4] sm:$0xf]
        %v814 = vld [vmem:[%s758 + $0xf8] sm:$0xf]
        %vm847 = vcmask 1040384
        %vm848 = vcmask 1044484
        %vm849 = vmor %vm847, %vm848
        %v850 = vrot.slane %v759, 7
        %v851 = vrot.slane %v850, 4
        %v852 = vrot.slane %v760, 7
        %v853 = vsel %vm849, %v851, %v852
        %v854 = vrot.slane %v852, 4
        %v855 = vrot.slane %v761, 7
        %v856 = vsel %vm849, %v854, %v855
        %v857 = vrot.slane %v855, 4
        %v858 = vrot.slane %v762, 7
        %v859 = vsel %vm849, %v857, %v858
        %v860 = vrot.slane %v766, 7
        %v861 = vrot.slane %v860, 4
        %v862 = vrot.slane %v767, 7
        %v863 = vsel %vm849, %v861, %v862
        %v864 = vrot.slane %v862, 4
        %v865 = vrot.slane %v768, 7
        %v866 = vsel %vm849, %v864, %v865
        %v867 = vrot.slane %v865, 4
        %v868 = vrot.slane %v769, 7
        %v869 = vsel %vm849, %v867, %v868
        %v870 = vrot.slane %v773, 7
        %v871 = vrot.slane %v870, 4
        %v872 = vrot.slane %v774, 7
        %v873 = vsel %vm849, %v871, %v872
        %v874 = vrot.slane %v872, 4
        %v875 = vrot.slane %v775, 7
        %v876 = vsel %vm849, %v874, %v875
        %v877 = vrot.slane %v875, 4
        %v878 = vrot.slane %v776, 7
        %v879 = vsel %vm849, %v877, %v878
        %v880 = vrot.slane %v780, 7
        %v881 = vrot.slane %v880, 4
        %v882 = vrot.slane %v781, 7
        %v883 = vsel %vm849, %v881, %v882
        %v884 = vrot.slane %v882, 4
        %v885 = vrot.slane %v782, 7
        %v886 = vsel %vm849, %v884, %v885
        %v887 = vrot.slane %v885, 4
        %v888 = vrot.slane %v783, 7
        %v889 = vsel %vm849, %v887, %v888
        %v890 = vrot.slane %v787, 7
        %v891 = vrot.slane %v890, 4
        %v892 = vrot.slane %v788, 7
        %v893 = vsel %vm849, %v891, %v892
        %v894 = vrot.slane %v892, 4
        %v895 = vrot.slane %v789, 7
        %v896 = vsel %vm849, %v894, %v895
        %v897 = vrot.slane %v895, 4
        %v898 = vrot.slane %v790, 7
        %v899 = vsel %vm849, %v897, %v898
        %v900 = vrot.slane %v794, 7
        %v901 = vrot.slane %v900, 4
        %v902 = vrot.slane %v795, 7
        %v903 = vsel %vm849, %v901, %v902
        %v904 = vrot.slane %v902, 4
        %v905 = vrot.slane %v796, 7
        %v906 = vsel %vm849, %v904, %v905
        %v907 = vrot.slane %v905, 4
        %v908 = vrot.slane %v797, 7
        %v909 = vsel %vm849, %v907, %v908
        %v910 = vrot.slane %v801, 7
        %v911 = vrot.slane %v910, 4
        %v912 = vrot.slane %v802, 7
        %v913 = vsel %vm849, %v911, %v912
        %v914 = vrot.slane %v912, 4
        %v915 = vrot.slane %v803, 7
        %v916 = vsel %vm849, %v914, %v915
        %v917 = vrot.slane %v915, 4
        %v918 = vrot.slane %v804, 7
        %v919 = vsel %vm849, %v917, %v918
        %v920 = vrot.slane %v808, 7
        %v921 = vrot.slane %v920, 4
        %v922 = vrot.slane %v809, 7
        %v923 = vsel %vm849, %v921, %v922
        %v924 = vrot.slane %v922, 4
        %v925 = vrot.slane %v810, 7
        %v926 = vsel %vm849, %v924, %v925
        %v927 = vrot.slane %v925, 4
        %v928 = vrot.slane %v811, 7
        %v929 = vsel %vm849, %v927, %v928
        %v930 = vunpack.c.l.b16 %v853
        %v931 = vunpack.c.l.b16 %v856
        %v932 = vunpack.c.l.b16 %v859
        %v933 = vunpack.c.l.b16 %v863
        %v934 = vunpack.c.l.b16 %v866
        %v935 = vunpack.c.l.b16 %v869
        %v936 = vunpack.c.l.b16 %v873
        %v937 = vunpack.c.l.b16 %v876
        %v938 = vunpack.c.l.b16 %v879
        %v939 = vunpack.c.l.b16 %v883
        %v940 = vunpack.c.l.b16 %v886
        %v941 = vunpack.c.l.b16 %v889
        %v942 = vunpack.c.l.b16 %v893
        %v943 = vunpack.c.l.b16 %v896
        %v944 = vunpack.c.l.b16 %v899
        %v945 = vunpack.c.l.b16 %v903
        %v946 = vunpack.c.l.b16 %v906
        %v947 = vunpack.c.l.b16 %v909
        %v948 = vunpack.c.l.b16 %v913
        %v949 = vunpack.c.l.b16 %v916
        %v950 = vunpack.c.l.b16 %v919
        %v951 = vunpack.c.l.b16 %v923
        %v952 = vunpack.c.l.b16 %v926
        %v953 = vunpack.c.l.b16 %v929
        %v954 = vpack.c.b16 %v931, %v930
        %v955 = vpack.c.b16 %v933, %v932
        %v956 = vpack.c.b16 %v935, %v934
        %v957 = vpack.c.b16 %v937, %v936
        %v958 = vpack.c.b16 %v939, %v938
        %v959 = vpack.c.b16 %v941, %v940
        %v960 = vpack.c.b16 %v943, %v942
        %v961 = vpack.c.b16 %v945, %v944
        %v962 = vpack.c.b16 %v947, %v946
        %v963 = vpack.c.b16 %v949, %v948
        %v964 = vpack.c.b16 %v951, %v950
        %v965 = vpack.c.b16 %v953, %v952
        %966 = vrot.lane.b32.xlu0 %v954, 32
        %v967 = vpop.permute.xlu0 %966
        %968 = vrot.lane.b32.xlu0 %v955, 32
        %v969 = vpop.permute.xlu0 %968
        %970 = vrot.lane.b32.xlu0 %v956, 32
        %v971 = vpop.permute.xlu0 %970
        %972 = vrot.lane.b32.xlu0 %v957, 32
        %v973 = vpop.permute.xlu0 %972
        %974 = vrot.lane.b32.xlu0 %v958, 32
        %v975 = vpop.permute.xlu0 %974
        %976 = vrot.lane.b32.xlu0 %v959, 32
        %v977 = vpop.permute.xlu0 %976
        %978 = vrot.lane.b32.xlu0 %v960, 32
        %v979 = vpop.permute.xlu0 %978
        %980 = vrot.lane.b32.xlu0 %v961, 32
        %v981 = vpop.permute.xlu0 %980
        %982 = vrot.lane.b32.xlu0 %v962, 32
        %v983 = vpop.permute.xlu0 %982
        %984 = vrot.lane.b32.xlu0 %v963, 32
        %v985 = vpop.permute.xlu0 %984
        %986 = vrot.lane.b32.xlu0 %v964, 32
        %v987 = vpop.permute.xlu0 %986
        %988 = vrot.lane.b32.xlu0 %v965, 32
        %v989 = vpop.permute.xlu0 %988
        %vm1002 = vcmask 392448
        %1003 = vst.msk [vmem:[#allocation2 + $0x8] sm:$0xff] %vm1002, %v967
        %1004 = vst.msk [vmem:[#allocation2 + $0x28] sm:$0xff] %vm1002, %v969
        %1005 = vst.msk [vmem:[#allocation2 + $0x48] sm:$0xff] %vm1002, %v971
        %1006 = vst.msk [vmem:[#allocation2 + $0x68] sm:$0xff] %vm1002, %v973
        %1007 = vst.msk [vmem:[#allocation2 + $0x88] sm:$0xff] %vm1002, %v975
        %1008 = vst.msk [vmem:[#allocation2 + $0xa8] sm:$0xff] %vm1002, %v977
        %1009 = vst.msk [vmem:[#allocation2 + $0xc8] sm:$0xff] %vm1002, %v979
        %1010 = vst.msk [vmem:[#allocation2 + $0xe8] sm:$0xff] %vm1002, %v981
        %1011 = vst.msk [vmem:[#allocation2 + $0x108] sm:$0xff] %vm1002, %v983
        %1012 = vst.msk [vmem:[#allocation2 + $0x128] sm:$0xff] %vm1002, %v985
        %1013 = vst.msk [vmem:[#allocation2 + $0x148] sm:$0xff] %vm1002, %v987
        %1014 = vst.msk [vmem:[#allocation2 + $0x168] sm:$0xff] %vm1002, %v989
        %v1031 = vrot.slane %v761, 5
        %v1032 = vrot.slane %v1031, 4
        %v1033 = vrot.slane %v762, 5
        %v1034 = vsel %vm405, %v1032, %v1033
        %v1035 = vrot.slane %v1033, 4
        %v1036 = vrot.slane %v763, 5
        %v1037 = vsel %vm405, %v1035, %v1036
        %v1038 = vrot.slane %v1036, 4
        %v1039 = vrot.slane %v764, 5
        %v1040 = vsel %vm405, %v1038, %v1039
        %v1041 = vrot.slane %v768, 5
        %v1042 = vrot.slane %v1041, 4
        %v1043 = vrot.slane %v769, 5
        %v1044 = vsel %vm405, %v1042, %v1043
        %v1045 = vrot.slane %v1043, 4
        %v1046 = vrot.slane %v770, 5
        %v1047 = vsel %vm405, %v1045, %v1046
        %v1048 = vrot.slane %v1046, 4
        %v1049 = vrot.slane %v771, 5
        %v1050 = vsel %vm405, %v1048, %v1049
        %v1051 = vrot.slane %v775, 5
        %v1052 = vrot.slane %v1051, 4
        %v1053 = vrot.slane %v776, 5
        %v1054 = vsel %vm405, %v1052, %v1053
        %v1055 = vrot.slane %v1053, 4
        %v1056 = vrot.slane %v777, 5
        %v1057 = vsel %vm405, %v1055, %v1056
        %v1058 = vrot.slane %v1056, 4
        %v1059 = vrot.slane %v778, 5
        %v1060 = vsel %vm405, %v1058, %v1059
        %v1061 = vrot.slane %v782, 5
        %v1062 = vrot.slane %v1061, 4
        %v1063 = vrot.slane %v783, 5
        %v1064 = vsel %vm405, %v1062, %v1063
        %v1065 = vrot.slane %v1063, 4
        %v1066 = vrot.slane %v784, 5
        %v1067 = vsel %vm405, %v1065, %v1066
        %v1068 = vrot.slane %v1066, 4
        %v1069 = vrot.slane %v785, 5
        %v1070 = vsel %vm405, %v1068, %v1069
        %v1071 = vrot.slane %v789, 5
        %v1072 = vrot.slane %v1071, 4
        %v1073 = vrot.slane %v790, 5
        %v1074 = vsel %vm405, %v1072, %v1073
        %v1075 = vrot.slane %v1073, 4
        %v1076 = vrot.slane %v791, 5
        %v1077 = vsel %vm405, %v1075, %v1076
        %v1078 = vrot.slane %v1076, 4
        %v1079 = vrot.slane %v792, 5
        %v1080 = vsel %vm405, %v1078, %v1079
        %v1081 = vrot.slane %v796, 5
        %v1082 = vrot.slane %v1081, 4
        %v1083 = vrot.slane %v797, 5
        %v1084 = vsel %vm405, %v1082, %v1083
        %v1085 = vrot.slane %v1083, 4
        %v1086 = vrot.slane %v798, 5
        %v1087 = vsel %vm405, %v1085, %v1086
        %v1088 = vrot.slane %v1086, 4
        %v1089 = vrot.slane %v799, 5
        %v1090 = vsel %vm405, %v1088, %v1089
        %v1091 = vrot.slane %v803, 5
        %v1092 = vrot.slane %v1091, 4
        %v1093 = vrot.slane %v804, 5
        %v1094 = vsel %vm405, %v1092, %v1093
        %v1095 = vrot.slane %v1093, 4
        %v1096 = vrot.slane %v805, 5
        %v1097 = vsel %vm405, %v1095, %v1096
        %v1098 = vrot.slane %v1096, 4
        %v1099 = vrot.slane %v806, 5
        %v1100 = vsel %vm405, %v1098, %v1099
        %v1101 = vrot.slane %v810, 5
        %v1102 = vrot.slane %v1101, 4
        %v1103 = vrot.slane %v811, 5
        %v1104 = vsel %vm405, %v1102, %v1103
        %v1105 = vrot.slane %v1103, 4
        %v1106 = vrot.slane %v812, 5
        %v1107 = vsel %vm405, %v1105, %v1106
        %v1108 = vrot.slane %v1106, 4
        %v1109 = vrot.slane %v813, 5
        %v1110 = vsel %vm405, %v1108, %v1109
        %v1111 = vunpack.c.l.b16 %v1034
        %v1112 = vunpack.c.l.b16 %v1037
        %v1113 = vunpack.c.l.b16 %v1040
        %v1114 = vunpack.c.l.b16 %v1044
        %v1115 = vunpack.c.l.b16 %v1047
        %v1116 = vunpack.c.l.b16 %v1050
        %v1117 = vunpack.c.l.b16 %v1054
        %v1118 = vunpack.c.l.b16 %v1057
        %v1119 = vunpack.c.l.b16 %v1060
        %v1120 = vunpack.c.l.b16 %v1064
        %v1121 = vunpack.c.l.b16 %v1067
        %v1122 = vunpack.c.l.b16 %v1070
        %v1123 = vunpack.c.l.b16 %v1074
        %v1124 = vunpack.c.l.b16 %v1077
        %v1125 = vunpack.c.l.b16 %v1080
        %v1126 = vunpack.c.l.b16 %v1084
        %v1127 = vunpack.c.l.b16 %v1087
        %v1128 = vunpack.c.l.b16 %v1090
        %v1129 = vunpack.c.l.b16 %v1094
        %v1130 = vunpack.c.l.b16 %v1097
        %v1131 = vunpack.c.l.b16 %v1100
        %v1132 = vunpack.c.l.b16 %v1104
        %v1133 = vunpack.c.l.b16 %v1107
        %v1134 = vunpack.c.l.b16 %v1110
        %v1135 = vpack.c.b16 %v1112, %v1111
        %v1136 = vpack.c.b16 %v1114, %v1113
        %v1137 = vpack.c.b16 %v1116, %v1115
        %v1138 = vpack.c.b16 %v1118, %v1117
        %v1139 = vpack.c.b16 %v1120, %v1119
        %v1140 = vpack.c.b16 %v1122, %v1121
        %v1141 = vpack.c.b16 %v1124, %v1123
        %v1142 = vpack.c.b16 %v1126, %v1125
        %v1143 = vpack.c.b16 %v1128, %v1127
        %v1144 = vpack.c.b16 %v1130, %v1129
        %v1145 = vpack.c.b16 %v1132, %v1131
        %v1146 = vpack.c.b16 %v1134, %v1133
        %1147 = vrot.lane.b32.xlu0 %v1135, 48
        %v1148 = vpop.permute.xlu0 %1147
        %1149 = vrot.lane.b32.xlu0 %v1136, 48
        %v1150 = vpop.permute.xlu0 %1149
        %1151 = vrot.lane.b32.xlu0 %v1137, 48
        %v1152 = vpop.permute.xlu0 %1151
        %1153 = vrot.lane.b32.xlu0 %v1138, 48
        %v1154 = vpop.permute.xlu0 %1153
        %1155 = vrot.lane.b32.xlu0 %v1139, 48
        %v1156 = vpop.permute.xlu0 %1155
        %1157 = vrot.lane.b32.xlu0 %v1140, 48
        %v1158 = vpop.permute.xlu0 %1157
        %1159 = vrot.lane.b32.xlu0 %v1141, 48
        %v1160 = vpop.permute.xlu0 %1159
        %1161 = vrot.lane.b32.xlu0 %v1142, 48
        %v1162 = vpop.permute.xlu0 %1161
        %1163 = vrot.lane.b32.xlu0 %v1143, 48
        %v1164 = vpop.permute.xlu0 %1163
        %1165 = vrot.lane.b32.xlu0 %v1144, 48
        %v1166 = vpop.permute.xlu0 %1165
        %1167 = vrot.lane.b32.xlu0 %v1145, 48
        %v1168 = vpop.permute.xlu0 %1167
        %1169 = vrot.lane.b32.xlu0 %v1146, 48
        %v1170 = vpop.permute.xlu0 %1169
        %1183 = vst.msk [vmem:[#allocation2 + $0x8] sm:$0xff] %vm366, %v1148
        %1184 = vst.msk [vmem:[#allocation2 + $0x28] sm:$0xff] %vm366, %v1150
        %1185 = vst.msk [vmem:[#allocation2 + $0x48] sm:$0xff] %vm366, %v1152
        %1186 = vst.msk [vmem:[#allocation2 + $0x68] sm:$0xff] %vm366, %v1154
        %1187 = vst.msk [vmem:[#allocation2 + $0x88] sm:$0xff] %vm366, %v1156
        %1188 = vst.msk [vmem:[#allocation2 + $0xa8] sm:$0xff] %vm366, %v1158
        %1189 = vst.msk [vmem:[#allocation2 + $0xc8] sm:$0xff] %vm366, %v1160
        %1190 = vst.msk [vmem:[#allocation2 + $0xe8] sm:$0xff] %vm366, %v1162
        %1191 = vst.msk [vmem:[#allocation2 + $0x108] sm:$0xff] %vm366, %v1164
        %1192 = vst.msk [vmem:[#allocation2 + $0x128] sm:$0xff] %vm366, %v1166
        %1193 = vst.msk [vmem:[#allocation2 + $0x148] sm:$0xff] %vm366, %v1168
        %1194 = vst.msk [vmem:[#allocation2 + $0x168] sm:$0xff] %vm366, %v1170
        %v1203 = vrot.slane %v858, 4
        %v1204 = vrot.slane %v763, 7
        %v1205 = vsel %vm849, %v1203, %v1204
        %v1206 = vrot.slane %v1204, 4
        %v1207 = vrot.slane %v764, 7
        %v1208 = vsel %vm849, %v1206, %v1207
        %v1209 = vrot.slane %v1207, 4
        %v1210 = vrot.slane %v765, 7
        %v1211 = vsel %vm849, %v1209, %v1210
        %v1212 = vrot.slane %v868, 4
        %v1213 = vrot.slane %v770, 7
        %v1214 = vsel %vm849, %v1212, %v1213
        %v1215 = vrot.slane %v1213, 4
        %v1216 = vrot.slane %v771, 7
        %v1217 = vsel %vm849, %v1215, %v1216
        %v1218 = vrot.slane %v1216, 4
        %v1219 = vrot.slane %v772, 7
        %v1220 = vsel %vm849, %v1218, %v1219
        %v1221 = vrot.slane %v878, 4
        %v1222 = vrot.slane %v777, 7
        %v1223 = vsel %vm849, %v1221, %v1222
        %v1224 = vrot.slane %v1222, 4
        %v1225 = vrot.slane %v778, 7
        %v1226 = vsel %vm849, %v1224, %v1225
        %v1227 = vrot.slane %v1225, 4
        %v1228 = vrot.slane %v779, 7
        %v1229 = vsel %vm849, %v1227, %v1228
        %v1230 = vrot.slane %v888, 4
        %v1231 = vrot.slane %v784, 7
        %v1232 = vsel %vm849, %v1230, %v1231
        %v1233 = vrot.slane %v1231, 4
        %v1234 = vrot.slane %v785, 7
        %v1235 = vsel %vm849, %v1233, %v1234
        %v1236 = vrot.slane %v1234, 4
        %v1237 = vrot.slane %v786, 7
        %v1238 = vsel %vm849, %v1236, %v1237
        %v1239 = vrot.slane %v898, 4
        %v1240 = vrot.slane %v791, 7
        %v1241 = vsel %vm849, %v1239, %v1240
        %v1242 = vrot.slane %v1240, 4
        %v1243 = vrot.slane %v792, 7
        %v1244 = vsel %vm849, %v1242, %v1243
        %v1245 = vrot.slane %v1243, 4
        %v1246 = vrot.slane %v793, 7
        %v1247 = vsel %vm849, %v1245, %v1246
        %v1248 = vrot.slane %v908, 4
        %v1249 = vrot.slane %v798, 7
        %v1250 = vsel %vm849, %v1248, %v1249
        %v1251 = vrot.slane %v1249, 4
        %v1252 = vrot.slane %v799, 7
        %v1253 = vsel %vm849, %v1251, %v1252
        %v1254 = vrot.slane %v1252, 4
        %v1255 = vrot.slane %v800, 7
        %v1256 = vsel %vm849, %v1254, %v1255
        %v1257 = vrot.slane %v918, 4
        %v1258 = vrot.slane %v805, 7
        %v1259 = vsel %vm849, %v1257, %v1258
        %v1260 = vrot.slane %v1258, 4
        %v1261 = vrot.slane %v806, 7
        %v1262 = vsel %vm849, %v1260, %v1261
        %v1263 = vrot.slane %v1261, 4
        %v1264 = vrot.slane %v807, 7
        %v1265 = vsel %vm849, %v1263, %v1264
        %v1266 = vrot.slane %v928, 4
        %v1267 = vrot.slane %v812, 7
        %v1268 = vsel %vm849, %v1266, %v1267
        %v1269 = vrot.slane %v1267, 4
        %v1270 = vrot.slane %v813, 7
        %v1271 = vsel %vm849, %v1269, %v1270
        %v1272 = vrot.slane %v1270, 4
        %v1273 = vrot.slane %v814, 7
        %v1274 = vsel %vm849, %v1272, %v1273
        %v1275 = vunpack.c.l.b16 %v1205
        %v1276 = vunpack.c.l.b16 %v1208
        %v1277 = vunpack.c.l.b16 %v1211
        %v1278 = vunpack.c.l.b16 %v1214
        %v1279 = vunpack.c.l.b16 %v1217
        %v1280 = vunpack.c.l.b16 %v1220
        %v1281 = vunpack.c.l.b16 %v1223
        %v1282 = vunpack.c.l.b16 %v1226
        %v1283 = vunpack.c.l.b16 %v1229
        %v1284 = vunpack.c.l.b16 %v1232
        %v1285 = vunpack.c.l.b16 %v1235
        %v1286 = vunpack.c.l.b16 %v1238
        %v1287 = vunpack.c.l.b16 %v1241
        %v1288 = vunpack.c.l.b16 %v1244
        %v1289 = vunpack.c.l.b16 %v1247
        %v1290 = vunpack.c.l.b16 %v1250
        %v1291 = vunpack.c.l.b16 %v1253
        %v1292 = vunpack.c.l.b16 %v1256
        %v1293 = vunpack.c.l.b16 %v1259
        %v1294 = vunpack.c.l.b16 %v1262
        %v1295 = vunpack.c.l.b16 %v1265
        %v1296 = vunpack.c.l.b16 %v1268
        %v1297 = vunpack.c.l.b16 %v1271
        %v1298 = vunpack.c.l.b16 %v1274
        %v1299 = vpack.c.b16 %v1276, %v1275
        %v1300 = vpack.c.b16 %v1278, %v1277
        %v1301 = vpack.c.b16 %v1280, %v1279
        %v1302 = vpack.c.b16 %v1282, %v1281
        %v1303 = vpack.c.b16 %v1284, %v1283
        %v1304 = vpack.c.b16 %v1286, %v1285
        %v1305 = vpack.c.b16 %v1288, %v1287
        %v1306 = vpack.c.b16 %v1290, %v1289
        %v1307 = vpack.c.b16 %v1292, %v1291
        %v1308 = vpack.c.b16 %v1294, %v1293
        %v1309 = vpack.c.b16 %v1296, %v1295
        %v1310 = vpack.c.b16 %v1298, %v1297
        %1311 = vrot.lane.b32.xlu0 %v1299, 64
        %v1312 = vpop.permute.xlu0 %1311
        %1313 = vrot.lane.b32.xlu0 %v1300, 64
        %v1314 = vpop.permute.xlu0 %1313
        %1315 = vrot.lane.b32.xlu0 %v1301, 64
        %v1316 = vpop.permute.xlu0 %1315
        %1317 = vrot.lane.b32.xlu0 %v1302, 64
        %v1318 = vpop.permute.xlu0 %1317
        %1319 = vrot.lane.b32.xlu0 %v1303, 64
        %v1320 = vpop.permute.xlu0 %1319
        %1321 = vrot.lane.b32.xlu0 %v1304, 64
        %v1322 = vpop.permute.xlu0 %1321
        %1323 = vrot.lane.b32.xlu0 %v1305, 64
        %v1324 = vpop.permute.xlu0 %1323
        %1325 = vrot.lane.b32.xlu0 %v1306, 64
        %v1326 = vpop.permute.xlu0 %1325
        %1327 = vrot.lane.b32.xlu0 %v1307, 64
        %v1328 = vpop.permute.xlu0 %1327
        %1329 = vrot.lane.b32.xlu0 %v1308, 64
        %v1330 = vpop.permute.xlu0 %1329
        %1331 = vrot.lane.b32.xlu0 %v1309, 64
        %v1332 = vpop.permute.xlu0 %1331
        %1333 = vrot.lane.b32.xlu0 %v1310, 64
        %v1334 = vpop.permute.xlu0 %1333
        %1347 = vst.msk [vmem:[#allocation2 + $0x8] sm:$0xff] %vm558, %v1312
        %1348 = vst.msk [vmem:[#allocation2 + $0x28] sm:$0xff] %vm558, %v1314
        %1349 = vst.msk [vmem:[#allocation2 + $0x48] sm:$0xff] %vm558, %v1316
        %1350 = vst.msk [vmem:[#allocation2 + $0x68] sm:$0xff] %vm558, %v1318
        %1351 = vst.msk [vmem:[#allocation2 + $0x88] sm:$0xff] %vm558, %v1320
        %1352 = vst.msk [vmem:[#allocation2 + $0xa8] sm:$0xff] %vm558, %v1322
        %1353 = vst.msk [vmem:[#allocation2 + $0xc8] sm:$0xff] %vm558, %v1324
        %1354 = vst.msk [vmem:[#allocation2 + $0xe8] sm:$0xff] %vm558, %v1326
        %1355 = vst.msk [vmem:[#allocation2 + $0x108] sm:$0xff] %vm558, %v1328
        %1356 = vst.msk [vmem:[#allocation2 + $0x128] sm:$0xff] %vm558, %v1330
        %1357 = vst.msk [vmem:[#allocation2 + $0x148] sm:$0xff] %vm558, %v1332
        %1358 = vst.msk [vmem:[#allocation2 + $0x168] sm:$0xff] %vm558, %v1334
        %s1359 = sadd.s32 %s202, 12
        %s1360 = smul.u32 %s1359, 8
        %s1361 = smul.addr %s1360, 4
        %s1362 = scalar_lea.vmem %s195, %s1361
        %v1363 = vld [vmem:[%s1362 + $0x4] sm:$0xf]
        %v1364 = vld [vmem:[%s1362 + $0x8] sm:$0xf]
        %v1365 = vld [vmem:[%s1362 + $0xc] sm:$0xf]
        %v1366 = vld [vmem:[%s1362 + $0x10] sm:$0xf]
        %v1367 = vld [vmem:[%s1362 + $0x14] sm:$0xf]
        %v1368 = vld [vmem:[%s1362 + $0x24] sm:$0xf]
        %v1369 = vld [vmem:[%s1362 + $0x28] sm:$0xf]
        %v1370 = vld [vmem:[%s1362 + $0x2c] sm:$0xf]
        %v1371 = vld [vmem:[%s1362 + $0x30] sm:$0xf]
        %v1372 = vld [vmem:[%s1362 + $0x34] sm:$0xf]
        %v1373 = vld [vmem:[%s1362 + $0x44] sm:$0xf]
        %v1374 = vld [vmem:[%s1362 + $0x48] sm:$0xf]
        %v1375 = vld [vmem:[%s1362 + $0x4c] sm:$0xf]
        %v1376 = vld [vmem:[%s1362 + $0x50] sm:$0xf]
        %v1377 = vld [vmem:[%s1362 + $0x54] sm:$0xf]
        %v1378 = vld [vmem:[%s1362 + $0x64] sm:$0xf]
        %v1379 = vld [vmem:[%s1362 + $0x68] sm:$0xf]
        %v1380 = vld [vmem:[%s1362 + $0x6c] sm:$0xf]
        %v1381 = vld [vmem:[%s1362 + $0x70] sm:$0xf]
        %v1382 = vld [vmem:[%s1362 + $0x74] sm:$0xf]
        %v1383 = vld [vmem:[%s1362 + $0x84] sm:$0xf]
        %v1384 = vld [vmem:[%s1362 + $0x88] sm:$0xf]
        %v1385 = vld [vmem:[%s1362 + $0x8c] sm:$0xf]
        %v1386 = vld [vmem:[%s1362 + $0x90] sm:$0xf]
        %v1387 = vld [vmem:[%s1362 + $0x94] sm:$0xf]
        %v1388 = vld [vmem:[%s1362 + $0xa4] sm:$0xf]
        %v1389 = vld [vmem:[%s1362 + $0xa8] sm:$0xf]
        %v1390 = vld [vmem:[%s1362 + $0xac] sm:$0xf]
        %v1391 = vld [vmem:[%s1362 + $0xb0] sm:$0xf]
        %v1392 = vld [vmem:[%s1362 + $0xb4] sm:$0xf]
        %v1393 = vld [vmem:[%s1362 + $0xc4] sm:$0xf]
        %v1394 = vld [vmem:[%s1362 + $0xc8] sm:$0xf]
        %v1395 = vld [vmem:[%s1362 + $0xcc] sm:$0xf]
        %v1396 = vld [vmem:[%s1362 + $0xd0] sm:$0xf]
        %v1397 = vld [vmem:[%s1362 + $0xd4] sm:$0xf]
        %v1398 = vld [vmem:[%s1362 + $0xe4] sm:$0xf]
        %v1399 = vld [vmem:[%s1362 + $0xe8] sm:$0xf]
        %v1400 = vld [vmem:[%s1362 + $0xec] sm:$0xf]
        %v1401 = vld [vmem:[%s1362 + $0xf0] sm:$0xf]
        %v1402 = vld [vmem:[%s1362 + $0xf4] sm:$0xf]
        %v1435 = vrot.slane %v1363, 6
        %v1436 = vrot.slane %v1435, 4
        %v1437 = vrot.slane %v1364, 6
        %v1438 = vsel %vm589, %v1436, %v1437
        %v1439 = vrot.slane %v1437, 4
        %v1440 = vrot.slane %v1365, 6
        %v1441 = vsel %vm589, %v1439, %v1440
        %v1442 = vrot.slane %v1440, 4
        %v1443 = vrot.slane %v1366, 6
        %v1444 = vsel %vm589, %v1442, %v1443
        %v1445 = vrot.slane %v1368, 6
        %v1446 = vrot.slane %v1445, 4
        %v1447 = vrot.slane %v1369, 6
        %v1448 = vsel %vm589, %v1446, %v1447
        %v1449 = vrot.slane %v1447, 4
        %v1450 = vrot.slane %v1370, 6
        %v1451 = vsel %vm589, %v1449, %v1450
        %v1452 = vrot.slane %v1450, 4
        %v1453 = vrot.slane %v1371, 6
        %v1454 = vsel %vm589, %v1452, %v1453
        %v1455 = vrot.slane %v1373, 6
        %v1456 = vrot.slane %v1455, 4
        %v1457 = vrot.slane %v1374, 6
        %v1458 = vsel %vm589, %v1456, %v1457
        %v1459 = vrot.slane %v1457, 4
        %v1460 = vrot.slane %v1375, 6
        %v1461 = vsel %vm589, %v1459, %v1460
        %v1462 = vrot.slane %v1460, 4
        %v1463 = vrot.slane %v1376, 6
        %v1464 = vsel %vm589, %v1462, %v1463
        %v1465 = vrot.slane %v1378, 6
        %v1466 = vrot.slane %v1465, 4
        %v1467 = vrot.slane %v1379, 6
        %v1468 = vsel %vm589, %v1466, %v1467
        %v1469 = vrot.slane %v1467, 4
        %v1470 = vrot.slane %v1380, 6
        %v1471 = vsel %vm589, %v1469, %v1470
        %v1472 = vrot.slane %v1470, 4
        %v1473 = vrot.slane %v1381, 6
        %v1474 = vsel %vm589, %v1472, %v1473
        %v1475 = vrot.slane %v1383, 6
        %v1476 = vrot.slane %v1475, 4
        %v1477 = vrot.slane %v1384, 6
        %v1478 = vsel %vm589, %v1476, %v1477
        %v1479 = vrot.slane %v1477, 4
        %v1480 = vrot.slane %v1385, 6
        %v1481 = vsel %vm589, %v1479, %v1480
        %v1482 = vrot.slane %v1480, 4
        %v1483 = vrot.slane %v1386, 6
        %v1484 = vsel %vm589, %v1482, %v1483
        %v1485 = vrot.slane %v1388, 6
        %v1486 = vrot.slane %v1485, 4
        %v1487 = vrot.slane %v1389, 6
        %v1488 = vsel %vm589, %v1486, %v1487
        %v1489 = vrot.slane %v1487, 4
        %v1490 = vrot.slane %v1390, 6
        %v1491 = vsel %vm589, %v1489, %v1490
        %v1492 = vrot.slane %v1490, 4
        %v1493 = vrot.slane %v1391, 6
        %v1494 = vsel %vm589, %v1492, %v1493
        %v1495 = vrot.slane %v1393, 6
        %v1496 = vrot.slane %v1495, 4
        %v1497 = vrot.slane %v1394, 6
        %v1498 = vsel %vm589, %v1496, %v1497
        %v1499 = vrot.slane %v1497, 4
        %v1500 = vrot.slane %v1395, 6
        %v1501 = vsel %vm589, %v1499, %v1500
        %v1502 = vrot.slane %v1500, 4
        %v1503 = vrot.slane %v1396, 6
        %v1504 = vsel %vm589, %v1502, %v1503
        %v1505 = vrot.slane %v1398, 6
        %v1506 = vrot.slane %v1505, 4
        %v1507 = vrot.slane %v1399, 6
        %v1508 = vsel %vm589, %v1506, %v1507
        %v1509 = vrot.slane %v1507, 4
        %v1510 = vrot.slane %v1400, 6
        %v1511 = vsel %vm589, %v1509, %v1510
        %v1512 = vrot.slane %v1510, 4
        %v1513 = vrot.slane %v1401, 6
        %v1514 = vsel %vm589, %v1512, %v1513
        %v1515 = vunpack.c.l.b16 %v1438
        %v1516 = vunpack.c.l.b16 %v1441
        %v1517 = vunpack.c.l.b16 %v1444
        %v1518 = vunpack.c.l.b16 %v1448
        %v1519 = vunpack.c.l.b16 %v1451
        %v1520 = vunpack.c.l.b16 %v1454
        %v1521 = vunpack.c.l.b16 %v1458
        %v1522 = vunpack.c.l.b16 %v1461
        %v1523 = vunpack.c.l.b16 %v1464
        %v1524 = vunpack.c.l.b16 %v1468
        %v1525 = vunpack.c.l.b16 %v1471
        %v1526 = vunpack.c.l.b16 %v1474
        %v1527 = vunpack.c.l.b16 %v1478
        %v1528 = vunpack.c.l.b16 %v1481
        %v1529 = vunpack.c.l.b16 %v1484
        %v1530 = vunpack.c.l.b16 %v1488
        %v1531 = vunpack.c.l.b16 %v1491
        %v1532 = vunpack.c.l.b16 %v1494
        %v1533 = vunpack.c.l.b16 %v1498
        %v1534 = vunpack.c.l.b16 %v1501
        %v1535 = vunpack.c.l.b16 %v1504
        %v1536 = vunpack.c.l.b16 %v1508
        %v1537 = vunpack.c.l.b16 %v1511
        %v1538 = vunpack.c.l.b16 %v1514
        %v1539 = vpack.c.b16 %v1516, %v1515
        %v1540 = vpack.c.b16 %v1518, %v1517
        %v1541 = vpack.c.b16 %v1520, %v1519
        %v1542 = vpack.c.b16 %v1522, %v1521
        %v1543 = vpack.c.b16 %v1524, %v1523
        %v1544 = vpack.c.b16 %v1526, %v1525
        %v1545 = vpack.c.b16 %v1528, %v1527
        %v1546 = vpack.c.b16 %v1530, %v1529
        %v1547 = vpack.c.b16 %v1532, %v1531
        %v1548 = vpack.c.b16 %v1534, %v1533
        %v1549 = vpack.c.b16 %v1536, %v1535
        %v1550 = vpack.c.b16 %v1538, %v1537
        %1551 = vrot.lane.b32.xlu0 %v1539, 16
        %v1552 = vpop.permute.xlu0 %1551
        %1553 = vrot.lane.b32.xlu0 %v1540, 16
        %v1554 = vpop.permute.xlu0 %1553
        %1555 = vrot.lane.b32.xlu0 %v1541, 16
        %v1556 = vpop.permute.xlu0 %1555
        %1557 = vrot.lane.b32.xlu0 %v1542, 16
        %v1558 = vpop.permute.xlu0 %1557
        %1559 = vrot.lane.b32.xlu0 %v1543, 16
        %v1560 = vpop.permute.xlu0 %1559
        %1561 = vrot.lane.b32.xlu0 %v1544, 16
        %v1562 = vpop.permute.xlu0 %1561
        %1563 = vrot.lane.b32.xlu0 %v1545, 16
        %v1564 = vpop.permute.xlu0 %1563
        %1565 = vrot.lane.b32.xlu0 %v1546, 16
        %v1566 = vpop.permute.xlu0 %1565
        %1567 = vrot.lane.b32.xlu0 %v1547, 16
        %v1568 = vpop.permute.xlu0 %1567
        %1569 = vrot.lane.b32.xlu0 %v1548, 16
        %v1570 = vpop.permute.xlu0 %1569
        %1571 = vrot.lane.b32.xlu0 %v1549, 16
        %v1572 = vpop.permute.xlu0 %1571
        %1573 = vrot.lane.b32.xlu0 %v1550, 16
        %v1574 = vpop.permute.xlu0 %1573
        %vm1587 = vcmask 261248
        %1588 = vst.msk [vmem:[#allocation2] sm:$0xff] %vm1587, %v1552
        %1589 = vst.msk [vmem:[#allocation2 + $0x20] sm:$0xff] %vm1587, %v1554
        %1590 = vst.msk [vmem:[#allocation2 + $0x40] sm:$0xff] %vm1587, %v1556
        %1591 = vst.msk [vmem:[#allocation2 + $0x60] sm:$0xff] %vm1587, %v1558
        %1592 = vst.msk [vmem:[#allocation2 + $0x80] sm:$0xff] %vm1587, %v1560
        %1593 = vst.msk [vmem:[#allocation2 + $0xa0] sm:$0xff] %vm1587, %v1562
        %1594 = vst.msk [vmem:[#allocation2 + $0xc0] sm:$0xff] %vm1587, %v1564
        %1595 = vst.msk [vmem:[#allocation2 + $0xe0] sm:$0xff] %vm1587, %v1566
        %1596 = vst.msk [vmem:[#allocation2 + $0x100] sm:$0xff] %vm1587, %v1568
        %1597 = vst.msk [vmem:[#allocation2 + $0x120] sm:$0xff] %vm1587, %v1570
        %1598 = vst.msk [vmem:[#allocation2 + $0x140] sm:$0xff] %vm1587, %v1572
        %1599 = vst.msk [vmem:[#allocation2 + $0x160] sm:$0xff] %vm1587, %v1574
        %v1608 = vrot.slane %v1364, 5
        %v1609 = vrot.slane %v1608, 4
        %v1610 = vrot.slane %v1365, 5
        %v1611 = vsel %vm405, %v1609, %v1610
        %v1612 = vrot.slane %v1610, 4
        %v1613 = vrot.slane %v1366, 5
        %v1614 = vsel %vm405, %v1612, %v1613
        %v1615 = vrot.slane %v1613, 4
        %v1616 = vrot.slane %v1367, 5
        %v1617 = vsel %vm405, %v1615, %v1616
        %v1618 = vrot.slane %v1369, 5
        %v1619 = vrot.slane %v1618, 4
        %v1620 = vrot.slane %v1370, 5
        %v1621 = vsel %vm405, %v1619, %v1620
        %v1622 = vrot.slane %v1620, 4
        %v1623 = vrot.slane %v1371, 5
        %v1624 = vsel %vm405, %v1622, %v1623
        %v1625 = vrot.slane %v1623, 4
        %v1626 = vrot.slane %v1372, 5
        %v1627 = vsel %vm405, %v1625, %v1626
        %v1628 = vrot.slane %v1374, 5
        %v1629 = vrot.slane %v1628, 4
        %v1630 = vrot.slane %v1375, 5
        %v1631 = vsel %vm405, %v1629, %v1630
        %v1632 = vrot.slane %v1630, 4
        %v1633 = vrot.slane %v1376, 5
        %v1634 = vsel %vm405, %v1632, %v1633
        %v1635 = vrot.slane %v1633, 4
        %v1636 = vrot.slane %v1377, 5
        %v1637 = vsel %vm405, %v1635, %v1636
        %v1638 = vrot.slane %v1379, 5
        %v1639 = vrot.slane %v1638, 4
        %v1640 = vrot.slane %v1380, 5
        %v1641 = vsel %vm405, %v1639, %v1640
        %v1642 = vrot.slane %v1640, 4
        %v1643 = vrot.slane %v1381, 5
        %v1644 = vsel %vm405, %v1642, %v1643
        %v1645 = vrot.slane %v1643, 4
        %v1646 = vrot.slane %v1382, 5
        %v1647 = vsel %vm405, %v1645, %v1646
        %v1648 = vrot.slane %v1384, 5
        %v1649 = vrot.slane %v1648, 4
        %v1650 = vrot.slane %v1385, 5
        %v1651 = vsel %vm405, %v1649, %v1650
        %v1652 = vrot.slane %v1650, 4
        %v1653 = vrot.slane %v1386, 5
        %v1654 = vsel %vm405, %v1652, %v1653
        %v1655 = vrot.slane %v1653, 4
        %v1656 = vrot.slane %v1387, 5
        %v1657 = vsel %vm405, %v1655, %v1656
        %v1658 = vrot.slane %v1389, 5
        %v1659 = vrot.slane %v1658, 4
        %v1660 = vrot.slane %v1390, 5
        %v1661 = vsel %vm405, %v1659, %v1660
        %v1662 = vrot.slane %v1660, 4
        %v1663 = vrot.slane %v1391, 5
        %v1664 = vsel %vm405, %v1662, %v1663
        %v1665 = vrot.slane %v1663, 4
        %v1666 = vrot.slane %v1392, 5
        %v1667 = vsel %vm405, %v1665, %v1666
        %v1668 = vrot.slane %v1394, 5
        %v1669 = vrot.slane %v1668, 4
        %v1670 = vrot.slane %v1395, 5
        %v1671 = vsel %vm405, %v1669, %v1670
        %v1672 = vrot.slane %v1670, 4
        %v1673 = vrot.slane %v1396, 5
        %v1674 = vsel %vm405, %v1672, %v1673
        %v1675 = vrot.slane %v1673, 4
        %v1676 = vrot.slane %v1397, 5
        %v1677 = vsel %vm405, %v1675, %v1676
        %v1678 = vrot.slane %v1399, 5
        %v1679 = vrot.slane %v1678, 4
        %v1680 = vrot.slane %v1400, 5
        %v1681 = vsel %vm405, %v1679, %v1680
        %v1682 = vrot.slane %v1680, 4
        %v1683 = vrot.slane %v1401, 5
        %v1684 = vsel %vm405, %v1682, %v1683
        %v1685 = vrot.slane %v1683, 4
        %v1686 = vrot.slane %v1402, 5
        %v1687 = vsel %vm405, %v1685, %v1686
        %v1688 = vunpack.c.l.b16 %v1611
        %v1689 = vunpack.c.l.b16 %v1614
        %v1690 = vunpack.c.l.b16 %v1617
        %v1691 = vunpack.c.l.b16 %v1621
        %v1692 = vunpack.c.l.b16 %v1624
        %v1693 = vunpack.c.l.b16 %v1627
        %v1694 = vunpack.c.l.b16 %v1631
        %v1695 = vunpack.c.l.b16 %v1634
        %v1696 = vunpack.c.l.b16 %v1637
        %v1697 = vunpack.c.l.b16 %v1641
        %v1698 = vunpack.c.l.b16 %v1644
        %v1699 = vunpack.c.l.b16 %v1647
        %v1700 = vunpack.c.l.b16 %v1651
        %v1701 = vunpack.c.l.b16 %v1654
        %v1702 = vunpack.c.l.b16 %v1657
        %v1703 = vunpack.c.l.b16 %v1661
        %v1704 = vunpack.c.l.b16 %v1664
        %v1705 = vunpack.c.l.b16 %v1667
        %v1706 = vunpack.c.l.b16 %v1671
        %v1707 = vunpack.c.l.b16 %v1674
        %v1708 = vunpack.c.l.b16 %v1677
        %v1709 = vunpack.c.l.b16 %v1681
        %v1710 = vunpack.c.l.b16 %v1684
        %v1711 = vunpack.c.l.b16 %v1687
        %v1712 = vpack.c.b16 %v1689, %v1688
        %v1713 = vpack.c.b16 %v1691, %v1690
        %v1714 = vpack.c.b16 %v1693, %v1692
        %v1715 = vpack.c.b16 %v1695, %v1694
        %v1716 = vpack.c.b16 %v1697, %v1696
        %v1717 = vpack.c.b16 %v1699, %v1698
        %v1718 = vpack.c.b16 %v1701, %v1700
        %v1719 = vpack.c.b16 %v1703, %v1702
        %v1720 = vpack.c.b16 %v1705, %v1704
        %v1721 = vpack.c.b16 %v1707, %v1706
        %v1722 = vpack.c.b16 %v1709, %v1708
        %v1723 = vpack.c.b16 %v1711, %v1710
        %1724 = vrot.lane.b32.xlu0 %v1712, 32
        %v1725 = vpop.permute.xlu0 %1724
        %1726 = vrot.lane.b32.xlu0 %v1713, 32
        %v1727 = vpop.permute.xlu0 %1726
        %1728 = vrot.lane.b32.xlu0 %v1714, 32
        %v1729 = vpop.permute.xlu0 %1728
        %1730 = vrot.lane.b32.xlu0 %v1715, 32
        %v1731 = vpop.permute.xlu0 %1730
        %1732 = vrot.lane.b32.xlu0 %v1716, 32
        %v1733 = vpop.permute.xlu0 %1732
        %1734 = vrot.lane.b32.xlu0 %v1717, 32
        %v1735 = vpop.permute.xlu0 %1734
        %1736 = vrot.lane.b32.xlu0 %v1718, 32
        %v1737 = vpop.permute.xlu0 %1736
        %1738 = vrot.lane.b32.xlu0 %v1719, 32
        %v1739 = vpop.permute.xlu0 %1738
        %1740 = vrot.lane.b32.xlu0 %v1720, 32
        %v1741 = vpop.permute.xlu0 %1740
        %1742 = vrot.lane.b32.xlu0 %v1721, 32
        %v1743 = vpop.permute.xlu0 %1742
        %1744 = vrot.lane.b32.xlu0 %v1722, 32
        %v1745 = vpop.permute.xlu0 %1744
        %1746 = vrot.lane.b32.xlu0 %v1723, 32
        %v1747 = vpop.permute.xlu0 %1746
        %1760 = vst.msk [vmem:[#allocation2] sm:$0xff] %vm1002, %v1725
        %1761 = vst.msk [vmem:[#allocation2 + $0x20] sm:$0xff] %vm1002, %v1727
        %1762 = vst.msk [vmem:[#allocation2 + $0x40] sm:$0xff] %vm1002, %v1729
        %1763 = vst.msk [vmem:[#allocation2 + $0x60] sm:$0xff] %vm1002, %v1731
        %1764 = vst.msk [vmem:[#allocation2 + $0x80] sm:$0xff] %vm1002, %v1733
        %1765 = vst.msk [vmem:[#allocation2 + $0xa0] sm:$0xff] %vm1002, %v1735
        %1766 = vst.msk [vmem:[#allocation2 + $0xc0] sm:$0xff] %vm1002, %v1737
        %1767 = vst.msk [vmem:[#allocation2 + $0xe0] sm:$0xff] %vm1002, %v1739
        %1768 = vst.msk [vmem:[#allocation2 + $0x100] sm:$0xff] %vm1002, %v1741
        %1769 = vst.msk [vmem:[#allocation2 + $0x120] sm:$0xff] %vm1002, %v1743
        %1770 = vst.msk [vmem:[#allocation2 + $0x140] sm:$0xff] %vm1002, %v1745
        %1771 = vst.msk [vmem:[#allocation2 + $0x160] sm:$0xff] %vm1002, %v1747
        %v1772 = vunpack.c.l.b16 %v1365
        %v1773 = vunpack.c.l.b16 %v1366
        %v1774 = vunpack.c.l.b16 %v1367
        %v1775 = vunpack.c.l.b16 %v1370
        %v1776 = vunpack.c.l.b16 %v1371
        %v1777 = vunpack.c.l.b16 %v1372
        %v1778 = vunpack.c.l.b16 %v1375
        %v1779 = vunpack.c.l.b16 %v1376
        %v1780 = vunpack.c.l.b16 %v1377
        %v1781 = vunpack.c.l.b16 %v1380
        %v1782 = vunpack.c.l.b16 %v1381
        %v1783 = vunpack.c.l.b16 %v1382
        %v1784 = vunpack.c.l.b16 %v1385
        %v1785 = vunpack.c.l.b16 %v1386
        %v1786 = vunpack.c.l.b16 %v1387
        %v1787 = vunpack.c.l.b16 %v1390
        %v1788 = vunpack.c.l.b16 %v1391
        %v1789 = vunpack.c.l.b16 %v1392
        %v1790 = vunpack.c.l.b16 %v1395
        %v1791 = vunpack.c.l.b16 %v1396
        %v1792 = vunpack.c.l.b16 %v1397
        %v1793 = vunpack.c.l.b16 %v1400
        %v1794 = vunpack.c.l.b16 %v1401
        %v1795 = vunpack.c.l.b16 %v1402
        %v1796 = vpack.c.b16 %v1773, %v1772
        %v1797 = vpack.c.b16 %v1775, %v1774
        %v1798 = vpack.c.b16 %v1777, %v1776
        %v1799 = vpack.c.b16 %v1779, %v1778
        %v1800 = vpack.c.b16 %v1781, %v1780
        %v1801 = vpack.c.b16 %v1783, %v1782
        %v1802 = vpack.c.b16 %v1785, %v1784
        %v1803 = vpack.c.b16 %v1787, %v1786
        %v1804 = vpack.c.b16 %v1789, %v1788
        %v1805 = vpack.c.b16 %v1791, %v1790
        %v1806 = vpack.c.b16 %v1793, %v1792
        %v1807 = vpack.c.b16 %v1795, %v1794
        %1808 = vrot.lane.b32.xlu0 %v1796, 48
        %v1809 = vpop.permute.xlu0 %1808
        %1810 = vrot.lane.b32.xlu0 %v1797, 48
        %v1811 = vpop.permute.xlu0 %1810
        %1812 = vrot.lane.b32.xlu0 %v1798, 48
        %v1813 = vpop.permute.xlu0 %1812
        %1814 = vrot.lane.b32.xlu0 %v1799, 48
        %v1815 = vpop.permute.xlu0 %1814
        %1816 = vrot.lane.b32.xlu0 %v1800, 48
        %v1817 = vpop.permute.xlu0 %1816
        %1818 = vrot.lane.b32.xlu0 %v1801, 48
        %v1819 = vpop.permute.xlu0 %1818
        %1820 = vrot.lane.b32.xlu0 %v1802, 48
        %v1821 = vpop.permute.xlu0 %1820
        %1822 = vrot.lane.b32.xlu0 %v1803, 48
        %v1823 = vpop.permute.xlu0 %1822
        %1824 = vrot.lane.b32.xlu0 %v1804, 48
        %v1825 = vpop.permute.xlu0 %1824
        %1826 = vrot.lane.b32.xlu0 %v1805, 48
        %v1827 = vpop.permute.xlu0 %1826
        %1828 = vrot.lane.b32.xlu0 %v1806, 48
        %v1829 = vpop.permute.xlu0 %1828
        %1830 = vrot.lane.b32.xlu0 %v1807, 48
        %v1831 = vpop.permute.xlu0 %1830
        %1844 = vst.msk [vmem:[#allocation2] sm:$0xff] %vm366, %v1809
        %1845 = vst.msk [vmem:[#allocation2 + $0x20] sm:$0xff] %vm366, %v1811
        %1846 = vst.msk [vmem:[#allocation2 + $0x40] sm:$0xff] %vm366, %v1813
        %1847 = vst.msk [vmem:[#allocation2 + $0x60] sm:$0xff] %vm366, %v1815
        %1848 = vst.msk [vmem:[#allocation2 + $0x80] sm:$0xff] %vm366, %v1817
        %1849 = vst.msk [vmem:[#allocation2 + $0xa0] sm:$0xff] %vm366, %v1819
        %1850 = vst.msk [vmem:[#allocation2 + $0xc0] sm:$0xff] %vm366, %v1821
        %1851 = vst.msk [vmem:[#allocation2 + $0xe0] sm:$0xff] %vm366, %v1823
        %1852 = vst.msk [vmem:[#allocation2 + $0x100] sm:$0xff] %vm366, %v1825
        %1853 = vst.msk [vmem:[#allocation2 + $0x120] sm:$0xff] %vm366, %v1827
        %1854 = vst.msk [vmem:[#allocation2 + $0x140] sm:$0xff] %vm366, %v1829
        %1855 = vst.msk [vmem:[#allocation2 + $0x160] sm:$0xff] %vm366, %v1831
        %s1856 = sadd.s32 %s202, 18
        %s1857 = smul.u32 %s1856, 8
        %s1858 = smul.addr %s1857, 4
        %s1859 = scalar_lea.vmem %s195, %s1858
        %v1860 = vld [vmem:[%s1859] sm:$0xf]
        %v1861 = vld [vmem:[%s1859 + $0x4] sm:$0xf]
        %v1862 = vld [vmem:[%s1859 + $0x8] sm:$0xf]
        %v1863 = vld [vmem:[%s1859 + $0xc] sm:$0xf]
        %v1864 = vld [vmem:[%s1859 + $0x10] sm:$0xf]
        %v1865 = vld [vmem:[%s1859 + $0x14] sm:$0xf]
        %v1866 = vld [vmem:[%s1859 + $0x18] sm:$0xf]
        %v1867 = vld [vmem:[%s1859 + $0x1c] sm:$0x3]
        %v1868 = vld [vmem:[%s1859 + $0x20] sm:$0xf]
        %v1869 = vld [vmem:[%s1859 + $0x24] sm:$0xf]
        %v1870 = vld [vmem:[%s1859 + $0x28] sm:$0xf]
        %v1871 = vld [vmem:[%s1859 + $0x2c] sm:$0xf]
        %v1872 = vld [vmem:[%s1859 + $0x30] sm:$0xf]
        %v1873 = vld [vmem:[%s1859 + $0x34] sm:$0xf]
        %v1874 = vld [vmem:[%s1859 + $0x38] sm:$0xf]
        %v1875 = vld [vmem:[%s1859 + $0x3c] sm:$0x3]
        %v1876 = vld [vmem:[%s1859 + $0x40] sm:$0xf]
        %v1877 = vld [vmem:[%s1859 + $0x44] sm:$0xf]
        %v1878 = vld [vmem:[%s1859 + $0x48] sm:$0xf]
        %v1879 = vld [vmem:[%s1859 + $0x4c] sm:$0xf]
        %v1880 = vld [vmem:[%s1859 + $0x50] sm:$0xf]
        %v1881 = vld [vmem:[%s1859 + $0x54] sm:$0xf]
        %v1882 = vld [vmem:[%s1859 + $0x58] sm:$0xf]
        %v1883 = vld [vmem:[%s1859 + $0x5c] sm:$0x3]
        %v1884 = vld [vmem:[%s1859 + $0x60] sm:$0xf]
        %v1885 = vld [vmem:[%s1859 + $0x64] sm:$0xf]
        %v1886 = vld [vmem:[%s1859 + $0x68] sm:$0xf]
        %v1887 = vld [vmem:[%s1859 + $0x6c] sm:$0xf]
        %v1888 = vld [vmem:[%s1859 + $0x70] sm:$0xf]
        %v1889 = vld [vmem:[%s1859 + $0x74] sm:$0xf]
        %v1890 = vld [vmem:[%s1859 + $0x78] sm:$0xf]
        %v1891 = vld [vmem:[%s1859 + $0x7c] sm:$0x3]
        %v1892 = vld [vmem:[%s1859 + $0x80] sm:$0xf]
        %v1893 = vld [vmem:[%s1859 + $0x84] sm:$0xf]
        %v1894 = vld [vmem:[%s1859 + $0x88] sm:$0xf]
        %v1895 = vld [vmem:[%s1859 + $0x8c] sm:$0xf]
        %v1896 = vld [vmem:[%s1859 + $0x90] sm:$0xf]
        %v1897 = vld [vmem:[%s1859 + $0x94] sm:$0xf]
        %v1898 = vld [vmem:[%s1859 + $0x98] sm:$0xf]
        %v1899 = vld [vmem:[%s1859 + $0x9c] sm:$0x3]
        %v1900 = vld [vmem:[%s1859 + $0xa0] sm:$0xf]
        %v1901 = vld [vmem:[%s1859 + $0xa4] sm:$0xf]
        %v1902 = vld [vmem:[%s1859 + $0xa8] sm:$0xf]
        %v1903 = vld [vmem:[%s1859 + $0xac] sm:$0xf]
        %v1904 = vld [vmem:[%s1859 + $0xb0] sm:$0xf]
        %v1905 = vld [vmem:[%s1859 + $0xb4] sm:$0xf]
        %v1906 = vld [vmem:[%s1859 + $0xb8] sm:$0xf]
        %v1907 = vld [vmem:[%s1859 + $0xbc] sm:$0x3]
        %v1908 = vld [vmem:[%s1859 + $0xc0] sm:$0xf]
        %v1909 = vld [vmem:[%s1859 + $0xc4] sm:$0xf]
        %v1910 = vld [vmem:[%s1859 + $0xc8] sm:$0xf]
        %v1911 = vld [vmem:[%s1859 + $0xcc] sm:$0xf]
        %v1912 = vld [vmem:[%s1859 + $0xd0] sm:$0xf]
        %v1913 = vld [vmem:[%s1859 + $0xd4] sm:$0xf]
        %v1914 = vld [vmem:[%s1859 + $0xd8] sm:$0xf]
        %v1915 = vld [vmem:[%s1859 + $0xdc] sm:$0x3]
        %v1916 = vld [vmem:[%s1859 + $0xe0] sm:$0xf]
        %v1917 = vld [vmem:[%s1859 + $0xe4] sm:$0xf]
        %v1918 = vld [vmem:[%s1859 + $0xe8] sm:$0xf]
        %v1919 = vld [vmem:[%s1859 + $0xec] sm:$0xf]
        %v1920 = vld [vmem:[%s1859 + $0xf0] sm:$0xf]
        %v1921 = vld [vmem:[%s1859 + $0xf4] sm:$0xf]
        %v1922 = vld [vmem:[%s1859 + $0xf8] sm:$0xf]
        %v1923 = vld [vmem:[%s1859 + $0xfc] sm:$0x3]
        %v1956 = vrot.slane %v1862, 5
        %v1957 = vrot.slane %v1956, 4
        %v1958 = vrot.slane %v1863, 5
        %v1959 = vsel %vm405, %v1957, %v1958
        %v1960 = vrot.slane %v1958, 4
        %v1961 = vrot.slane %v1864, 5
        %v1962 = vsel %vm405, %v1960, %v1961
        %v1963 = vrot.slane %v1961, 4
        %v1964 = vrot.slane %v1865, 5
        %v1965 = vsel %vm405, %v1963, %v1964
        %v1966 = vrot.slane %v1870, 5
        %v1967 = vrot.slane %v1966, 4
        %v1968 = vrot.slane %v1871, 5
        %v1969 = vsel %vm405, %v1967, %v1968
        %v1970 = vrot.slane %v1968, 4
        %v1971 = vrot.slane %v1872, 5
        %v1972 = vsel %vm405, %v1970, %v1971
        %v1973 = vrot.slane %v1971, 4
        %v1974 = vrot.slane %v1873, 5
        %v1975 = vsel %vm405, %v1973, %v1974
        %v1976 = vrot.slane %v1878, 5
        %v1977 = vrot.slane %v1976, 4
        %v1978 = vrot.slane %v1879, 5
        %v1979 = vsel %vm405, %v1977, %v1978
        %v1980 = vrot.slane %v1978, 4
        %v1981 = vrot.slane %v1880, 5
        %v1982 = vsel %vm405, %v1980, %v1981
        %v1983 = vrot.slane %v1981, 4
        %v1984 = vrot.slane %v1881, 5
        %v1985 = vsel %vm405, %v1983, %v1984
        %v1986 = vrot.slane %v1886, 5
        %v1987 = vrot.slane %v1986, 4
        %v1988 = vrot.slane %v1887, 5
        %v1989 = vsel %vm405, %v1987, %v1988
        %v1990 = vrot.slane %v1988, 4
        %v1991 = vrot.slane %v1888, 5
        %v1992 = vsel %vm405, %v1990, %v1991
        %v1993 = vrot.slane %v1991, 4
        %v1994 = vrot.slane %v1889, 5
        %v1995 = vsel %vm405, %v1993, %v1994
        %v1996 = vrot.slane %v1894, 5
        %v1997 = vrot.slane %v1996, 4
        %v1998 = vrot.slane %v1895, 5
        %v1999 = vsel %vm405, %v1997, %v1998
        %v2000 = vrot.slane %v1998, 4
        %v2001 = vrot.slane %v1896, 5
        %v2002 = vsel %vm405, %v2000, %v2001
        %v2003 = vrot.slane %v2001, 4
        %v2004 = vrot.slane %v1897, 5
        %v2005 = vsel %vm405, %v2003, %v2004
        %v2006 = vrot.slane %v1902, 5
        %v2007 = vrot.slane %v2006, 4
        %v2008 = vrot.slane %v1903, 5
        %v2009 = vsel %vm405, %v2007, %v2008
        %v2010 = vrot.slane %v2008, 4
        %v2011 = vrot.slane %v1904, 5
        %v2012 = vsel %vm405, %v2010, %v2011
        %v2013 = vrot.slane %v2011, 4
        %v2014 = vrot.slane %v1905, 5
        %v2015 = vsel %vm405, %v2013, %v2014
        %v2016 = vrot.slane %v1910, 5
        %v2017 = vrot.slane %v2016, 4
        %v2018 = vrot.slane %v1911, 5
        %v2019 = vsel %vm405, %v2017, %v2018
        %v2020 = vrot.slane %v2018, 4
        %v2021 = vrot.slane %v1912, 5
        %v2022 = vsel %vm405, %v2020, %v2021
        %v2023 = vrot.slane %v2021, 4
        %v2024 = vrot.slane %v1913, 5
        %v2025 = vsel %vm405, %v2023, %v2024
        %v2026 = vrot.slane %v1918, 5
        %v2027 = vrot.slane %v2026, 4
        %v2028 = vrot.slane %v1919, 5
        %v2029 = vsel %vm405, %v2027, %v2028
        %v2030 = vrot.slane %v2028, 4
        %v2031 = vrot.slane %v1920, 5
        %v2032 = vsel %vm405, %v2030, %v2031
        %v2033 = vrot.slane %v2031, 4
        %v2034 = vrot.slane %v1921, 5
        %v2035 = vsel %vm405, %v2033, %v2034
        %v2036 = vunpack.c.l.b16 %v1959
        %v2037 = vunpack.c.l.b16 %v1962
        %v2038 = vunpack.c.l.b16 %v1965
        %v2039 = vunpack.c.l.b16 %v1969
        %v2040 = vunpack.c.l.b16 %v1972
        %v2041 = vunpack.c.l.b16 %v1975
        %v2042 = vunpack.c.l.b16 %v1979
        %v2043 = vunpack.c.l.b16 %v1982
        %v2044 = vunpack.c.l.b16 %v1985
        %v2045 = vunpack.c.l.b16 %v1989
        %v2046 = vunpack.c.l.b16 %v1992
        %v2047 = vunpack.c.l.b16 %v1995
        %v2048 = vunpack.c.l.b16 %v1999
        %v2049 = vunpack.c.l.b16 %v2002
        %v2050 = vunpack.c.l.b16 %v2005
        %v2051 = vunpack.c.l.b16 %v2009
        %v2052 = vunpack.c.l.b16 %v2012
        %v2053 = vunpack.c.l.b16 %v2015
        %v2054 = vunpack.c.l.b16 %v2019
        %v2055 = vunpack.c.l.b16 %v2022
        %v2056 = vunpack.c.l.b16 %v2025
        %v2057 = vunpack.c.l.b16 %v2029
        %v2058 = vunpack.c.l.b16 %v2032
        %v2059 = vunpack.c.l.b16 %v2035
        %v2060 = vpack.c.b16 %v2037, %v2036
        %v2061 = vpack.c.b16 %v2039, %v2038
        %v2062 = vpack.c.b16 %v2041, %v2040
        %v2063 = vpack.c.b16 %v2043, %v2042
        %v2064 = vpack.c.b16 %v2045, %v2044
        %v2065 = vpack.c.b16 %v2047, %v2046
        %v2066 = vpack.c.b16 %v2049, %v2048
        %v2067 = vpack.c.b16 %v2051, %v2050
        %v2068 = vpack.c.b16 %v2053, %v2052
        %v2069 = vpack.c.b16 %v2055, %v2054
        %v2070 = vpack.c.b16 %v2057, %v2056
        %v2071 = vpack.c.b16 %v2059, %v2058
        %vm2084 = vcmask 130048
        %2085 = vst.msk [vmem:[#allocation2] sm:$0xff] %vm2084, %v2060
        %2086 = vst.msk [vmem:[#allocation2 + $0x20] sm:$0xff] %vm2084, %v2061
        %2087 = vst.msk [vmem:[#allocation2 + $0x40] sm:$0xff] %vm2084, %v2062
        %2088 = vst.msk [vmem:[#allocation2 + $0x60] sm:$0xff] %vm2084, %v2063
        %2089 = vst.msk [vmem:[#allocation2 + $0x80] sm:$0xff] %vm2084, %v2064
        %2090 = vst.msk [vmem:[#allocation2 + $0xa0] sm:$0xff] %vm2084, %v2065
        %2091 = vst.msk [vmem:[#allocation2 + $0xc0] sm:$0xff] %vm2084, %v2066
        %2092 = vst.msk [vmem:[#allocation2 + $0xe0] sm:$0xff] %vm2084, %v2067
        %2093 = vst.msk [vmem:[#allocation2 + $0x100] sm:$0xff] %vm2084, %v2068
        %2094 = vst.msk [vmem:[#allocation2 + $0x120] sm:$0xff] %vm2084, %v2069
        %2095 = vst.msk [vmem:[#allocation2 + $0x140] sm:$0xff] %vm2084, %v2070
        %2096 = vst.msk [vmem:[#allocation2 + $0x160] sm:$0xff] %vm2084, %v2071
        %v2105 = vrot.slane %v1861, 6
        %v2106 = vrot.slane %v2105, 4
        %v2107 = vrot.slane %v1862, 6
        %v2108 = vsel %vm589, %v2106, %v2107
        %v2109 = vrot.slane %v2107, 4
        %v2110 = vrot.slane %v1863, 6
        %v2111 = vsel %vm589, %v2109, %v2110
        %v2112 = vrot.slane %v2110, 4
        %v2113 = vrot.slane %v1864, 6
        %v2114 = vsel %vm589, %v2112, %v2113
        %v2115 = vrot.slane %v1869, 6
        %v2116 = vrot.slane %v2115, 4
        %v2117 = vrot.slane %v1870, 6
        %v2118 = vsel %vm589, %v2116, %v2117
        %v2119 = vrot.slane %v2117, 4
        %v2120 = vrot.slane %v1871, 6
        %v2121 = vsel %vm589, %v2119, %v2120
        %v2122 = vrot.slane %v2120, 4
        %v2123 = vrot.slane %v1872, 6
        %v2124 = vsel %vm589, %v2122, %v2123
        %v2125 = vrot.slane %v1877, 6
        %v2126 = vrot.slane %v2125, 4
        %v2127 = vrot.slane %v1878, 6
        %v2128 = vsel %vm589, %v2126, %v2127
        %v2129 = vrot.slane %v2127, 4
        %v2130 = vrot.slane %v1879, 6
        %v2131 = vsel %vm589, %v2129, %v2130
        %v2132 = vrot.slane %v2130, 4
        %v2133 = vrot.slane %v1880, 6
        %v2134 = vsel %vm589, %v2132, %v2133
        %v2135 = vrot.slane %v1885, 6
        %v2136 = vrot.slane %v2135, 4
        %v2137 = vrot.slane %v1886, 6
        %v2138 = vsel %vm589, %v2136, %v2137
        %v2139 = vrot.slane %v2137, 4
        %v2140 = vrot.slane %v1887, 6
        %v2141 = vsel %vm589, %v2139, %v2140
        %v2142 = vrot.slane %v2140, 4
        %v2143 = vrot.slane %v1888, 6
        %v2144 = vsel %vm589, %v2142, %v2143
        %v2145 = vrot.slane %v1893, 6
        %v2146 = vrot.slane %v2145, 4
        %v2147 = vrot.slane %v1894, 6
        %v2148 = vsel %vm589, %v2146, %v2147
        %v2149 = vrot.slane %v2147, 4
        %v2150 = vrot.slane %v1895, 6
        %v2151 = vsel %vm589, %v2149, %v2150
        %v2152 = vrot.slane %v2150, 4
        %v2153 = vrot.slane %v1896, 6
        %v2154 = vsel %vm589, %v2152, %v2153
        %v2155 = vrot.slane %v1901, 6
        %v2156 = vrot.slane %v2155, 4
        %v2157 = vrot.slane %v1902, 6
        %v2158 = vsel %vm589, %v2156, %v2157
        %v2159 = vrot.slane %v2157, 4
        %v2160 = vrot.slane %v1903, 6
        %v2161 = vsel %vm589, %v2159, %v2160
        %v2162 = vrot.slane %v2160, 4
        %v2163 = vrot.slane %v1904, 6
        %v2164 = vsel %vm589, %v2162, %v2163
        %v2165 = vrot.slane %v1909, 6
        %v2166 = vrot.slane %v2165, 4
        %v2167 = vrot.slane %v1910, 6
        %v2168 = vsel %vm589, %v2166, %v2167
        %v2169 = vrot.slane %v2167, 4
        %v2170 = vrot.slane %v1911, 6
        %v2171 = vsel %vm589, %v2169, %v2170
        %v2172 = vrot.slane %v2170, 4
        %v2173 = vrot.slane %v1912, 6
        %v2174 = vsel %vm589, %v2172, %v2173
        %v2175 = vrot.slane %v1917, 6
        %v2176 = vrot.slane %v2175, 4
        %v2177 = vrot.slane %v1918, 6
        %v2178 = vsel %vm589, %v2176, %v2177
        %v2179 = vrot.slane %v2177, 4
        %v2180 = vrot.slane %v1919, 6
        %v2181 = vsel %vm589, %v2179, %v2180
        %v2182 = vrot.slane %v2180, 4
        %v2183 = vrot.slane %v1920, 6
        %v2184 = vsel %vm589, %v2182, %v2183
        %v2185 = vunpack.c.l.b16 %v2108
        %v2186 = vunpack.c.l.b16 %v2111
        %v2187 = vunpack.c.l.b16 %v2114
        %v2188 = vunpack.c.l.b16 %v2118
        %v2189 = vunpack.c.l.b16 %v2121
        %v2190 = vunpack.c.l.b16 %v2124
        %v2191 = vunpack.c.l.b16 %v2128
        %v2192 = vunpack.c.l.b16 %v2131
        %v2193 = vunpack.c.l.b16 %v2134
        %v2194 = vunpack.c.l.b16 %v2138
        %v2195 = vunpack.c.l.b16 %v2141
        %v2196 = vunpack.c.l.b16 %v2144
        %v2197 = vunpack.c.l.b16 %v2148
        %v2198 = vunpack.c.l.b16 %v2151
        %v2199 = vunpack.c.l.b16 %v2154
        %v2200 = vunpack.c.l.b16 %v2158
        %v2201 = vunpack.c.l.b16 %v2161
        %v2202 = vunpack.c.l.b16 %v2164
        %v2203 = vunpack.c.l.b16 %v2168
        %v2204 = vunpack.c.l.b16 %v2171
        %v2205 = vunpack.c.l.b16 %v2174
        %v2206 = vunpack.c.l.b16 %v2178
        %v2207 = vunpack.c.l.b16 %v2181
        %v2208 = vunpack.c.l.b16 %v2184
        %v2209 = vpack.c.b16 %v2186, %v2185
        %v2210 = vpack.c.b16 %v2188, %v2187
        %v2211 = vpack.c.b16 %v2190, %v2189
        %v2212 = vpack.c.b16 %v2192, %v2191
        %v2213 = vpack.c.b16 %v2194, %v2193
        %v2214 = vpack.c.b16 %v2196, %v2195
        %v2215 = vpack.c.b16 %v2198, %v2197
        %v2216 = vpack.c.b16 %v2200, %v2199
        %v2217 = vpack.c.b16 %v2202, %v2201
        %v2218 = vpack.c.b16 %v2204, %v2203
        %v2219 = vpack.c.b16 %v2206, %v2205
        %v2220 = vpack.c.b16 %v2208, %v2207
        %2221 = vrot.lane.b32.xlu0 %v2209, 64
        %v2222 = vpop.permute.xlu0 %2221
        %2223 = vrot.lane.b32.xlu0 %v2210, 64
        %v2224 = vpop.permute.xlu0 %2223
        %2225 = vrot.lane.b32.xlu0 %v2211, 64
        %v2226 = vpop.permute.xlu0 %2225
        %2227 = vrot.lane.b32.xlu0 %v2212, 64
        %v2228 = vpop.permute.xlu0 %2227
        %2229 = vrot.lane.b32.xlu0 %v2213, 64
        %v2230 = vpop.permute.xlu0 %2229
        %2231 = vrot.lane.b32.xlu0 %v2214, 64
        %v2232 = vpop.permute.xlu0 %2231
        %2233 = vrot.lane.b32.xlu0 %v2215, 64
        %v2234 = vpop.permute.xlu0 %2233
        %2235 = vrot.lane.b32.xlu0 %v2216, 64
        %v2236 = vpop.permute.xlu0 %2235
        %2237 = vrot.lane.b32.xlu0 %v2217, 64
        %v2238 = vpop.permute.xlu0 %2237
        %2239 = vrot.lane.b32.xlu0 %v2218, 64
        %v2240 = vpop.permute.xlu0 %2239
        %2241 = vrot.lane.b32.xlu0 %v2219, 64
        %v2242 = vpop.permute.xlu0 %2241
        %2243 = vrot.lane.b32.xlu0 %v2220, 64
        %v2244 = vpop.permute.xlu0 %2243
        %2257 = vst.msk [vmem:[#allocation2] sm:$0xff] %vm558, %v2222
        %2258 = vst.msk [vmem:[#allocation2 + $0x20] sm:$0xff] %vm558, %v2224
        %2259 = vst.msk [vmem:[#allocation2 + $0x40] sm:$0xff] %vm558, %v2226
        %2260 = vst.msk [vmem:[#allocation2 + $0x60] sm:$0xff] %vm558, %v2228
        %2261 = vst.msk [vmem:[#allocation2 + $0x80] sm:$0xff] %vm558, %v2230
        %2262 = vst.msk [vmem:[#allocation2 + $0xa0] sm:$0xff] %vm558, %v2232
        %2263 = vst.msk [vmem:[#allocation2 + $0xc0] sm:$0xff] %vm558, %v2234
        %2264 = vst.msk [vmem:[#allocation2 + $0xe0] sm:$0xff] %vm558, %v2236
        %2265 = vst.msk [vmem:[#allocation2 + $0x100] sm:$0xff] %vm558, %v2238
        %2266 = vst.msk [vmem:[#allocation2 + $0x120] sm:$0xff] %vm558, %v2240
        %2267 = vst.msk [vmem:[#allocation2 + $0x140] sm:$0xff] %vm558, %v2242
        %2268 = vst.msk [vmem:[#allocation2 + $0x160] sm:$0xff] %vm558, %v2244
        %2269 = vrot.lane.b32.xlu0 %v2060, 80
        %v2270 = vpop.permute.xlu0 %2269
        %2271 = vrot.lane.b32.xlu0 %v2061, 80
        %v2272 = vpop.permute.xlu0 %2271
        %2273 = vrot.lane.b32.xlu0 %v2062, 80
        %v2274 = vpop.permute.xlu0 %2273
        %2275 = vrot.lane.b32.xlu0 %v2063, 80
        %v2276 = vpop.permute.xlu0 %2275
        %2277 = vrot.lane.b32.xlu0 %v2064, 80
        %v2278 = vpop.permute.xlu0 %2277
        %2279 = vrot.lane.b32.xlu0 %v2065, 80
        %v2280 = vpop.permute.xlu0 %2279
        %2281 = vrot.lane.b32.xlu0 %v2066, 80
        %v2282 = vpop.permute.xlu0 %2281
        %2283 = vrot.lane.b32.xlu0 %v2067, 80
        %v2284 = vpop.permute.xlu0 %2283
        %2285 = vrot.lane.b32.xlu0 %v2068, 80
        %v2286 = vpop.permute.xlu0 %2285
        %2287 = vrot.lane.b32.xlu0 %v2069, 80
        %v2288 = vpop.permute.xlu0 %2287
        %2289 = vrot.lane.b32.xlu0 %v2070, 80
        %v2290 = vpop.permute.xlu0 %2289
        %2291 = vrot.lane.b32.xlu0 %v2071, 80
        %v2292 = vpop.permute.xlu0 %2291
        %2305 = vst.msk [vmem:[#allocation2] sm:$0xff] %vm742, %v2270
        %2306 = vst.msk [vmem:[#allocation2 + $0x20] sm:$0xff] %vm742, %v2272
        %2307 = vst.msk [vmem:[#allocation2 + $0x40] sm:$0xff] %vm742, %v2274
        %2308 = vst.msk [vmem:[#allocation2 + $0x60] sm:$0xff] %vm742, %v2276
        %2309 = vst.msk [vmem:[#allocation2 + $0x80] sm:$0xff] %vm742, %v2278
        %2310 = vst.msk [vmem:[#allocation2 + $0xa0] sm:$0xff] %vm742, %v2280
        %2311 = vst.msk [vmem:[#allocation2 + $0xc0] sm:$0xff] %vm742, %v2282
        %2312 = vst.msk [vmem:[#allocation2 + $0xe0] sm:$0xff] %vm742, %v2284
        %2313 = vst.msk [vmem:[#allocation2 + $0x100] sm:$0xff] %vm742, %v2286
        %2314 = vst.msk [vmem:[#allocation2 + $0x120] sm:$0xff] %vm742, %v2288
        %2315 = vst.msk [vmem:[#allocation2 + $0x140] sm:$0xff] %vm742, %v2290
        %2316 = vst.msk [vmem:[#allocation2 + $0x160] sm:$0xff] %vm742, %v2292
        %v2317 = vunpack.c.l.b16 %v1863
        %v2318 = vunpack.c.l.b16 %v1864
        %v2319 = vunpack.c.l.b16 %v1865
        %v2320 = vunpack.c.l.b16 %v1871
        %v2321 = vunpack.c.l.b16 %v1872
        %v2322 = vunpack.c.l.b16 %v1873
        %v2323 = vunpack.c.l.b16 %v1879
        %v2324 = vunpack.c.l.b16 %v1880
        %v2325 = vunpack.c.l.b16 %v1881
        %v2326 = vunpack.c.l.b16 %v1887
        %v2327 = vunpack.c.l.b16 %v1888
        %v2328 = vunpack.c.l.b16 %v1889
        %v2329 = vunpack.c.l.b16 %v1895
        %v2330 = vunpack.c.l.b16 %v1896
        %v2331 = vunpack.c.l.b16 %v1897
        %v2332 = vunpack.c.l.b16 %v1903
        %v2333 = vunpack.c.l.b16 %v1904
        %v2334 = vunpack.c.l.b16 %v1905
        %v2335 = vunpack.c.l.b16 %v1911
        %v2336 = vunpack.c.l.b16 %v1912
        %v2337 = vunpack.c.l.b16 %v1913
        %v2338 = vunpack.c.l.b16 %v1919
        %v2339 = vunpack.c.l.b16 %v1920
        %v2340 = vunpack.c.l.b16 %v1921
        %v2341 = vpack.c.b16 %v2318, %v2317
        %v2342 = vpack.c.b16 %v2320, %v2319
        %v2343 = vpack.c.b16 %v2322, %v2321
        %v2344 = vpack.c.b16 %v2324, %v2323
        %v2345 = vpack.c.b16 %v2326, %v2325
        %v2346 = vpack.c.b16 %v2328, %v2327
        %v2347 = vpack.c.b16 %v2330, %v2329
        %v2348 = vpack.c.b16 %v2332, %v2331
        %v2349 = vpack.c.b16 %v2334, %v2333
        %v2350 = vpack.c.b16 %v2336, %v2335
        %v2351 = vpack.c.b16 %v2338, %v2337
        %v2352 = vpack.c.b16 %v2340, %v2339
        %2353 = vrot.lane.b32.xlu0 %v2341, 96
        %v2354 = vpop.permute.xlu0 %2353
        %2355 = vrot.lane.b32.xlu0 %v2342, 96
        %v2356 = vpop.permute.xlu0 %2355
        %2357 = vrot.lane.b32.xlu0 %v2343, 96
        %v2358 = vpop.permute.xlu0 %2357
        %2359 = vrot.lane.b32.xlu0 %v2344, 96
        %v2360 = vpop.permute.xlu0 %2359
        %2361 = vrot.lane.b32.xlu0 %v2345, 96
        %v2362 = vpop.permute.xlu0 %2361
        %2363 = vrot.lane.b32.xlu0 %v2346, 96
        %v2364 = vpop.permute.xlu0 %2363
        %2365 = vrot.lane.b32.xlu0 %v2347, 96
        %v2366 = vpop.permute.xlu0 %2365
        %2367 = vrot.lane.b32.xlu0 %v2348, 96
        %v2368 = vpop.permute.xlu0 %2367
        %2369 = vrot.lane.b32.xlu0 %v2349, 96
        %v2370 = vpop.permute.xlu0 %2369
        %2371 = vrot.lane.b32.xlu0 %v2350, 96
        %v2372 = vpop.permute.xlu0 %2371
        %2373 = vrot.lane.b32.xlu0 %v2351, 96
        %v2374 = vpop.permute.xlu0 %2373
        %2375 = vrot.lane.b32.xlu0 %v2352, 96
        %v2376 = vpop.permute.xlu0 %2375
        %vm2389 = vcmask 917248
        %2390 = vst.msk [vmem:[#allocation2] sm:$0xff] %vm2389, %v2354
        %2391 = vst.msk [vmem:[#allocation2 + $0x20] sm:$0xff] %vm2389, %v2356
        %2392 = vst.msk [vmem:[#allocation2 + $0x40] sm:$0xff] %vm2389, %v2358
        %2393 = vst.msk [vmem:[#allocation2 + $0x60] sm:$0xff] %vm2389, %v2360
        %2394 = vst.msk [vmem:[#allocation2 + $0x80] sm:$0xff] %vm2389, %v2362
        %2395 = vst.msk [vmem:[#allocation2 + $0xa0] sm:$0xff] %vm2389, %v2364
        %2396 = vst.msk [vmem:[#allocation2 + $0xc0] sm:$0xff] %vm2389, %v2366
        %2397 = vst.msk [vmem:[#allocation2 + $0xe0] sm:$0xff] %vm2389, %v2368
        %2398 = vst.msk [vmem:[#allocation2 + $0x100] sm:$0xff] %vm2389, %v2370
        %2399 = vst.msk [vmem:[#allocation2 + $0x120] sm:$0xff] %vm2389, %v2372
        %2400 = vst.msk [vmem:[#allocation2 + $0x140] sm:$0xff] %vm2389, %v2374
        %2401 = vst.msk [vmem:[#allocation2 + $0x160] sm:$0xff] %vm2389, %v2376
        %v2410 = vrot.slane %v1860, 7
        %v2411 = vrot.slane %v2410, 4
        %v2412 = vrot.slane %v1861, 7
        %v2413 = vsel %vm849, %v2411, %v2412
        %v2414 = vrot.slane %v2412, 4
        %v2415 = vrot.slane %v1862, 7
        %v2416 = vsel %vm849, %v2414, %v2415
        %v2417 = vrot.slane %v2415, 4
        %v2418 = vrot.slane %v1863, 7
        %v2419 = vsel %vm849, %v2417, %v2418
        %v2420 = vrot.slane %v1868, 7
        %v2421 = vrot.slane %v2420, 4
        %v2422 = vrot.slane %v1869, 7
        %v2423 = vsel %vm849, %v2421, %v2422
        %v2424 = vrot.slane %v2422, 4
        %v2425 = vrot.slane %v1870, 7
        %v2426 = vsel %vm849, %v2424, %v2425
        %v2427 = vrot.slane %v2425, 4
        %v2428 = vrot.slane %v1871, 7
        %v2429 = vsel %vm849, %v2427, %v2428
        %v2430 = vrot.slane %v1876, 7
        %v2431 = vrot.slane %v2430, 4
        %v2432 = vrot.slane %v1877, 7
        %v2433 = vsel %vm849, %v2431, %v2432
        %v2434 = vrot.slane %v2432, 4
        %v2435 = vrot.slane %v1878, 7
        %v2436 = vsel %vm849, %v2434, %v2435
        %v2437 = vrot.slane %v2435, 4
        %v2438 = vrot.slane %v1879, 7
        %v2439 = vsel %vm849, %v2437, %v2438
        %v2440 = vrot.slane %v1884, 7
        %v2441 = vrot.slane %v2440, 4
        %v2442 = vrot.slane %v1885, 7
        %v2443 = vsel %vm849, %v2441, %v2442
        %v2444 = vrot.slane %v2442, 4
        %v2445 = vrot.slane %v1886, 7
        %v2446 = vsel %vm849, %v2444, %v2445
        %v2447 = vrot.slane %v2445, 4
        %v2448 = vrot.slane %v1887, 7
        %v2449 = vsel %vm849, %v2447, %v2448
        %v2450 = vrot.slane %v1892, 7
        %v2451 = vrot.slane %v2450, 4
        %v2452 = vrot.slane %v1893, 7
        %v2453 = vsel %vm849, %v2451, %v2452
        %v2454 = vrot.slane %v2452, 4
        %v2455 = vrot.slane %v1894, 7
        %v2456 = vsel %vm849, %v2454, %v2455
        %v2457 = vrot.slane %v2455, 4
        %v2458 = vrot.slane %v1895, 7
        %v2459 = vsel %vm849, %v2457, %v2458
        %v2460 = vrot.slane %v1900, 7
        %v2461 = vrot.slane %v2460, 4
        %v2462 = vrot.slane %v1901, 7
        %v2463 = vsel %vm849, %v2461, %v2462
        %v2464 = vrot.slane %v2462, 4
        %v2465 = vrot.slane %v1902, 7
        %v2466 = vsel %vm849, %v2464, %v2465
        %v2467 = vrot.slane %v2465, 4
        %v2468 = vrot.slane %v1903, 7
        %v2469 = vsel %vm849, %v2467, %v2468
        %v2470 = vrot.slane %v1908, 7
        %v2471 = vrot.slane %v2470, 4
        %v2472 = vrot.slane %v1909, 7
        %v2473 = vsel %vm849, %v2471, %v2472
        %v2474 = vrot.slane %v2472, 4
        %v2475 = vrot.slane %v1910, 7
        %v2476 = vsel %vm849, %v2474, %v2475
        %v2477 = vrot.slane %v2475, 4
        %v2478 = vrot.slane %v1911, 7
        %v2479 = vsel %vm849, %v2477, %v2478
        %v2480 = vrot.slane %v1916, 7
        %v2481 = vrot.slane %v2480, 4
        %v2482 = vrot.slane %v1917, 7
        %v2483 = vsel %vm849, %v2481, %v2482
        %v2484 = vrot.slane %v2482, 4
        %v2485 = vrot.slane %v1918, 7
        %v2486 = vsel %vm849, %v2484, %v2485
        %v2487 = vrot.slane %v2485, 4
        %v2488 = vrot.slane %v1919, 7
        %v2489 = vsel %vm849, %v2487, %v2488
        %v2490 = vunpack.c.l.b16 %v2413
        %v2491 = vunpack.c.l.b16 %v2416
        %v2492 = vunpack.c.l.b16 %v2419
        %v2493 = vunpack.c.l.b16 %v2423
        %v2494 = vunpack.c.l.b16 %v2426
        %v2495 = vunpack.c.l.b16 %v2429
        %v2496 = vunpack.c.l.b16 %v2433
        %v2497 = vunpack.c.l.b16 %v2436
        %v2498 = vunpack.c.l.b16 %v2439
        %v2499 = vunpack.c.l.b16 %v2443
        %v2500 = vunpack.c.l.b16 %v2446
        %v2501 = vunpack.c.l.b16 %v2449
        %v2502 = vunpack.c.l.b16 %v2453
        %v2503 = vunpack.c.l.b16 %v2456
        %v2504 = vunpack.c.l.b16 %v2459
        %v2505 = vunpack.c.l.b16 %v2463
        %v2506 = vunpack.c.l.b16 %v2466
        %v2507 = vunpack.c.l.b16 %v2469
        %v2508 = vunpack.c.l.b16 %v2473
        %v2509 = vunpack.c.l.b16 %v2476
        %v2510 = vunpack.c.l.b16 %v2479
        %v2511 = vunpack.c.l.b16 %v2483
        %v2512 = vunpack.c.l.b16 %v2486
        %v2513 = vunpack.c.l.b16 %v2489
        %v2514 = vpack.c.b16 %v2491, %v2490
        %v2515 = vpack.c.b16 %v2493, %v2492
        %v2516 = vpack.c.b16 %v2495, %v2494
        %v2517 = vpack.c.b16 %v2497, %v2496
        %v2518 = vpack.c.b16 %v2499, %v2498
        %v2519 = vpack.c.b16 %v2501, %v2500
        %v2520 = vpack.c.b16 %v2503, %v2502
        %v2521 = vpack.c.b16 %v2505, %v2504
        %v2522 = vpack.c.b16 %v2507, %v2506
        %v2523 = vpack.c.b16 %v2509, %v2508
        %v2524 = vpack.c.b16 %v2511, %v2510
        %v2525 = vpack.c.b16 %v2513, %v2512
        %2526 = vrot.lane.b32.xlu0 %v2514, 80
        %v2527 = vpop.permute.xlu0 %2526
        %2528 = vrot.lane.b32.xlu0 %v2515, 80
        %v2529 = vpop.permute.xlu0 %2528
        %2530 = vrot.lane.b32.xlu0 %v2516, 80
        %v2531 = vpop.permute.xlu0 %2530
        %2532 = vrot.lane.b32.xlu0 %v2517, 80
        %v2533 = vpop.permute.xlu0 %2532
        %2534 = vrot.lane.b32.xlu0 %v2518, 80
        %v2535 = vpop.permute.xlu0 %2534
        %2536 = vrot.lane.b32.xlu0 %v2519, 80
        %v2537 = vpop.permute.xlu0 %2536
        %2538 = vrot.lane.b32.xlu0 %v2520, 80
        %v2539 = vpop.permute.xlu0 %2538
        %2540 = vrot.lane.b32.xlu0 %v2521, 80
        %v2541 = vpop.permute.xlu0 %2540
        %2542 = vrot.lane.b32.xlu0 %v2522, 80
        %v2543 = vpop.permute.xlu0 %2542
        %2544 = vrot.lane.b32.xlu0 %v2523, 80
        %v2545 = vpop.permute.xlu0 %2544
        %2546 = vrot.lane.b32.xlu0 %v2524, 80
        %v2547 = vpop.permute.xlu0 %2546
        %2548 = vrot.lane.b32.xlu0 %v2525, 80
        %v2549 = vpop.permute.xlu0 %2548
        %2562 = vst.msk [vmem:[#allocation2 + $0x8] sm:$0xff] %vm742, %v2527
        %2563 = vst.msk [vmem:[#allocation2 + $0x28] sm:$0xff] %vm742, %v2529
        %2564 = vst.msk [vmem:[#allocation2 + $0x48] sm:$0xff] %vm742, %v2531
        %2565 = vst.msk [vmem:[#allocation2 + $0x68] sm:$0xff] %vm742, %v2533
        %2566 = vst.msk [vmem:[#allocation2 + $0x88] sm:$0xff] %vm742, %v2535
        %2567 = vst.msk [vmem:[#allocation2 + $0xa8] sm:$0xff] %vm742, %v2537
        %2568 = vst.msk [vmem:[#allocation2 + $0xc8] sm:$0xff] %vm742, %v2539
        %2569 = vst.msk [vmem:[#allocation2 + $0xe8] sm:$0xff] %vm742, %v2541
        %2570 = vst.msk [vmem:[#allocation2 + $0x108] sm:$0xff] %vm742, %v2543
        %2571 = vst.msk [vmem:[#allocation2 + $0x128] sm:$0xff] %vm742, %v2545
        %2572 = vst.msk [vmem:[#allocation2 + $0x148] sm:$0xff] %vm742, %v2547
        %2573 = vst.msk [vmem:[#allocation2 + $0x168] sm:$0xff] %vm742, %v2549
        %2574 = vrot.lane.b32.xlu0 %v2060, 96
        %v2575 = vpop.permute.xlu0 %2574
        %2576 = vrot.lane.b32.xlu0 %v2061, 96
        %v2577 = vpop.permute.xlu0 %2576
        %2578 = vrot.lane.b32.xlu0 %v2062, 96
        %v2579 = vpop.permute.xlu0 %2578
        %2580 = vrot.lane.b32.xlu0 %v2063, 96
        %v2581 = vpop.permute.xlu0 %2580
        %2582 = vrot.lane.b32.xlu0 %v2064, 96
        %v2583 = vpop.permute.xlu0 %2582
        %2584 = vrot.lane.b32.xlu0 %v2065, 96
        %v2585 = vpop.permute.xlu0 %2584
        %2586 = vrot.lane.b32.xlu0 %v2066, 96
        %v2587 = vpop.permute.xlu0 %2586
        %2588 = vrot.lane.b32.xlu0 %v2067, 96
        %v2589 = vpop.permute.xlu0 %2588
        %2590 = vrot.lane.b32.xlu0 %v2068, 96
        %v2591 = vpop.permute.xlu0 %2590
        %2592 = vrot.lane.b32.xlu0 %v2069, 96
        %v2593 = vpop.permute.xlu0 %2592
        %2594 = vrot.lane.b32.xlu0 %v2070, 96
        %v2595 = vpop.permute.xlu0 %2594
        %2596 = vrot.lane.b32.xlu0 %v2071, 96
        %v2597 = vpop.permute.xlu0 %2596
        %2610 = vst.msk [vmem:[#allocation2 + $0x8] sm:$0xff] %vm2389, %v2575
        %2611 = vst.msk [vmem:[#allocation2 + $0x28] sm:$0xff] %vm2389, %v2577
        %2612 = vst.msk [vmem:[#allocation2 + $0x48] sm:$0xff] %vm2389, %v2579
        %2613 = vst.msk [vmem:[#allocation2 + $0x68] sm:$0xff] %vm2389, %v2581
        %2614 = vst.msk [vmem:[#allocation2 + $0x88] sm:$0xff] %vm2389, %v2583
        %2615 = vst.msk [vmem:[#allocation2 + $0xa8] sm:$0xff] %vm2389, %v2585
        %2616 = vst.msk [vmem:[#allocation2 + $0xc8] sm:$0xff] %vm2389, %v2587
        %2617 = vst.msk [vmem:[#allocation2 + $0xe8] sm:$0xff] %vm2389, %v2589
        %2618 = vst.msk [vmem:[#allocation2 + $0x108] sm:$0xff] %vm2389, %v2591
        %2619 = vst.msk [vmem:[#allocation2 + $0x128] sm:$0xff] %vm2389, %v2593
        %2620 = vst.msk [vmem:[#allocation2 + $0x148] sm:$0xff] %vm2389, %v2595
        %2621 = vst.msk [vmem:[#allocation2 + $0x168] sm:$0xff] %vm2389, %v2597
        %v2630 = vrot.slane %v2418, 4
        %v2631 = vrot.slane %v1864, 7
        %v2632 = vsel %vm849, %v2630, %v2631
        %v2633 = vrot.slane %v2631, 4
        %v2634 = vrot.slane %v1865, 7
        %v2635 = vsel %vm849, %v2633, %v2634
        %v2636 = vrot.slane %v2634, 4
        %v2637 = vrot.slane %v1866, 7
        %v2638 = vsel %vm849, %v2636, %v2637
        %v2639 = vrot.slane %v2428, 4
        %v2640 = vrot.slane %v1872, 7
        %v2641 = vsel %vm849, %v2639, %v2640
        %v2642 = vrot.slane %v2640, 4
        %v2643 = vrot.slane %v1873, 7
        %v2644 = vsel %vm849, %v2642, %v2643
        %v2645 = vrot.slane %v2643, 4
        %v2646 = vrot.slane %v1874, 7
        %v2647 = vsel %vm849, %v2645, %v2646
        %v2648 = vrot.slane %v2438, 4
        %v2649 = vrot.slane %v1880, 7
        %v2650 = vsel %vm849, %v2648, %v2649
        %v2651 = vrot.slane %v2649, 4
        %v2652 = vrot.slane %v1881, 7
        %v2653 = vsel %vm849, %v2651, %v2652
        %v2654 = vrot.slane %v2652, 4
        %v2655 = vrot.slane %v1882, 7
        %v2656 = vsel %vm849, %v2654, %v2655
        %v2657 = vrot.slane %v2448, 4
        %v2658 = vrot.slane %v1888, 7
        %v2659 = vsel %vm849, %v2657, %v2658
        %v2660 = vrot.slane %v2658, 4
        %v2661 = vrot.slane %v1889, 7
        %v2662 = vsel %vm849, %v2660, %v2661
        %v2663 = vrot.slane %v2661, 4
        %v2664 = vrot.slane %v1890, 7
        %v2665 = vsel %vm849, %v2663, %v2664
        %v2666 = vrot.slane %v2458, 4
        %v2667 = vrot.slane %v1896, 7
        %v2668 = vsel %vm849, %v2666, %v2667
        %v2669 = vrot.slane %v2667, 4
        %v2670 = vrot.slane %v1897, 7
        %v2671 = vsel %vm849, %v2669, %v2670
        %v2672 = vrot.slane %v2670, 4
        %v2673 = vrot.slane %v1898, 7
        %v2674 = vsel %vm849, %v2672, %v2673
        %v2675 = vrot.slane %v2468, 4
        %v2676 = vrot.slane %v1904, 7
        %v2677 = vsel %vm849, %v2675, %v2676
        %v2678 = vrot.slane %v2676, 4
        %v2679 = vrot.slane %v1905, 7
        %v2680 = vsel %vm849, %v2678, %v2679
        %v2681 = vrot.slane %v2679, 4
        %v2682 = vrot.slane %v1906, 7
        %v2683 = vsel %vm849, %v2681, %v2682
        %v2684 = vrot.slane %v2478, 4
        %v2685 = vrot.slane %v1912, 7
        %v2686 = vsel %vm849, %v2684, %v2685
        %v2687 = vrot.slane %v2685, 4
        %v2688 = vrot.slane %v1913, 7
        %v2689 = vsel %vm849, %v2687, %v2688
        %v2690 = vrot.slane %v2688, 4
        %v2691 = vrot.slane %v1914, 7
        %v2692 = vsel %vm849, %v2690, %v2691
        %v2693 = vrot.slane %v2488, 4
        %v2694 = vrot.slane %v1920, 7
        %v2695 = vsel %vm849, %v2693, %v2694
        %v2696 = vrot.slane %v2694, 4
        %v2697 = vrot.slane %v1921, 7
        %v2698 = vsel %vm849, %v2696, %v2697
        %v2699 = vrot.slane %v2697, 4
        %v2700 = vrot.slane %v1922, 7
        %v2701 = vsel %vm849, %v2699, %v2700
        %v2702 = vunpack.c.l.b16 %v2632
        %v2703 = vunpack.c.l.b16 %v2635
        %v2704 = vunpack.c.l.b16 %v2638
        %v2705 = vunpack.c.l.b16 %v2641
        %v2706 = vunpack.c.l.b16 %v2644
        %v2707 = vunpack.c.l.b16 %v2647
        %v2708 = vunpack.c.l.b16 %v2650
        %v2709 = vunpack.c.l.b16 %v2653
        %v2710 = vunpack.c.l.b16 %v2656
        %v2711 = vunpack.c.l.b16 %v2659
        %v2712 = vunpack.c.l.b16 %v2662
        %v2713 = vunpack.c.l.b16 %v2665
        %v2714 = vunpack.c.l.b16 %v2668
        %v2715 = vunpack.c.l.b16 %v2671
        %v2716 = vunpack.c.l.b16 %v2674
        %v2717 = vunpack.c.l.b16 %v2677
        %v2718 = vunpack.c.l.b16 %v2680
        %v2719 = vunpack.c.l.b16 %v2683
        %v2720 = vunpack.c.l.b16 %v2686
        %v2721 = vunpack.c.l.b16 %v2689
        %v2722 = vunpack.c.l.b16 %v2692
        %v2723 = vunpack.c.l.b16 %v2695
        %v2724 = vunpack.c.l.b16 %v2698
        %v2725 = vunpack.c.l.b16 %v2701
        %v2726 = vpack.c.b16 %v2703, %v2702
        %v2727 = vpack.c.b16 %v2705, %v2704
        %v2728 = vpack.c.b16 %v2707, %v2706
        %v2729 = vpack.c.b16 %v2709, %v2708
        %v2730 = vpack.c.b16 %v2711, %v2710
        %v2731 = vpack.c.b16 %v2713, %v2712
        %v2732 = vpack.c.b16 %v2715, %v2714
        %v2733 = vpack.c.b16 %v2717, %v2716
        %v2734 = vpack.c.b16 %v2719, %v2718
        %v2735 = vpack.c.b16 %v2721, %v2720
        %v2736 = vpack.c.b16 %v2723, %v2722
        %v2737 = vpack.c.b16 %v2725, %v2724
        %2738 = vrot.lane.b32.xlu0 %v2726, 112
        %v2739 = vpop.permute.xlu0 %2738
        %2740 = vrot.lane.b32.xlu0 %v2727, 112
        %v2741 = vpop.permute.xlu0 %2740
        %2742 = vrot.lane.b32.xlu0 %v2728, 112
        %v2743 = vpop.permute.xlu0 %2742
        %2744 = vrot.lane.b32.xlu0 %v2729, 112
        %v2745 = vpop.permute.xlu0 %2744
        %2746 = vrot.lane.b32.xlu0 %v2730, 112
        %v2747 = vpop.permute.xlu0 %2746
        %2748 = vrot.lane.b32.xlu0 %v2731, 112
        %v2749 = vpop.permute.xlu0 %2748
        %2750 = vrot.lane.b32.xlu0 %v2732, 112
        %v2751 = vpop.permute.xlu0 %2750
        %2752 = vrot.lane.b32.xlu0 %v2733, 112
        %v2753 = vpop.permute.xlu0 %2752
        %2754 = vrot.lane.b32.xlu0 %v2734, 112
        %v2755 = vpop.permute.xlu0 %2754
        %2756 = vrot.lane.b32.xlu0 %v2735, 112
        %v2757 = vpop.permute.xlu0 %2756
        %2758 = vrot.lane.b32.xlu0 %v2736, 112
        %v2759 = vpop.permute.xlu0 %2758
        %2760 = vrot.lane.b32.xlu0 %v2737, 112
        %v2761 = vpop.permute.xlu0 %2760
        %vm2774 = vcmask 1048448
        %2775 = vst.msk [vmem:[#allocation2 + $0x8] sm:$0xff] %vm2774, %v2739
        %2776 = vst.msk [vmem:[#allocation2 + $0x28] sm:$0xff] %vm2774, %v2741
        %2777 = vst.msk [vmem:[#allocation2 + $0x48] sm:$0xff] %vm2774, %v2743
        %2778 = vst.msk [vmem:[#allocation2 + $0x68] sm:$0xff] %vm2774, %v2745
        %2779 = vst.msk [vmem:[#allocation2 + $0x88] sm:$0xff] %vm2774, %v2747
        %2780 = vst.msk [vmem:[#allocation2 + $0xa8] sm:$0xff] %vm2774, %v2749
        %2781 = vst.msk [vmem:[#allocation2 + $0xc8] sm:$0xff] %vm2774, %v2751
        %2782 = vst.msk [vmem:[#allocation2 + $0xe8] sm:$0xff] %vm2774, %v2753
        %2783 = vst.msk [vmem:[#allocation2 + $0x108] sm:$0xff] %vm2774, %v2755
        %2784 = vst.msk [vmem:[#allocation2 + $0x128] sm:$0xff] %vm2774, %v2757
        %2785 = vst.msk [vmem:[#allocation2 + $0x148] sm:$0xff] %vm2774, %v2759
        %2786 = vst.msk [vmem:[#allocation2 + $0x168] sm:$0xff] %vm2774, %v2761
        %v2787 = vunpack.c.l.b16 %v1860
        %v2788 = vunpack.c.l.b16 %v1861
        %v2789 = vunpack.c.l.b16 %v1862
        %v2790 = vunpack.c.l.b16 %v1868
        %v2791 = vunpack.c.l.b16 %v1869
        %v2792 = vunpack.c.l.b16 %v1870
        %v2793 = vunpack.c.l.b16 %v1876
        %v2794 = vunpack.c.l.b16 %v1877
        %v2795 = vunpack.c.l.b16 %v1878
        %v2796 = vunpack.c.l.b16 %v1884
        %v2797 = vunpack.c.l.b16 %v1885
        %v2798 = vunpack.c.l.b16 %v1886
        %v2799 = vunpack.c.l.b16 %v1892
        %v2800 = vunpack.c.l.b16 %v1893
        %v2801 = vunpack.c.l.b16 %v1894
        %v2802 = vunpack.c.l.b16 %v1900
        %v2803 = vunpack.c.l.b16 %v1901
        %v2804 = vunpack.c.l.b16 %v1902
        %v2805 = vunpack.c.l.b16 %v1908
        %v2806 = vunpack.c.l.b16 %v1909
        %v2807 = vunpack.c.l.b16 %v1910
        %v2808 = vunpack.c.l.b16 %v1916
        %v2809 = vunpack.c.l.b16 %v1917
        %v2810 = vunpack.c.l.b16 %v1918
        %v2811 = vpack.c.b16 %v2788, %v2787
        %v2812 = vpack.c.b16 %v2790, %v2789
        %v2813 = vpack.c.b16 %v2792, %v2791
        %v2814 = vpack.c.b16 %v2794, %v2793
        %v2815 = vpack.c.b16 %v2796, %v2795
        %v2816 = vpack.c.b16 %v2798, %v2797
        %v2817 = vpack.c.b16 %v2800, %v2799
        %v2818 = vpack.c.b16 %v2802, %v2801
        %v2819 = vpack.c.b16 %v2804, %v2803
        %v2820 = vpack.c.b16 %v2806, %v2805
        %v2821 = vpack.c.b16 %v2808, %v2807
        %v2822 = vpack.c.b16 %v2810, %v2809
        %2823 = vrot.lane.b32.xlu0 %v2811, 96
        %v2824 = vpop.permute.xlu0 %2823
        %2825 = vrot.lane.b32.xlu0 %v2812, 96
        %v2826 = vpop.permute.xlu0 %2825
        %2827 = vrot.lane.b32.xlu0 %v2813, 96
        %v2828 = vpop.permute.xlu0 %2827
        %2829 = vrot.lane.b32.xlu0 %v2814, 96
        %v2830 = vpop.permute.xlu0 %2829
        %2831 = vrot.lane.b32.xlu0 %v2815, 96
        %v2832 = vpop.permute.xlu0 %2831
        %2833 = vrot.lane.b32.xlu0 %v2816, 96
        %v2834 = vpop.permute.xlu0 %2833
        %2835 = vrot.lane.b32.xlu0 %v2817, 96
        %v2836 = vpop.permute.xlu0 %2835
        %2837 = vrot.lane.b32.xlu0 %v2818, 96
        %v2838 = vpop.permute.xlu0 %2837
        %2839 = vrot.lane.b32.xlu0 %v2819, 96
        %v2840 = vpop.permute.xlu0 %2839
        %2841 = vrot.lane.b32.xlu0 %v2820, 96
        %v2842 = vpop.permute.xlu0 %2841
        %2843 = vrot.lane.b32.xlu0 %v2821, 96
        %v2844 = vpop.permute.xlu0 %2843
        %2845 = vrot.lane.b32.xlu0 %v2822, 96
        %v2846 = vpop.permute.xlu0 %2845
        %2859 = vst.msk [vmem:[#allocation2 + $0x10] sm:$0xff] %vm2389, %v2824
        %2860 = vst.msk [vmem:[#allocation2 + $0x30] sm:$0xff] %vm2389, %v2826
        %2861 = vst.msk [vmem:[#allocation2 + $0x50] sm:$0xff] %vm2389, %v2828
        %2862 = vst.msk [vmem:[#allocation2 + $0x70] sm:$0xff] %vm2389, %v2830
        %2863 = vst.msk [vmem:[#allocation2 + $0x90] sm:$0xff] %vm2389, %v2832
        %2864 = vst.msk [vmem:[#allocation2 + $0xb0] sm:$0xff] %vm2389, %v2834
        %2865 = vst.msk [vmem:[#allocation2 + $0xd0] sm:$0xff] %vm2389, %v2836
        %2866 = vst.msk [vmem:[#allocation2 + $0xf0] sm:$0xff] %vm2389, %v2838
        %2867 = vst.msk [vmem:[#allocation2 + $0x110] sm:$0xff] %vm2389, %v2840
        %2868 = vst.msk [vmem:[#allocation2 + $0x130] sm:$0xff] %vm2389, %v2842
        %2869 = vst.msk [vmem:[#allocation2 + $0x150] sm:$0xff] %vm2389, %v2844
        %2870 = vst.msk [vmem:[#allocation2 + $0x170] sm:$0xff] %vm2389, %v2846
        %2871 = vrot.lane.b32.xlu0 %v2060, 112
        %v2872 = vpop.permute.xlu0 %2871
        %2873 = vrot.lane.b32.xlu0 %v2061, 112
        %v2874 = vpop.permute.xlu0 %2873
        %2875 = vrot.lane.b32.xlu0 %v2062, 112
        %v2876 = vpop.permute.xlu0 %2875
        %2877 = vrot.lane.b32.xlu0 %v2063, 112
        %v2878 = vpop.permute.xlu0 %2877
        %2879 = vrot.lane.b32.xlu0 %v2064, 112
        %v2880 = vpop.permute.xlu0 %2879
        %2881 = vrot.lane.b32.xlu0 %v2065, 112
        %v2882 = vpop.permute.xlu0 %2881
        %2883 = vrot.lane.b32.xlu0 %v2066, 112
        %v2884 = vpop.permute.xlu0 %2883
        %2885 = vrot.lane.b32.xlu0 %v2067, 112
        %v2886 = vpop.permute.xlu0 %2885
        %2887 = vrot.lane.b32.xlu0 %v2068, 112
        %v2888 = vpop.permute.xlu0 %2887
        %2889 = vrot.lane.b32.xlu0 %v2069, 112
        %v2890 = vpop.permute.xlu0 %2889
        %2891 = vrot.lane.b32.xlu0 %v2070, 112
        %v2892 = vpop.permute.xlu0 %2891
        %2893 = vrot.lane.b32.xlu0 %v2071, 112
        %v2894 = vpop.permute.xlu0 %2893
        %2907 = vst.msk [vmem:[#allocation2 + $0x10] sm:$0xff] %vm2774, %v2872
        %2908 = vst.msk [vmem:[#allocation2 + $0x30] sm:$0xff] %vm2774, %v2874
        %2909 = vst.msk [vmem:[#allocation2 + $0x50] sm:$0xff] %vm2774, %v2876
        %2910 = vst.msk [vmem:[#allocation2 + $0x70] sm:$0xff] %vm2774, %v2878
        %2911 = vst.msk [vmem:[#allocation2 + $0x90] sm:$0xff] %vm2774, %v2880
        %2912 = vst.msk [vmem:[#allocation2 + $0xb0] sm:$0xff] %vm2774, %v2882
        %2913 = vst.msk [vmem:[#allocation2 + $0xd0] sm:$0xff] %vm2774, %v2884
        %2914 = vst.msk [vmem:[#allocation2 + $0xf0] sm:$0xff] %vm2774, %v2886
        %2915 = vst.msk [vmem:[#allocation2 + $0x110] sm:$0xff] %vm2774, %v2888
        %2916 = vst.msk [vmem:[#allocation2 + $0x130] sm:$0xff] %vm2774, %v2890
        %2917 = vst.msk [vmem:[#allocation2 + $0x150] sm:$0xff] %vm2774, %v2892
        %2918 = vst.msk [vmem:[#allocation2 + $0x170] sm:$0xff] %vm2774, %v2894
        %v2927 = vrot.slane %v2113, 4
        %v2928 = vrot.slane %v1865, 6
        %v2929 = vsel %vm589, %v2927, %v2928
        %v2930 = vrot.slane %v2928, 4
        %v2931 = vrot.slane %v1866, 6
        %v2932 = vsel %vm589, %v2930, %v2931
        %v2933 = vrot.slane %v2931, 4
        %v2934 = vrot.slane %v1867, 6
        %v2935 = vsel %vm589, %v2933, %v2934
        %v2936 = vrot.slane %v2123, 4
        %v2937 = vrot.slane %v1873, 6
        %v2938 = vsel %vm589, %v2936, %v2937
        %v2939 = vrot.slane %v2937, 4
        %v2940 = vrot.slane %v1874, 6
        %v2941 = vsel %vm589, %v2939, %v2940
        %v2942 = vrot.slane %v2940, 4
        %v2943 = vrot.slane %v1875, 6
        %v2944 = vsel %vm589, %v2942, %v2943
        %v2945 = vrot.slane %v2133, 4
        %v2946 = vrot.slane %v1881, 6
        %v2947 = vsel %vm589, %v2945, %v2946
        %v2948 = vrot.slane %v2946, 4
        %v2949 = vrot.slane %v1882, 6
        %v2950 = vsel %vm589, %v2948, %v2949
        %v2951 = vrot.slane %v2949, 4
        %v2952 = vrot.slane %v1883, 6
        %v2953 = vsel %vm589, %v2951, %v2952
        %v2954 = vrot.slane %v2143, 4
        %v2955 = vrot.slane %v1889, 6
        %v2956 = vsel %vm589, %v2954, %v2955
        %v2957 = vrot.slane %v2955, 4
        %v2958 = vrot.slane %v1890, 6
        %v2959 = vsel %vm589, %v2957, %v2958
        %v2960 = vrot.slane %v2958, 4
        %v2961 = vrot.slane %v1891, 6
        %v2962 = vsel %vm589, %v2960, %v2961
        %v2963 = vrot.slane %v2153, 4
        %v2964 = vrot.slane %v1897, 6
        %v2965 = vsel %vm589, %v2963, %v2964
        %v2966 = vrot.slane %v2964, 4
        %v2967 = vrot.slane %v1898, 6
        %v2968 = vsel %vm589, %v2966, %v2967
        %v2969 = vrot.slane %v2967, 4
        %v2970 = vrot.slane %v1899, 6
        %v2971 = vsel %vm589, %v2969, %v2970
        %v2972 = vrot.slane %v2163, 4
        %v2973 = vrot.slane %v1905, 6
        %v2974 = vsel %vm589, %v2972, %v2973
        %v2975 = vrot.slane %v2973, 4
        %v2976 = vrot.slane %v1906, 6
        %v2977 = vsel %vm589, %v2975, %v2976
        %v2978 = vrot.slane %v2976, 4
        %v2979 = vrot.slane %v1907, 6
        %v2980 = vsel %vm589, %v2978, %v2979
        %v2981 = vrot.slane %v2173, 4
        %v2982 = vrot.slane %v1913, 6
        %v2983 = vsel %vm589, %v2981, %v2982
        %v2984 = vrot.slane %v2982, 4
        %v2985 = vrot.slane %v1914, 6
        %v2986 = vsel %vm589, %v2984, %v2985
        %v2987 = vrot.slane %v2985, 4
        %v2988 = vrot.slane %v1915, 6
        %v2989 = vsel %vm589, %v2987, %v2988
        %v2990 = vrot.slane %v2183, 4
        %v2991 = vrot.slane %v1921, 6
        %v2992 = vsel %vm589, %v2990, %v2991
        %v2993 = vrot.slane %v2991, 4
        %v2994 = vrot.slane %v1922, 6
        %v2995 = vsel %vm589, %v2993, %v2994
        %v2996 = vrot.slane %v2994, 4
        %v2997 = vrot.slane %v1923, 6
        %v2998 = vsel %vm589, %v2996, %v2997
        %v2999 = vunpack.c.l.b16 %v2929
        %v3000 = vunpack.c.l.b16 %v2932
        %v3001 = vunpack.c.l.b16 %v2935
        %v3002 = vunpack.c.l.b16 %v2938
        %v3003 = vunpack.c.l.b16 %v2941
        %v3004 = vunpack.c.l.b16 %v2944
        %v3005 = vunpack.c.l.b16 %v2947
        %v3006 = vunpack.c.l.b16 %v2950
        %v3007 = vunpack.c.l.b16 %v2953
        %v3008 = vunpack.c.l.b16 %v2956
        %v3009 = vunpack.c.l.b16 %v2959
        %v3010 = vunpack.c.l.b16 %v2962
        %v3011 = vunpack.c.l.b16 %v2965
        %v3012 = vunpack.c.l.b16 %v2968
        %v3013 = vunpack.c.l.b16 %v2971
        %v3014 = vunpack.c.l.b16 %v2974
        %v3015 = vunpack.c.l.b16 %v2977
        %v3016 = vunpack.c.l.b16 %v2980
        %v3017 = vunpack.c.l.b16 %v2983
        %v3018 = vunpack.c.l.b16 %v2986
        %v3019 = vunpack.c.l.b16 %v2989
        %v3020 = vunpack.c.l.b16 %v2992
        %v3021 = vunpack.c.l.b16 %v2995
        %v3022 = vunpack.c.l.b16 %v2998
        %v3023 = vpack.c.b16 %v3000, %v2999
        %v3024 = vpack.c.b16 %v3002, %v3001
        %v3025 = vpack.c.b16 %v3004, %v3003
        %v3026 = vpack.c.b16 %v3006, %v3005
        %v3027 = vpack.c.b16 %v3008, %v3007
        %v3028 = vpack.c.b16 %v3010, %v3009
        %v3029 = vpack.c.b16 %v3012, %v3011
        %v3030 = vpack.c.b16 %v3014, %v3013
        %v3031 = vpack.c.b16 %v3016, %v3015
        %v3032 = vpack.c.b16 %v3018, %v3017
        %v3033 = vpack.c.b16 %v3020, %v3019
        %v3034 = vpack.c.b16 %v3022, %v3021
        %3047 = vst.msk [vmem:[#allocation2 + $0x18] sm:$0xff] %vm2084, %v3023
        %3048 = vst.msk [vmem:[#allocation2 + $0x38] sm:$0xff] %vm2084, %v3024
        %3049 = vst.msk [vmem:[#allocation2 + $0x58] sm:$0xff] %vm2084, %v3025
        %3050 = vst.msk [vmem:[#allocation2 + $0x78] sm:$0xff] %vm2084, %v3026
        %3051 = vst.msk [vmem:[#allocation2 + $0x98] sm:$0xff] %vm2084, %v3027
        %3052 = vst.msk [vmem:[#allocation2 + $0xb8] sm:$0xff] %vm2084, %v3028
        %3053 = vst.msk [vmem:[#allocation2 + $0xd8] sm:$0xff] %vm2084, %v3029
        %3054 = vst.msk [vmem:[#allocation2 + $0xf8] sm:$0xff] %vm2084, %v3030
        %3055 = vst.msk [vmem:[#allocation2 + $0x118] sm:$0xff] %vm2084, %v3031
        %3056 = vst.msk [vmem:[#allocation2 + $0x138] sm:$0xff] %vm2084, %v3032
        %3057 = vst.msk [vmem:[#allocation2 + $0x158] sm:$0xff] %vm2084, %v3033
        %3058 = vst.msk [vmem:[#allocation2 + $0x178] sm:$0xff] %vm2084, %v3034
        %s3059 = sadd.s32 %s202, 24
        %s3060 = smul.u32 %s3059, 8
        %s3061 = smul.addr %s3060, 4
        %s3062 = scalar_lea.vmem %s195, %s3061
        %v3063 = vld [vmem:[%s3062 + $0x4] sm:$0xf]
        %v3064 = vld [vmem:[%s3062 + $0x8] sm:$0xf]
        %v3065 = vld [vmem:[%s3062 + $0xc] sm:$0xf]
        %v3066 = vld [vmem:[%s3062 + $0x10] sm:$0xf]
        %v3067 = vld [vmem:[%s3062 + $0x14] sm:$0xf]
        %v3068 = vld [vmem:[%s3062 + $0x24] sm:$0xf]
        %v3069 = vld [vmem:[%s3062 + $0x28] sm:$0xf]
        %v3070 = vld [vmem:[%s3062 + $0x2c] sm:$0xf]
        %v3071 = vld [vmem:[%s3062 + $0x30] sm:$0xf]
        %v3072 = vld [vmem:[%s3062 + $0x34] sm:$0xf]
        %v3073 = vld [vmem:[%s3062 + $0x44] sm:$0xf]
        %v3074 = vld [vmem:[%s3062 + $0x48] sm:$0xf]
        %v3075 = vld [vmem:[%s3062 + $0x4c] sm:$0xf]
        %v3076 = vld [vmem:[%s3062 + $0x50] sm:$0xf]
        %v3077 = vld [vmem:[%s3062 + $0x54] sm:$0xf]
        %v3078 = vld [vmem:[%s3062 + $0x64] sm:$0xf]
        %v3079 = vld [vmem:[%s3062 + $0x68] sm:$0xf]
        %v3080 = vld [vmem:[%s3062 + $0x6c] sm:$0xf]
        %v3081 = vld [vmem:[%s3062 + $0x70] sm:$0xf]
        %v3082 = vld [vmem:[%s3062 + $0x74] sm:$0xf]
        %v3083 = vld [vmem:[%s3062 + $0x84] sm:$0xf]
        %v3084 = vld [vmem:[%s3062 + $0x88] sm:$0xf]
        %v3085 = vld [vmem:[%s3062 + $0x8c] sm:$0xf]
        %v3086 = vld [vmem:[%s3062 + $0x90] sm:$0xf]
        %v3087 = vld [vmem:[%s3062 + $0x94] sm:$0xf]
        %v3088 = vld [vmem:[%s3062 + $0xa4] sm:$0xf]
        %v3089 = vld [vmem:[%s3062 + $0xa8] sm:$0xf]
        %v3090 = vld [vmem:[%s3062 + $0xac] sm:$0xf]
        %v3091 = vld [vmem:[%s3062 + $0xb0] sm:$0xf]
        %v3092 = vld [vmem:[%s3062 + $0xb4] sm:$0xf]
        %v3093 = vld [vmem:[%s3062 + $0xc4] sm:$0xf]
        %v3094 = vld [vmem:[%s3062 + $0xc8] sm:$0xf]
        %v3095 = vld [vmem:[%s3062 + $0xcc] sm:$0xf]
        %v3096 = vld [vmem:[%s3062 + $0xd0] sm:$0xf]
        %v3097 = vld [vmem:[%s3062 + $0xd4] sm:$0xf]
        %v3098 = vld [vmem:[%s3062 + $0xe4] sm:$0xf]
        %v3099 = vld [vmem:[%s3062 + $0xe8] sm:$0xf]
        %v3100 = vld [vmem:[%s3062 + $0xec] sm:$0xf]
        %v3101 = vld [vmem:[%s3062 + $0xf0] sm:$0xf]
        %v3102 = vld [vmem:[%s3062 + $0xf4] sm:$0xf]
        %v3135 = vrot.slane %v3063, 6
        %v3136 = vrot.slane %v3135, 4
        %v3137 = vrot.slane %v3064, 6
        %v3138 = vsel %vm589, %v3136, %v3137
        %v3139 = vrot.slane %v3137, 4
        %v3140 = vrot.slane %v3065, 6
        %v3141 = vsel %vm589, %v3139, %v3140
        %v3142 = vrot.slane %v3140, 4
        %v3143 = vrot.slane %v3066, 6
        %v3144 = vsel %vm589, %v3142, %v3143
        %v3145 = vrot.slane %v3068, 6
        %v3146 = vrot.slane %v3145, 4
        %v3147 = vrot.slane %v3069, 6
        %v3148 = vsel %vm589, %v3146, %v3147
        %v3149 = vrot.slane %v3147, 4
        %v3150 = vrot.slane %v3070, 6
        %v3151 = vsel %vm589, %v3149, %v3150
        %v3152 = vrot.slane %v3150, 4
        %v3153 = vrot.slane %v3071, 6
        %v3154 = vsel %vm589, %v3152, %v3153
        %v3155 = vrot.slane %v3073, 6
        %v3156 = vrot.slane %v3155, 4
        %v3157 = vrot.slane %v3074, 6
        %v3158 = vsel %vm589, %v3156, %v3157
        %v3159 = vrot.slane %v3157, 4
        %v3160 = vrot.slane %v3075, 6
        %v3161 = vsel %vm589, %v3159, %v3160
        %v3162 = vrot.slane %v3160, 4
        %v3163 = vrot.slane %v3076, 6
        %v3164 = vsel %vm589, %v3162, %v3163
        %v3165 = vrot.slane %v3078, 6
        %v3166 = vrot.slane %v3165, 4
        %v3167 = vrot.slane %v3079, 6
        %v3168 = vsel %vm589, %v3166, %v3167
        %v3169 = vrot.slane %v3167, 4
        %v3170 = vrot.slane %v3080, 6
        %v3171 = vsel %vm589, %v3169, %v3170
        %v3172 = vrot.slane %v3170, 4
        %v3173 = vrot.slane %v3081, 6
        %v3174 = vsel %vm589, %v3172, %v3173
        %v3175 = vrot.slane %v3083, 6
        %v3176 = vrot.slane %v3175, 4
        %v3177 = vrot.slane %v3084, 6
        %v3178 = vsel %vm589, %v3176, %v3177
        %v3179 = vrot.slane %v3177, 4
        %v3180 = vrot.slane %v3085, 6
        %v3181 = vsel %vm589, %v3179, %v3180
        %v3182 = vrot.slane %v3180, 4
        %v3183 = vrot.slane %v3086, 6
        %v3184 = vsel %vm589, %v3182, %v3183
        %v3185 = vrot.slane %v3088, 6
        %v3186 = vrot.slane %v3185, 4
        %v3187 = vrot.slane %v3089, 6
        %v3188 = vsel %vm589, %v3186, %v3187
        %v3189 = vrot.slane %v3187, 4
        %v3190 = vrot.slane %v3090, 6
        %v3191 = vsel %vm589, %v3189, %v3190
        %v3192 = vrot.slane %v3190, 4
        %v3193 = vrot.slane %v3091, 6
        %v3194 = vsel %vm589, %v3192, %v3193
        %v3195 = vrot.slane %v3093, 6
        %v3196 = vrot.slane %v3195, 4
        %v3197 = vrot.slane %v3094, 6
        %v3198 = vsel %vm589, %v3196, %v3197
        %v3199 = vrot.slane %v3197, 4
        %v3200 = vrot.slane %v3095, 6
        %v3201 = vsel %vm589, %v3199, %v3200
        %v3202 = vrot.slane %v3200, 4
        %v3203 = vrot.slane %v3096, 6
        %v3204 = vsel %vm589, %v3202, %v3203
        %v3205 = vrot.slane %v3098, 6
        %v3206 = vrot.slane %v3205, 4
        %v3207 = vrot.slane %v3099, 6
        %v3208 = vsel %vm589, %v3206, %v3207
        %v3209 = vrot.slane %v3207, 4
        %v3210 = vrot.slane %v3100, 6
        %v3211 = vsel %vm589, %v3209, %v3210
        %v3212 = vrot.slane %v3210, 4
        %v3213 = vrot.slane %v3101, 6
        %v3214 = vsel %vm589, %v3212, %v3213
        %v3215 = vunpack.c.l.b16 %v3138
        %v3216 = vunpack.c.l.b16 %v3141
        %v3217 = vunpack.c.l.b16 %v3144
        %v3218 = vunpack.c.l.b16 %v3148
        %v3219 = vunpack.c.l.b16 %v3151
        %v3220 = vunpack.c.l.b16 %v3154
        %v3221 = vunpack.c.l.b16 %v3158
        %v3222 = vunpack.c.l.b16 %v3161
        %v3223 = vunpack.c.l.b16 %v3164
        %v3224 = vunpack.c.l.b16 %v3168
        %v3225 = vunpack.c.l.b16 %v3171
        %v3226 = vunpack.c.l.b16 %v3174
        %v3227 = vunpack.c.l.b16 %v3178
        %v3228 = vunpack.c.l.b16 %v3181
        %v3229 = vunpack.c.l.b16 %v3184
        %v3230 = vunpack.c.l.b16 %v3188
        %v3231 = vunpack.c.l.b16 %v3191
        %v3232 = vunpack.c.l.b16 %v3194
        %v3233 = vunpack.c.l.b16 %v3198
        %v3234 = vunpack.c.l.b16 %v3201
        %v3235 = vunpack.c.l.b16 %v3204
        %v3236 = vunpack.c.l.b16 %v3208
        %v3237 = vunpack.c.l.b16 %v3211
        %v3238 = vunpack.c.l.b16 %v3214
        %v3239 = vpack.c.b16 %v3216, %v3215
        %v3240 = vpack.c.b16 %v3218, %v3217
        %v3241 = vpack.c.b16 %v3220, %v3219
        %v3242 = vpack.c.b16 %v3222, %v3221
        %v3243 = vpack.c.b16 %v3224, %v3223
        %v3244 = vpack.c.b16 %v3226, %v3225
        %v3245 = vpack.c.b16 %v3228, %v3227
        %v3246 = vpack.c.b16 %v3230, %v3229
        %v3247 = vpack.c.b16 %v3232, %v3231
        %v3248 = vpack.c.b16 %v3234, %v3233
        %v3249 = vpack.c.b16 %v3236, %v3235
        %v3250 = vpack.c.b16 %v3238, %v3237
        %3251 = vrot.lane.b32.xlu0 %v3239, 112
        %v3252 = vpop.permute.xlu0 %3251
        %3253 = vrot.lane.b32.xlu0 %v3240, 112
        %v3254 = vpop.permute.xlu0 %3253
        %3255 = vrot.lane.b32.xlu0 %v3241, 112
        %v3256 = vpop.permute.xlu0 %3255
        %3257 = vrot.lane.b32.xlu0 %v3242, 112
        %v3258 = vpop.permute.xlu0 %3257
        %3259 = vrot.lane.b32.xlu0 %v3243, 112
        %v3260 = vpop.permute.xlu0 %3259
        %3261 = vrot.lane.b32.xlu0 %v3244, 112
        %v3262 = vpop.permute.xlu0 %3261
        %3263 = vrot.lane.b32.xlu0 %v3245, 112
        %v3264 = vpop.permute.xlu0 %3263
        %3265 = vrot.lane.b32.xlu0 %v3246, 112
        %v3266 = vpop.permute.xlu0 %3265
        %3267 = vrot.lane.b32.xlu0 %v3247, 112
        %v3268 = vpop.permute.xlu0 %3267
        %3269 = vrot.lane.b32.xlu0 %v3248, 112
        %v3270 = vpop.permute.xlu0 %3269
        %3271 = vrot.lane.b32.xlu0 %v3249, 112
        %v3272 = vpop.permute.xlu0 %3271
        %3273 = vrot.lane.b32.xlu0 %v3250, 112
        %v3274 = vpop.permute.xlu0 %3273
        %3287 = vst.msk [vmem:[#allocation2] sm:$0xff] %vm2774, %v3252
        %3288 = vst.msk [vmem:[#allocation2 + $0x20] sm:$0xff] %vm2774, %v3254
        %3289 = vst.msk [vmem:[#allocation2 + $0x40] sm:$0xff] %vm2774, %v3256
        %3290 = vst.msk [vmem:[#allocation2 + $0x60] sm:$0xff] %vm2774, %v3258
        %3291 = vst.msk [vmem:[#allocation2 + $0x80] sm:$0xff] %vm2774, %v3260
        %3292 = vst.msk [vmem:[#allocation2 + $0xa0] sm:$0xff] %vm2774, %v3262
        %3293 = vst.msk [vmem:[#allocation2 + $0xc0] sm:$0xff] %vm2774, %v3264
        %3294 = vst.msk [vmem:[#allocation2 + $0xe0] sm:$0xff] %vm2774, %v3266
        %3295 = vst.msk [vmem:[#allocation2 + $0x100] sm:$0xff] %vm2774, %v3268
        %3296 = vst.msk [vmem:[#allocation2 + $0x120] sm:$0xff] %vm2774, %v3270
        %3297 = vst.msk [vmem:[#allocation2 + $0x140] sm:$0xff] %vm2774, %v3272
        %3298 = vst.msk [vmem:[#allocation2 + $0x160] sm:$0xff] %vm2774, %v3274
        %v3307 = vrot.slane %v3064, 5
        %v3308 = vrot.slane %v3307, 4
        %v3309 = vrot.slane %v3065, 5
        %v3310 = vsel %vm405, %v3308, %v3309
        %v3311 = vrot.slane %v3309, 4
        %v3312 = vrot.slane %v3066, 5
        %v3313 = vsel %vm405, %v3311, %v3312
        %v3314 = vrot.slane %v3312, 4
        %v3315 = vrot.slane %v3067, 5
        %v3316 = vsel %vm405, %v3314, %v3315
        %v3317 = vrot.slane %v3069, 5
        %v3318 = vrot.slane %v3317, 4
        %v3319 = vrot.slane %v3070, 5
        %v3320 = vsel %vm405, %v3318, %v3319
        %v3321 = vrot.slane %v3319, 4
        %v3322 = vrot.slane %v3071, 5
        %v3323 = vsel %vm405, %v3321, %v3322
        %v3324 = vrot.slane %v3322, 4
        %v3325 = vrot.slane %v3072, 5
        %v3326 = vsel %vm405, %v3324, %v3325
        %v3327 = vrot.slane %v3074, 5
        %v3328 = vrot.slane %v3327, 4
        %v3329 = vrot.slane %v3075, 5
        %v3330 = vsel %vm405, %v3328, %v3329
        %v3331 = vrot.slane %v3329, 4
        %v3332 = vrot.slane %v3076, 5
        %v3333 = vsel %vm405, %v3331, %v3332
        %v3334 = vrot.slane %v3332, 4
        %v3335 = vrot.slane %v3077, 5
        %v3336 = vsel %vm405, %v3334, %v3335
        %v3337 = vrot.slane %v3079, 5
        %v3338 = vrot.slane %v3337, 4
        %v3339 = vrot.slane %v3080, 5
        %v3340 = vsel %vm405, %v3338, %v3339
        %v3341 = vrot.slane %v3339, 4
        %v3342 = vrot.slane %v3081, 5
        %v3343 = vsel %vm405, %v3341, %v3342
        %v3344 = vrot.slane %v3342, 4
        %v3345 = vrot.slane %v3082, 5
        %v3346 = vsel %vm405, %v3344, %v3345
        %v3347 = vrot.slane %v3084, 5
        %v3348 = vrot.slane %v3347, 4
        %v3349 = vrot.slane %v3085, 5
        %v3350 = vsel %vm405, %v3348, %v3349
        %v3351 = vrot.slane %v3349, 4
        %v3352 = vrot.slane %v3086, 5
        %v3353 = vsel %vm405, %v3351, %v3352
        %v3354 = vrot.slane %v3352, 4
        %v3355 = vrot.slane %v3087, 5
        %v3356 = vsel %vm405, %v3354, %v3355
        %v3357 = vrot.slane %v3089, 5
        %v3358 = vrot.slane %v3357, 4
        %v3359 = vrot.slane %v3090, 5
        %v3360 = vsel %vm405, %v3358, %v3359
        %v3361 = vrot.slane %v3359, 4
        %v3362 = vrot.slane %v3091, 5
        %v3363 = vsel %vm405, %v3361, %v3362
        %v3364 = vrot.slane %v3362, 4
        %v3365 = vrot.slane %v3092, 5
        %v3366 = vsel %vm405, %v3364, %v3365
        %v3367 = vrot.slane %v3094, 5
        %v3368 = vrot.slane %v3367, 4
        %v3369 = vrot.slane %v3095, 5
        %v3370 = vsel %vm405, %v3368, %v3369
        %v3371 = vrot.slane %v3369, 4
        %v3372 = vrot.slane %v3096, 5
        %v3373 = vsel %vm405, %v3371, %v3372
        %v3374 = vrot.slane %v3372, 4
        %v3375 = vrot.slane %v3097, 5
        %v3376 = vsel %vm405, %v3374, %v3375
        %v3377 = vrot.slane %v3099, 5
        %v3378 = vrot.slane %v3377, 4
        %v3379 = vrot.slane %v3100, 5
        %v3380 = vsel %vm405, %v3378, %v3379
        %v3381 = vrot.slane %v3379, 4
        %v3382 = vrot.slane %v3101, 5
        %v3383 = vsel %vm405, %v3381, %v3382
        %v3384 = vrot.slane %v3382, 4
        %v3385 = vrot.slane %v3102, 5
        %v3386 = vsel %vm405, %v3384, %v3385
        %v3387 = vunpack.c.l.b16 %v3310
        %v3388 = vunpack.c.l.b16 %v3313
        %v3389 = vunpack.c.l.b16 %v3316
        %v3390 = vunpack.c.l.b16 %v3320
        %v3391 = vunpack.c.l.b16 %v3323
        %v3392 = vunpack.c.l.b16 %v3326
        %v3393 = vunpack.c.l.b16 %v3330
        %v3394 = vunpack.c.l.b16 %v3333
        %v3395 = vunpack.c.l.b16 %v3336
        %v3396 = vunpack.c.l.b16 %v3340
        %v3397 = vunpack.c.l.b16 %v3343
        %v3398 = vunpack.c.l.b16 %v3346
        %v3399 = vunpack.c.l.b16 %v3350
        %v3400 = vunpack.c.l.b16 %v3353
        %v3401 = vunpack.c.l.b16 %v3356
        %v3402 = vunpack.c.l.b16 %v3360
        %v3403 = vunpack.c.l.b16 %v3363
        %v3404 = vunpack.c.l.b16 %v3366
        %v3405 = vunpack.c.l.b16 %v3370
        %v3406 = vunpack.c.l.b16 %v3373
        %v3407 = vunpack.c.l.b16 %v3376
        %v3408 = vunpack.c.l.b16 %v3380
        %v3409 = vunpack.c.l.b16 %v3383
        %v3410 = vunpack.c.l.b16 %v3386
        %v3411 = vpack.c.b16 %v3388, %v3387
        %v3412 = vpack.c.b16 %v3390, %v3389
        %v3413 = vpack.c.b16 %v3392, %v3391
        %v3414 = vpack.c.b16 %v3394, %v3393
        %v3415 = vpack.c.b16 %v3396, %v3395
        %v3416 = vpack.c.b16 %v3398, %v3397
        %v3417 = vpack.c.b16 %v3400, %v3399
        %v3418 = vpack.c.b16 %v3402, %v3401
        %v3419 = vpack.c.b16 %v3404, %v3403
        %v3420 = vpack.c.b16 %v3406, %v3405
        %v3421 = vpack.c.b16 %v3408, %v3407
        %v3422 = vpack.c.b16 %v3410, %v3409
        %3435 = vst.msk [vmem:[#allocation2 + $0x8] sm:$0xff] %vm2084, %v3411
        %3436 = vst.msk [vmem:[#allocation2 + $0x28] sm:$0xff] %vm2084, %v3412
        %3437 = vst.msk [vmem:[#allocation2 + $0x48] sm:$0xff] %vm2084, %v3413
        %3438 = vst.msk [vmem:[#allocation2 + $0x68] sm:$0xff] %vm2084, %v3414
        %3439 = vst.msk [vmem:[#allocation2 + $0x88] sm:$0xff] %vm2084, %v3415
        %3440 = vst.msk [vmem:[#allocation2 + $0xa8] sm:$0xff] %vm2084, %v3416
        %3441 = vst.msk [vmem:[#allocation2 + $0xc8] sm:$0xff] %vm2084, %v3417
        %3442 = vst.msk [vmem:[#allocation2 + $0xe8] sm:$0xff] %vm2084, %v3418
        %3443 = vst.msk [vmem:[#allocation2 + $0x108] sm:$0xff] %vm2084, %v3419
        %3444 = vst.msk [vmem:[#allocation2 + $0x128] sm:$0xff] %vm2084, %v3420
        %3445 = vst.msk [vmem:[#allocation2 + $0x148] sm:$0xff] %vm2084, %v3421
        %3446 = vst.msk [vmem:[#allocation2 + $0x168] sm:$0xff] %vm2084, %v3422
        %v3447 = vunpack.c.l.b16 %v3065
        %v3448 = vunpack.c.l.b16 %v3066
        %v3449 = vunpack.c.l.b16 %v3067
        %v3450 = vunpack.c.l.b16 %v3070
        %v3451 = vunpack.c.l.b16 %v3071
        %v3452 = vunpack.c.l.b16 %v3072
        %v3453 = vunpack.c.l.b16 %v3075
        %v3454 = vunpack.c.l.b16 %v3076
        %v3455 = vunpack.c.l.b16 %v3077
        %v3456 = vunpack.c.l.b16 %v3080
        %v3457 = vunpack.c.l.b16 %v3081
        %v3458 = vunpack.c.l.b16 %v3082
        %v3459 = vunpack.c.l.b16 %v3085
        %v3460 = vunpack.c.l.b16 %v3086
        %v3461 = vunpack.c.l.b16 %v3087
        %v3462 = vunpack.c.l.b16 %v3090
        %v3463 = vunpack.c.l.b16 %v3091
        %v3464 = vunpack.c.l.b16 %v3092
        %v3465 = vunpack.c.l.b16 %v3095
        %v3466 = vunpack.c.l.b16 %v3096
        %v3467 = vunpack.c.l.b16 %v3097
        %v3468 = vunpack.c.l.b16 %v3100
        %v3469 = vunpack.c.l.b16 %v3101
        %v3470 = vunpack.c.l.b16 %v3102
        %v3471 = vpack.c.b16 %v3448, %v3447
        %v3472 = vpack.c.b16 %v3450, %v3449
        %v3473 = vpack.c.b16 %v3452, %v3451
        %v3474 = vpack.c.b16 %v3454, %v3453
        %v3475 = vpack.c.b16 %v3456, %v3455
        %v3476 = vpack.c.b16 %v3458, %v3457
        %v3477 = vpack.c.b16 %v3460, %v3459
        %v3478 = vpack.c.b16 %v3462, %v3461
        %v3479 = vpack.c.b16 %v3464, %v3463
        %v3480 = vpack.c.b16 %v3466, %v3465
        %v3481 = vpack.c.b16 %v3468, %v3467
        %v3482 = vpack.c.b16 %v3470, %v3469
        %3483 = vrot.lane.b32.xlu0 %v3471, 16
        %v3484 = vpop.permute.xlu0 %3483
        %3485 = vrot.lane.b32.xlu0 %v3472, 16
        %v3486 = vpop.permute.xlu0 %3485
        %3487 = vrot.lane.b32.xlu0 %v3473, 16
        %v3488 = vpop.permute.xlu0 %3487
        %3489 = vrot.lane.b32.xlu0 %v3474, 16
        %v3490 = vpop.permute.xlu0 %3489
        %3491 = vrot.lane.b32.xlu0 %v3475, 16
        %v3492 = vpop.permute.xlu0 %3491
        %3493 = vrot.lane.b32.xlu0 %v3476, 16
        %v3494 = vpop.permute.xlu0 %3493
        %3495 = vrot.lane.b32.xlu0 %v3477, 16
        %v3496 = vpop.permute.xlu0 %3495
        %3497 = vrot.lane.b32.xlu0 %v3478, 16
        %v3498 = vpop.permute.xlu0 %3497
        %3499 = vrot.lane.b32.xlu0 %v3479, 16
        %v3500 = vpop.permute.xlu0 %3499
        %3501 = vrot.lane.b32.xlu0 %v3480, 16
        %v3502 = vpop.permute.xlu0 %3501
        %3503 = vrot.lane.b32.xlu0 %v3481, 16
        %v3504 = vpop.permute.xlu0 %3503
        %3505 = vrot.lane.b32.xlu0 %v3482, 16
        %v3506 = vpop.permute.xlu0 %3505
        %3519 = vst.msk [vmem:[#allocation2 + $0x8] sm:$0xff] %vm1587, %v3484
        %3520 = vst.msk [vmem:[#allocation2 + $0x28] sm:$0xff] %vm1587, %v3486
        %3521 = vst.msk [vmem:[#allocation2 + $0x48] sm:$0xff] %vm1587, %v3488
        %3522 = vst.msk [vmem:[#allocation2 + $0x68] sm:$0xff] %vm1587, %v3490
        %3523 = vst.msk [vmem:[#allocation2 + $0x88] sm:$0xff] %vm1587, %v3492
        %3524 = vst.msk [vmem:[#allocation2 + $0xa8] sm:$0xff] %vm1587, %v3494
        %3525 = vst.msk [vmem:[#allocation2 + $0xc8] sm:$0xff] %vm1587, %v3496
        %3526 = vst.msk [vmem:[#allocation2 + $0xe8] sm:$0xff] %vm1587, %v3498
        %3527 = vst.msk [vmem:[#allocation2 + $0x108] sm:$0xff] %vm1587, %v3500
        %3528 = vst.msk [vmem:[#allocation2 + $0x128] sm:$0xff] %vm1587, %v3502
        %3529 = vst.msk [vmem:[#allocation2 + $0x148] sm:$0xff] %vm1587, %v3504
        %3530 = vst.msk [vmem:[#allocation2 + $0x168] sm:$0xff] %vm1587, %v3506
        %s3531 = sadd.s32 %s202, 30
        %s3532 = smul.u32 %s3531, 8
        %s3533 = smul.addr %s3532, 4
        %s3534 = scalar_lea.vmem %s195, %s3533
        %v3535 = vld [vmem:[%s3534] sm:$0xf]
        %v3536 = vld [vmem:[%s3534 + $0x4] sm:$0xf]
        %v3537 = vld [vmem:[%s3534 + $0x8] sm:$0xf]
        %v3538 = vld [vmem:[%s3534 + $0xc] sm:$0xf]
        %v3539 = vld [vmem:[%s3534 + $0x10] sm:$0xf]
        %v3540 = vld [vmem:[%s3534 + $0x14] sm:$0xf]
        %v3541 = vld [vmem:[%s3534 + $0x18] sm:$0xf]
        %v3542 = vld [vmem:[%s3534 + $0x20] sm:$0xf]
        %v3543 = vld [vmem:[%s3534 + $0x24] sm:$0xf]
        %v3544 = vld [vmem:[%s3534 + $0x28] sm:$0xf]
        %v3545 = vld [vmem:[%s3534 + $0x2c] sm:$0xf]
        %v3546 = vld [vmem:[%s3534 + $0x30] sm:$0xf]
        %v3547 = vld [vmem:[%s3534 + $0x34] sm:$0xf]
        %v3548 = vld [vmem:[%s3534 + $0x38] sm:$0xf]
        %v3549 = vld [vmem:[%s3534 + $0x40] sm:$0xf]
        %v3550 = vld [vmem:[%s3534 + $0x44] sm:$0xf]
        %v3551 = vld [vmem:[%s3534 + $0x48] sm:$0xf]
        %v3552 = vld [vmem:[%s3534 + $0x4c] sm:$0xf]
        %v3553 = vld [vmem:[%s3534 + $0x50] sm:$0xf]
        %v3554 = vld [vmem:[%s3534 + $0x54] sm:$0xf]
        %v3555 = vld [vmem:[%s3534 + $0x58] sm:$0xf]
        %v3556 = vld [vmem:[%s3534 + $0x60] sm:$0xf]
        %v3557 = vld [vmem:[%s3534 + $0x64] sm:$0xf]
        %v3558 = vld [vmem:[%s3534 + $0x68] sm:$0xf]
        %v3559 = vld [vmem:[%s3534 + $0x6c] sm:$0xf]
        %v3560 = vld [vmem:[%s3534 + $0x70] sm:$0xf]
        %v3561 = vld [vmem:[%s3534 + $0x74] sm:$0xf]
        %v3562 = vld [vmem:[%s3534 + $0x78] sm:$0xf]
        %v3563 = vld [vmem:[%s3534 + $0x80] sm:$0xf]
        %v3564 = vld [vmem:[%s3534 + $0x84] sm:$0xf]
        %v3565 = vld [vmem:[%s3534 + $0x88] sm:$0xf]
        %v3566 = vld [vmem:[%s3534 + $0x8c] sm:$0xf]
        %v3567 = vld [vmem:[%s3534 + $0x90] sm:$0xf]
        %v3568 = vld [vmem:[%s3534 + $0x94] sm:$0xf]
        %v3569 = vld [vmem:[%s3534 + $0x98] sm:$0xf]
        %v3570 = vld [vmem:[%s3534 + $0xa0] sm:$0xf]
        %v3571 = vld [vmem:[%s3534 + $0xa4] sm:$0xf]
        %v3572 = vld [vmem:[%s3534 + $0xa8] sm:$0xf]
        %v3573 = vld [vmem:[%s3534 + $0xac] sm:$0xf]
        %v3574 = vld [vmem:[%s3534 + $0xb0] sm:$0xf]
        %v3575 = vld [vmem:[%s3534 + $0xb4] sm:$0xf]
        %v3576 = vld [vmem:[%s3534 + $0xb8] sm:$0xf]
        %v3577 = vld [vmem:[%s3534 + $0xc0] sm:$0xf]
        %v3578 = vld [vmem:[%s3534 + $0xc4] sm:$0xf]
        %v3579 = vld [vmem:[%s3534 + $0xc8] sm:$0xf]
        %v3580 = vld [vmem:[%s3534 + $0xcc] sm:$0xf]
        %v3581 = vld [vmem:[%s3534 + $0xd0] sm:$0xf]
        %v3582 = vld [vmem:[%s3534 + $0xd4] sm:$0xf]
        %v3583 = vld [vmem:[%s3534 + $0xd8] sm:$0xf]
        %v3584 = vld [vmem:[%s3534 + $0xe0] sm:$0xf]
        %v3585 = vld [vmem:[%s3534 + $0xe4] sm:$0xf]
        %v3586 = vld [vmem:[%s3534 + $0xe8] sm:$0xf]
        %v3587 = vld [vmem:[%s3534 + $0xec] sm:$0xf]
        %v3588 = vld [vmem:[%s3534 + $0xf0] sm:$0xf]
        %v3589 = vld [vmem:[%s3534 + $0xf4] sm:$0xf]
        %v3590 = vld [vmem:[%s3534 + $0xf8] sm:$0xf]
        %v3623 = vrot.slane %v3535, 7
        %v3624 = vrot.slane %v3623, 4
        %v3625 = vrot.slane %v3536, 7
        %v3626 = vsel %vm849, %v3624, %v3625
        %v3627 = vrot.slane %v3625, 4
        %v3628 = vrot.slane %v3537, 7
        %v3629 = vsel %vm849, %v3627, %v3628
        %v3630 = vrot.slane %v3628, 4
        %v3631 = vrot.slane %v3538, 7
        %v3632 = vsel %vm849, %v3630, %v3631
        %v3633 = vrot.slane %v3542, 7
        %v3634 = vrot.slane %v3633, 4
        %v3635 = vrot.slane %v3543, 7
        %v3636 = vsel %vm849, %v3634, %v3635
        %v3637 = vrot.slane %v3635, 4
        %v3638 = vrot.slane %v3544, 7
        %v3639 = vsel %vm849, %v3637, %v3638
        %v3640 = vrot.slane %v3638, 4
        %v3641 = vrot.slane %v3545, 7
        %v3642 = vsel %vm849, %v3640, %v3641
        %v3643 = vrot.slane %v3549, 7
        %v3644 = vrot.slane %v3643, 4
        %v3645 = vrot.slane %v3550, 7
        %v3646 = vsel %vm849, %v3644, %v3645
        %v3647 = vrot.slane %v3645, 4
        %v3648 = vrot.slane %v3551, 7
        %v3649 = vsel %vm849, %v3647, %v3648
        %v3650 = vrot.slane %v3648, 4
        %v3651 = vrot.slane %v3552, 7
        %v3652 = vsel %vm849, %v3650, %v3651
        %v3653 = vrot.slane %v3556, 7
        %v3654 = vrot.slane %v3653, 4
        %v3655 = vrot.slane %v3557, 7
        %v3656 = vsel %vm849, %v3654, %v3655
        %v3657 = vrot.slane %v3655, 4
        %v3658 = vrot.slane %v3558, 7
        %v3659 = vsel %vm849, %v3657, %v3658
        %v3660 = vrot.slane %v3658, 4
        %v3661 = vrot.slane %v3559, 7
        %v3662 = vsel %vm849, %v3660, %v3661
        %v3663 = vrot.slane %v3563, 7
        %v3664 = vrot.slane %v3663, 4
        %v3665 = vrot.slane %v3564, 7
        %v3666 = vsel %vm849, %v3664, %v3665
        %v3667 = vrot.slane %v3665, 4
        %v3668 = vrot.slane %v3565, 7
        %v3669 = vsel %vm849, %v3667, %v3668
        %v3670 = vrot.slane %v3668, 4
        %v3671 = vrot.slane %v3566, 7
        %v3672 = vsel %vm849, %v3670, %v3671
        %v3673 = vrot.slane %v3570, 7
        %v3674 = vrot.slane %v3673, 4
        %v3675 = vrot.slane %v3571, 7
        %v3676 = vsel %vm849, %v3674, %v3675
        %v3677 = vrot.slane %v3675, 4
        %v3678 = vrot.slane %v3572, 7
        %v3679 = vsel %vm849, %v3677, %v3678
        %v3680 = vrot.slane %v3678, 4
        %v3681 = vrot.slane %v3573, 7
        %v3682 = vsel %vm849, %v3680, %v3681
        %v3683 = vrot.slane %v3577, 7
        %v3684 = vrot.slane %v3683, 4
        %v3685 = vrot.slane %v3578, 7
        %v3686 = vsel %vm849, %v3684, %v3685
        %v3687 = vrot.slane %v3685, 4
        %v3688 = vrot.slane %v3579, 7
        %v3689 = vsel %vm849, %v3687, %v3688
        %v3690 = vrot.slane %v3688, 4
        %v3691 = vrot.slane %v3580, 7
        %v3692 = vsel %vm849, %v3690, %v3691
        %v3693 = vrot.slane %v3584, 7
        %v3694 = vrot.slane %v3693, 4
        %v3695 = vrot.slane %v3585, 7
        %v3696 = vsel %vm849, %v3694, %v3695
        %v3697 = vrot.slane %v3695, 4
        %v3698 = vrot.slane %v3586, 7
        %v3699 = vsel %vm849, %v3697, %v3698
        %v3700 = vrot.slane %v3698, 4
        %v3701 = vrot.slane %v3587, 7
        %v3702 = vsel %vm849, %v3700, %v3701
        %v3703 = vunpack.c.l.b16 %v3626
        %v3704 = vunpack.c.l.b16 %v3629
        %v3705 = vunpack.c.l.b16 %v3632
        %v3706 = vunpack.c.l.b16 %v3636
        %v3707 = vunpack.c.l.b16 %v3639
        %v3708 = vunpack.c.l.b16 %v3642
        %v3709 = vunpack.c.l.b16 %v3646
        %v3710 = vunpack.c.l.b16 %v3649
        %v3711 = vunpack.c.l.b16 %v3652
        %v3712 = vunpack.c.l.b16 %v3656
        %v3713 = vunpack.c.l.b16 %v3659
        %v3714 = vunpack.c.l.b16 %v3662
        %v3715 = vunpack.c.l.b16 %v3666
        %v3716 = vunpack.c.l.b16 %v3669
        %v3717 = vunpack.c.l.b16 %v3672
        %v3718 = vunpack.c.l.b16 %v3676
        %v3719 = vunpack.c.l.b16 %v3679
        %v3720 = vunpack.c.l.b16 %v3682
        %v3721 = vunpack.c.l.b16 %v3686
        %v3722 = vunpack.c.l.b16 %v3689
        %v3723 = vunpack.c.l.b16 %v3692
        %v3724 = vunpack.c.l.b16 %v3696
        %v3725 = vunpack.c.l.b16 %v3699
        %v3726 = vunpack.c.l.b16 %v3702
        %v3727 = vpack.c.b16 %v3704, %v3703
        %v3728 = vpack.c.b16 %v3706, %v3705
        %v3729 = vpack.c.b16 %v3708, %v3707
        %v3730 = vpack.c.b16 %v3710, %v3709
        %v3731 = vpack.c.b16 %v3712, %v3711
        %v3732 = vpack.c.b16 %v3714, %v3713
        %v3733 = vpack.c.b16 %v3716, %v3715
        %v3734 = vpack.c.b16 %v3718, %v3717
        %v3735 = vpack.c.b16 %v3720, %v3719
        %v3736 = vpack.c.b16 %v3722, %v3721
        %v3737 = vpack.c.b16 %v3724, %v3723
        %v3738 = vpack.c.b16 %v3726, %v3725
        %3751 = vst.msk [vmem:[#allocation2 + $0x10] sm:$0xff] %vm2084, %v3727
        %3752 = vst.msk [vmem:[#allocation2 + $0x30] sm:$0xff] %vm2084, %v3728
        %3753 = vst.msk [vmem:[#allocation2 + $0x50] sm:$0xff] %vm2084, %v3729
        %3754 = vst.msk [vmem:[#allocation2 + $0x70] sm:$0xff] %vm2084, %v3730
        %3755 = vst.msk [vmem:[#allocation2 + $0x90] sm:$0xff] %vm2084, %v3731
        %3756 = vst.msk [vmem:[#allocation2 + $0xb0] sm:$0xff] %vm2084, %v3732
        %3757 = vst.msk [vmem:[#allocation2 + $0xd0] sm:$0xff] %vm2084, %v3733
        %3758 = vst.msk [vmem:[#allocation2 + $0xf0] sm:$0xff] %vm2084, %v3734
        %3759 = vst.msk [vmem:[#allocation2 + $0x110] sm:$0xff] %vm2084, %v3735
        %3760 = vst.msk [vmem:[#allocation2 + $0x130] sm:$0xff] %vm2084, %v3736
        %3761 = vst.msk [vmem:[#allocation2 + $0x150] sm:$0xff] %vm2084, %v3737
        %3762 = vst.msk [vmem:[#allocation2 + $0x170] sm:$0xff] %vm2084, %v3738
        %v3779 = vrot.slane %v3537, 5
        %v3780 = vrot.slane %v3779, 4
        %v3781 = vrot.slane %v3538, 5
        %v3782 = vsel %vm405, %v3780, %v3781
        %v3783 = vrot.slane %v3781, 4
        %v3784 = vrot.slane %v3539, 5
        %v3785 = vsel %vm405, %v3783, %v3784
        %v3786 = vrot.slane %v3784, 4
        %v3787 = vrot.slane %v3540, 5
        %v3788 = vsel %vm405, %v3786, %v3787
        %v3789 = vrot.slane %v3544, 5
        %v3790 = vrot.slane %v3789, 4
        %v3791 = vrot.slane %v3545, 5
        %v3792 = vsel %vm405, %v3790, %v3791
        %v3793 = vrot.slane %v3791, 4
        %v3794 = vrot.slane %v3546, 5
        %v3795 = vsel %vm405, %v3793, %v3794
        %v3796 = vrot.slane %v3794, 4
        %v3797 = vrot.slane %v3547, 5
        %v3798 = vsel %vm405, %v3796, %v3797
        %v3799 = vrot.slane %v3551, 5
        %v3800 = vrot.slane %v3799, 4
        %v3801 = vrot.slane %v3552, 5
        %v3802 = vsel %vm405, %v3800, %v3801
        %v3803 = vrot.slane %v3801, 4
        %v3804 = vrot.slane %v3553, 5
        %v3805 = vsel %vm405, %v3803, %v3804
        %v3806 = vrot.slane %v3804, 4
        %v3807 = vrot.slane %v3554, 5
        %v3808 = vsel %vm405, %v3806, %v3807
        %v3809 = vrot.slane %v3558, 5
        %v3810 = vrot.slane %v3809, 4
        %v3811 = vrot.slane %v3559, 5
        %v3812 = vsel %vm405, %v3810, %v3811
        %v3813 = vrot.slane %v3811, 4
        %v3814 = vrot.slane %v3560, 5
        %v3815 = vsel %vm405, %v3813, %v3814
        %v3816 = vrot.slane %v3814, 4
        %v3817 = vrot.slane %v3561, 5
        %v3818 = vsel %vm405, %v3816, %v3817
        %v3819 = vrot.slane %v3565, 5
        %v3820 = vrot.slane %v3819, 4
        %v3821 = vrot.slane %v3566, 5
        %v3822 = vsel %vm405, %v3820, %v3821
        %v3823 = vrot.slane %v3821, 4
        %v3824 = vrot.slane %v3567, 5
        %v3825 = vsel %vm405, %v3823, %v3824
        %v3826 = vrot.slane %v3824, 4
        %v3827 = vrot.slane %v3568, 5
        %v3828 = vsel %vm405, %v3826, %v3827
        %v3829 = vrot.slane %v3572, 5
        %v3830 = vrot.slane %v3829, 4
        %v3831 = vrot.slane %v3573, 5
        %v3832 = vsel %vm405, %v3830, %v3831
        %v3833 = vrot.slane %v3831, 4
        %v3834 = vrot.slane %v3574, 5
        %v3835 = vsel %vm405, %v3833, %v3834
        %v3836 = vrot.slane %v3834, 4
        %v3837 = vrot.slane %v3575, 5
        %v3838 = vsel %vm405, %v3836, %v3837
        %v3839 = vrot.slane %v3579, 5
        %v3840 = vrot.slane %v3839, 4
        %v3841 = vrot.slane %v3580, 5
        %v3842 = vsel %vm405, %v3840, %v3841
        %v3843 = vrot.slane %v3841, 4
        %v3844 = vrot.slane %v3581, 5
        %v3845 = vsel %vm405, %v3843, %v3844
        %v3846 = vrot.slane %v3844, 4
        %v3847 = vrot.slane %v3582, 5
        %v3848 = vsel %vm405, %v3846, %v3847
        %v3849 = vrot.slane %v3586, 5
        %v3850 = vrot.slane %v3849, 4
        %v3851 = vrot.slane %v3587, 5
        %v3852 = vsel %vm405, %v3850, %v3851
        %v3853 = vrot.slane %v3851, 4
        %v3854 = vrot.slane %v3588, 5
        %v3855 = vsel %vm405, %v3853, %v3854
        %v3856 = vrot.slane %v3854, 4
        %v3857 = vrot.slane %v3589, 5
        %v3858 = vsel %vm405, %v3856, %v3857
        %v3859 = vunpack.c.l.b16 %v3782
        %v3860 = vunpack.c.l.b16 %v3785
        %v3861 = vunpack.c.l.b16 %v3788
        %v3862 = vunpack.c.l.b16 %v3792
        %v3863 = vunpack.c.l.b16 %v3795
        %v3864 = vunpack.c.l.b16 %v3798
        %v3865 = vunpack.c.l.b16 %v3802
        %v3866 = vunpack.c.l.b16 %v3805
        %v3867 = vunpack.c.l.b16 %v3808
        %v3868 = vunpack.c.l.b16 %v3812
        %v3869 = vunpack.c.l.b16 %v3815
        %v3870 = vunpack.c.l.b16 %v3818
        %v3871 = vunpack.c.l.b16 %v3822
        %v3872 = vunpack.c.l.b16 %v3825
        %v3873 = vunpack.c.l.b16 %v3828
        %v3874 = vunpack.c.l.b16 %v3832
        %v3875 = vunpack.c.l.b16 %v3835
        %v3876 = vunpack.c.l.b16 %v3838
        %v3877 = vunpack.c.l.b16 %v3842
        %v3878 = vunpack.c.l.b16 %v3845
        %v3879 = vunpack.c.l.b16 %v3848
        %v3880 = vunpack.c.l.b16 %v3852
        %v3881 = vunpack.c.l.b16 %v3855
        %v3882 = vunpack.c.l.b16 %v3858
        %v3883 = vpack.c.b16 %v3860, %v3859
        %v3884 = vpack.c.b16 %v3862, %v3861
        %v3885 = vpack.c.b16 %v3864, %v3863
        %v3886 = vpack.c.b16 %v3866, %v3865
        %v3887 = vpack.c.b16 %v3868, %v3867
        %v3888 = vpack.c.b16 %v3870, %v3869
        %v3889 = vpack.c.b16 %v3872, %v3871
        %v3890 = vpack.c.b16 %v3874, %v3873
        %v3891 = vpack.c.b16 %v3876, %v3875
        %v3892 = vpack.c.b16 %v3878, %v3877
        %v3893 = vpack.c.b16 %v3880, %v3879
        %v3894 = vpack.c.b16 %v3882, %v3881
        %3895 = vrot.lane.b32.xlu0 %v3883, 16
        %v3896 = vpop.permute.xlu0 %3895
        %3897 = vrot.lane.b32.xlu0 %v3884, 16
        %v3898 = vpop.permute.xlu0 %3897
        %3899 = vrot.lane.b32.xlu0 %v3885, 16
        %v3900 = vpop.permute.xlu0 %3899
        %3901 = vrot.lane.b32.xlu0 %v3886, 16
        %v3902 = vpop.permute.xlu0 %3901
        %3903 = vrot.lane.b32.xlu0 %v3887, 16
        %v3904 = vpop.permute.xlu0 %3903
        %3905 = vrot.lane.b32.xlu0 %v3888, 16
        %v3906 = vpop.permute.xlu0 %3905
        %3907 = vrot.lane.b32.xlu0 %v3889, 16
        %v3908 = vpop.permute.xlu0 %3907
        %3909 = vrot.lane.b32.xlu0 %v3890, 16
        %v3910 = vpop.permute.xlu0 %3909
        %3911 = vrot.lane.b32.xlu0 %v3891, 16
        %v3912 = vpop.permute.xlu0 %3911
        %3913 = vrot.lane.b32.xlu0 %v3892, 16
        %v3914 = vpop.permute.xlu0 %3913
        %3915 = vrot.lane.b32.xlu0 %v3893, 16
        %v3916 = vpop.permute.xlu0 %3915
        %3917 = vrot.lane.b32.xlu0 %v3894, 16
        %v3918 = vpop.permute.xlu0 %3917
        %3931 = vst.msk [vmem:[#allocation2 + $0x10] sm:$0xff] %vm1587, %v3896
        %3932 = vst.msk [vmem:[#allocation2 + $0x30] sm:$0xff] %vm1587, %v3898
        %3933 = vst.msk [vmem:[#allocation2 + $0x50] sm:$0xff] %vm1587, %v3900
        %3934 = vst.msk [vmem:[#allocation2 + $0x70] sm:$0xff] %vm1587, %v3902
        %3935 = vst.msk [vmem:[#allocation2 + $0x90] sm:$0xff] %vm1587, %v3904
        %3936 = vst.msk [vmem:[#allocation2 + $0xb0] sm:$0xff] %vm1587, %v3906
        %3937 = vst.msk [vmem:[#allocation2 + $0xd0] sm:$0xff] %vm1587, %v3908
        %3938 = vst.msk [vmem:[#allocation2 + $0xf0] sm:$0xff] %vm1587, %v3910
        %3939 = vst.msk [vmem:[#allocation2 + $0x110] sm:$0xff] %vm1587, %v3912
        %3940 = vst.msk [vmem:[#allocation2 + $0x130] sm:$0xff] %vm1587, %v3914
        %3941 = vst.msk [vmem:[#allocation2 + $0x150] sm:$0xff] %vm1587, %v3916
        %3942 = vst.msk [vmem:[#allocation2 + $0x170] sm:$0xff] %vm1587, %v3918
        %v3951 = vrot.slane %v3631, 4
        %v3952 = vrot.slane %v3539, 7
        %v3953 = vsel %vm849, %v3951, %v3952
        %v3954 = vrot.slane %v3952, 4
        %v3955 = vrot.slane %v3540, 7
        %v3956 = vsel %vm849, %v3954, %v3955
        %v3957 = vrot.slane %v3955, 4
        %v3958 = vrot.slane %v3541, 7
        %v3959 = vsel %vm849, %v3957, %v3958
        %v3960 = vrot.slane %v3641, 4
        %v3961 = vrot.slane %v3546, 7
        %v3962 = vsel %vm849, %v3960, %v3961
        %v3963 = vrot.slane %v3961, 4
        %v3964 = vrot.slane %v3547, 7
        %v3965 = vsel %vm849, %v3963, %v3964
        %v3966 = vrot.slane %v3964, 4
        %v3967 = vrot.slane %v3548, 7
        %v3968 = vsel %vm849, %v3966, %v3967
        %v3969 = vrot.slane %v3651, 4
        %v3970 = vrot.slane %v3553, 7
        %v3971 = vsel %vm849, %v3969, %v3970
        %v3972 = vrot.slane %v3970, 4
        %v3973 = vrot.slane %v3554, 7
        %v3974 = vsel %vm849, %v3972, %v3973
        %v3975 = vrot.slane %v3973, 4
        %v3976 = vrot.slane %v3555, 7
        %v3977 = vsel %vm849, %v3975, %v3976
        %v3978 = vrot.slane %v3661, 4
        %v3979 = vrot.slane %v3560, 7
        %v3980 = vsel %vm849, %v3978, %v3979
        %v3981 = vrot.slane %v3979, 4
        %v3982 = vrot.slane %v3561, 7
        %v3983 = vsel %vm849, %v3981, %v3982
        %v3984 = vrot.slane %v3982, 4
        %v3985 = vrot.slane %v3562, 7
        %v3986 = vsel %vm849, %v3984, %v3985
        %v3987 = vrot.slane %v3671, 4
        %v3988 = vrot.slane %v3567, 7
        %v3989 = vsel %vm849, %v3987, %v3988
        %v3990 = vrot.slane %v3988, 4
        %v3991 = vrot.slane %v3568, 7
        %v3992 = vsel %vm849, %v3990, %v3991
        %v3993 = vrot.slane %v3991, 4
        %v3994 = vrot.slane %v3569, 7
        %v3995 = vsel %vm849, %v3993, %v3994
        %v3996 = vrot.slane %v3681, 4
        %v3997 = vrot.slane %v3574, 7
        %v3998 = vsel %vm849, %v3996, %v3997
        %v3999 = vrot.slane %v3997, 4
        %v4000 = vrot.slane %v3575, 7
        %v4001 = vsel %vm849, %v3999, %v4000
        %v4002 = vrot.slane %v4000, 4
        %v4003 = vrot.slane %v3576, 7
        %v4004 = vsel %vm849, %v4002, %v4003
        %v4005 = vrot.slane %v3691, 4
        %v4006 = vrot.slane %v3581, 7
        %v4007 = vsel %vm849, %v4005, %v4006
        %v4008 = vrot.slane %v4006, 4
        %v4009 = vrot.slane %v3582, 7
        %v4010 = vsel %vm849, %v4008, %v4009
        %v4011 = vrot.slane %v4009, 4
        %v4012 = vrot.slane %v3583, 7
        %v4013 = vsel %vm849, %v4011, %v4012
        %v4014 = vrot.slane %v3701, 4
        %v4015 = vrot.slane %v3588, 7
        %v4016 = vsel %vm849, %v4014, %v4015
        %v4017 = vrot.slane %v4015, 4
        %v4018 = vrot.slane %v3589, 7
        %v4019 = vsel %vm849, %v4017, %v4018
        %v4020 = vrot.slane %v4018, 4
        %v4021 = vrot.slane %v3590, 7
        %v4022 = vsel %vm849, %v4020, %v4021
        %v4023 = vunpack.c.l.b16 %v3953
        %v4024 = vunpack.c.l.b16 %v3956
        %v4025 = vunpack.c.l.b16 %v3959
        %v4026 = vunpack.c.l.b16 %v3962
        %v4027 = vunpack.c.l.b16 %v3965
        %v4028 = vunpack.c.l.b16 %v3968
        %v4029 = vunpack.c.l.b16 %v3971
        %v4030 = vunpack.c.l.b16 %v3974
        %v4031 = vunpack.c.l.b16 %v3977
        %v4032 = vunpack.c.l.b16 %v3980
        %v4033 = vunpack.c.l.b16 %v3983
        %v4034 = vunpack.c.l.b16 %v3986
        %v4035 = vunpack.c.l.b16 %v3989
        %v4036 = vunpack.c.l.b16 %v3992
        %v4037 = vunpack.c.l.b16 %v3995
        %v4038 = vunpack.c.l.b16 %v3998
        %v4039 = vunpack.c.l.b16 %v4001
        %v4040 = vunpack.c.l.b16 %v4004
        %v4041 = vunpack.c.l.b16 %v4007
        %v4042 = vunpack.c.l.b16 %v4010
        %v4043 = vunpack.c.l.b16 %v4013
        %v4044 = vunpack.c.l.b16 %v4016
        %v4045 = vunpack.c.l.b16 %v4019
        %v4046 = vunpack.c.l.b16 %v4022
        %v4047 = vpack.c.b16 %v4024, %v4023
        %v4048 = vpack.c.b16 %v4026, %v4025
        %v4049 = vpack.c.b16 %v4028, %v4027
        %v4050 = vpack.c.b16 %v4030, %v4029
        %v4051 = vpack.c.b16 %v4032, %v4031
        %v4052 = vpack.c.b16 %v4034, %v4033
        %v4053 = vpack.c.b16 %v4036, %v4035
        %v4054 = vpack.c.b16 %v4038, %v4037
        %v4055 = vpack.c.b16 %v4040, %v4039
        %v4056 = vpack.c.b16 %v4042, %v4041
        %v4057 = vpack.c.b16 %v4044, %v4043
        %v4058 = vpack.c.b16 %v4046, %v4045
        %4059 = vrot.lane.b32.xlu0 %v4047, 32
        %v4060 = vpop.permute.xlu0 %4059
        %4061 = vrot.lane.b32.xlu0 %v4048, 32
        %v4062 = vpop.permute.xlu0 %4061
        %4063 = vrot.lane.b32.xlu0 %v4049, 32
        %v4064 = vpop.permute.xlu0 %4063
        %4065 = vrot.lane.b32.xlu0 %v4050, 32
        %v4066 = vpop.permute.xlu0 %4065
        %4067 = vrot.lane.b32.xlu0 %v4051, 32
        %v4068 = vpop.permute.xlu0 %4067
        %4069 = vrot.lane.b32.xlu0 %v4052, 32
        %v4070 = vpop.permute.xlu0 %4069
        %4071 = vrot.lane.b32.xlu0 %v4053, 32
        %v4072 = vpop.permute.xlu0 %4071
        %4073 = vrot.lane.b32.xlu0 %v4054, 32
        %v4074 = vpop.permute.xlu0 %4073
        %4075 = vrot.lane.b32.xlu0 %v4055, 32
        %v4076 = vpop.permute.xlu0 %4075
        %4077 = vrot.lane.b32.xlu0 %v4056, 32
        %v4078 = vpop.permute.xlu0 %4077
        %4079 = vrot.lane.b32.xlu0 %v4057, 32
        %v4080 = vpop.permute.xlu0 %4079
        %4081 = vrot.lane.b32.xlu0 %v4058, 32
        %v4082 = vpop.permute.xlu0 %4081
        %4095 = vst.msk [vmem:[#allocation2 + $0x10] sm:$0xff] %vm1002, %v4060
        %4096 = vst.msk [vmem:[#allocation2 + $0x30] sm:$0xff] %vm1002, %v4062
        %4097 = vst.msk [vmem:[#allocation2 + $0x50] sm:$0xff] %vm1002, %v4064
        %4098 = vst.msk [vmem:[#allocation2 + $0x70] sm:$0xff] %vm1002, %v4066
        %4099 = vst.msk [vmem:[#allocation2 + $0x90] sm:$0xff] %vm1002, %v4068
        %4100 = vst.msk [vmem:[#allocation2 + $0xb0] sm:$0xff] %vm1002, %v4070
        %4101 = vst.msk [vmem:[#allocation2 + $0xd0] sm:$0xff] %vm1002, %v4072
        %4102 = vst.msk [vmem:[#allocation2 + $0xf0] sm:$0xff] %vm1002, %v4074
        %4103 = vst.msk [vmem:[#allocation2 + $0x110] sm:$0xff] %vm1002, %v4076
        %4104 = vst.msk [vmem:[#allocation2 + $0x130] sm:$0xff] %vm1002, %v4078
        %4105 = vst.msk [vmem:[#allocation2 + $0x150] sm:$0xff] %vm1002, %v4080
        %4106 = vst.msk [vmem:[#allocation2 + $0x170] sm:$0xff] %vm1002, %v4082
        %s4107 = sadd.s32 %s202, 36
        %s4108 = smul.u32 %s4107, 8
        %s4109 = smul.addr %s4108, 4
        %s4110 = scalar_lea.vmem %s195, %s4109
        %v4111 = vld [vmem:[%s4110] sm:$0xf]
        %v4112 = vld [vmem:[%s4110 + $0x4] sm:$0xf]
        %v4113 = vld [vmem:[%s4110 + $0x8] sm:$0xf]
        %v4114 = vld [vmem:[%s4110 + $0xc] sm:$0xf]
        %v4115 = vld [vmem:[%s4110 + $0x10] sm:$0xf]
        %v4116 = vld [vmem:[%s4110 + $0x14] sm:$0xf]
        %v4117 = vld [vmem:[%s4110 + $0x18] sm:$0xf]
        %v4118 = vld [vmem:[%s4110 + $0x1c] sm:$0x3]
        %v4119 = vld [vmem:[%s4110 + $0x20] sm:$0xf]
        %v4120 = vld [vmem:[%s4110 + $0x24] sm:$0xf]
        %v4121 = vld [vmem:[%s4110 + $0x28] sm:$0xf]
        %v4122 = vld [vmem:[%s4110 + $0x2c] sm:$0xf]
        %v4123 = vld [vmem:[%s4110 + $0x30] sm:$0xf]
        %v4124 = vld [vmem:[%s4110 + $0x34] sm:$0xf]
        %v4125 = vld [vmem:[%s4110 + $0x38] sm:$0xf]
        %v4126 = vld [vmem:[%s4110 + $0x3c] sm:$0x3]
        %v4127 = vld [vmem:[%s4110 + $0x40] sm:$0xf]
        %v4128 = vld [vmem:[%s4110 + $0x44] sm:$0xf]
        %v4129 = vld [vmem:[%s4110 + $0x48] sm:$0xf]
        %v4130 = vld [vmem:[%s4110 + $0x4c] sm:$0xf]
        %v4131 = vld [vmem:[%s4110 + $0x50] sm:$0xf]
        %v4132 = vld [vmem:[%s4110 + $0x54] sm:$0xf]
        %v4133 = vld [vmem:[%s4110 + $0x58] sm:$0xf]
        %v4134 = vld [vmem:[%s4110 + $0x5c] sm:$0x3]
        %v4135 = vld [vmem:[%s4110 + $0x60] sm:$0xf]
        %v4136 = vld [vmem:[%s4110 + $0x64] sm:$0xf]
        %v4137 = vld [vmem:[%s4110 + $0x68] sm:$0xf]
        %v4138 = vld [vmem:[%s4110 + $0x6c] sm:$0xf]
        %v4139 = vld [vmem:[%s4110 + $0x70] sm:$0xf]
        %v4140 = vld [vmem:[%s4110 + $0x74] sm:$0xf]
        %v4141 = vld [vmem:[%s4110 + $0x78] sm:$0xf]
        %v4142 = vld [vmem:[%s4110 + $0x7c] sm:$0x3]
        %v4143 = vld [vmem:[%s4110 + $0x80] sm:$0xf]
        %v4144 = vld [vmem:[%s4110 + $0x84] sm:$0xf]
        %v4145 = vld [vmem:[%s4110 + $0x88] sm:$0xf]
        %v4146 = vld [vmem:[%s4110 + $0x8c] sm:$0xf]
        %v4147 = vld [vmem:[%s4110 + $0x90] sm:$0xf]
        %v4148 = vld [vmem:[%s4110 + $0x94] sm:$0xf]
        %v4149 = vld [vmem:[%s4110 + $0x98] sm:$0xf]
        %v4150 = vld [vmem:[%s4110 + $0x9c] sm:$0x3]
        %v4151 = vld [vmem:[%s4110 + $0xa0] sm:$0xf]
        %v4152 = vld [vmem:[%s4110 + $0xa4] sm:$0xf]
        %v4153 = vld [vmem:[%s4110 + $0xa8] sm:$0xf]
        %v4154 = vld [vmem:[%s4110 + $0xac] sm:$0xf]
        %v4155 = vld [vmem:[%s4110 + $0xb0] sm:$0xf]
        %v4156 = vld [vmem:[%s4110 + $0xb4] sm:$0xf]
        %v4157 = vld [vmem:[%s4110 + $0xb8] sm:$0xf]
        %v4158 = vld [vmem:[%s4110 + $0xbc] sm:$0x3]
        %v4159 = vld [vmem:[%s4110 + $0xc0] sm:$0xf]
        %v4160 = vld [vmem:[%s4110 + $0xc4] sm:$0xf]
        %v4161 = vld [vmem:[%s4110 + $0xc8] sm:$0xf]
        %v4162 = vld [vmem:[%s4110 + $0xcc] sm:$0xf]
        %v4163 = vld [vmem:[%s4110 + $0xd0] sm:$0xf]
        %v4164 = vld [vmem:[%s4110 + $0xd4] sm:$0xf]
        %v4165 = vld [vmem:[%s4110 + $0xd8] sm:$0xf]
        %v4166 = vld [vmem:[%s4110 + $0xdc] sm:$0x3]
        %v4167 = vld [vmem:[%s4110 + $0xe0] sm:$0xf]
        %v4168 = vld [vmem:[%s4110 + $0xe4] sm:$0xf]
        %v4169 = vld [vmem:[%s4110 + $0xe8] sm:$0xf]
        %v4170 = vld [vmem:[%s4110 + $0xec] sm:$0xf]
        %v4171 = vld [vmem:[%s4110 + $0xf0] sm:$0xf]
        %v4172 = vld [vmem:[%s4110 + $0xf4] sm:$0xf]
        %v4173 = vld [vmem:[%s4110 + $0xf8] sm:$0xf]
        %v4174 = vld [vmem:[%s4110 + $0xfc] sm:$0x3]
        %v4199 = vunpack.c.l.b16 %v4111
        %v4200 = vunpack.c.l.b16 %v4112
        %v4201 = vunpack.c.l.b16 %v4113
        %v4202 = vunpack.c.l.b16 %v4119
        %v4203 = vunpack.c.l.b16 %v4120
        %v4204 = vunpack.c.l.b16 %v4121
        %v4205 = vunpack.c.l.b16 %v4127
        %v4206 = vunpack.c.l.b16 %v4128
        %v4207 = vunpack.c.l.b16 %v4129
        %v4208 = vunpack.c.l.b16 %v4135
        %v4209 = vunpack.c.l.b16 %v4136
        %v4210 = vunpack.c.l.b16 %v4137
        %v4211 = vunpack.c.l.b16 %v4143
        %v4212 = vunpack.c.l.b16 %v4144
        %v4213 = vunpack.c.l.b16 %v4145
        %v4214 = vunpack.c.l.b16 %v4151
        %v4215 = vunpack.c.l.b16 %v4152
        %v4216 = vunpack.c.l.b16 %v4153
        %v4217 = vunpack.c.l.b16 %v4159
        %v4218 = vunpack.c.l.b16 %v4160
        %v4219 = vunpack.c.l.b16 %v4161
        %v4220 = vunpack.c.l.b16 %v4167
        %v4221 = vunpack.c.l.b16 %v4168
        %v4222 = vunpack.c.l.b16 %v4169
        %v4223 = vpack.c.b16 %v4200, %v4199
        %v4224 = vpack.c.b16 %v4202, %v4201
        %v4225 = vpack.c.b16 %v4204, %v4203
        %v4226 = vpack.c.b16 %v4206, %v4205
        %v4227 = vpack.c.b16 %v4208, %v4207
        %v4228 = vpack.c.b16 %v4210, %v4209
        %v4229 = vpack.c.b16 %v4212, %v4211
        %v4230 = vpack.c.b16 %v4214, %v4213
        %v4231 = vpack.c.b16 %v4216, %v4215
        %v4232 = vpack.c.b16 %v4218, %v4217
        %v4233 = vpack.c.b16 %v4220, %v4219
        %v4234 = vpack.c.b16 %v4222, %v4221
        %4235 = vrot.lane.b32.xlu0 %v4223, 16
        %v4236 = vpop.permute.xlu0 %4235
        %4237 = vrot.lane.b32.xlu0 %v4224, 16
        %v4238 = vpop.permute.xlu0 %4237
        %4239 = vrot.lane.b32.xlu0 %v4225, 16
        %v4240 = vpop.permute.xlu0 %4239
        %4241 = vrot.lane.b32.xlu0 %v4226, 16
        %v4242 = vpop.permute.xlu0 %4241
        %4243 = vrot.lane.b32.xlu0 %v4227, 16
        %v4244 = vpop.permute.xlu0 %4243
        %4245 = vrot.lane.b32.xlu0 %v4228, 16
        %v4246 = vpop.permute.xlu0 %4245
        %4247 = vrot.lane.b32.xlu0 %v4229, 16
        %v4248 = vpop.permute.xlu0 %4247
        %4249 = vrot.lane.b32.xlu0 %v4230, 16
        %v4250 = vpop.permute.xlu0 %4249
        %4251 = vrot.lane.b32.xlu0 %v4231, 16
        %v4252 = vpop.permute.xlu0 %4251
        %4253 = vrot.lane.b32.xlu0 %v4232, 16
        %v4254 = vpop.permute.xlu0 %4253
        %4255 = vrot.lane.b32.xlu0 %v4233, 16
        %v4256 = vpop.permute.xlu0 %4255
        %4257 = vrot.lane.b32.xlu0 %v4234, 16
        %v4258 = vpop.permute.xlu0 %4257
        %4271 = vst.msk [vmem:[#allocation2 + $0x18] sm:$0xff] %vm1587, %v4236
        %4272 = vst.msk [vmem:[#allocation2 + $0x38] sm:$0xff] %vm1587, %v4238
        %4273 = vst.msk [vmem:[#allocation2 + $0x58] sm:$0xff] %vm1587, %v4240
        %4274 = vst.msk [vmem:[#allocation2 + $0x78] sm:$0xff] %vm1587, %v4242
        %4275 = vst.msk [vmem:[#allocation2 + $0x98] sm:$0xff] %vm1587, %v4244
        %4276 = vst.msk [vmem:[#allocation2 + $0xb8] sm:$0xff] %vm1587, %v4246
        %4277 = vst.msk [vmem:[#allocation2 + $0xd8] sm:$0xff] %vm1587, %v4248
        %4278 = vst.msk [vmem:[#allocation2 + $0xf8] sm:$0xff] %vm1587, %v4250
        %4279 = vst.msk [vmem:[#allocation2 + $0x118] sm:$0xff] %vm1587, %v4252
        %4280 = vst.msk [vmem:[#allocation2 + $0x138] sm:$0xff] %vm1587, %v4254
        %4281 = vst.msk [vmem:[#allocation2 + $0x158] sm:$0xff] %vm1587, %v4256
        %4282 = vst.msk [vmem:[#allocation2 + $0x178] sm:$0xff] %vm1587, %v4258
        %v4307 = vrot.slane %v4113, 5
        %v4308 = vrot.slane %v4307, 4
        %v4309 = vrot.slane %v4114, 5
        %v4310 = vsel %vm405, %v4308, %v4309
        %v4311 = vrot.slane %v4309, 4
        %v4312 = vrot.slane %v4115, 5
        %v4313 = vsel %vm405, %v4311, %v4312
        %v4314 = vrot.slane %v4312, 4
        %v4315 = vrot.slane %v4116, 5
        %v4316 = vsel %vm405, %v4314, %v4315
        %v4317 = vrot.slane %v4121, 5
        %v4318 = vrot.slane %v4317, 4
        %v4319 = vrot.slane %v4122, 5
        %v4320 = vsel %vm405, %v4318, %v4319
        %v4321 = vrot.slane %v4319, 4
        %v4322 = vrot.slane %v4123, 5
        %v4323 = vsel %vm405, %v4321, %v4322
        %v4324 = vrot.slane %v4322, 4
        %v4325 = vrot.slane %v4124, 5
        %v4326 = vsel %vm405, %v4324, %v4325
        %v4327 = vrot.slane %v4129, 5
        %v4328 = vrot.slane %v4327, 4
        %v4329 = vrot.slane %v4130, 5
        %v4330 = vsel %vm405, %v4328, %v4329
        %v4331 = vrot.slane %v4329, 4
        %v4332 = vrot.slane %v4131, 5
        %v4333 = vsel %vm405, %v4331, %v4332
        %v4334 = vrot.slane %v4332, 4
        %v4335 = vrot.slane %v4132, 5
        %v4336 = vsel %vm405, %v4334, %v4335
        %v4337 = vrot.slane %v4137, 5
        %v4338 = vrot.slane %v4337, 4
        %v4339 = vrot.slane %v4138, 5
        %v4340 = vsel %vm405, %v4338, %v4339
        %v4341 = vrot.slane %v4339, 4
        %v4342 = vrot.slane %v4139, 5
        %v4343 = vsel %vm405, %v4341, %v4342
        %v4344 = vrot.slane %v4342, 4
        %v4345 = vrot.slane %v4140, 5
        %v4346 = vsel %vm405, %v4344, %v4345
        %v4347 = vrot.slane %v4145, 5
        %v4348 = vrot.slane %v4347, 4
        %v4349 = vrot.slane %v4146, 5
        %v4350 = vsel %vm405, %v4348, %v4349
        %v4351 = vrot.slane %v4349, 4
        %v4352 = vrot.slane %v4147, 5
        %v4353 = vsel %vm405, %v4351, %v4352
        %v4354 = vrot.slane %v4352, 4
        %v4355 = vrot.slane %v4148, 5
        %v4356 = vsel %vm405, %v4354, %v4355
        %v4357 = vrot.slane %v4153, 5
        %v4358 = vrot.slane %v4357, 4
        %v4359 = vrot.slane %v4154, 5
        %v4360 = vsel %vm405, %v4358, %v4359
        %v4361 = vrot.slane %v4359, 4
        %v4362 = vrot.slane %v4155, 5
        %v4363 = vsel %vm405, %v4361, %v4362
        %v4364 = vrot.slane %v4362, 4
        %v4365 = vrot.slane %v4156, 5
        %v4366 = vsel %vm405, %v4364, %v4365
        %v4367 = vrot.slane %v4161, 5
        %v4368 = vrot.slane %v4367, 4
        %v4369 = vrot.slane %v4162, 5
        %v4370 = vsel %vm405, %v4368, %v4369
        %v4371 = vrot.slane %v4369, 4
        %v4372 = vrot.slane %v4163, 5
        %v4373 = vsel %vm405, %v4371, %v4372
        %v4374 = vrot.slane %v4372, 4
        %v4375 = vrot.slane %v4164, 5
        %v4376 = vsel %vm405, %v4374, %v4375
        %v4377 = vrot.slane %v4169, 5
        %v4378 = vrot.slane %v4377, 4
        %v4379 = vrot.slane %v4170, 5
        %v4380 = vsel %vm405, %v4378, %v4379
        %v4381 = vrot.slane %v4379, 4
        %v4382 = vrot.slane %v4171, 5
        %v4383 = vsel %vm405, %v4381, %v4382
        %v4384 = vrot.slane %v4382, 4
        %v4385 = vrot.slane %v4172, 5
        %v4386 = vsel %vm405, %v4384, %v4385
        %v4387 = vunpack.c.l.b16 %v4310
        %v4388 = vunpack.c.l.b16 %v4313
        %v4389 = vunpack.c.l.b16 %v4316
        %v4390 = vunpack.c.l.b16 %v4320
        %v4391 = vunpack.c.l.b16 %v4323
        %v4392 = vunpack.c.l.b16 %v4326
        %v4393 = vunpack.c.l.b16 %v4330
        %v4394 = vunpack.c.l.b16 %v4333
        %v4395 = vunpack.c.l.b16 %v4336
        %v4396 = vunpack.c.l.b16 %v4340
        %v4397 = vunpack.c.l.b16 %v4343
        %v4398 = vunpack.c.l.b16 %v4346
        %v4399 = vunpack.c.l.b16 %v4350
        %v4400 = vunpack.c.l.b16 %v4353
        %v4401 = vunpack.c.l.b16 %v4356
        %v4402 = vunpack.c.l.b16 %v4360
        %v4403 = vunpack.c.l.b16 %v4363
        %v4404 = vunpack.c.l.b16 %v4366
        %v4405 = vunpack.c.l.b16 %v4370
        %v4406 = vunpack.c.l.b16 %v4373
        %v4407 = vunpack.c.l.b16 %v4376
        %v4408 = vunpack.c.l.b16 %v4380
        %v4409 = vunpack.c.l.b16 %v4383
        %v4410 = vunpack.c.l.b16 %v4386
        %v4411 = vpack.c.b16 %v4388, %v4387
        %v4412 = vpack.c.b16 %v4390, %v4389
        %v4413 = vpack.c.b16 %v4392, %v4391
        %v4414 = vpack.c.b16 %v4394, %v4393
        %v4415 = vpack.c.b16 %v4396, %v4395
        %v4416 = vpack.c.b16 %v4398, %v4397
        %v4417 = vpack.c.b16 %v4400, %v4399
        %v4418 = vpack.c.b16 %v4402, %v4401
        %v4419 = vpack.c.b16 %v4404, %v4403
        %v4420 = vpack.c.b16 %v4406, %v4405
        %v4421 = vpack.c.b16 %v4408, %v4407
        %v4422 = vpack.c.b16 %v4410, %v4409
        %4423 = vrot.lane.b32.xlu0 %v4411, 32
        %v4424 = vpop.permute.xlu0 %4423
        %4425 = vrot.lane.b32.xlu0 %v4412, 32
        %v4426 = vpop.permute.xlu0 %4425
        %4427 = vrot.lane.b32.xlu0 %v4413, 32
        %v4428 = vpop.permute.xlu0 %4427
        %4429 = vrot.lane.b32.xlu0 %v4414, 32
        %v4430 = vpop.permute.xlu0 %4429
        %4431 = vrot.lane.b32.xlu0 %v4415, 32
        %v4432 = vpop.permute.xlu0 %4431
        %4433 = vrot.lane.b32.xlu0 %v4416, 32
        %v4434 = vpop.permute.xlu0 %4433
        %4435 = vrot.lane.b32.xlu0 %v4417, 32
        %v4436 = vpop.permute.xlu0 %4435
        %4437 = vrot.lane.b32.xlu0 %v4418, 32
        %v4438 = vpop.permute.xlu0 %4437
        %4439 = vrot.lane.b32.xlu0 %v4419, 32
        %v4440 = vpop.permute.xlu0 %4439
        %4441 = vrot.lane.b32.xlu0 %v4420, 32
        %v4442 = vpop.permute.xlu0 %4441
        %4443 = vrot.lane.b32.xlu0 %v4421, 32
        %v4444 = vpop.permute.xlu0 %4443
        %4445 = vrot.lane.b32.xlu0 %v4422, 32
        %v4446 = vpop.permute.xlu0 %4445
        %4459 = vst.msk [vmem:[#allocation2 + $0x18] sm:$0xff] %vm1002, %v4424
        %4460 = vst.msk [vmem:[#allocation2 + $0x38] sm:$0xff] %vm1002, %v4426
        %4461 = vst.msk [vmem:[#allocation2 + $0x58] sm:$0xff] %vm1002, %v4428
        %4462 = vst.msk [vmem:[#allocation2 + $0x78] sm:$0xff] %vm1002, %v4430
        %4463 = vst.msk [vmem:[#allocation2 + $0x98] sm:$0xff] %vm1002, %v4432
        %4464 = vst.msk [vmem:[#allocation2 + $0xb8] sm:$0xff] %vm1002, %v4434
        %4465 = vst.msk [vmem:[#allocation2 + $0xd8] sm:$0xff] %vm1002, %v4436
        %4466 = vst.msk [vmem:[#allocation2 + $0xf8] sm:$0xff] %vm1002, %v4438
        %4467 = vst.msk [vmem:[#allocation2 + $0x118] sm:$0xff] %vm1002, %v4440
        %4468 = vst.msk [vmem:[#allocation2 + $0x138] sm:$0xff] %vm1002, %v4442
        %4469 = vst.msk [vmem:[#allocation2 + $0x158] sm:$0xff] %vm1002, %v4444
        %4470 = vst.msk [vmem:[#allocation2 + $0x178] sm:$0xff] %vm1002, %v4446
        %v4487 = vrot.slane %v4115, 6
        %v4488 = vrot.slane %v4487, 4
        %v4489 = vrot.slane %v4116, 6
        %v4490 = vsel %vm589, %v4488, %v4489
        %v4491 = vrot.slane %v4489, 4
        %v4492 = vrot.slane %v4117, 6
        %v4493 = vsel %vm589, %v4491, %v4492
        %v4494 = vrot.slane %v4492, 4
        %v4495 = vrot.slane %v4118, 6
        %v4496 = vsel %vm589, %v4494, %v4495
        %v4497 = vrot.slane %v4123, 6
        %v4498 = vrot.slane %v4497, 4
        %v4499 = vrot.slane %v4124, 6
        %v4500 = vsel %vm589, %v4498, %v4499
        %v4501 = vrot.slane %v4499, 4
        %v4502 = vrot.slane %v4125, 6
        %v4503 = vsel %vm589, %v4501, %v4502
        %v4504 = vrot.slane %v4502, 4
        %v4505 = vrot.slane %v4126, 6
        %v4506 = vsel %vm589, %v4504, %v4505
        %v4507 = vrot.slane %v4131, 6
        %v4508 = vrot.slane %v4507, 4
        %v4509 = vrot.slane %v4132, 6
        %v4510 = vsel %vm589, %v4508, %v4509
        %v4511 = vrot.slane %v4509, 4
        %v4512 = vrot.slane %v4133, 6
        %v4513 = vsel %vm589, %v4511, %v4512
        %v4514 = vrot.slane %v4512, 4
        %v4515 = vrot.slane %v4134, 6
        %v4516 = vsel %vm589, %v4514, %v4515
        %v4517 = vrot.slane %v4139, 6
        %v4518 = vrot.slane %v4517, 4
        %v4519 = vrot.slane %v4140, 6
        %v4520 = vsel %vm589, %v4518, %v4519
        %v4521 = vrot.slane %v4519, 4
        %v4522 = vrot.slane %v4141, 6
        %v4523 = vsel %vm589, %v4521, %v4522
        %v4524 = vrot.slane %v4522, 4
        %v4525 = vrot.slane %v4142, 6
        %v4526 = vsel %vm589, %v4524, %v4525
        %v4527 = vrot.slane %v4147, 6
        %v4528 = vrot.slane %v4527, 4
        %v4529 = vrot.slane %v4148, 6
        %v4530 = vsel %vm589, %v4528, %v4529
        %v4531 = vrot.slane %v4529, 4
        %v4532 = vrot.slane %v4149, 6
        %v4533 = vsel %vm589, %v4531, %v4532
        %v4534 = vrot.slane %v4532, 4
        %v4535 = vrot.slane %v4150, 6
        %v4536 = vsel %vm589, %v4534, %v4535
        %v4537 = vrot.slane %v4155, 6
        %v4538 = vrot.slane %v4537, 4
        %v4539 = vrot.slane %v4156, 6
        %v4540 = vsel %vm589, %v4538, %v4539
        %v4541 = vrot.slane %v4539, 4
        %v4542 = vrot.slane %v4157, 6
        %v4543 = vsel %vm589, %v4541, %v4542
        %v4544 = vrot.slane %v4542, 4
        %v4545 = vrot.slane %v4158, 6
        %v4546 = vsel %vm589, %v4544, %v4545
        %v4547 = vrot.slane %v4163, 6
        %v4548 = vrot.slane %v4547, 4
        %v4549 = vrot.slane %v4164, 6
        %v4550 = vsel %vm589, %v4548, %v4549
        %v4551 = vrot.slane %v4549, 4
        %v4552 = vrot.slane %v4165, 6
        %v4553 = vsel %vm589, %v4551, %v4552
        %v4554 = vrot.slane %v4552, 4
        %v4555 = vrot.slane %v4166, 6
        %v4556 = vsel %vm589, %v4554, %v4555
        %v4557 = vrot.slane %v4171, 6
        %v4558 = vrot.slane %v4557, 4
        %v4559 = vrot.slane %v4172, 6
        %v4560 = vsel %vm589, %v4558, %v4559
        %v4561 = vrot.slane %v4559, 4
        %v4562 = vrot.slane %v4173, 6
        %v4563 = vsel %vm589, %v4561, %v4562
        %v4564 = vrot.slane %v4562, 4
        %v4565 = vrot.slane %v4174, 6
        %v4566 = vsel %vm589, %v4564, %v4565
        %v4567 = vunpack.c.l.b16 %v4490
        %v4568 = vunpack.c.l.b16 %v4493
        %v4569 = vunpack.c.l.b16 %v4496
        %v4570 = vunpack.c.l.b16 %v4500
        %v4571 = vunpack.c.l.b16 %v4503
        %v4572 = vunpack.c.l.b16 %v4506
        %v4573 = vunpack.c.l.b16 %v4510
        %v4574 = vunpack.c.l.b16 %v4513
        %v4575 = vunpack.c.l.b16 %v4516
        %v4576 = vunpack.c.l.b16 %v4520
        %v4577 = vunpack.c.l.b16 %v4523
        %v4578 = vunpack.c.l.b16 %v4526
        %v4579 = vunpack.c.l.b16 %v4530
        %v4580 = vunpack.c.l.b16 %v4533
        %v4581 = vunpack.c.l.b16 %v4536
        %v4582 = vunpack.c.l.b16 %v4540
        %v4583 = vunpack.c.l.b16 %v4543
        %v4584 = vunpack.c.l.b16 %v4546
        %v4585 = vunpack.c.l.b16 %v4550
        %v4586 = vunpack.c.l.b16 %v4553
        %v4587 = vunpack.c.l.b16 %v4556
        %v4588 = vunpack.c.l.b16 %v4560
        %v4589 = vunpack.c.l.b16 %v4563
        %v4590 = vunpack.c.l.b16 %v4566
        %v4591 = vpack.c.b16 %v4568, %v4567
        %v4592 = vpack.c.b16 %v4570, %v4569
        %v4593 = vpack.c.b16 %v4572, %v4571
        %v4594 = vpack.c.b16 %v4574, %v4573
        %v4595 = vpack.c.b16 %v4576, %v4575
        %v4596 = vpack.c.b16 %v4578, %v4577
        %v4597 = vpack.c.b16 %v4580, %v4579
        %v4598 = vpack.c.b16 %v4582, %v4581
        %v4599 = vpack.c.b16 %v4584, %v4583
        %v4600 = vpack.c.b16 %v4586, %v4585
        %v4601 = vpack.c.b16 %v4588, %v4587
        %v4602 = vpack.c.b16 %v4590, %v4589
        %4603 = vrot.lane.b32.xlu0 %v4591, 48
        %v4604 = vpop.permute.xlu0 %4603
        %4605 = vrot.lane.b32.xlu0 %v4592, 48
        %v4606 = vpop.permute.xlu0 %4605
        %4607 = vrot.lane.b32.xlu0 %v4593, 48
        %v4608 = vpop.permute.xlu0 %4607
        %4609 = vrot.lane.b32.xlu0 %v4594, 48
        %v4610 = vpop.permute.xlu0 %4609
        %4611 = vrot.lane.b32.xlu0 %v4595, 48
        %v4612 = vpop.permute.xlu0 %4611
        %4613 = vrot.lane.b32.xlu0 %v4596, 48
        %v4614 = vpop.permute.xlu0 %4613
        %4615 = vrot.lane.b32.xlu0 %v4597, 48
        %v4616 = vpop.permute.xlu0 %4615
        %4617 = vrot.lane.b32.xlu0 %v4598, 48
        %v4618 = vpop.permute.xlu0 %4617
        %4619 = vrot.lane.b32.xlu0 %v4599, 48
        %v4620 = vpop.permute.xlu0 %4619
        %4621 = vrot.lane.b32.xlu0 %v4600, 48
        %v4622 = vpop.permute.xlu0 %4621
        %4623 = vrot.lane.b32.xlu0 %v4601, 48
        %v4624 = vpop.permute.xlu0 %4623
        %4625 = vrot.lane.b32.xlu0 %v4602, 48
        %v4626 = vpop.permute.xlu0 %4625
        %4639 = vst.msk [vmem:[#allocation2 + $0x18] sm:$0xff] %vm366, %v4604
        %4640 = vst.msk [vmem:[#allocation2 + $0x38] sm:$0xff] %vm366, %v4606
        %4641 = vst.msk [vmem:[#allocation2 + $0x58] sm:$0xff] %vm366, %v4608
        %4642 = vst.msk [vmem:[#allocation2 + $0x78] sm:$0xff] %vm366, %v4610
        %4643 = vst.msk [vmem:[#allocation2 + $0x98] sm:$0xff] %vm366, %v4612
        %4644 = vst.msk [vmem:[#allocation2 + $0xb8] sm:$0xff] %vm366, %v4614
        %4645 = vst.msk [vmem:[#allocation2 + $0xd8] sm:$0xff] %vm366, %v4616
        %4646 = vst.msk [vmem:[#allocation2 + $0xf8] sm:$0xff] %vm366, %v4618
        %4647 = vst.msk [vmem:[#allocation2 + $0x118] sm:$0xff] %vm366, %v4620
        %4648 = vst.msk [vmem:[#allocation2 + $0x138] sm:$0xff] %vm366, %v4622
        %4649 = vst.msk [vmem:[#allocation2 + $0x158] sm:$0xff] %vm366, %v4624
        %4650 = vst.msk [vmem:[#allocation2 + $0x178] sm:$0xff] %vm366, %v4626
        %v4651 = vld [vmem:[#allocation2] sm:$0xff]
        %v4652 = vld [vmem:[#allocation2 + $0x8] sm:$0xff]
        %v4653 = vld [vmem:[#allocation2 + $0x10] sm:$0xff]
        %v4654 = vld [vmem:[#allocation2 + $0x18] sm:$0xff]
        %v4655 = vld [vmem:[#allocation2 + $0x20] sm:$0xff]
        %v4656 = vld [vmem:[#allocation2 + $0x28] sm:$0xff]
        %v4657 = vld [vmem:[#allocation2 + $0x30] sm:$0xff]
        %v4658 = vld [vmem:[#allocation2 + $0x38] sm:$0xff]
        %v4659 = vld [vmem:[#allocation2 + $0x40] sm:$0xff]
        %v4660 = vld [vmem:[#allocation2 + $0x48] sm:$0xff]
        %v4661 = vld [vmem:[#allocation2 + $0x50] sm:$0xff]
        %v4662 = vld [vmem:[#allocation2 + $0x58] sm:$0xff]
        %v4663 = vld [vmem:[#allocation2 + $0x60] sm:$0xff]
        %v4664 = vld [vmem:[#allocation2 + $0x68] sm:$0xff]
        %v4665 = vld [vmem:[#allocation2 + $0x70] sm:$0xff]
        %v4666 = vld [vmem:[#allocation2 + $0x78] sm:$0xff]
        %v4667 = vld [vmem:[#allocation2 + $0x80] sm:$0xff]
        %v4668 = vld [vmem:[#allocation2 + $0x88] sm:$0xff]
        %v4669 = vld [vmem:[#allocation2 + $0x90] sm:$0xff]
        %v4670 = vld [vmem:[#allocation2 + $0x98] sm:$0xff]
        %v4671 = vld [vmem:[#allocation2 + $0xa0] sm:$0xff]
        %v4672 = vld [vmem:[#allocation2 + $0xa8] sm:$0xff]
        %v4673 = vld [vmem:[#allocation2 + $0xb0] sm:$0xff]
        %v4674 = vld [vmem:[#allocation2 + $0xb8] sm:$0xff]
        %v4675 = vld [vmem:[#allocation2 + $0xc0] sm:$0xff]
        %v4676 = vld [vmem:[#allocation2 + $0xc8] sm:$0xff]
        %v4677 = vld [vmem:[#allocation2 + $0xd0] sm:$0xff]
        %v4678 = vld [vmem:[#allocation2 + $0xd8] sm:$0xff]
        %v4679 = vld [vmem:[#allocation2 + $0xe0] sm:$0xff]
        %v4680 = vld [vmem:[#allocation2 + $0xe8] sm:$0xff]
        %v4681 = vld [vmem:[#allocation2 + $0xf0] sm:$0xff]
        %v4682 = vld [vmem:[#allocation2 + $0xf8] sm:$0xff]
        %v4683 = vld [vmem:[#allocation2 + $0x100] sm:$0xff]
        %v4684 = vld [vmem:[#allocation2 + $0x108] sm:$0xff]
        %v4685 = vld [vmem:[#allocation2 + $0x110] sm:$0xff]
        %v4686 = vld [vmem:[#allocation2 + $0x118] sm:$0xff]
        %v4687 = vld [vmem:[#allocation2 + $0x120] sm:$0xff]
        %v4688 = vld [vmem:[#allocation2 + $0x128] sm:$0xff]
        %v4689 = vld [vmem:[#allocation2 + $0x130] sm:$0xff]
        %v4690 = vld [vmem:[#allocation2 + $0x138] sm:$0xff]
        %v4691 = vld [vmem:[#allocation2 + $0x140] sm:$0xff]
        %v4692 = vld [vmem:[#allocation2 + $0x148] sm:$0xff]
        %v4693 = vld [vmem:[#allocation2 + $0x150] sm:$0xff]
        %v4694 = vld [vmem:[#allocation2 + $0x158] sm:$0xff]
        %v4695 = vld [vmem:[#allocation2 + $0x160] sm:$0xff]
        %v4696 = vld [vmem:[#allocation2 + $0x168] sm:$0xff]
        %v4697 = vld [vmem:[#allocation2 + $0x170] sm:$0xff]
        %v4698 = vld [vmem:[#allocation2 + $0x178] sm:$0xff]
        %v4699 = vld [vmem:[%s2] sm:$0xf]
        %v4700 = vld [vmem:[%s2 + $0x4] sm:$0xf]
        %v4701 = vld [vmem:[%s2 + $0x8] sm:$0xf]
        %v4702 = vld [vmem:[%s2 + $0xc] sm:$0xf]
        %v4703 = vld [vmem:[%s2 + $0x10] sm:$0xf]
        %v4704 = vld [vmem:[%s2 + $0x14] sm:$0xf]
        %v4705 = vld [vmem:[%s2 + $0x18] sm:$0xf]
        %v4706 = vld [vmem:[%s2 + $0x1c] sm:$0xf]
        %v4707 = vld [vmem:[%s2 + $0x20] sm:$0xf]
        %v4708 = vld [vmem:[%s2 + $0x24] sm:$0xf]
        %v4709 = vld [vmem:[%s2 + $0x28] sm:$0xf]
        %v4710 = vld [vmem:[%s2 + $0x2c] sm:$0xf]
        %v4711 = vld [vmem:[%s2 + $0x30] sm:$0xf]
        %v4712 = vld [vmem:[%s2 + $0x34] sm:$0xf]
        %v4713 = vld [vmem:[%s2 + $0x38] sm:$0xf]
        %v4714 = vld [vmem:[%s2 + $0x3c] sm:$0xf]
        %v4715 = vld [vmem:[%s2 + $0x40] sm:$0xf]
        %v4716 = vld [vmem:[%s2 + $0x44] sm:$0xf]
        %v4717 = vld [vmem:[%s2 + $0x48] sm:$0xf]
        %v4718 = vld [vmem:[%s2 + $0x4c] sm:$0xf]
        %v4719 = vld [vmem:[%s2 + $0x50] sm:$0xf]
        %v4720 = vld [vmem:[%s2 + $0x54] sm:$0xf]
        %v4721 = vld [vmem:[%s2 + $0x58] sm:$0xf]
        %v4722 = vld [vmem:[%s2 + $0x5c] sm:$0xf]
        %v4723 = vld [vmem:[%s2 + $0x60] sm:$0xf]
        %v4724 = vld [vmem:[%s2 + $0x64] sm:$0xf]
        %v4725 = vld [vmem:[%s2 + $0x68] sm:$0xf]
        %v4726 = vld [vmem:[%s2 + $0x6c] sm:$0xf]
        %v4727 = vld [vmem:[%s2 + $0x70] sm:$0xf]
        %v4728 = vld [vmem:[%s2 + $0x74] sm:$0xf]
        %v4729 = vld [vmem:[%s2 + $0x78] sm:$0xf]
        %v4730 = vld [vmem:[%s2 + $0x7c] sm:$0xf]
        %v4731 = vld [vmem:[%s2 + $0x80] sm:$0xf]
        %v4732 = vld [vmem:[%s2 + $0x84] sm:$0xf]
        %v4733 = vld [vmem:[%s2 + $0x88] sm:$0xf]
        %v4734 = vld [vmem:[%s2 + $0x8c] sm:$0xf]
        %v4735 = vld [vmem:[%s2 + $0x90] sm:$0xf]
        %v4736 = vld [vmem:[%s2 + $0x94] sm:$0xf]
        %v4737 = vld [vmem:[%s2 + $0x98] sm:$0xf]
        %v4738 = vld [vmem:[%s2 + $0x9c] sm:$0xf]
        %v4739 = vld [vmem:[%s2 + $0xa0] sm:$0xf]
        %v4740 = vld [vmem:[%s2 + $0xa4] sm:$0xf]
        %v4741 = vld [vmem:[%s2 + $0xa8] sm:$0xf]
        %v4742 = vld [vmem:[%s2 + $0xac] sm:$0xf]
        %v4743 = vld [vmem:[%s2 + $0xb0] sm:$0xf]
        %v4744 = vld [vmem:[%s2 + $0xb4] sm:$0xf]
        %v4745 = vld [vmem:[%s2 + $0xb8] sm:$0xf]
        %v4746 = vld [vmem:[%s2 + $0xbc] sm:$0xf]
        %v4747 = vld [vmem:[%s2 + $0xc0] sm:$0xf]
        %v4748 = vld [vmem:[%s2 + $0xc4] sm:$0xf]
        %v4749 = vld [vmem:[%s2 + $0xc8] sm:$0xf]
        %v4750 = vld [vmem:[%s2 + $0xcc] sm:$0xf]
        %v4751 = vld [vmem:[%s2 + $0xd0] sm:$0xf]
        %v4752 = vld [vmem:[%s2 + $0xd4] sm:$0xf]
        %v4753 = vld [vmem:[%s2 + $0xd8] sm:$0xf]
        %v4754 = vld [vmem:[%s2 + $0xdc] sm:$0xf]
        %v4755 = vld [vmem:[%s199] sm:$0x1]
        %v4756 = vlaneseq
        %v4757 = vshrl.u32 %v4756, 7
        %v4758 = vsub.s32 0, %v4757
        %v4759 = vrot.slane %v4755, %v4758
        %v4816 = vunpack.c.l.b16 %v4699
        %v4817 = vunpack.c.l.b16 %v4700
        %v4818 = vunpack.c.l.b16 %v4701
        %v4819 = vunpack.c.l.b16 %v4702
        %v4820 = vunpack.c.l.b16 %v4703
        %v4821 = vunpack.c.l.b16 %v4704
        %v4822 = vunpack.c.l.b16 %v4705
        %v4823 = vunpack.c.l.b16 %v4706
        %v4824 = vunpack.c.l.b16 %v4707
        %v4825 = vunpack.c.l.b16 %v4708
        %v4826 = vunpack.c.l.b16 %v4709
        %v4827 = vunpack.c.l.b16 %v4710
        %v4828 = vunpack.c.l.b16 %v4711
        %v4829 = vunpack.c.l.b16 %v4712
        %v4830 = vunpack.c.l.b16 %v4713
        %v4831 = vunpack.c.l.b16 %v4714
        %v4832 = vunpack.c.l.b16 %v4715
        %v4833 = vunpack.c.l.b16 %v4716
        %v4834 = vunpack.c.l.b16 %v4717
        %v4835 = vunpack.c.l.b16 %v4718
        %v4836 = vunpack.c.l.b16 %v4719
        %v4837 = vunpack.c.l.b16 %v4720
        %v4838 = vunpack.c.l.b16 %v4721
        %v4839 = vunpack.c.l.b16 %v4722
        %v4840 = vunpack.c.l.b16 %v4723
        %v4841 = vunpack.c.l.b16 %v4724
        %v4842 = vunpack.c.l.b16 %v4725
        %v4843 = vunpack.c.l.b16 %v4726
        %v4844 = vunpack.c.l.b16 %v4727
        %v4845 = vunpack.c.l.b16 %v4728
        %v4846 = vunpack.c.l.b16 %v4729
        %v4847 = vunpack.c.l.b16 %v4730
        %v4848 = vunpack.c.l.b16 %v4731
        %v4849 = vunpack.c.l.b16 %v4732
        %v4850 = vunpack.c.l.b16 %v4733
        %v4851 = vunpack.c.l.b16 %v4734
        %v4852 = vunpack.c.l.b16 %v4735
        %v4853 = vunpack.c.l.b16 %v4736
        %v4854 = vunpack.c.l.b16 %v4737
        %v4855 = vunpack.c.l.b16 %v4738
        %v4856 = vunpack.c.l.b16 %v4739
        %v4857 = vunpack.c.l.b16 %v4740
        %v4858 = vunpack.c.l.b16 %v4741
        %v4859 = vunpack.c.l.b16 %v4742
        %v4860 = vunpack.c.l.b16 %v4743
        %v4861 = vunpack.c.l.b16 %v4744
        %v4862 = vunpack.c.l.b16 %v4745
        %v4863 = vunpack.c.l.b16 %v4746
        %v4864 = vunpack.c.l.b16 %v4747
        %v4865 = vunpack.c.l.b16 %v4748
        %v4866 = vunpack.c.l.b16 %v4749
        %v4867 = vunpack.c.l.b16 %v4750
        %v4868 = vunpack.c.l.b16 %v4751
        %v4869 = vunpack.c.l.b16 %v4752
        %v4870 = vunpack.c.l.b16 %v4753
        %v4871 = vunpack.c.l.b16 %v4754
        %v4872 = vpack.c.b16 %v4817, %v4816
        %v4873 = vpack.c.b16 %v4819, %v4818
        %v4874 = vpack.c.b16 %v4821, %v4820
        %v4875 = vpack.c.b16 %v4823, %v4822
        %v4876 = vpack.c.b16 %v4825, %v4824
        %v4877 = vpack.c.b16 %v4827, %v4826
        %v4878 = vpack.c.b16 %v4829, %v4828
        %v4879 = vpack.c.b16 %v4831, %v4830
        %v4880 = vpack.c.b16 %v4833, %v4832
        %v4881 = vpack.c.b16 %v4835, %v4834
        %v4882 = vpack.c.b16 %v4837, %v4836
        %v4883 = vpack.c.b16 %v4839, %v4838
        %v4884 = vpack.c.b16 %v4841, %v4840
        %v4885 = vpack.c.b16 %v4843, %v4842
        %v4886 = vpack.c.b16 %v4845, %v4844
        %v4887 = vpack.c.b16 %v4847, %v4846
        %v4888 = vpack.c.b16 %v4849, %v4848
        %v4889 = vpack.c.b16 %v4851, %v4850
        %v4890 = vpack.c.b16 %v4853, %v4852
        %v4891 = vpack.c.b16 %v4855, %v4854
        %v4892 = vpack.c.b16 %v4857, %v4856
        %v4893 = vpack.c.b16 %v4859, %v4858
        %v4894 = vpack.c.b16 %v4861, %v4860
        %v4895 = vpack.c.b16 %v4863, %v4862
        %v4896 = vpack.c.b16 %v4865, %v4864
        %v4897 = vpack.c.b16 %v4867, %v4866
        %v4898 = vpack.c.b16 %v4869, %v4868
        %v4899 = vpack.c.b16 %v4871, %v4870
        %vm4928 = vcmask 523264
        %v4930 = vsel %vm4928, %v4654, 0
        %v4933 = vsel %vm4928, %v4658, 0
        %v4936 = vsel %vm4928, %v4662, 0
        %v4939 = vsel %vm4928, %v4666, 0
        %v4942 = vsel %vm4928, %v4670, 0
        %v4945 = vsel %vm4928, %v4674, 0
        %v4948 = vsel %vm4928, %v4678, 0
        %v4951 = vsel %vm4928, %v4682, 0
        %v4954 = vsel %vm4928, %v4686, 0
        %v4957 = vsel %vm4928, %v4690, 0
        %v4960 = vsel %vm4928, %v4694, 0
        %v4963 = vsel %vm4928, %v4698, 0
        %4965 = vmatprep.subr.bf16.mxu0 0
        %4966 = vmatpush1.bf16.msra.mxu0 %v4872
        %4967 = vmatprep.subr.bf16.mxu0 0
        %4968 = vmatpush1.bf16.msra.mxu0 %v4873
        %4969 = vmatprep.subr.bf16.mxu0 0
        %4970 = vmatpush1.bf16.msra.mxu0 %v4874
        %4971 = vmatprep.subr.bf16.mxu0 0
        %4972 = vmatpush1.bf16.msra.mxu0 %v4875
        %4973 = vmatprep.subr.bf16.mxu0 0
        %4974 = vmatpush1.bf16.msra.mxu0 %v4876
        %4975 = vmatprep.subr.bf16.mxu0 0
        %4976 = vmatpush1.bf16.msra.mxu0 %v4877
        %4977 = vmatprep.subr.bf16.mxu0 0
        %4978 = vmatpush1.bf16.msra.mxu0 %v4878
        %4979 = vmatprep.subr.bf16.mxu0 0
        %4980 = vmatpush1.bf16.msra.mxu0 %v4879
        %4981 = vmatprep.subr.bf16.mxu0 0
        %4982 = vmatpush1.bf16.msra.mxu0 %v4880
        %4983 = vmatprep.subr.bf16.mxu0 0
        %4984 = vmatpush1.bf16.msra.mxu0 %v4881
        %4985 = vmatprep.subr.bf16.mxu0 0
        %4986 = vmatpush1.bf16.msra.mxu0 %v4882
        %4987 = vmatprep.subr.bf16.mxu0 0
        %4988 = vmatpush1.bf16.msra.mxu0 %v4883
        %4989 = vmatprep.subr.bf16.mxu0 0
        %4990 = vmatpush1.bf16.msra.mxu0 %v4884
        %4991 = vmatprep.subr.bf16.mxu0 0
        %4992 = vmatpush1.bf16.msra.mxu0 %v4885
        %4993 = vmatprep.subr.bf16.mxu0 0
        %4994 = vmatpush1.bf16.msra.mxu0 %v4886
        %4995 = vmatprep.subr.bf16.mxu0 0
        %4996 = vmatpush1.bf16.msra.mxu0 %v4887
        %4997 = vmatprep.mubr.bf16.mxu0 %v4652
        %4998 = vmatmul.mubr.bf16.gmra.mrb[0].mxu0 %v4651
        %v4999 = vpop.f32.mrb[0].mxu0
        %v5000 = vadd.f32 %v4759, %v4999
        %v5001 = vpop.f32.mrb[0].mxu0
        %v5002 = vpop.f32.mrb[0].mxu0
        %v5003 = vadd.f32 %v4759, %v5002
        %v5004 = vpop.f32.mrb[0].mxu0
        %5005 = vmatprep.mubr.bf16.mxu0 %v4656
        %5006 = vmatmul.mubr.bf16.gmra.mrb[0].mxu0 %v4655
        %v5007 = vpop.f32.mrb[0].mxu0
        %v5008 = vadd.f32 %v4759, %v5007
        %v5009 = vpop.f32.mrb[0].mxu0
        %v5010 = vpop.f32.mrb[0].mxu0
        %v5011 = vadd.f32 %v4759, %v5010
        %v5012 = vpop.f32.mrb[0].mxu0
        %5013 = vmatprep.mubr.bf16.mxu0 %v4660
        %5014 = vmatmul.mubr.bf16.gmra.mrb[0].mxu0 %v4659
        %v5015 = vpop.f32.mrb[0].mxu0
        %v5016 = vadd.f32 %v4759, %v5015
        %v5017 = vpop.f32.mrb[0].mxu0
        %v5018 = vpop.f32.mrb[0].mxu0
        %v5019 = vadd.f32 %v4759, %v5018
        %v5020 = vpop.f32.mrb[0].mxu0
        %5021 = vmatprep.mubr.bf16.mxu0 %v4664
        %5022 = vmatmul.mubr.bf16.gmra.mrb[0].mxu0 %v4663
        %v5023 = vpop.f32.mrb[0].mxu0
        %v5024 = vadd.f32 %v4759, %v5023
        %v5025 = vpop.f32.mrb[0].mxu0
        %v5026 = vpop.f32.mrb[0].mxu0
        %v5027 = vadd.f32 %v4759, %v5026
        %v5028 = vpop.f32.mrb[0].mxu0
        %5029 = vmatprep.mubr.bf16.mxu0 %v4668
        %5030 = vmatmul.mubr.bf16.gmra.mrb[0].mxu0 %v4667
        %v5031 = vpop.f32.mrb[0].mxu0
        %v5032 = vadd.f32 %v4759, %v5031
        %v5033 = vpop.f32.mrb[0].mxu0
        %v5034 = vpop.f32.mrb[0].mxu0
        %v5035 = vadd.f32 %v4759, %v5034
        %v5036 = vpop.f32.mrb[0].mxu0
        %5037 = vmatprep.mubr.bf16.mxu0 %v4672
        %5038 = vmatmul.mubr.bf16.gmra.mrb[0].mxu0 %v4671
        %v5039 = vpop.f32.mrb[0].mxu0
        %v5040 = vadd.f32 %v4759, %v5039
        %v5041 = vpop.f32.mrb[0].mxu0
        %v5042 = vpop.f32.mrb[0].mxu0
        %v5043 = vadd.f32 %v4759, %v5042
        %v5044 = vpop.f32.mrb[0].mxu0
        %5045 = vmatprep.mubr.bf16.mxu0 %v4676
        %5046 = vmatmul.mubr.bf16.gmra.mrb[0].mxu0 %v4675
        %v5047 = vpop.f32.mrb[0].mxu0
        %v5048 = vadd.f32 %v4759, %v5047
        %v5049 = vpop.f32.mrb[0].mxu0
        %v5050 = vpop.f32.mrb[0].mxu0
        %v5051 = vadd.f32 %v4759, %v5050
        %v5052 = vpop.f32.mrb[0].mxu0
        %5053 = vmatprep.mubr.bf16.mxu0 %v4680
        %5054 = vmatmul.mubr.bf16.gmra.mrb[0].mxu0 %v4679
        %v5055 = vpop.f32.mrb[0].mxu0
        %v5056 = vadd.f32 %v4759, %v5055
        %v5057 = vpop.f32.mrb[0].mxu0
        %v5058 = vpop.f32.mrb[0].mxu0
        %v5059 = vadd.f32 %v4759, %v5058
        %v5060 = vpop.f32.mrb[0].mxu0
        %5061 = vmatprep.mubr.bf16.mxu0 %v4684
        %5062 = vmatmul.mubr.bf16.gmra.mrb[0].mxu0 %v4683
        %v5063 = vpop.f32.mrb[0].mxu0
        %v5064 = vadd.f32 %v4759, %v5063
        %v5065 = vpop.f32.mrb[0].mxu0
        %v5066 = vpop.f32.mrb[0].mxu0
        %v5067 = vadd.f32 %v4759, %v5066
        %v5068 = vpop.f32.mrb[0].mxu0
        %5069 = vmatprep.mubr.bf16.mxu0 %v4688
        %5070 = vmatmul.mubr.bf16.gmra.mrb[0].mxu0 %v4687
        %v5071 = vpop.f32.mrb[0].mxu0
        %v5072 = vadd.f32 %v4759, %v5071
        %v5073 = vpop.f32.mrb[0].mxu0
        %v5074 = vpop.f32.mrb[0].mxu0
        %v5075 = vadd.f32 %v4759, %v5074
        %v5076 = vpop.f32.mrb[0].mxu0
        %5077 = vmatprep.mubr.bf16.mxu0 %v4692
        %5078 = vmatmul.mubr.bf16.gmra.mrb[0].mxu0 %v4691
        %v5079 = vpop.f32.mrb[0].mxu0
        %v5080 = vadd.f32 %v4759, %v5079
        %v5081 = vpop.f32.mrb[0].mxu0
        %v5082 = vpop.f32.mrb[0].mxu0
        %v5083 = vadd.f32 %v4759, %v5082
        %v5084 = vpop.f32.mrb[0].mxu0
        %5085 = vmatprep.mubr.bf16.mxu0 %v4696
        %5086 = vmatmul.mubr.bf16.gmra.mrb[0].mxu0 %v4695
        %v5087 = vpop.f32.mrb[0].mxu0
        %v5088 = vadd.f32 %v4759, %v5087
        %v5089 = vpop.f32.mrb[0].mxu0
        %v5090 = vpop.f32.mrb[0].mxu0
        %v5091 = vadd.f32 %v4759, %v5090
        %v5092 = vpop.f32.mrb[0].mxu0
        %5093 = vdwg.mxu0
        %5094 = vmatprep.subr.bf16.mxu0 0
        %5095 = vmatpush1.bf16.msra.mxu0 %v4888
        %5096 = vmatprep.subr.bf16.mxu0 0
        %5097 = vmatpush1.bf16.msra.mxu0 %v4889
        %5098 = vmatprep.subr.bf16.mxu0 0
        %5099 = vmatpush1.bf16.msra.mxu0 %v4890
        %5100 = vmatprep.subr.bf16.mxu0 0
        %5101 = vmatpush1.bf16.msra.mxu0 %v4891
        %5102 = vmatprep.subr.bf16.mxu0 0
        %5103 = vmatpush1.bf16.msra.mxu0 %v4892
        %5104 = vmatprep.subr.bf16.mxu0 0
        %5105 = vmatpush1.bf16.msra.mxu0 %v4893
        %5106 = vmatprep.subr.bf16.mxu0 0
        %5107 = vmatpush1.bf16.msra.mxu0 %v4894
        %5108 = vmatprep.subr.bf16.mxu0 0
        %5109 = vmatpush1.bf16.msra.mxu0 %v4895
        %5110 = vmatprep.subr.bf16.mxu0 0
        %5111 = vmatpush1.bf16.msra.mxu0 %v4896
        %5112 = vmatprep.subr.bf16.mxu0 0
        %5113 = vmatpush1.bf16.msra.mxu0 %v4897
        %5114 = vmatprep.subr.bf16.mxu0 0
        %5115 = vmatpush1.bf16.msra.mxu0 %v4898
        %5116 = vmatprep.subr.bf16.mxu0 0
        %5117 = vmatpush1.bf16.msra.mxu0 %v4899
        %5118 = vmatprep.subr.bf16.mxu0 0
        %5119 = vmatpush1.bf16.msra.mxu0 0
        %5120 = vmatprep.subr.bf16.mxu0 0
        %5121 = vmatpush1.bf16.msra.mxu0 0
        %5122 = vmatprep.subr.bf16.mxu0 0
        %5123 = vmatpush1.bf16.msra.mxu0 0
        %5124 = vmatprep.subr.bf16.mxu0 0
        %5125 = vmatpush1.bf16.msra.mxu0 0
        %5126 = vmatprep.mubr.bf16.mxu0 %v4930
        %5127 = vmatmul.mubr.bf16.gmra.mrb[0].mxu0 %v4653
        %v5128 = vpop.f32.mrb[0].mxu0
        %v5129 = vadd.f32 %v5000, %v5128
        %v5130 = vpop.f32.mrb[0].mxu0
        %v5131 = vpop.f32.mrb[0].mxu0
        %v5132 = vadd.f32 %v5003, %v5131
        %v5133 = vpop.f32.mrb[0].mxu0
        %5134 = vmatprep.mubr.bf16.mxu0 %v4933
        %5135 = vmatmul.mubr.bf16.gmra.mrb[0].mxu0 %v4657
        %v5136 = vpop.f32.mrb[0].mxu0
        %v5137 = vadd.f32 %v5008, %v5136
        %v5138 = vpop.f32.mrb[0].mxu0
        %v5139 = vpop.f32.mrb[0].mxu0
        %v5140 = vadd.f32 %v5011, %v5139
        %v5141 = vpop.f32.mrb[0].mxu0
        %5142 = vmatprep.mubr.bf16.mxu0 %v4936
        %5143 = vmatmul.mubr.bf16.gmra.mrb[0].mxu0 %v4661
        %v5144 = vpop.f32.mrb[0].mxu0
        %v5145 = vadd.f32 %v5016, %v5144
        %v5146 = vpop.f32.mrb[0].mxu0
        %v5147 = vpop.f32.mrb[0].mxu0
        %v5148 = vadd.f32 %v5019, %v5147
        %v5149 = vpop.f32.mrb[0].mxu0
        %5150 = vmatprep.mubr.bf16.mxu0 %v4939
        %5151 = vmatmul.mubr.bf16.gmra.mrb[0].mxu0 %v4665
        %v5152 = vpop.f32.mrb[0].mxu0
        %v5153 = vadd.f32 %v5024, %v5152
        %v5154 = vpop.f32.mrb[0].mxu0
        %v5155 = vpop.f32.mrb[0].mxu0
        %v5156 = vadd.f32 %v5027, %v5155
        %v5157 = vpop.f32.mrb[0].mxu0
        %5158 = vmatprep.mubr.bf16.mxu0 %v4942
        %5159 = vmatmul.mubr.bf16.gmra.mrb[0].mxu0 %v4669
        %v5160 = vpop.f32.mrb[0].mxu0
        %v5161 = vadd.f32 %v5032, %v5160
        %v5162 = vpop.f32.mrb[0].mxu0
        %v5163 = vpop.f32.mrb[0].mxu0
        %v5164 = vadd.f32 %v5035, %v5163
        %v5165 = vpop.f32.mrb[0].mxu0
        %5166 = vmatprep.mubr.bf16.mxu0 %v4945
        %5167 = vmatmul.mubr.bf16.gmra.mrb[0].mxu0 %v4673
        %v5168 = vpop.f32.mrb[0].mxu0
        %v5169 = vadd.f32 %v5040, %v5168
        %v5170 = vpop.f32.mrb[0].mxu0
        %v5171 = vpop.f32.mrb[0].mxu0
        %v5172 = vadd.f32 %v5043, %v5171
        %v5173 = vpop.f32.mrb[0].mxu0
        %5174 = vmatprep.mubr.bf16.mxu0 %v4948
        %5175 = vmatmul.mubr.bf16.gmra.mrb[0].mxu0 %v4677
        %v5176 = vpop.f32.mrb[0].mxu0
        %v5177 = vadd.f32 %v5048, %v5176
        %v5178 = vpop.f32.mrb[0].mxu0
        %v5179 = vpop.f32.mrb[0].mxu0
        %v5180 = vadd.f32 %v5051, %v5179
        %v5181 = vpop.f32.mrb[0].mxu0
        %5182 = vmatprep.mubr.bf16.mxu0 %v4951
        %5183 = vmatmul.mubr.bf16.gmra.mrb[0].mxu0 %v4681
        %v5184 = vpop.f32.mrb[0].mxu0
        %v5185 = vadd.f32 %v5056, %v5184
        %v5186 = vpop.f32.mrb[0].mxu0
        %v5187 = vpop.f32.mrb[0].mxu0
        %v5188 = vadd.f32 %v5059, %v5187
        %v5189 = vpop.f32.mrb[0].mxu0
        %5190 = vmatprep.mubr.bf16.mxu0 %v4954
        %5191 = vmatmul.mubr.bf16.gmra.mrb[0].mxu0 %v4685
        %v5192 = vpop.f32.mrb[0].mxu0
        %v5193 = vadd.f32 %v5064, %v5192
        %v5194 = vpop.f32.mrb[0].mxu0
        %v5195 = vpop.f32.mrb[0].mxu0
        %v5196 = vadd.f32 %v5067, %v5195
        %v5197 = vpop.f32.mrb[0].mxu0
        %5198 = vmatprep.mubr.bf16.mxu0 %v4957
        %5199 = vmatmul.mubr.bf16.gmra.mrb[0].mxu0 %v4689
        %v5200 = vpop.f32.mrb[0].mxu0
        %v5201 = vadd.f32 %v5072, %v5200
        %v5202 = vpop.f32.mrb[0].mxu0
        %v5203 = vpop.f32.mrb[0].mxu0
        %v5204 = vadd.f32 %v5075, %v5203
        %v5205 = vpop.f32.mrb[0].mxu0
        %5206 = vmatprep.mubr.bf16.mxu0 %v4960
        %5207 = vmatmul.mubr.bf16.gmra.mrb[0].mxu0 %v4693
        %v5208 = vpop.f32.mrb[0].mxu0
        %v5209 = vadd.f32 %v5080, %v5208
        %v5210 = vpop.f32.mrb[0].mxu0
        %v5211 = vpop.f32.mrb[0].mxu0
        %v5212 = vadd.f32 %v5083, %v5211
        %v5213 = vpop.f32.mrb[0].mxu0
        %5214 = vmatprep.mubr.bf16.mxu0 %v4963
        %5215 = vmatmul.mubr.bf16.gmra.mrb[0].mxu0 %v4697
        %v5216 = vpop.f32.mrb[0].mxu0
        %v5217 = vadd.f32 %v5088, %v5216
        %v5218 = vpop.f32.mrb[0].mxu0
        %v5219 = vpop.f32.mrb[0].mxu0
        %v5220 = vadd.f32 %v5091, %v5219
        %v5221 = vpop.f32.mrb[0].mxu0
        %5222 = vdwg.mxu0
        %5223 = vst [vmem:[%s190] sm:$0xff] %v5129
        %5224 = vst [vmem:[%s190 + $0x8] sm:$0xff] %v5132
        %5225 = vst [vmem:[%s190 + $0x10] sm:$0xff] %v5137
        %5226 = vst [vmem:[%s190 + $0x18] sm:$0xff] %v5140
        %5227 = vst [vmem:[%s190 + $0x20] sm:$0xff] %v5145
        %5228 = vst [vmem:[%s190 + $0x28] sm:$0xff] %v5148
        %5229 = vst [vmem:[%s190 + $0x30] sm:$0xff] %v5153
        %5230 = vst [vmem:[%s190 + $0x38] sm:$0xff] %v5156
        %5231 = vst [vmem:[%s190 + $0x40] sm:$0xff] %v5161
        %5232 = vst [vmem:[%s190 + $0x48] sm:$0xff] %v5164
        %5233 = vst [vmem:[%s190 + $0x50] sm:$0xff] %v5169
        %5234 = vst [vmem:[%s190 + $0x58] sm:$0xff] %v5172
        %5235 = vst [vmem:[%s190 + $0x60] sm:$0xff] %v5177
        %5236 = vst [vmem:[%s190 + $0x68] sm:$0xff] %v5180
        %5237 = vst [vmem:[%s190 + $0x70] sm:$0xff] %v5185
        %5238 = vst [vmem:[%s190 + $0x78] sm:$0xff] %v5188
        %5239 = vst [vmem:[%s190 + $0x80] sm:$0xff] %v5193
        %5240 = vst [vmem:[%s190 + $0x88] sm:$0xff] %v5196
        %5241 = vst [vmem:[%s190 + $0x90] sm:$0xff] %v5201
        %5242 = vst [vmem:[%s190 + $0x98] sm:$0xff] %v5204
        %5243 = vst [vmem:[%s190 + $0xa0] sm:$0xff] %v5209
        %5244 = vst [vmem:[%s190 + $0xa8] sm:$0xff] %v5212
        %5245 = vst [vmem:[%s190 + $0xb0] sm:$0xff] %v5217
        %5246 = vst [vmem:[%s190 + $0xb8] sm:$0xff] %v5220
        %s5247 = sand.u32 %s112, 1
        %s5248 = scalar_lea.sflag [#allocation4], %s5247
        %s5249 = sand.u32 %s112, 1
        %s5250 = smul.addr %s5249, 192
        %s5251 = scalar_lea.vmem [#allocation3], %s5250
        // Predicated region
        $region33: #{tpu_custom_call.1} parent=31 // pred_check
          %p5252 = pneg %p122
        $region34: #{tpu_custom_call.1} parent=31 // pred_check_branch
          %5254 = sbr.rel (%p5252) target = $region36
        $region35: #{tpu_custom_call.1} parent=31 // pred_region
          %s5255 = smul.u32 24, %s22
          %s5257 = ssub.s32 3072, 3072
          %5258 = vsyncadd %s5248, %s5257
          %s5259 = smul.addr %s21, 72
          %s5260 = sadd.s32 %s5255, %s5259
          %s5261 = smul.addr %s5260, 128
          %s5262 = scalar_lea.hbm %s3, %s5261
          %s5263 = sshll.u32 %s5251, 4
          %s5264 = int_to_ptr.vmem [resolvable:$true] %s5263
          %5269 = dma.vmem_to_hbm [thread:$0]  %s5264, 3072, %s5262, %s5248, 128, 128, 8
        $region36: #{tpu_custom_call.1} parent=31 // pred_fallthru
          _
      $region32: #{tpu_custom_call.1} parent=5 // pred_fallthru
        _
      %p5270 = scmp.le.s32.totalorder 2, %s12
      // Predicated region
      $region37: #{tpu_custom_call.1} parent=5 // pred_check
        %p5271 = pneg %p5270
      $region38: #{tpu_custom_call.1} parent=5 // pred_check_branch
        %5273 = sbr.rel (%p5271) target = $region40
      $region39: #{tpu_custom_call.1} parent=5 // pred_region
        %s5274 = ssub.s32 %s12, 2
        // Predicated region
        $region41: #{tpu_custom_call.1} parent=39 // pred_check
          %p5275 = pneg %p128
        $region42: #{tpu_custom_call.1} parent=39 // pred_check_branch
          %5277 = sbr.rel (%p5275) target = $region44
        $region43: #{tpu_custom_call.1} parent=39 // pred_region
          %s5278 = sand.u32 %s113, 1
          %s5279 = scalar_lea.sflag [#allocation4], %s5278
          %s5280 = sand.u32 %s113, 1
          %s5281 = smul.addr %s5280, 192
          %s5282 = scalar_lea.vmem [#allocation3], %s5281
          %5283 = dma.done %s5279, 3072
        $region44: #{tpu_custom_call.1} parent=39 // pred_fallthru
          _
      $region40: #{tpu_custom_call.1} parent=5 // pred_fallthru
        _
    $region6: #{tpu_custom_call.1} parent=1 // loop_footer
      %s16 = sadd.s32 1, %s12
    $region7: #{tpu_custom_call.1} parent=1 // loop_footer_branch
      %11 = sbr.rel target = $region3
    $region8: #{tpu_custom_call.1} parent=1 // loop_exit
      _
    %5284 = vsyncpa [#allocation4], 1
    %s5285 = scalar_lea.sflag [#allocation4], 1
    %5286 = vsyncpa %s5285, 1

</llo_original>
